<compile_context>
chip_gen: v6e
topology: v6e:2x2x1
jax: 0.10.0
libtpu: 0.0.40
codegen_flags: <defaults>
</compile_context>

<pallas_src>
import jax
import jax.numpy as jnp
from jax.experimental import pallas as pl
from jax.experimental.pallas import tpu as pltpu

EPS = 1e-5
LANES = 128
VMEM_LIMIT = 64 * 1024 * 1024


def _round_up(v, m):
    return ((v + m - 1) // m) * m


def _pad_vec(v, cp):
    return jnp.pad(v.astype(jnp.float32), (0, cp - v.shape[0]))


# ----------------------- per-channel sum / sum-of-squares (bn1 stats) -----------------------
def _make_stats_kernel(total_rows, tm):
    masked = (total_rows % tm) != 0

    def kernel(x_ref, sum_ref, sq_ref):
        i = pl.program_id(0)

        @pl.when(i == 0)
        def _():
            sum_ref[...] = jnp.zeros_like(sum_ref)
            sq_ref[...] = jnp.zeros_like(sq_ref)

        x = x_ref[...].astype(jnp.float32)
        if masked:
            rows = jax.lax.broadcasted_iota(jnp.int32, x.shape, 0) + i * tm
            x = jnp.where(rows < total_rows, x, 0.0)
        sum_ref[...] += jnp.sum(x, axis=0, keepdims=True)
        sq_ref[...] += jnp.sum(x * x, axis=0, keepdims=True)

    return kernel


def channel_stats(x_flat):
    """x_flat: (M, Cp) -> per-channel (sum, sum-of-squares); single in-kernel reduction."""
    M, Cp = x_flat.shape
    TM = min(1024, _round_up(M, 8))
    grid = (pl.cdiv(M, TM),)
    s, q = pl.pallas_call(
        _make_stats_kernel(M, TM),
        out_shape=(jax.ShapeDtypeStruct((1, Cp), jnp.float32),
                   jax.ShapeDtypeStruct((1, Cp), jnp.float32)),
        grid=grid,
        in_specs=[pl.BlockSpec((TM, Cp), lambda i: (i, 0))],
        out_specs=(pl.BlockSpec((1, Cp), lambda i: (0, 0)),
                   pl.BlockSpec((1, Cp), lambda i: (0, 0))),
        compiler_params=pltpu.CompilerParams(
            dimension_semantics=("arbitrary",),
            vmem_limit_bytes=VMEM_LIMIT),
    )(x_flat)
    return s[0], q[0]


def _bn_affine(s, q, count, gamma_p, beta_p):
    """Fold batch-stat BatchNorm into per-channel scale/shift (padded channels -> 0)."""
    mean = s / count
    var = jnp.maximum(q / count - mean * mean, 0.0)          # biased var (torch training BN)
    scale = gamma_p * jax.lax.rsqrt(var + EPS)
    shift = beta_p - mean * scale
    cp = scale.shape[0]
    return scale.reshape(1, cp), shift.reshape(1, cp)


# -------------------------- weight prepacking (bf16, taps packed along K) --------------------------
def _pack_conv_weight(w, ci_p, co_p, stride):
    """(KH,KW,Ci,Co) -> (KH, ceil(KW/stride), stride*ci_p, co_p) bf16.
    Group g holds taps kw = g*stride + j stacked along the contraction dim (zeros for
    phantom taps), so each in-kernel matmul contracts K = stride*ci_p."""
    KH, KW, ci, co = w.shape
    G = -(-KW // stride)
    wp = jnp.zeros((KH, G, stride * ci_p, co_p), jnp.float32)
    wf = w.astype(jnp.float32)
    for kw in range(KW):
        g, j = divmod(kw, stride)
        wp = wp.at[:, g, j * ci_p:j * ci_p + ci, :co].set(wf[:, kw])
    return wp.astype(jnp.bfloat16)


def _pack_shortcut_weight(w_sc, ci_p, co_p, stride, pad):
    """1x1 stride-s shortcut weight packed into one K = stride*ci_p slab (block pad%stride)."""
    ci, co = w_sc.shape[2], w_sc.shape[3]
    j = pad % stride
    wp = jnp.zeros((stride * ci_p, co_p), jnp.float32)
    wp = wp.at[j * ci_p:j * ci_p + ci, :co].set(w_sc[0, 0].astype(jnp.float32))
    return wp.astype(jnp.bfloat16)


# --------------- fused (BN+ReLU prologue) conv kernel, strided, fused shortcut/residual ---------------
def _make_fused_conv_kernel(H, W, KH, KW, stride, pad, Ho, Wo, Hq, Wbuf,
                            with_shortcut, with_residual, with_stats):
    G = -(-KW // stride)
    chunk_w = stride * Wo
    row_chunk = next(c for c in (8, 4, 2, 1) if H % c == 0)

    def kernel(*refs):
        i = 0
        x_ref = refs[i]; i += 1
        scale_ref = refs[i]; i += 1
        shift_ref = refs[i]; i += 1
        w_ref = refs[i]; i += 1
        wsc_ref = None
        if with_shortcut:
            wsc_ref = refs[i]; i += 1
        res_ref = None
        if with_residual:
            res_ref = refs[i]; i += 1
        out_ref = refs[i]; i += 1
        sc_ref = None
        if with_shortcut:
            sc_ref = refs[i]; i += 1
        psum_ref = psq_ref = None
        if with_stats:
            psum_ref = refs[i]; i += 1
            psq_ref = refs[i]; i += 1
        pbuf_ref = refs[i]; i += 1
        acc_ref = refs[i]; i += 1

        cp = pbuf_ref.shape[-1]
        pdt = pbuf_ref.dtype

        # --- zero only the halo border (interior rows/cols are fully rewritten below) ---
        for rh in range(stride):
            qlo = max(0, -((rh - pad) // stride))        # first written row of plane rh
            qhi = (pad + H - 1 - rh) // stride           # last written row of plane rh
            if qlo > 0:
                pbuf_ref[rh, pl.ds(0, qlo)] = jnp.zeros((qlo, Wbuf, cp), pdt)
            nbot = Hq - 1 - qhi
            if nbot > 0:
                pbuf_ref[rh, pl.ds(qhi + 1, nbot)] = jnp.zeros((nbot, Wbuf, cp), pdt)
            nrow = qhi - qlo + 1
            if pad > 0:
                pbuf_ref[rh, pl.ds(qlo, nrow), pl.ds(0, pad), :] = (
                    jnp.zeros((nrow, pad, cp), pdt))
            nright = Wbuf - (pad + W)
            if nright > 0:
                pbuf_ref[rh, pl.ds(qlo, nrow), pl.ds(pad + W, nright), :] = (
                    jnp.zeros((nrow, nright, cp), pdt))

        # --- BN (precomputed batch-stat affine) + ReLU, streamed in row chunks into pbuf (bf16) ---
        scale = scale_ref[...]                           # (1, cp) f32
        shift = shift_ref[...]
        for h0 in range(0, H, row_chunk):
            xc = x_ref[0, pl.ds(h0, row_chunk)].astype(jnp.float32)   # (rc, W, cp)
            xc = jnp.maximum(xc * scale + shift, 0.0).astype(pdt)
            if stride == 1:
                pbuf_ref[0, pl.ds(h0 + pad, row_chunk), pl.ds(pad, W), :] = xc
            else:
                for r in range(row_chunk):               # deinterleave H by stride
                    hp = h0 + r + pad
                    pbuf_ref[hp % stride, hp // stride, pl.ds(pad, W), :] = xc[r]

        # --- tap matmuls: `stride` kw-taps packed along K, bf16 x bf16 -> f32 accumulate ---
        # TODO(synk): for stride==1 on v6e/v7x, lane-concat adjacent kw patches to reach
        # K=256 per matmul as well (K=128 kept here: optimal on v5e, lowering-simple).
        def tap_dot(kh, g):
            patch = pbuf_ref[kh % stride, pl.ds(kh // stride, Ho),
                             pl.ds(g * stride, chunk_w), :]           # (Ho, stride*Wo, cp)
            patch = patch.reshape(Ho * Wo, stride * cp)
            return jnp.dot(patch, w_ref[kh, g], preferred_element_type=jnp.float32)

        taps = [(kh, g) for kh in range(KH) for g in range(G)]
        acc_ref[...] = tap_dot(*taps[0])                 # first tap: plain store, no init pass
        t = 1
        while t < len(taps):
            if t + 1 < len(taps):                        # pair taps: one acc RMW per two matmuls
                acc_ref[...] += tap_dot(*taps[t]) + tap_dot(*taps[t + 1])
                t += 2
            else:
                acc_ref[...] += tap_dot(*taps[t])
                t += 1

        acc = acc_ref[...]                               # (Ho*Wo, Cout_p) f32
        if with_stats:                                   # bn2 batch-stats epilogue (f32)
            psum_ref[0] = jnp.sum(acc, axis=0, keepdims=True)
            psq_ref[0] = jnp.sum(acc * acc, axis=0, keepdims=True)
        if with_residual:                                # fused residual add
            acc = acc + res_ref[0].astype(jnp.float32)
        out_ref[0] = acc.astype(out_ref.dtype)

        if with_shortcut:                                # fused 1x1 strided shortcut conv
            g0 = pad // stride
            patch = pbuf_ref[pad % stride, pl.ds(g0, Ho),
                             pl.ds(g0 * stride, chunk_w), :]
            patch = patch.reshape(Ho * Wo, stride * cp)
            sc = jnp.dot(patch, wsc_ref[...], preferred_element_type=jnp.float32)
            sc_ref[0] = sc.astype(sc_ref.dtype)

    return kernel


def fused_conv(x, scale, shift, w_packed, *, stride, pad, KH, KW,
               w_sc_packed=None, residual=None, emit_stats=False,
               out_dtype=jnp.float32):
    """x: (N,H,W,Cin_p) lane-padded NHWC; w_packed: (KH, ceil(KW/stride), stride*Cin_p, Cout_p).
    Returns tuple: (out(N,Ho*Wo,Cout_p), [shortcut], [psum, psq])."""
    N, H, W, Cin_p = x.shape
    Cout_p = w_packed.shape[-1]
    Ho = (H + 2 * pad - KH) // stride + 1
    Wo = (W + 2 * pad - KW) // stride + 1
    Hq = max((H - 1 + pad) // stride, (KH - 1) // stride + Ho - 1) + 1
    Wbuf = stride * Wo + KW

    with_sc = w_sc_packed is not None
    with_res = residual is not None

    in_specs = [pl.BlockSpec((1, H, W, Cin_p), lambda n: (n, 0, 0, 0)),
                pl.BlockSpec((1, Cin_p), lambda n: (0, 0)),
                pl.BlockSpec((1, Cin_p), lambda n: (0, 0)),
                pl.BlockSpec(w_packed.shape, lambda n: (0, 0, 0, 0))]
    inputs = [x, scale, shift, w_packed]
    if with_sc:
        Csc = w_sc_packed.shape[-1]
        in_specs.append(pl.BlockSpec(w_sc_packed.shape, lambda n: (0, 0)))
        inputs.append(w_sc_packed)
    if with_res:
        Cr = residual.shape[-1]
        in_specs.append(pl.BlockSpec((1, Ho * Wo, Cr), lambda n: (n, 0, 0)))
        inputs.append(residual)

    out_shape = [jax.ShapeDtypeStruct((N, Ho * Wo, Cout_p), out_dtype)]
    out_specs = [pl.BlockSpec((1, Ho * Wo, Cout_p), lambda n: (n, 0, 0))]
    if with_sc:
        out_shape.append(jax.ShapeDtypeStruct((N, Ho * Wo, Csc), jnp.bfloat16))
        out_specs.append(pl.BlockSpec((1, Ho * Wo, Csc), lambda n: (n, 0, 0)))
    if emit_stats:
        for _ in range(2):
            out_shape.append(jax.ShapeDtypeStruct((N, 1, Cout_p), jnp.float32))
            out_specs.append(pl.BlockSpec((1, 1, Cout_p), lambda n: (n, 0, 0)))

    kernel = _make_fused_conv_kernel(H, W, KH, KW, stride, pad, Ho, Wo, Hq, Wbuf,
                                     with_sc, with_res, emit_stats)
    # TODO(synk): for real ResNet spatial sizes add an output-row grid axis with a
    # (KH-1)-row halo so the per-step working set fits v7x's 64 MiB VMEM and both v7x
    # TensorCores get work even at small batch.
    return pl.pallas_call(
        kernel,
        out_shape=tuple(out_shape),
        grid=(N,),
        in_specs=in_specs,
        out_specs=tuple(out_specs),
        scratch_shapes=[pltpu.VMEM((stride, Hq, Wbuf, Cin_p), jnp.bfloat16),
                        pltpu.VMEM((Ho * Wo, Cout_p), jnp.float32)],
        compiler_params=pltpu.CompilerParams(
            dimension_semantics=("parallel",),
            vmem_limit_bytes=VMEM_LIMIT),
    )(*inputs)


# ------------------------------------ BasicBlock forward ------------------------------------
def basic_block_forward(x_nchw, params, stride):
    N, Cin, H, W = x_nchw.shape
    KH, KW = params["w1"].shape[0], params["w1"].shape[1]
    pad = (KH - 1) // 2
    Cmid = params["w1"].shape[-1]
    Cout = params["w2"].shape[-1]
    Cin_p, Cmid_p, Cout_p = (_round_up(c, LANES) for c in (Cin, Cmid, Cout))
    has_sc = (stride > 1) or (Cin != Cout)

    # NCHW -> NHWC + lane padding (single fused XLA copy before the stats/conv kernels).
    x = jnp.transpose(x_nchw, (0, 2, 3, 1)).astype(jnp.float32)
    xp = jnp.pad(x, ((0, 0), (0, 0), (0, 0), (0, Cin_p - Cin)))

    w1p = _pack_conv_weight(params["w1"], Cin_p, Cmid_p, stride)
    w2p = _pack_conv_weight(params["w2"], Cmid_p, Cout_p, 1)
    g1, b1 = _pad_vec(params["bn1_gamma"], Cin_p), _pad_vec(params["bn1_beta"], Cin_p)
    # bn2 in the PyTorch module is sized with out_channels; valid only when
    # mid_channels == out_channels (expand_ratio == 1), same assumption here.
    g2, b2 = _pad_vec(params["bn2_gamma"], Cmid_p), _pad_vec(params["bn2_beta"], Cmid_p)

    # bn1 batch statistics over the input, folded into per-channel scale/shift.
    s1, q1 = channel_stats(xp.reshape(N * H * W, Cin_p))
    scale1, shift1 = _bn_affine(s1, q1, N * H * W, g1, b1)

    Ho = (H + 2 * pad - KH) // stride + 1
    Wo = (W + 2 * pad - KW) // stride + 1

    if has_sc:
        wscp = _pack_shortcut_weight(params["w_sc"], Cin_p, Cout_p, stride, pad)
        out1, sc, ps, pq = fused_conv(xp, scale1, shift1, w1p, stride=stride, pad=pad,
                                      KH=KH, KW=KW, w_sc_packed=wscp, emit_stats=True,
                                      out_dtype=jnp.bfloat16)
    else:
        out1, ps, pq = fused_conv(xp, scale1, shift1, w1p, stride=stride, pad=pad,
                                  KH=KH, KW=KW, emit_stats=True, out_dtype=jnp.bfloat16)
        sc = xp.reshape(N, H * W, Cin_p)              # identity shortcut (raw x)

    # bn2 batch statistics come from the conv1 kernel epilogue (no extra HBM pass).
    s2 = jnp.sum(ps, axis=(0, 1))
    q2 = jnp.sum(pq, axis=(0, 1))
    scale2, shift2 = _bn_affine(s2, q2, N * Ho * Wo, g2, b2)

    out1_img = out1.reshape(N, Ho, Wo, Cmid_p)
    y = fused_conv(out1_img, scale2, shift2, w2p, stride=1, pad=pad, KH=KH, KW=KW,
                   residual=sc, out_dtype=jnp.float32)[0]
    y = y.reshape(N, Ho, Wo, Cout_p)[..., :Cout]
    return jnp.transpose(y, (0, 3, 1, 2))             # NHWC -> NCHW
    # TODO(synk): BatchNorm running-stat buffer updates (training side effect) are not
    # modelled; they do not affect the forward output.


# ------------------------------------- pure-JAX reference -------------------------------------
def _ref_bn_relu(x, g, b):
    mean = jnp.mean(x, axis=(0, 1, 2), keepdims=True)
    var = jnp.mean((x - mean) ** 2, axis=(0, 1, 2), keepdims=True)
    return jnp.maximum((x - mean) * jax.lax.rsqrt(var + EPS) * g + b, 0.0)


def _ref_conv(x, w, stride, pad):
    return jax.lax.conv_general_dilated(
        x, w, window_strides=(stride, stride), padding=[(pad, pad), (pad, pad)],
        dimension_numbers=("NHWC", "HWIO", "NHWC"),
        precision=jax.lax.Precision.HIGHEST)


def reference_forward(x_nchw, params, stride, kernel_size):
    x = jnp.transpose(x_nchw, (0, 2, 3, 1)).astype(jnp.float32)
    cin = x.shape[-1]
    cout = params["w2"].shape[-1]
    p = (kernel_size - 1) // 2
    out = _ref_bn_relu(x, params["bn1_gamma"], params["bn1_beta"])
    shortcut = _ref_conv(out, params["w_sc"], stride, 0) if (stride > 1 or cin != cout) else x
    out = _ref_conv(out, params["w1"], stride, p)
    out = _ref_bn_relu(out, params["bn2_gamma"], params["bn2_beta"])
    out = _ref_conv(out, params["w2"], 1, p) + shortcut
    return jnp.transpose(out, (0, 3, 1, 2))


if __name__ == "__main__":
    in_channels, out_channels = 4, 8
    kernel_size, stride, expand_ratio = 3, 2, 1
    mid_channels = out_channels // expand_ratio
    N, H, W = 2, 16, 16

    key = jax.random.PRNGKey(0)
    ks = jax.random.split(key, 8)
    params = {
        "bn1_gamma": 1.0 + 0.1 * jax.random.normal(ks[0], (in_channels,), jnp.float32),
        "bn1_beta": 0.1 * jax.random.normal(ks[1], (in_channels,), jnp.float32),
        "w1": 0.1 * jax.random.normal(
            ks[2], (kernel_size, kernel_size, in_channels, mid_channels), jnp.float32),
        "bn2_gamma": 1.0 + 0.1 * jax.random.normal(ks[3], (out_channels,), jnp.float32),
        "bn2_beta": 0.1 * jax.random.normal(ks[4], (out_channels,), jnp.float32),
        "w2": 0.1 * jax.random.normal(
            ks[5], (kernel_size, kernel_size, mid_channels, out_channels), jnp.float32),
        "w_sc": 0.1 * jax.random.normal(ks[6], (1, 1, in_channels, out_channels), jnp.float32),
    }
    x = jax.random.normal(ks[7], (N, in_channels, H, W), jnp.float32)  # NCHW like PyTorch

    fwd = jax.jit(basic_block_forward, static_argnums=(2,))
    y = jax.block_until_ready(fwd(x, params, stride))

    y_ref = reference_forward(x, params, stride, kernel_size)
    assert y.shape == (N, out_channels, H // stride, W // stride), y.shape
    max_err = float(jnp.max(jnp.abs(y - y_ref)))
    assert jnp.allclose(y, y_ref, atol=2e-2, rtol=2e-2), max_err
    print("KERNEL_OK")
</pallas_src>

<mosaic_0001>
module attributes {stable_mosaic.version = 11 : i64} {
  func.func @kernel(%arg0: i32, %arg1: memref<512x128xf32, #tpu.memory_space<vmem>>, %arg2: memref<1x128xf32, #tpu.memory_space<vmem>>, %arg3: memref<1x128xf32, #tpu.memory_space<vmem>>) attributes {dimension_semantics = [#tpu.dimension_semantics<arbitrary>], iteration_bounds = array<i64: 1>, scalar_prefetch = 0 : i64, scratch_operands = 0 : i64, tpu.core_type = #tpu.core_type<tc>, window_params = [{transform_indices = @transform_0, window_bounds = array<i64: 512, 128>}, {pipeline_mode = #tpu.pipeline_mode<synchronous>, transform_indices = @transform_1, window_bounds = array<i64: 1, 128>}, {pipeline_mode = #tpu.pipeline_mode<synchronous>, transform_indices = @transform_2, window_bounds = array<i64: 1, 128>}]} {
    %c0_i32 = arith.constant 0 : i32
    %0 = arith.cmpi eq, %arg0, %c0_i32 : i32
    %1 = arith.extui %0 : i1 to i32
    %c0_i32_0 = arith.constant 0 : i32
    %2 = arith.cmpi ne, %1, %c0_i32_0 : i32
    scf.if %2 {
      %cst_11 = arith.constant 0.000000e+00 : f32
      %15 = vector.broadcast %cst_11 : f32 to vector<1x128xf32>
      %c0_12 = arith.constant 0 : index
      %c0_13 = arith.constant 0 : index
      %16 = vector.load %arg2[%c0_12, %c0_13] : memref<1x128xf32, #tpu.memory_space<vmem>>, vector<1x128xf32>
      tpu.vector_store %arg2[%c0_12, %c0_13], %15 {strides = array<i32>} : memref<1x128xf32, #tpu.memory_space<vmem>>, vector<1x128xf32>,
      %cst_14 = arith.constant 0.000000e+00 : f32
      %17 = vector.broadcast %cst_14 : f32 to vector<1x128xf32>
      %c0_15 = arith.constant 0 : index
      %c0_16 = arith.constant 0 : index
      %18 = vector.load %arg3[%c0_15, %c0_16] : memref<1x128xf32, #tpu.memory_space<vmem>>, vector<1x128xf32>
      tpu.vector_store %arg3[%c0_15, %c0_16], %17 {strides = array<i32>} : memref<1x128xf32, #tpu.memory_space<vmem>>, vector<1x128xf32>,
    } else {
    }
    %c0 = arith.constant 0 : index
    %c0_1 = arith.constant 0 : index
    %3 = vector.load %arg1[%c0, %c0_1] : memref<512x128xf32, #tpu.memory_space<vmem>>, vector<512x128xf32>
    %c0_2 = arith.constant 0 : index
    %c0_3 = arith.constant 0 : index
    %4 = vector.load %arg2[%c0_2, %c0_3] : memref<1x128xf32, #tpu.memory_space<vmem>>, vector<1x128xf32>
    %cst = arith.constant dense<0.000000e+00> : vector<128xf32>
    %5 = vector.multi_reduction <add>, %3, %cst [0] : vector<512x128xf32> to vector<128xf32>
    %6 = vector.shape_cast %5 : vector<128xf32> to vector<1x128xf32>
    %7 = arith.addf %4, %6 : vector<1x128xf32>
    %c0_4 = arith.constant 0 : index
    %c0_5 = arith.constant 0 : index
    %8 = vector.load %arg2[%c0_4, %c0_5] : memref<1x128xf32, #tpu.memory_space<vmem>>, vector<1x128xf32>
    tpu.vector_store %arg2[%c0_4, %c0_5], %7 {strides = array<i32>} : memref<1x128xf32, #tpu.memory_space<vmem>>, vector<1x128xf32>,
    %c0_6 = arith.constant 0 : index
    %c0_7 = arith.constant 0 : index
    %9 = vector.load %arg3[%c0_6, %c0_7] : memref<1x128xf32, #tpu.memory_space<vmem>>, vector<1x128xf32>
    %10 = arith.mulf %3, %3 : vector<512x128xf32>
    %cst_8 = arith.constant dense<0.000000e+00> : vector<128xf32>
    %11 = vector.multi_reduction <add>, %10, %cst_8 [0] : vector<512x128xf32> to vector<128xf32>
    %12 = vector.shape_cast %11 : vector<128xf32> to vector<1x128xf32>
    %13 = arith.addf %9, %12 : vector<1x128xf32>
    %c0_9 = arith.constant 0 : index
    %c0_10 = arith.constant 0 : index
    %14 = vector.load %arg3[%c0_9, %c0_10] : memref<1x128xf32, #tpu.memory_space<vmem>>, vector<1x128xf32>
    tpu.vector_store %arg3[%c0_9, %c0_10], %13 {strides = array<i32>} : memref<1x128xf32, #tpu.memory_space<vmem>>, vector<1x128xf32>,
    return
  }
  func.func @transform_0(%arg0: i32) -> (i32, i32) {
    %c0_i32 = arith.constant 0 : i32
    %c0_i32_0 = arith.constant 0 : i32
    return %arg0, %c0_i32 : i32, i32
  }
  func.func @transform_1(%arg0: i32) -> (i32, i32) {
    %c0_i32 = arith.constant 0 : i32
    %c0_i32_0 = arith.constant 0 : i32
    %c0_i32_1 = arith.constant 0 : i32
    return %c0_i32, %c0_i32_0 : i32, i32
  }
  func.func @transform_2(%arg0: i32) -> (i32, i32) {
    %c0_i32 = arith.constant 0 : i32
    %c0_i32_0 = arith.constant 0 : i32
    %c0_i32_1 = arith.constant 0 : i32
    return %c0_i32, %c0_i32_0 : i32, i32
  }
}

module attributes {stable_mosaic.version = 11 : i64} {
  func.func @kernel(%arg0: i32, %arg1: memref<1x16x16x128xf32, #tpu.memory_space<vmem>>, %arg2: memref<1x128xf32, #tpu.memory_space<vmem>>, %arg3: memref<1x128xf32, #tpu.memory_space<vmem>>, %arg4: memref<3x2x256x128xbf16, #tpu.memory_space<vmem>>, %arg5: memref<256x128xbf16, #tpu.memory_space<vmem>>, %arg6: memref<1x64x128xbf16, #tpu.memory_space<vmem>>, %arg7: memref<1x64x128xbf16, #tpu.memory_space<vmem>>, %arg8: memref<1x1x128xf32, #tpu.memory_space<vmem>>, %arg9: memref<1x1x128xf32, #tpu.memory_space<vmem>>, %arg10: memref<2x9x19x128xbf16, #tpu.memory_space<vmem>>, %arg11: memref<64x128xf32, #tpu.memory_space<vmem>>) attributes {dimension_semantics = [#tpu.dimension_semantics<parallel>], iteration_bounds = array<i64: 2>, scalar_prefetch = 0 : i64, scratch_operands = 2 : i64, tpu.core_type = #tpu.core_type<tc>, window_params = [{transform_indices = @transform_0, window_bounds = array<i64: 1, 16, 16, 128>}, {pipeline_mode = #tpu.pipeline_mode<synchronous>, transform_indices = @transform_1, window_bounds = array<i64: 1, 128>}, {pipeline_mode = #tpu.pipeline_mode<synchronous>, transform_indices = @transform_2, window_bounds = array<i64: 1, 128>}, {pipeline_mode = #tpu.pipeline_mode<synchronous>, transform_indices = @transform_3, window_bounds = array<i64: 3, 2, 256, 128>}, {pipeline_mode = #tpu.pipeline_mode<synchronous>, transform_indices = @transform_4, window_bounds = array<i64: 256, 128>}, {transform_indices = @transform_5, window_bounds = array<i64: 1, 64, 128>}, {transform_indices = @transform_6, window_bounds = array<i64: 1, 64, 128>}, {transform_indices = @transform_7, window_bounds = array<i64: 1, 1, 128>}, {transform_indices = @transform_8, window_bounds = array<i64: 1, 1, 128>}]} {
    %cst = arith.constant 0.000000e+00 : bf16
    %0 = vector.broadcast %cst : bf16 to vector<1x19x128xbf16>
    %c0 = arith.constant 0 : index
    %c0_0 = arith.constant 0 : index
    %c0_1 = arith.constant 0 : index
    %c0_2 = arith.constant 0 : index
    %1 = vector.load %arg10[%c0, %c0_0, %c0_1, %c0_2] : memref<2x9x19x128xbf16, #tpu.memory_space<vmem>>, vector<1x1x19x128xbf16>
    %2 = vector.shape_cast %1 : vector<1x1x19x128xbf16> to vector<1x19x128xbf16>
    %3 = vector.shape_cast %0 : vector<1x19x128xbf16> to vector<1x1x19x128xbf16>
    tpu.vector_store %arg10[%c0, %c0_0, %c0_1, %c0_2], %3 {strides = array<i32>} : memref<2x9x19x128xbf16, #tpu.memory_space<vmem>>, vector<1x1x19x128xbf16>,
    %cst_3 = arith.constant 0.000000e+00 : bf16
    %4 = vector.broadcast %cst_3 : bf16 to vector<8x1x128xbf16>
    %c0_4 = arith.constant 0 : index
    %c1 = arith.constant 1 : index
    %c0_5 = arith.constant 0 : index
    %c0_6 = arith.constant 0 : index
    %5 = vector.load %arg10[%c0_4, %c1, %c0_5, %c0_6] : memref<2x9x19x128xbf16, #tpu.memory_space<vmem>>, vector<1x8x1x128xbf16>
    %6 = vector.shape_cast %5 : vector<1x8x1x128xbf16> to vector<8x1x128xbf16>
    %7 = vector.shape_cast %4 : vector<8x1x128xbf16> to vector<1x8x1x128xbf16>
    tpu.vector_store %arg10[%c0_4, %c1, %c0_5, %c0_6], %7 {strides = array<i32>} : memref<2x9x19x128xbf16, #tpu.memory_space<vmem>>, vector<1x8x1x128xbf16>,
    %cst_7 = arith.constant 0.000000e+00 : bf16
    %8 = vector.broadcast %cst_7 : bf16 to vector<8x2x128xbf16>
    %c0_8 = arith.constant 0 : index
    %c1_9 = arith.constant 1 : index
    %c17 = arith.constant 17 : index
    %c0_10 = arith.constant 0 : index
    %9 = vector.load %arg10[%c0_8, %c1_9, %c17, %c0_10] : memref<2x9x19x128xbf16, #tpu.memory_space<vmem>>, vector<1x8x2x128xbf16>
    %10 = vector.shape_cast %9 : vector<1x8x2x128xbf16> to vector<8x2x128xbf16>
    %11 = vector.shape_cast %8 : vector<8x2x128xbf16> to vector<1x8x2x128xbf16>
    tpu.vector_store %arg10[%c0_8, %c1_9, %c17, %c0_10], %11 {strides = array<i32>} : memref<2x9x19x128xbf16, #tpu.memory_space<vmem>>, vector<1x8x2x128xbf16>,
    %cst_11 = arith.constant 0.000000e+00 : bf16
    %12 = vector.broadcast %cst_11 : bf16 to vector<1x19x128xbf16>
    %c1_12 = arith.constant 1 : index
    %c8 = arith.constant 8 : index
    %c0_13 = arith.constant 0 : index
    %c0_14 = arith.constant 0 : index
    %13 = vector.load %arg10[%c1_12, %c8, %c0_13, %c0_14] : memref<2x9x19x128xbf16, #tpu.memory_space<vmem>>, vector<1x1x19x128xbf16>
    %14 = vector.shape_cast %13 : vector<1x1x19x128xbf16> to vector<1x19x128xbf16>
    %15 = vector.shape_cast %12 : vector<1x19x128xbf16> to vector<1x1x19x128xbf16>
    tpu.vector_store %arg10[%c1_12, %c8, %c0_13, %c0_14], %15 {strides = array<i32>} : memref<2x9x19x128xbf16, #tpu.memory_space<vmem>>, vector<1x1x19x128xbf16>,
    %cst_15 = arith.constant 0.000000e+00 : bf16
    %16 = vector.broadcast %cst_15 : bf16 to vector<8x1x128xbf16>
    %c1_16 = arith.constant 1 : index
    %c0_17 = arith.constant 0 : index
    %c0_18 = arith.constant 0 : index
    %c0_19 = arith.constant 0 : index
    %17 = vector.load %arg10[%c1_16, %c0_17, %c0_18, %c0_19] : memref<2x9x19x128xbf16, #tpu.memory_space<vmem>>, vector<1x8x1x128xbf16>
    %18 = vector.shape_cast %17 : vector<1x8x1x128xbf16> to vector<8x1x128xbf16>
    %19 = vector.shape_cast %16 : vector<8x1x128xbf16> to vector<1x8x1x128xbf16>
    tpu.vector_store %arg10[%c1_16, %c0_17, %c0_18, %c0_19], %19 {strides = array<i32>} : memref<2x9x19x128xbf16, #tpu.memory_space<vmem>>, vector<1x8x1x128xbf16>,
    %cst_20 = arith.constant 0.000000e+00 : bf16
    %20 = vector.broadcast %cst_20 : bf16 to vector<8x2x128xbf16>
    %c1_21 = arith.constant 1 : index
    %c0_22 = arith.constant 0 : index
    %c17_23 = arith.constant 17 : index
    %c0_24 = arith.constant 0 : index
    %21 = vector.load %arg10[%c1_21, %c0_22, %c17_23, %c0_24] : memref<2x9x19x128xbf16, #tpu.memory_space<vmem>>, vector<1x8x2x128xbf16>
    %22 = vector.shape_cast %21 : vector<1x8x2x128xbf16> to vector<8x2x128xbf16>
    %23 = vector.shape_cast %20 : vector<8x2x128xbf16> to vector<1x8x2x128xbf16>
    tpu.vector_store %arg10[%c1_21, %c0_22, %c17_23, %c0_24], %23 {strides = array<i32>} : memref<2x9x19x128xbf16, #tpu.memory_space<vmem>>, vector<1x8x2x128xbf16>,
    %c0_25 = arith.constant 0 : index
    %c0_26 = arith.constant 0 : index
    %24 = vector.load %arg2[%c0_25, %c0_26] : memref<1x128xf32, #tpu.memory_space<vmem>>, vector<1x128xf32>
    %c0_27 = arith.constant 0 : index
    %c0_28 = arith.constant 0 : index
    %25 = vector.load %arg3[%c0_27, %c0_28] : memref<1x128xf32, #tpu.memory_space<vmem>>, vector<1x128xf32>
    %c0_29 = arith.constant 0 : index
    %c0_30 = arith.constant 0 : index
    %c0_31 = arith.constant 0 : index
    %c0_32 = arith.constant 0 : index
    %26 = vector.load %arg1[%c0_29, %c0_30, %c0_31, %c0_32] : memref<1x16x16x128xf32, #tpu.memory_space<vmem>>, vector<1x8x16x128xf32>
    %27 = vector.shape_cast %26 : vector<1x8x16x128xf32> to vector<8x16x128xf32>
    %28 = vector.shape_cast %24 : vector<1x128xf32> to vector<1x1x128xf32>
    %29 = vector.broadcast %28 : vector<1x1x128xf32> to vector<8x16x128xf32>
    %30 = arith.mulf %27, %29 : vector<8x16x128xf32>
    %31 = vector.shape_cast %25 : vector<1x128xf32> to vector<1x1x128xf32>
    %32 = vector.broadcast %31 : vector<1x1x128xf32> to vector<8x16x128xf32>
    %33 = arith.addf %30, %32 : vector<8x16x128xf32>
    %cst_33 = arith.constant 0.000000e+00 : f32
    %34 = vector.broadcast %cst_33 : f32 to vector<8x16x128xf32>
    %35 = arith.maximumf %33, %34 : vector<8x16x128xf32>
    %36 = arith.truncf %35 : vector<8x16x128xf32> to vector<8x16x128xbf16>
    %37 = vector.extract_strided_slice %36 {offsets = [0, 0, 0], sizes = [1, 16, 128], strides = [1, 1, 1]} : vector<8x16x128xbf16> to vector<1x16x128xbf16>
    %38 = vector.shape_cast %37 : vector<1x16x128xbf16> to vector<16x128xbf16>
    %c1_34 = arith.constant 1 : index
    %c0_35 = arith.constant 0 : index
    %c1_36 = arith.constant 1 : index
    %c0_37 = arith.constant 0 : index
    %39 = vector.load %arg10[%c1_34, %c0_35, %c1_36, %c0_37] : memref<2x9x19x128xbf16, #tpu.memory_space<vmem>>, vector<1x1x16x128xbf16>
    %40 = vector.shape_cast %39 : vector<1x1x16x128xbf16> to vector<16x128xbf16>
    %41 = vector.shape_cast %38 : vector<16x128xbf16> to vector<1x1x16x128xbf16>
    tpu.vector_store %arg10[%c1_34, %c0_35, %c1_36, %c0_37], %41 {strides = array<i32>} : memref<2x9x19x128xbf16, #tpu.memory_space<vmem>>, vector<1x1x16x128xbf16>,
    %42 = vector.extract_strided_slice %36 {offsets = [1, 0, 0], sizes = [1, 16, 128], strides = [1, 1, 1]} : vector<8x16x128xbf16> to vector<1x16x128xbf16>
    %43 = vector.shape_cast %42 : vector<1x16x128xbf16> to vector<16x128xbf16>
    %c0_38 = arith.constant 0 : index
    %c1_39 = arith.constant 1 : index
    %c1_40 = arith.constant 1 : index
    %c0_41 = arith.constant 0 : index
    %44 = vector.load %arg10[%c0_38, %c1_39, %c1_40, %c0_41] : memref<2x9x19x128xbf16, #tpu.memory_space<vmem>>, vector<1x1x16x128xbf16>
    %45 = vector.shape_cast %44 : vector<1x1x16x128xbf16> to vector<16x128xbf16>
    %46 = vector.shape_cast %43 : vector<16x128xbf16> to vector<1x1x16x128xbf16>
    tpu.vector_store %arg10[%c0_38, %c1_39, %c1_40, %c0_41], %46 {strides = array<i32>} : memref<2x9x19x128xbf16, #tpu.memory_space<vmem>>, vector<1x1x16x128xbf16>,
    %47 = vector.extract_strided_slice %36 {offsets = [2, 0, 0], sizes = [1, 16, 128], strides = [1, 1, 1]} : vector<8x16x128xbf16> to vector<1x16x128xbf16>
    %48 = vector.shape_cast %47 : vector<1x16x128xbf16> to vector<16x128xbf16>
    %c1_42 = arith.constant 1 : index
    %c1_43 = arith.constant 1 : index
    %c1_44 = arith.constant 1 : index
    %c0_45 = arith.constant 0 : index
    %49 = vector.load %arg10[%c1_42, %c1_43, %c1_44, %c0_45] : memref<2x9x19x128xbf16, #tpu.memory_space<vmem>>, vector<1x1x16x128xbf16>
    %50 = vector.shape_cast %49 : vector<1x1x16x128xbf16> to vector<16x128xbf16>
    %51 = vector.shape_cast %48 : vector<16x128xbf16> to vector<1x1x16x128xbf16>
    tpu.vector_store %arg10[%c1_42, %c1_43, %c1_44, %c0_45], %51 {strides = array<i32>} : memref<2x9x19x128xbf16, #tpu.memory_space<vmem>>, vector<1x1x16x128xbf16>,
    %52 = vector.extract_strided_slice %36 {offsets = [3, 0, 0], sizes = [1, 16, 128], strides = [1, 1, 1]} : vector<8x16x128xbf16> to vector<1x16x128xbf16>
    %53 = vector.shape_cast %52 : vector<1x16x128xbf16> to vector<16x128xbf16>
    %c0_46 = arith.constant 0 : index
    %c2 = arith.constant 2 : index
    %c1_47 = arith.constant 1 : index
    %c0_48 = arith.constant 0 : index
    %54 = vector.load %arg10[%c0_46, %c2, %c1_47, %c0_48] : memref<2x9x19x128xbf16, #tpu.memory_space<vmem>>, vector<1x1x16x128xbf16>
    %55 = vector.shape_cast %54 : vector<1x1x16x128xbf16> to vector<16x128xbf16>
    %56 = vector.shape_cast %53 : vector<16x128xbf16> to vector<1x1x16x128xbf16>
    tpu.vector_store %arg10[%c0_46, %c2, %c1_47, %c0_48], %56 {strides = array<i32>} : memref<2x9x19x128xbf16, #tpu.memory_space<vmem>>, vector<1x1x16x128xbf16>,
    %57 = vector.extract_strided_slice %36 {offsets = [4, 0, 0], sizes = [1, 16, 128], strides = [1, 1, 1]} : vector<8x16x128xbf16> to vector<1x16x128xbf16>
    %58 = vector.shape_cast %57 : vector<1x16x128xbf16> to vector<16x128xbf16>
    %c1_49 = arith.constant 1 : index
    %c2_50 = arith.constant 2 : index
    %c1_51 = arith.constant 1 : index
    %c0_52 = arith.constant 0 : index
    %59 = vector.load %arg10[%c1_49, %c2_50, %c1_51, %c0_52] : memref<2x9x19x128xbf16, #tpu.memory_space<vmem>>, vector<1x1x16x128xbf16>
    %60 = vector.shape_cast %59 : vector<1x1x16x128xbf16> to vector<16x128xbf16>
    %61 = vector.shape_cast %58 : vector<16x128xbf16> to vector<1x1x16x128xbf16>
    tpu.vector_store %arg10[%c1_49, %c2_50, %c1_51, %c0_52], %61 {strides = array<i32>} : memref<2x9x19x128xbf16, #tpu.memory_space<vmem>>, vector<1x1x16x128xbf16>,
    %62 = vector.extract_strided_slice %36 {offsets = [5, 0, 0], sizes = [1, 16, 128], strides = [1, 1, 1]} : vector<8x16x128xbf16> to vector<1x16x128xbf16>
    %63 = vector.shape_cast %62 : vector<1x16x128xbf16> to vector<16x128xbf16>
    %c0_53 = arith.constant 0 : index
    %c3 = arith.constant 3 : index
    %c1_54 = arith.constant 1 : index
    %c0_55 = arith.constant 0 : index
    %64 = vector.load %arg10[%c0_53, %c3, %c1_54, %c0_55] : memref<2x9x19x128xbf16, #tpu.memory_space<vmem>>, vector<1x1x16x128xbf16>
    %65 = vector.shape_cast %64 : vector<1x1x16x128xbf16> to vector<16x128xbf16>
    %66 = vector.shape_cast %63 : vector<16x128xbf16> to vector<1x1x16x128xbf16>
    tpu.vector_store %arg10[%c0_53, %c3, %c1_54, %c0_55], %66 {strides = array<i32>} : memref<2x9x19x128xbf16, #tpu.memory_space<vmem>>, vector<1x1x16x128xbf16>,
    %67 = vector.extract_strided_slice %36 {offsets = [6, 0, 0], sizes = [1, 16, 128], strides = [1, 1, 1]} : vector<8x16x128xbf16> to vector<1x16x128xbf16>
    %68 = vector.shape_cast %67 : vector<1x16x128xbf16> to vector<16x128xbf16>
    %c1_56 = arith.constant 1 : index
    %c3_57 = arith.constant 3 : index
    %c1_58 = arith.constant 1 : index
    %c0_59 = arith.constant 0 : index
    %69 = vector.load %arg10[%c1_56, %c3_57, %c1_58, %c0_59] : memref<2x9x19x128xbf16, #tpu.memory_space<vmem>>, vector<1x1x16x128xbf16>
    %70 = vector.shape_cast %69 : vector<1x1x16x128xbf16> to vector<16x128xbf16>
    %71 = vector.shape_cast %68 : vector<16x128xbf16> to vector<1x1x16x128xbf16>
    tpu.vector_store %arg10[%c1_56, %c3_57, %c1_58, %c0_59], %71 {strides = array<i32>} : memref<2x9x19x128xbf16, #tpu.memory_space<vmem>>, vector<1x1x16x128xbf16>,
    %72 = vector.extract_strided_slice %36 {offsets = [7, 0, 0], sizes = [1, 16, 128], strides = [1, 1, 1]} : vector<8x16x128xbf16> to vector<1x16x128xbf16>
    %73 = vector.shape_cast %72 : vector<1x16x128xbf16> to vector<16x128xbf16>
    %c0_60 = arith.constant 0 : index
    %c4 = arith.constant 4 : index
    %c1_61 = arith.constant 1 : index
    %c0_62 = arith.constant 0 : index
    %74 = vector.load %arg10[%c0_60, %c4, %c1_61, %c0_62] : memref<2x9x19x128xbf16, #tpu.memory_space<vmem>>, vector<1x1x16x128xbf16>
    %75 = vector.shape_cast %74 : vector<1x1x16x128xbf16> to vector<16x128xbf16>
    %76 = vector.shape_cast %73 : vector<16x128xbf16> to vector<1x1x16x128xbf16>
    tpu.vector_store %arg10[%c0_60, %c4, %c1_61, %c0_62], %76 {strides = array<i32>} : memref<2x9x19x128xbf16, #tpu.memory_space<vmem>>, vector<1x1x16x128xbf16>,
    %c0_63 = arith.constant 0 : index
    %c8_64 = arith.constant 8 : index
    %c0_65 = arith.constant 0 : index
    %c0_66 = arith.constant 0 : index
    %77 = vector.load %arg1[%c0_63, %c8_64, %c0_65, %c0_66] : memref<1x16x16x128xf32, #tpu.memory_space<vmem>>, vector<1x8x16x128xf32>
    %78 = vector.shape_cast %77 : vector<1x8x16x128xf32> to vector<8x16x128xf32>
    %79 = vector.shape_cast %24 : vector<1x128xf32> to vector<1x1x128xf32>
    %80 = vector.broadcast %79 : vector<1x1x128xf32> to vector<8x16x128xf32>
    %81 = arith.mulf %78, %80 : vector<8x16x128xf32>
    %82 = vector.shape_cast %25 : vector<1x128xf32> to vector<1x1x128xf32>
    %83 = vector.broadcast %82 : vector<1x1x128xf32> to vector<8x16x128xf32>
    %84 = arith.addf %81, %83 : vector<8x16x128xf32>
    %cst_67 = arith.constant 0.000000e+00 : f32
    %85 = vector.broadcast %cst_67 : f32 to vector<8x16x128xf32>
    %86 = arith.maximumf %84, %85 : vector<8x16x128xf32>
    %87 = arith.truncf %86 : vector<8x16x128xf32> to vector<8x16x128xbf16>
    %88 = vector.extract_strided_slice %87 {offsets = [0, 0, 0], sizes = [1, 16, 128], strides = [1, 1, 1]} : vector<8x16x128xbf16> to vector<1x16x128xbf16>
    %89 = vector.shape_cast %88 : vector<1x16x128xbf16> to vector<16x128xbf16>
    %c1_68 = arith.constant 1 : index
    %c4_69 = arith.constant 4 : index
    %c1_70 = arith.constant 1 : index
    %c0_71 = arith.constant 0 : index
    %90 = vector.load %arg10[%c1_68, %c4_69, %c1_70, %c0_71] : memref<2x9x19x128xbf16, #tpu.memory_space<vmem>>, vector<1x1x16x128xbf16>
    %91 = vector.shape_cast %90 : vector<1x1x16x128xbf16> to vector<16x128xbf16>
    %92 = vector.shape_cast %89 : vector<16x128xbf16> to vector<1x1x16x128xbf16>
    tpu.vector_store %arg10[%c1_68, %c4_69, %c1_70, %c0_71], %92 {strides = array<i32>} : memref<2x9x19x128xbf16, #tpu.memory_space<vmem>>, vector<1x1x16x128xbf16>,
    %93 = vector.extract_strided_slice %87 {offsets = [1, 0, 0], sizes = [1, 16, 128], strides = [1, 1, 1]} : vector<8x16x128xbf16> to vector<1x16x128xbf16>
    %94 = vector.shape_cast %93 : vector<1x16x128xbf16> to vector<16x128xbf16>
    %c0_72 = arith.constant 0 : index
    %c5 = arith.constant 5 : index
    %c1_73 = arith.constant 1 : index
    %c0_74 = arith.constant 0 : index
    %95 = vector.load %arg10[%c0_72, %c5, %c1_73, %c0_74] : memref<2x9x19x128xbf16, #tpu.memory_space<vmem>>, vector<1x1x16x128xbf16>
    %96 = vector.shape_cast %95 : vector<1x1x16x128xbf16> to vector<16x128xbf16>
    %97 = vector.shape_cast %94 : vector<16x128xbf16> to vector<1x1x16x128xbf16>
    tpu.vector_store %arg10[%c0_72, %c5, %c1_73, %c0_74], %97 {strides = array<i32>} : memref<2x9x19x128xbf16, #tpu.memory_space<vmem>>, vector<1x1x16x128xbf16>,
    %98 = vector.extract_strided_slice %87 {offsets = [2, 0, 0], sizes = [1, 16, 128], strides = [1, 1, 1]} : vector<8x16x128xbf16> to vector<1x16x128xbf16>
    %99 = vector.shape_cast %98 : vector<1x16x128xbf16> to vector<16x128xbf16>
    %c1_75 = arith.constant 1 : index
    %c5_76 = arith.constant 5 : index
    %c1_77 = arith.constant 1 : index
    %c0_78 = arith.constant 0 : index
    %100 = vector.load %arg10[%c1_75, %c5_76, %c1_77, %c0_78] : memref<2x9x19x128xbf16, #tpu.memory_space<vmem>>, vector<1x1x16x128xbf16>
    %101 = vector.shape_cast %100 : vector<1x1x16x128xbf16> to vector<16x128xbf16>
    %102 = vector.shape_cast %99 : vector<16x128xbf16> to vector<1x1x16x128xbf16>
    tpu.vector_store %arg10[%c1_75, %c5_76, %c1_77, %c0_78], %102 {strides = array<i32>} : memref<2x9x19x128xbf16, #tpu.memory_space<vmem>>, vector<1x1x16x128xbf16>,
    %103 = vector.extract_strided_slice %87 {offsets = [3, 0, 0], sizes = [1, 16, 128], strides = [1, 1, 1]} : vector<8x16x128xbf16> to vector<1x16x128xbf16>
    %104 = vector.shape_cast %103 : vector<1x16x128xbf16> to vector<16x128xbf16>
    %c0_79 = arith.constant 0 : index
    %c6 = arith.constant 6 : index
    %c1_80 = arith.constant 1 : index
    %c0_81 = arith.constant 0 : index
    %105 = vector.load %arg10[%c0_79, %c6, %c1_80, %c0_81] : memref<2x9x19x128xbf16, #tpu.memory_space<vmem>>, vector<1x1x16x128xbf16>
    %106 = vector.shape_cast %105 : vector<1x1x16x128xbf16> to vector<16x128xbf16>
    %107 = vector.shape_cast %104 : vector<16x128xbf16> to vector<1x1x16x128xbf16>
    tpu.vector_store %arg10[%c0_79, %c6, %c1_80, %c0_81], %107 {strides = array<i32>} : memref<2x9x19x128xbf16, #tpu.memory_space<vmem>>, vector<1x1x16x128xbf16>,
    %108 = vector.extract_strided_slice %87 {offsets = [4, 0, 0], sizes = [1, 16, 128], strides = [1, 1, 1]} : vector<8x16x128xbf16> to vector<1x16x128xbf16>
    %109 = vector.shape_cast %108 : vector<1x16x128xbf16> to vector<16x128xbf16>
    %c1_82 = arith.constant 1 : index
    %c6_83 = arith.constant 6 : index
    %c1_84 = arith.constant 1 : index
    %c0_85 = arith.constant 0 : index
    %110 = vector.load %arg10[%c1_82, %c6_83, %c1_84, %c0_85] : memref<2x9x19x128xbf16, #tpu.memory_space<vmem>>, vector<1x1x16x128xbf16>
    %111 = vector.shape_cast %110 : vector<1x1x16x128xbf16> to vector<16x128xbf16>
    %112 = vector.shape_cast %109 : vector<16x128xbf16> to vector<1x1x16x128xbf16>
    tpu.vector_store %arg10[%c1_82, %c6_83, %c1_84, %c0_85], %112 {strides = array<i32>} : memref<2x9x19x128xbf16, #tpu.memory_space<vmem>>, vector<1x1x16x128xbf16>,
    %113 = vector.extract_strided_slice %87 {offsets = [5, 0, 0], sizes = [1, 16, 128], strides = [1, 1, 1]} : vector<8x16x128xbf16> to vector<1x16x128xbf16>
    %114 = vector.shape_cast %113 : vector<1x16x128xbf16> to vector<16x128xbf16>
    %c0_86 = arith.constant 0 : index
    %c7 = arith.constant 7 : index
    %c1_87 = arith.constant 1 : index
    %c0_88 = arith.constant 0 : index
    %115 = vector.load %arg10[%c0_86, %c7, %c1_87, %c0_88] : memref<2x9x19x128xbf16, #tpu.memory_space<vmem>>, vector<1x1x16x128xbf16>
    %116 = vector.shape_cast %115 : vector<1x1x16x128xbf16> to vector<16x128xbf16>
    %117 = vector.shape_cast %114 : vector<16x128xbf16> to vector<1x1x16x128xbf16>
    tpu.vector_store %arg10[%c0_86, %c7, %c1_87, %c0_88], %117 {strides = array<i32>} : memref<2x9x19x128xbf16, #tpu.memory_space<vmem>>, vector<1x1x16x128xbf16>,
    %118 = vector.extract_strided_slice %87 {offsets = [6, 0, 0], sizes = [1, 16, 128], strides = [1, 1, 1]} : vector<8x16x128xbf16> to vector<1x16x128xbf16>
    %119 = vector.shape_cast %118 : vector<1x16x128xbf16> to vector<16x128xbf16>
    %c1_89 = arith.constant 1 : index
    %c7_90 = arith.constant 7 : index
    %c1_91 = arith.constant 1 : index
    %c0_92 = arith.constant 0 : index
    %120 = vector.load %arg10[%c1_89, %c7_90, %c1_91, %c0_92] : memref<2x9x19x128xbf16, #tpu.memory_space<vmem>>, vector<1x1x16x128xbf16>
    %121 = vector.shape_cast %120 : vector<1x1x16x128xbf16> to vector<16x128xbf16>
    %122 = vector.shape_cast %119 : vector<16x128xbf16> to vector<1x1x16x128xbf16>
    tpu.vector_store %arg10[%c1_89, %c7_90, %c1_91, %c0_92], %122 {strides = array<i32>} : memref<2x9x19x128xbf16, #tpu.memory_space<vmem>>, vector<1x1x16x128xbf16>,
    %123 = vector.extract_strided_slice %87 {offsets = [7, 0, 0], sizes = [1, 16, 128], strides = [1, 1, 1]} : vector<8x16x128xbf16> to vector<1x16x128xbf16>
    %124 = vector.shape_cast %123 : vector<1x16x128xbf16> to vector<16x128xbf16>
    %c0_93 = arith.constant 0 : index
    %c8_94 = arith.constant 8 : index
    %c1_95 = arith.constant 1 : index
    %c0_96 = arith.constant 0 : index
    %125 = vector.load %arg10[%c0_93, %c8_94, %c1_95, %c0_96] : memref<2x9x19x128xbf16, #tpu.memory_space<vmem>>, vector<1x1x16x128xbf16>
    %126 = vector.shape_cast %125 : vector<1x1x16x128xbf16> to vector<16x128xbf16>
    %127 = vector.shape_cast %124 : vector<16x128xbf16> to vector<1x1x16x128xbf16>
    tpu.vector_store %arg10[%c0_93, %c8_94, %c1_95, %c0_96], %127 {strides = array<i32>} : memref<2x9x19x128xbf16, #tpu.memory_space<vmem>>, vector<1x1x16x128xbf16>,
    %c0_97 = arith.constant 0 : index
    %c0_98 = arith.constant 0 : index
    %c0_99 = arith.constant 0 : index
    %c0_100 = arith.constant 0 : index
    %128 = vector.load %arg10[%c0_97, %c0_98, %c0_99, %c0_100] : memref<2x9x19x128xbf16, #tpu.memory_space<vmem>>, vector<1x8x16x128xbf16>
    %129 = vector.shape_cast %128 : vector<1x8x16x128xbf16> to vector<8x16x128xbf16>
    %130 = vector.shape_cast %129 : vector<8x16x128xbf16> to vector<64x256xbf16>
    %c0_101 = arith.constant 0 : index
    %c0_102 = arith.constant 0 : index
    %c0_103 = arith.constant 0 : index
    %c0_104 = arith.constant 0 : index
    %131 = vector.load %arg4[%c0_101, %c0_102, %c0_103, %c0_104] : memref<3x2x256x128xbf16, #tpu.memory_space<vmem>>, vector<1x1x256x128xbf16>
    %132 = vector.shape_cast %131 : vector<1x1x256x128xbf16> to vector<256x128xbf16>
    %cst_105 = arith.constant dense<0.000000e+00> : vector<64x128xf32>
    %133 = tpu.matmul %130, %132, %cst_105 {dimension_numbers = #tpu.dot_dimension_numbers<[1], [0], [0], [1], [0, 0, 1, 1], [], []>} : vector<64x256xbf16>, vector<256x128xbf16>, vector<64x128xf32> -> vector<64x128xf32>
    %c0_106 = arith.constant 0 : index
    %c0_107 = arith.constant 0 : index
    %134 = vector.load %arg11[%c0_106, %c0_107] : memref<64x128xf32, #tpu.memory_space<vmem>>, vector<64x128xf32>
    tpu.vector_store %arg11[%c0_106, %c0_107], %133 {strides = array<i32>} : memref<64x128xf32, #tpu.memory_space<vmem>>, vector<64x128xf32>,
    %c0_108 = arith.constant 0 : index
    %c0_109 = arith.constant 0 : index
    %135 = vector.load %arg11[%c0_108, %c0_109] : memref<64x128xf32, #tpu.memory_space<vmem>>, vector<64x128xf32>
    %c0_110 = arith.constant 0 : index
    %c0_111 = arith.constant 0 : index
    %c2_112 = arith.constant 2 : index
    %c0_113 = arith.constant 0 : index
    %136 = vector.load %arg10[%c0_110, %c0_111, %c2_112, %c0_113] : memref<2x9x19x128xbf16, #tpu.memory_space<vmem>>, vector<1x8x16x128xbf16>
    %137 = vector.shape_cast %136 : vector<1x8x16x128xbf16> to vector<8x16x128xbf16>
    %138 = vector.shape_cast %137 : vector<8x16x128xbf16> to vector<64x256xbf16>
    %c0_114 = arith.constant 0 : index
    %c1_115 = arith.constant 1 : index
    %c0_116 = arith.constant 0 : index
    %c0_117 = arith.constant 0 : index
    %139 = vector.load %arg4[%c0_114, %c1_115, %c0_116, %c0_117] : memref<3x2x256x128xbf16, #tpu.memory_space<vmem>>, vector<1x1x256x128xbf16>
    %140 = vector.shape_cast %139 : vector<1x1x256x128xbf16> to vector<256x128xbf16>
    %cst_118 = arith.constant dense<0.000000e+00> : vector<64x128xf32>
    %141 = tpu.matmul %138, %140, %cst_118 {dimension_numbers = #tpu.dot_dimension_numbers<[1], [0], [0], [1], [0, 0, 1, 1], [], []>} : vector<64x256xbf16>, vector<256x128xbf16>, vector<64x128xf32> -> vector<64x128xf32>
    %c1_119 = arith.constant 1 : index
    %c0_120 = arith.constant 0 : index
    %c0_121 = arith.constant 0 : index
    %c0_122 = arith.constant 0 : index
    %142 = vector.load %arg10[%c1_119, %c0_120, %c0_121, %c0_122] : memref<2x9x19x128xbf16, #tpu.memory_space<vmem>>, vector<1x8x16x128xbf16>
    %143 = vector.shape_cast %142 : vector<1x8x16x128xbf16> to vector<8x16x128xbf16>
    %144 = vector.shape_cast %143 : vector<8x16x128xbf16> to vector<64x256xbf16>
    %c1_123 = arith.constant 1 : index
    %c0_124 = arith.constant 0 : index
    %c0_125 = arith.constant 0 : index
    %c0_126 = arith.constant 0 : index
    %145 = vector.load %arg4[%c1_123, %c0_124, %c0_125, %c0_126] : memref<3x2x256x128xbf16, #tpu.memory_space<vmem>>, vector<1x1x256x128xbf16>
    %146 = vector.shape_cast %145 : vector<1x1x256x128xbf16> to vector<256x128xbf16>
    %cst_127 = arith.constant dense<0.000000e+00> : vector<64x128xf32>
    %147 = tpu.matmul %144, %146, %cst_127 {dimension_numbers = #tpu.dot_dimension_numbers<[1], [0], [0], [1], [0, 0, 1, 1], [], []>} : vector<64x256xbf16>, vector<256x128xbf16>, vector<64x128xf32> -> vector<64x128xf32>
    %148 = arith.addf %141, %147 : vector<64x128xf32>
    %149 = arith.addf %135, %148 : vector<64x128xf32>
    %c0_128 = arith.constant 0 : index
    %c0_129 = arith.constant 0 : index
    %150 = vector.load %arg11[%c0_128, %c0_129] : memref<64x128xf32, #tpu.memory_space<vmem>>, vector<64x128xf32>
    tpu.vector_store %arg11[%c0_128, %c0_129], %149 {strides = array<i32>} : memref<64x128xf32, #tpu.memory_space<vmem>>, vector<64x128xf32>,
    %c0_130 = arith.constant 0 : index
    %c0_131 = arith.constant 0 : index
    %151 = vector.load %arg11[%c0_130, %c0_131] : memref<64x128xf32, #tpu.memory_space<vmem>>, vector<64x128xf32>
    %c1_132 = arith.constant 1 : index
    %c0_133 = arith.constant 0 : index
    %c2_134 = arith.constant 2 : index
    %c0_135 = arith.constant 0 : index
    %152 = vector.load %arg10[%c1_132, %c0_133, %c2_134, %c0_135] : memref<2x9x19x128xbf16, #tpu.memory_space<vmem>>, vector<1x8x16x128xbf16>
    %153 = vector.shape_cast %152 : vector<1x8x16x128xbf16> to vector<8x16x128xbf16>
    %154 = vector.shape_cast %153 : vector<8x16x128xbf16> to vector<64x256xbf16>
    %c1_136 = arith.constant 1 : index
    %c1_137 = arith.constant 1 : index
    %c0_138 = arith.constant 0 : index
    %c0_139 = arith.constant 0 : index
    %155 = vector.load %arg4[%c1_136, %c1_137, %c0_138, %c0_139] : memref<3x2x256x128xbf16, #tpu.memory_space<vmem>>, vector<1x1x256x128xbf16>
    %156 = vector.shape_cast %155 : vector<1x1x256x128xbf16> to vector<256x128xbf16>
    %cst_140 = arith.constant dense<0.000000e+00> : vector<64x128xf32>
    %157 = tpu.matmul %154, %156, %cst_140 {dimension_numbers = #tpu.dot_dimension_numbers<[1], [0], [0], [1], [0, 0, 1, 1], [], []>} : vector<64x256xbf16>, vector<256x128xbf16>, vector<64x128xf32> -> vector<64x128xf32>
    %c0_141 = arith.constant 0 : index
    %c1_142 = arith.constant 1 : index
    %c0_143 = arith.constant 0 : index
    %c0_144 = arith.constant 0 : index
    %158 = vector.load %arg10[%c0_141, %c1_142, %c0_143, %c0_144] : memref<2x9x19x128xbf16, #tpu.memory_space<vmem>>, vector<1x8x16x128xbf16>
    %159 = vector.shape_cast %158 : vector<1x8x16x128xbf16> to vector<8x16x128xbf16>
    %160 = vector.shape_cast %159 : vector<8x16x128xbf16> to vector<64x256xbf16>
    %c2_145 = arith.constant 2 : index
    %c0_146 = arith.constant 0 : index
    %c0_147 = arith.constant 0 : index
    %c0_148 = arith.constant 0 : index
    %161 = vector.load %arg4[%c2_145, %c0_146, %c0_147, %c0_148] : memref<3x2x256x128xbf16, #tpu.memory_space<vmem>>, vector<1x1x256x128xbf16>
    %162 = vector.shape_cast %161 : vector<1x1x256x128xbf16> to vector<256x128xbf16>
    %cst_149 = arith.constant dense<0.000000e+00> : vector<64x128xf32>
    %163 = tpu.matmul %160, %162, %cst_149 {dimension_numbers = #tpu.dot_dimension_numbers<[1], [0], [0], [1], [0, 0, 1, 1], [], []>} : vector<64x256xbf16>, vector<256x128xbf16>, vector<64x128xf32> -> vector<64x128xf32>
    %164 = arith.addf %157, %163 : vector<64x128xf32>
    %165 = arith.addf %151, %164 : vector<64x128xf32>
    %c0_150 = arith.constant 0 : index
    %c0_151 = arith.constant 0 : index
    %166 = vector.load %arg11[%c0_150, %c0_151] : memref<64x128xf32, #tpu.memory_space<vmem>>, vector<64x128xf32>
    tpu.vector_store %arg11[%c0_150, %c0_151], %165 {strides = array<i32>} : memref<64x128xf32, #tpu.memory_space<vmem>>, vector<64x128xf32>,
    %c0_152 = arith.constant 0 : index
    %c0_153 = arith.constant 0 : index
    %167 = vector.load %arg11[%c0_152, %c0_153] : memref<64x128xf32, #tpu.memory_space<vmem>>, vector<64x128xf32>
    %c0_154 = arith.constant 0 : index
    %c1_155 = arith.constant 1 : index
    %c2_156 = arith.constant 2 : index
    %c0_157 = arith.constant 0 : index
    %168 = vector.load %arg10[%c0_154, %c1_155, %c2_156, %c0_157] : memref<2x9x19x128xbf16, #tpu.memory_space<vmem>>, vector<1x8x16x128xbf16>
    %169 = vector.shape_cast %168 : vector<1x8x16x128xbf16> to vector<8x16x128xbf16>
    %170 = vector.shape_cast %169 : vector<8x16x128xbf16> to vector<64x256xbf16>
    %c2_158 = arith.constant 2 : index
    %c1_159 = arith.constant 1 : index
    %c0_160 = arith.constant 0 : index
    %c0_161 = arith.constant 0 : index
    %171 = vector.load %arg4[%c2_158, %c1_159, %c0_160, %c0_161] : memref<3x2x256x128xbf16, #tpu.memory_space<vmem>>, vector<1x1x256x128xbf16>
    %172 = vector.shape_cast %171 : vector<1x1x256x128xbf16> to vector<256x128xbf16>
    %cst_162 = arith.constant dense<0.000000e+00> : vector<64x128xf32>
    %173 = tpu.matmul %170, %172, %cst_162 {dimension_numbers = #tpu.dot_dimension_numbers<[1], [0], [0], [1], [0, 0, 1, 1], [], []>} : vector<64x256xbf16>, vector<256x128xbf16>, vector<64x128xf32> -> vector<64x128xf32>
    %174 = arith.addf %167, %173 : vector<64x128xf32>
    %c0_163 = arith.constant 0 : index
    %c0_164 = arith.constant 0 : index
    %175 = vector.load %arg11[%c0_163, %c0_164] : memref<64x128xf32, #tpu.memory_space<vmem>>, vector<64x128xf32>
    tpu.vector_store %arg11[%c0_163, %c0_164], %174 {strides = array<i32>} : memref<64x128xf32, #tpu.memory_space<vmem>>, vector<64x128xf32>,
    %c0_165 = arith.constant 0 : index
    %c0_166 = arith.constant 0 : index
    %176 = vector.load %arg11[%c0_165, %c0_166] : memref<64x128xf32, #tpu.memory_space<vmem>>, vector<64x128xf32>
    %cst_167 = arith.constant dense<0.000000e+00> : vector<128xf32>
    %177 = vector.multi_reduction <add>, %176, %cst_167 [0] : vector<64x128xf32> to vector<128xf32>
    %178 = vector.shape_cast %177 : vector<128xf32> to vector<1x128xf32>
    %c0_168 = arith.constant 0 : index
    %c0_169 = arith.constant 0 : index
    %c0_170 = arith.constant 0 : index
    %179 = vector.load %arg8[%c0_168, %c0_169, %c0_170] : memref<1x1x128xf32, #tpu.memory_space<vmem>>, vector<1x1x128xf32>
    %180 = vector.shape_cast %179 : vector<1x1x128xf32> to vector<1x128xf32>
    %181 = vector.shape_cast %178 : vector<1x128xf32> to vector<1x1x128xf32>
    tpu.vector_store %arg8[%c0_168, %c0_169, %c0_170], %181 {strides = array<i32>} : memref<1x1x128xf32, #tpu.memory_space<vmem>>, vector<1x1x128xf32>,
    %182 = arith.mulf %176, %176 : vector<64x128xf32>
    %cst_171 = arith.constant dense<0.000000e+00> : vector<128xf32>
    %183 = vector.multi_reduction <add>, %182, %cst_171 [0] : vector<64x128xf32> to vector<128xf32>
    %184 = vector.shape_cast %183 : vector<128xf32> to vector<1x128xf32>
    %c0_172 = arith.constant 0 : index
    %c0_173 = arith.constant 0 : index
    %c0_174 = arith.constant 0 : index
    %185 = vector.load %arg9[%c0_172, %c0_173, %c0_174] : memref<1x1x128xf32, #tpu.memory_space<vmem>>, vector<1x1x128xf32>
    %186 = vector.shape_cast %185 : vector<1x1x128xf32> to vector<1x128xf32>
    %187 = vector.shape_cast %184 : vector<1x128xf32> to vector<1x1x128xf32>
    tpu.vector_store %arg9[%c0_172, %c0_173, %c0_174], %187 {strides = array<i32>} : memref<1x1x128xf32, #tpu.memory_space<vmem>>, vector<1x1x128xf32>,
    %188 = arith.truncf %176 : vector<64x128xf32> to vector<64x128xbf16>
    %c0_175 = arith.constant 0 : index
    %c0_176 = arith.constant 0 : index
    %c0_177 = arith.constant 0 : index
    %189 = vector.load %arg6[%c0_175, %c0_176, %c0_177] : memref<1x64x128xbf16, #tpu.memory_space<vmem>>, vector<1x64x128xbf16>
    %190 = vector.shape_cast %189 : vector<1x64x128xbf16> to vector<64x128xbf16>
    %191 = vector.shape_cast %188 : vector<64x128xbf16> to vector<1x64x128xbf16>
    tpu.vector_store %arg6[%c0_175, %c0_176, %c0_177], %191 {strides = array<i32>} : memref<1x64x128xbf16, #tpu.memory_space<vmem>>, vector<1x64x128xbf16>,
    %c1_178 = arith.constant 1 : index
    %c0_179 = arith.constant 0 : index
    %c0_180 = arith.constant 0 : index
    %c0_181 = arith.constant 0 : index
    %192 = vector.load %arg10[%c1_178, %c0_179, %c0_180, %c0_181] : memref<2x9x19x128xbf16, #tpu.memory_space<vmem>>, vector<1x8x16x128xbf16>
    %193 = vector.shape_cast %192 : vector<1x8x16x128xbf16> to vector<8x16x128xbf16>
    %194 = vector.shape_cast %193 : vector<8x16x128xbf16> to vector<64x256xbf16>
    %c0_182 = arith.constant 0 : index
    %c0_183 = arith.constant 0 : index
    %195 = vector.load %arg5[%c0_182, %c0_183] : memref<256x128xbf16, #tpu.memory_space<vmem>>, vector<256x128xbf16>
    %cst_184 = arith.constant dense<0.000000e+00> : vector<64x128xf32>
    %196 = tpu.matmul %194, %195, %cst_184 {dimension_numbers = #tpu.dot_dimension_numbers<[1], [0], [0], [1], [0, 0, 1, 1], [], []>} : vector<64x256xbf16>, vector<256x128xbf16>, vector<64x128xf32> -> vector<64x128xf32>
    %197 = arith.truncf %196 : vector<64x128xf32> to vector<64x128xbf16>
    %c0_185 = arith.constant 0 : index
    %c0_186 = arith.constant 0 : index
    %c0_187 = arith.constant 0 : index
    %198 = vector.load %arg7[%c0_185, %c0_186, %c0_187] : memref<1x64x128xbf16, #tpu.memory_space<vmem>>, vector<1x64x128xbf16>
    %199 = vector.shape_cast %198 : vector<1x64x128xbf16> to vector<64x128xbf16>
    %200 = vector.shape_cast %197 : vector<64x128xbf16> to vector<1x64x128xbf16>
    tpu.vector_store %arg7[%c0_185, %c0_186, %c0_187], %200 {strides = array<i32>} : memref<1x64x128xbf16, #tpu.memory_space<vmem>>, vector<1x64x128xbf16>,
    return
  }
  func.func @transform_0(%arg0: i32) -> (i32, i32, i32, i32) {
    %c0_i32 = arith.constant 0 : i32
    %c0_i32_0 = arith.constant 0 : i32
    %c0_i32_1 = arith.constant 0 : i32
    %c0_i32_2 = arith.constant 0 : i32
    return %arg0, %c0_i32, %c0_i32_0, %c0_i32_1 : i32, i32, i32, i32
  }
  func.func @transform_1(%arg0: i32) -> (i32, i32) {
    %c0_i32 = arith.constant 0 : i32
    %c0_i32_0 = arith.constant 0 : i32
    %c0_i32_1 = arith.constant 0 : i32
    return %c0_i32, %c0_i32_0 : i32, i32
  }
  func.func @transform_2(%arg0: i32) -> (i32, i32) {
    %c0_i32 = arith.constant 0 : i32
    %c0_i32_0 = arith.constant 0 : i32
    %c0_i32_1 = arith.constant 0 : i32
    return %c0_i32, %c0_i32_0 : i32, i32
  }
  func.func @transform_3(%arg0: i32) -> (i32, i32, i32, i32) {
    %c0_i32 = arith.constant 0 : i32
    %c0_i32_0 = arith.constant 0 : i32
    %c0_i32_1 = arith.constant 0 : i32
    %c0_i32_2 = arith.constant 0 : i32
    %c0_i32_3 = arith.constant 0 : i32
    return %c0_i32, %c0_i32_0, %c0_i32_1, %c0_i32_2 : i32, i32, i32, i32
  }
  func.func @transform_4(%arg0: i32) -> (i32, i32) {
    %c0_i32 = arith.constant 0 : i32
    %c0_i32_0 = arith.constant 0 : i32
    %c0_i32_1 = arith.constant 0 : i32
    return %c0_i32, %c0_i32_0 : i32, i32
  }
  func.func @transform_5(%arg0: i32) -> (i32, i32, i32) {
    %c0_i32 = arith.constant 0 : i32
    %c0_i32_0 = arith.constant 0 : i32
    %c0_i32_1 = arith.constant 0 : i32
    return %arg0, %c0_i32, %c0_i32_0 : i32, i32, i32
  }
  func.func @transform_6(%arg0: i32) -> (i32, i32, i32) {
    %c0_i32 = arith.constant 0 : i32
    %c0_i32_0 = arith.constant 0 : i32
    %c0_i32_1 = arith.constant 0 : i32
    return %arg0, %c0_i32, %c0_i32_0 : i32, i32, i32
  }
  func.func @transform_7(%arg0: i32) -> (i32, i32, i32) {
    %c0_i32 = arith.constant 0 : i32
    %c0_i32_0 = arith.constant 0 : i32
    %c0_i32_1 = arith.constant 0 : i32
    return %arg0, %c0_i32, %c0_i32_0 : i32, i32, i32
  }
  func.func @transform_8(%arg0: i32) -> (i32, i32, i32) {
    %c0_i32 = arith.constant 0 : i32
    %c0_i32_0 = arith.constant 0 : i32
    %c0_i32_1 = arith.constant 0 : i32
    return %arg0, %c0_i32, %c0_i32_0 : i32, i32, i32
  }
}

module attributes {stable_mosaic.version = 11 : i64} {
  func.func @kernel(%arg0: i32, %arg1: memref<1x8x8x128xbf16, #tpu.memory_space<vmem>>, %arg2: memref<1x128xf32, #tpu.memory_space<vmem>>, %arg3: memref<1x128xf32, #tpu.memory_space<vmem>>, %arg4: memref<3x3x128x128xbf16, #tpu.memory_space<vmem>>, %arg5: memref<1x64x128xbf16, #tpu.memory_space<vmem>>, %arg6: memref<1x64x128xf32, #tpu.memory_space<vmem>>, %arg7: memref<1x10x11x128xbf16, #tpu.memory_space<vmem>>, %arg8: memref<64x128xf32, #tpu.memory_space<vmem>>) attributes {dimension_semantics = [#tpu.dimension_semantics<parallel>], iteration_bounds = array<i64: 2>, scalar_prefetch = 0 : i64, scratch_operands = 2 : i64, tpu.core_type = #tpu.core_type<tc>, window_params = [{transform_indices = @transform_0, window_bounds = array<i64: 1, 8, 8, 128>}, {pipeline_mode = #tpu.pipeline_mode<synchronous>, transform_indices = @transform_1, window_bounds = array<i64: 1, 128>}, {pipeline_mode = #tpu.pipeline_mode<synchronous>, transform_indices = @transform_2, window_bounds = array<i64: 1, 128>}, {pipeline_mode = #tpu.pipeline_mode<synchronous>, transform_indices = @transform_3, window_bounds = array<i64: 3, 3, 128, 128>}, {transform_indices = @transform_4, window_bounds = array<i64: 1, 64, 128>}, {transform_indices = @transform_5, window_bounds = array<i64: 1, 64, 128>}]} {
    %cst = arith.constant 0.000000e+00 : bf16
    %0 = vector.broadcast %cst : bf16 to vector<1x11x128xbf16>
    %c0 = arith.constant 0 : index
    %c0_0 = arith.constant 0 : index
    %c0_1 = arith.constant 0 : index
    %c0_2 = arith.constant 0 : index
    %1 = vector.load %arg7[%c0, %c0_0, %c0_1, %c0_2] : memref<1x10x11x128xbf16, #tpu.memory_space<vmem>>, vector<1x1x11x128xbf16>
    %2 = vector.shape_cast %1 : vector<1x1x11x128xbf16> to vector<1x11x128xbf16>
    %3 = vector.shape_cast %0 : vector<1x11x128xbf16> to vector<1x1x11x128xbf16>
    tpu.vector_store %arg7[%c0, %c0_0, %c0_1, %c0_2], %3 {strides = array<i32>} : memref<1x10x11x128xbf16, #tpu.memory_space<vmem>>, vector<1x1x11x128xbf16>,
    %cst_3 = arith.constant 0.000000e+00 : bf16
    %4 = vector.broadcast %cst_3 : bf16 to vector<1x11x128xbf16>
    %c0_4 = arith.constant 0 : index
    %c9 = arith.constant 9 : index
    %c0_5 = arith.constant 0 : index
    %c0_6 = arith.constant 0 : index
    %5 = vector.load %arg7[%c0_4, %c9, %c0_5, %c0_6] : memref<1x10x11x128xbf16, #tpu.memory_space<vmem>>, vector<1x1x11x128xbf16>
    %6 = vector.shape_cast %5 : vector<1x1x11x128xbf16> to vector<1x11x128xbf16>
    %7 = vector.shape_cast %4 : vector<1x11x128xbf16> to vector<1x1x11x128xbf16>
    tpu.vector_store %arg7[%c0_4, %c9, %c0_5, %c0_6], %7 {strides = array<i32>} : memref<1x10x11x128xbf16, #tpu.memory_space<vmem>>, vector<1x1x11x128xbf16>,
    %cst_7 = arith.constant 0.000000e+00 : bf16
    %8 = vector.broadcast %cst_7 : bf16 to vector<8x1x128xbf16>
    %c0_8 = arith.constant 0 : index
    %c1 = arith.constant 1 : index
    %c0_9 = arith.constant 0 : index
    %c0_10 = arith.constant 0 : index
    %9 = vector.load %arg7[%c0_8, %c1, %c0_9, %c0_10] : memref<1x10x11x128xbf16, #tpu.memory_space<vmem>>, vector<1x8x1x128xbf16>
    %10 = vector.shape_cast %9 : vector<1x8x1x128xbf16> to vector<8x1x128xbf16>
    %11 = vector.shape_cast %8 : vector<8x1x128xbf16> to vector<1x8x1x128xbf16>
    tpu.vector_store %arg7[%c0_8, %c1, %c0_9, %c0_10], %11 {strides = array<i32>} : memref<1x10x11x128xbf16, #tpu.memory_space<vmem>>, vector<1x8x1x128xbf16>,
    %cst_11 = arith.constant 0.000000e+00 : bf16
    %12 = vector.broadcast %cst_11 : bf16 to vector<8x2x128xbf16>
    %c0_12 = arith.constant 0 : index
    %c1_13 = arith.constant 1 : index
    %c9_14 = arith.constant 9 : index
    %c0_15 = arith.constant 0 : index
    %13 = vector.load %arg7[%c0_12, %c1_13, %c9_14, %c0_15] : memref<1x10x11x128xbf16, #tpu.memory_space<vmem>>, vector<1x8x2x128xbf16>
    %14 = vector.shape_cast %13 : vector<1x8x2x128xbf16> to vector<8x2x128xbf16>
    %15 = vector.shape_cast %12 : vector<8x2x128xbf16> to vector<1x8x2x128xbf16>
    tpu.vector_store %arg7[%c0_12, %c1_13, %c9_14, %c0_15], %15 {strides = array<i32>} : memref<1x10x11x128xbf16, #tpu.memory_space<vmem>>, vector<1x8x2x128xbf16>,
    %c0_16 = arith.constant 0 : index
    %c0_17 = arith.constant 0 : index
    %16 = vector.load %arg2[%c0_16, %c0_17] : memref<1x128xf32, #tpu.memory_space<vmem>>, vector<1x128xf32>
    %c0_18 = arith.constant 0 : index
    %c0_19 = arith.constant 0 : index
    %17 = vector.load %arg3[%c0_18, %c0_19] : memref<1x128xf32, #tpu.memory_space<vmem>>, vector<1x128xf32>
    %c0_20 = arith.constant 0 : index
    %c0_21 = arith.constant 0 : index
    %c0_22 = arith.constant 0 : index
    %c0_23 = arith.constant 0 : index
    %18 = vector.load %arg1[%c0_20, %c0_21, %c0_22, %c0_23] : memref<1x8x8x128xbf16, #tpu.memory_space<vmem>>, vector<1x8x8x128xbf16>
    %19 = vector.shape_cast %18 : vector<1x8x8x128xbf16> to vector<8x8x128xbf16>
    %20 = arith.extf %19 : vector<8x8x128xbf16> to vector<8x8x128xf32>
    %21 = vector.shape_cast %16 : vector<1x128xf32> to vector<1x1x128xf32>
    %22 = vector.broadcast %21 : vector<1x1x128xf32> to vector<8x8x128xf32>
    %23 = arith.mulf %20, %22 : vector<8x8x128xf32>
    %24 = vector.shape_cast %17 : vector<1x128xf32> to vector<1x1x128xf32>
    %25 = vector.broadcast %24 : vector<1x1x128xf32> to vector<8x8x128xf32>
    %26 = arith.addf %23, %25 : vector<8x8x128xf32>
    %cst_24 = arith.constant 0.000000e+00 : f32
    %27 = vector.broadcast %cst_24 : f32 to vector<8x8x128xf32>
    %28 = arith.maximumf %26, %27 : vector<8x8x128xf32>
    %29 = arith.truncf %28 : vector<8x8x128xf32> to vector<8x8x128xbf16>
    %c0_25 = arith.constant 0 : index
    %c1_26 = arith.constant 1 : index
    %c1_27 = arith.constant 1 : index
    %c0_28 = arith.constant 0 : index
    %30 = vector.load %arg7[%c0_25, %c1_26, %c1_27, %c0_28] : memref<1x10x11x128xbf16, #tpu.memory_space<vmem>>, vector<1x8x8x128xbf16>
    %31 = vector.shape_cast %30 : vector<1x8x8x128xbf16> to vector<8x8x128xbf16>
    %32 = vector.shape_cast %29 : vector<8x8x128xbf16> to vector<1x8x8x128xbf16>
    tpu.vector_store %arg7[%c0_25, %c1_26, %c1_27, %c0_28], %32 {strides = array<i32>} : memref<1x10x11x128xbf16, #tpu.memory_space<vmem>>, vector<1x8x8x128xbf16>,
    %c0_29 = arith.constant 0 : index
    %c0_30 = arith.constant 0 : index
    %c0_31 = arith.constant 0 : index
    %c0_32 = arith.constant 0 : index
    %33 = vector.load %arg7[%c0_29, %c0_30, %c0_31, %c0_32] : memref<1x10x11x128xbf16, #tpu.memory_space<vmem>>, vector<1x8x8x128xbf16>
    %34 = vector.shape_cast %33 : vector<1x8x8x128xbf16> to vector<8x8x128xbf16>
    %35 = vector.shape_cast %34 : vector<8x8x128xbf16> to vector<64x128xbf16>
    %c0_33 = arith.constant 0 : index
    %c0_34 = arith.constant 0 : index
    %c0_35 = arith.constant 0 : index
    %c0_36 = arith.constant 0 : index
    %36 = vector.load %arg4[%c0_33, %c0_34, %c0_35, %c0_36] : memref<3x3x128x128xbf16, #tpu.memory_space<vmem>>, vector<1x1x128x128xbf16>
    %37 = vector.shape_cast %36 : vector<1x1x128x128xbf16> to vector<128x128xbf16>
    %cst_37 = arith.constant dense<0.000000e+00> : vector<64x128xf32>
    %38 = tpu.matmul %35, %37, %cst_37 {dimension_numbers = #tpu.dot_dimension_numbers<[1], [0], [0], [1], [0, 0, 1, 1], [], []>} : vector<64x128xbf16>, vector<128x128xbf16>, vector<64x128xf32> -> vector<64x128xf32>
    %c0_38 = arith.constant 0 : index
    %c0_39 = arith.constant 0 : index
    %39 = vector.load %arg8[%c0_38, %c0_39] : memref<64x128xf32, #tpu.memory_space<vmem>>, vector<64x128xf32>
    tpu.vector_store %arg8[%c0_38, %c0_39], %38 {strides = array<i32>} : memref<64x128xf32, #tpu.memory_space<vmem>>, vector<64x128xf32>,
    %c0_40 = arith.constant 0 : index
    %c0_41 = arith.constant 0 : index
    %40 = vector.load %arg8[%c0_40, %c0_41] : memref<64x128xf32, #tpu.memory_space<vmem>>, vector<64x128xf32>
    %c0_42 = arith.constant 0 : index
    %c0_43 = arith.constant 0 : index
    %c1_44 = arith.constant 1 : index
    %c0_45 = arith.constant 0 : index
    %41 = vector.load %arg7[%c0_42, %c0_43, %c1_44, %c0_45] : memref<1x10x11x128xbf16, #tpu.memory_space<vmem>>, vector<1x8x8x128xbf16>
    %42 = vector.shape_cast %41 : vector<1x8x8x128xbf16> to vector<8x8x128xbf16>
    %43 = vector.shape_cast %42 : vector<8x8x128xbf16> to vector<64x128xbf16>
    %c0_46 = arith.constant 0 : index
    %c1_47 = arith.constant 1 : index
    %c0_48 = arith.constant 0 : index
    %c0_49 = arith.constant 0 : index
    %44 = vector.load %arg4[%c0_46, %c1_47, %c0_48, %c0_49] : memref<3x3x128x128xbf16, #tpu.memory_space<vmem>>, vector<1x1x128x128xbf16>
    %45 = vector.shape_cast %44 : vector<1x1x128x128xbf16> to vector<128x128xbf16>
    %cst_50 = arith.constant dense<0.000000e+00> : vector<64x128xf32>
    %46 = tpu.matmul %43, %45, %cst_50 {dimension_numbers = #tpu.dot_dimension_numbers<[1], [0], [0], [1], [0, 0, 1, 1], [], []>} : vector<64x128xbf16>, vector<128x128xbf16>, vector<64x128xf32> -> vector<64x128xf32>
    %c0_51 = arith.constant 0 : index
    %c0_52 = arith.constant 0 : index
    %c2 = arith.constant 2 : index
    %c0_53 = arith.constant 0 : index
    %47 = vector.load %arg7[%c0_51, %c0_52, %c2, %c0_53] : memref<1x10x11x128xbf16, #tpu.memory_space<vmem>>, vector<1x8x8x128xbf16>
    %48 = vector.shape_cast %47 : vector<1x8x8x128xbf16> to vector<8x8x128xbf16>
    %49 = vector.shape_cast %48 : vector<8x8x128xbf16> to vector<64x128xbf16>
    %c0_54 = arith.constant 0 : index
    %c2_55 = arith.constant 2 : index
    %c0_56 = arith.constant 0 : index
    %c0_57 = arith.constant 0 : index
    %50 = vector.load %arg4[%c0_54, %c2_55, %c0_56, %c0_57] : memref<3x3x128x128xbf16, #tpu.memory_space<vmem>>, vector<1x1x128x128xbf16>
    %51 = vector.shape_cast %50 : vector<1x1x128x128xbf16> to vector<128x128xbf16>
    %cst_58 = arith.constant dense<0.000000e+00> : vector<64x128xf32>
    %52 = tpu.matmul %49, %51, %cst_58 {dimension_numbers = #tpu.dot_dimension_numbers<[1], [0], [0], [1], [0, 0, 1, 1], [], []>} : vector<64x128xbf16>, vector<128x128xbf16>, vector<64x128xf32> -> vector<64x128xf32>
    %53 = arith.addf %46, %52 : vector<64x128xf32>
    %54 = arith.addf %40, %53 : vector<64x128xf32>
    %c0_59 = arith.constant 0 : index
    %c0_60 = arith.constant 0 : index
    %55 = vector.load %arg8[%c0_59, %c0_60] : memref<64x128xf32, #tpu.memory_space<vmem>>, vector<64x128xf32>
    tpu.vector_store %arg8[%c0_59, %c0_60], %54 {strides = array<i32>} : memref<64x128xf32, #tpu.memory_space<vmem>>, vector<64x128xf32>,
    %c0_61 = arith.constant 0 : index
    %c0_62 = arith.constant 0 : index
    %56 = vector.load %arg8[%c0_61, %c0_62] : memref<64x128xf32, #tpu.memory_space<vmem>>, vector<64x128xf32>
    %c0_63 = arith.constant 0 : index
    %c1_64 = arith.constant 1 : index
    %c0_65 = arith.constant 0 : index
    %c0_66 = arith.constant 0 : index
    %57 = vector.load %arg7[%c0_63, %c1_64, %c0_65, %c0_66] : memref<1x10x11x128xbf16, #tpu.memory_space<vmem>>, vector<1x8x8x128xbf16>
    %58 = vector.shape_cast %57 : vector<1x8x8x128xbf16> to vector<8x8x128xbf16>
    %59 = vector.shape_cast %58 : vector<8x8x128xbf16> to vector<64x128xbf16>
    %c1_67 = arith.constant 1 : index
    %c0_68 = arith.constant 0 : index
    %c0_69 = arith.constant 0 : index
    %c0_70 = arith.constant 0 : index
    %60 = vector.load %arg4[%c1_67, %c0_68, %c0_69, %c0_70] : memref<3x3x128x128xbf16, #tpu.memory_space<vmem>>, vector<1x1x128x128xbf16>
    %61 = vector.shape_cast %60 : vector<1x1x128x128xbf16> to vector<128x128xbf16>
    %cst_71 = arith.constant dense<0.000000e+00> : vector<64x128xf32>
    %62 = tpu.matmul %59, %61, %cst_71 {dimension_numbers = #tpu.dot_dimension_numbers<[1], [0], [0], [1], [0, 0, 1, 1], [], []>} : vector<64x128xbf16>, vector<128x128xbf16>, vector<64x128xf32> -> vector<64x128xf32>
    %c0_72 = arith.constant 0 : index
    %c1_73 = arith.constant 1 : index
    %c1_74 = arith.constant 1 : index
    %c0_75 = arith.constant 0 : index
    %63 = vector.load %arg7[%c0_72, %c1_73, %c1_74, %c0_75] : memref<1x10x11x128xbf16, #tpu.memory_space<vmem>>, vector<1x8x8x128xbf16>
    %64 = vector.shape_cast %63 : vector<1x8x8x128xbf16> to vector<8x8x128xbf16>
    %65 = vector.shape_cast %64 : vector<8x8x128xbf16> to vector<64x128xbf16>
    %c1_76 = arith.constant 1 : index
    %c1_77 = arith.constant 1 : index
    %c0_78 = arith.constant 0 : index
    %c0_79 = arith.constant 0 : index
    %66 = vector.load %arg4[%c1_76, %c1_77, %c0_78, %c0_79] : memref<3x3x128x128xbf16, #tpu.memory_space<vmem>>, vector<1x1x128x128xbf16>
    %67 = vector.shape_cast %66 : vector<1x1x128x128xbf16> to vector<128x128xbf16>
    %cst_80 = arith.constant dense<0.000000e+00> : vector<64x128xf32>
    %68 = tpu.matmul %65, %67, %cst_80 {dimension_numbers = #tpu.dot_dimension_numbers<[1], [0], [0], [1], [0, 0, 1, 1], [], []>} : vector<64x128xbf16>, vector<128x128xbf16>, vector<64x128xf32> -> vector<64x128xf32>
    %69 = arith.addf %62, %68 : vector<64x128xf32>
    %70 = arith.addf %56, %69 : vector<64x128xf32>
    %c0_81 = arith.constant 0 : index
    %c0_82 = arith.constant 0 : index
    %71 = vector.load %arg8[%c0_81, %c0_82] : memref<64x128xf32, #tpu.memory_space<vmem>>, vector<64x128xf32>
    tpu.vector_store %arg8[%c0_81, %c0_82], %70 {strides = array<i32>} : memref<64x128xf32, #tpu.memory_space<vmem>>, vector<64x128xf32>,
    %c0_83 = arith.constant 0 : index
    %c0_84 = arith.constant 0 : index
    %72 = vector.load %arg8[%c0_83, %c0_84] : memref<64x128xf32, #tpu.memory_space<vmem>>, vector<64x128xf32>
    %c0_85 = arith.constant 0 : index
    %c1_86 = arith.constant 1 : index
    %c2_87 = arith.constant 2 : index
    %c0_88 = arith.constant 0 : index
    %73 = vector.load %arg7[%c0_85, %c1_86, %c2_87, %c0_88] : memref<1x10x11x128xbf16, #tpu.memory_space<vmem>>, vector<1x8x8x128xbf16>
    %74 = vector.shape_cast %73 : vector<1x8x8x128xbf16> to vector<8x8x128xbf16>
    %75 = vector.shape_cast %74 : vector<8x8x128xbf16> to vector<64x128xbf16>
    %c1_89 = arith.constant 1 : index
    %c2_90 = arith.constant 2 : index
    %c0_91 = arith.constant 0 : index
    %c0_92 = arith.constant 0 : index
    %76 = vector.load %arg4[%c1_89, %c2_90, %c0_91, %c0_92] : memref<3x3x128x128xbf16, #tpu.memory_space<vmem>>, vector<1x1x128x128xbf16>
    %77 = vector.shape_cast %76 : vector<1x1x128x128xbf16> to vector<128x128xbf16>
    %cst_93 = arith.constant dense<0.000000e+00> : vector<64x128xf32>
    %78 = tpu.matmul %75, %77, %cst_93 {dimension_numbers = #tpu.dot_dimension_numbers<[1], [0], [0], [1], [0, 0, 1, 1], [], []>} : vector<64x128xbf16>, vector<128x128xbf16>, vector<64x128xf32> -> vector<64x128xf32>
    %c0_94 = arith.constant 0 : index
    %c2_95 = arith.constant 2 : index
    %c0_96 = arith.constant 0 : index
    %c0_97 = arith.constant 0 : index
    %79 = vector.load %arg7[%c0_94, %c2_95, %c0_96, %c0_97] : memref<1x10x11x128xbf16, #tpu.memory_space<vmem>>, vector<1x8x8x128xbf16>
    %80 = vector.shape_cast %79 : vector<1x8x8x128xbf16> to vector<8x8x128xbf16>
    %81 = vector.shape_cast %80 : vector<8x8x128xbf16> to vector<64x128xbf16>
    %c2_98 = arith.constant 2 : index
    %c0_99 = arith.constant 0 : index
    %c0_100 = arith.constant 0 : index
    %c0_101 = arith.constant 0 : index
    %82 = vector.load %arg4[%c2_98, %c0_99, %c0_100, %c0_101] : memref<3x3x128x128xbf16, #tpu.memory_space<vmem>>, vector<1x1x128x128xbf16>
    %83 = vector.shape_cast %82 : vector<1x1x128x128xbf16> to vector<128x128xbf16>
    %cst_102 = arith.constant dense<0.000000e+00> : vector<64x128xf32>
    %84 = tpu.matmul %81, %83, %cst_102 {dimension_numbers = #tpu.dot_dimension_numbers<[1], [0], [0], [1], [0, 0, 1, 1], [], []>} : vector<64x128xbf16>, vector<128x128xbf16>, vector<64x128xf32> -> vector<64x128xf32>
    %85 = arith.addf %78, %84 : vector<64x128xf32>
    %86 = arith.addf %72, %85 : vector<64x128xf32>
    %c0_103 = arith.constant 0 : index
    %c0_104 = arith.constant 0 : index
    %87 = vector.load %arg8[%c0_103, %c0_104] : memref<64x128xf32, #tpu.memory_space<vmem>>, vector<64x128xf32>
    tpu.vector_store %arg8[%c0_103, %c0_104], %86 {strides = array<i32>} : memref<64x128xf32, #tpu.memory_space<vmem>>, vector<64x128xf32>,
    %c0_105 = arith.constant 0 : index
    %c0_106 = arith.constant 0 : index
    %88 = vector.load %arg8[%c0_105, %c0_106] : memref<64x128xf32, #tpu.memory_space<vmem>>, vector<64x128xf32>
    %c0_107 = arith.constant 0 : index
    %c2_108 = arith.constant 2 : index
    %c1_109 = arith.constant 1 : index
    %c0_110 = arith.constant 0 : index
    %89 = vector.load %arg7[%c0_107, %c2_108, %c1_109, %c0_110] : memref<1x10x11x128xbf16, #tpu.memory_space<vmem>>, vector<1x8x8x128xbf16>
    %90 = vector.shape_cast %89 : vector<1x8x8x128xbf16> to vector<8x8x128xbf16>
    %91 = vector.shape_cast %90 : vector<8x8x128xbf16> to vector<64x128xbf16>
    %c2_111 = arith.constant 2 : index
    %c1_112 = arith.constant 1 : index
    %c0_113 = arith.constant 0 : index
    %c0_114 = arith.constant 0 : index
    %92 = vector.load %arg4[%c2_111, %c1_112, %c0_113, %c0_114] : memref<3x3x128x128xbf16, #tpu.memory_space<vmem>>, vector<1x1x128x128xbf16>
    %93 = vector.shape_cast %92 : vector<1x1x128x128xbf16> to vector<128x128xbf16>
    %cst_115 = arith.constant dense<0.000000e+00> : vector<64x128xf32>
    %94 = tpu.matmul %91, %93, %cst_115 {dimension_numbers = #tpu.dot_dimension_numbers<[1], [0], [0], [1], [0, 0, 1, 1], [], []>} : vector<64x128xbf16>, vector<128x128xbf16>, vector<64x128xf32> -> vector<64x128xf32>
    %c0_116 = arith.constant 0 : index
    %c2_117 = arith.constant 2 : index
    %c2_118 = arith.constant 2 : index
    %c0_119 = arith.constant 0 : index
    %95 = vector.load %arg7[%c0_116, %c2_117, %c2_118, %c0_119] : memref<1x10x11x128xbf16, #tpu.memory_space<vmem>>, vector<1x8x8x128xbf16>
    %96 = vector.shape_cast %95 : vector<1x8x8x128xbf16> to vector<8x8x128xbf16>
    %97 = vector.shape_cast %96 : vector<8x8x128xbf16> to vector<64x128xbf16>
    %c2_120 = arith.constant 2 : index
    %c2_121 = arith.constant 2 : index
    %c0_122 = arith.constant 0 : index
    %c0_123 = arith.constant 0 : index
    %98 = vector.load %arg4[%c2_120, %c2_121, %c0_122, %c0_123] : memref<3x3x128x128xbf16, #tpu.memory_space<vmem>>, vector<1x1x128x128xbf16>
    %99 = vector.shape_cast %98 : vector<1x1x128x128xbf16> to vector<128x128xbf16>
    %cst_124 = arith.constant dense<0.000000e+00> : vector<64x128xf32>
    %100 = tpu.matmul %97, %99, %cst_124 {dimension_numbers = #tpu.dot_dimension_numbers<[1], [0], [0], [1], [0, 0, 1, 1], [], []>} : vector<64x128xbf16>, vector<128x128xbf16>, vector<64x128xf32> -> vector<64x128xf32>
    %101 = arith.addf %94, %100 : vector<64x128xf32>
    %102 = arith.addf %88, %101 : vector<64x128xf32>
    %c0_125 = arith.constant 0 : index
    %c0_126 = arith.constant 0 : index
    %103 = vector.load %arg8[%c0_125, %c0_126] : memref<64x128xf32, #tpu.memory_space<vmem>>, vector<64x128xf32>
    tpu.vector_store %arg8[%c0_125, %c0_126], %102 {strides = array<i32>} : memref<64x128xf32, #tpu.memory_space<vmem>>, vector<64x128xf32>,
    %c0_127 = arith.constant 0 : index
    %c0_128 = arith.constant 0 : index
    %104 = vector.load %arg8[%c0_127, %c0_128] : memref<64x128xf32, #tpu.memory_space<vmem>>, vector<64x128xf32>
    %c0_129 = arith.constant 0 : index
    %c0_130 = arith.constant 0 : index
    %c0_131 = arith.constant 0 : index
    %105 = vector.load %arg5[%c0_129, %c0_130, %c0_131] : memref<1x64x128xbf16, #tpu.memory_space<vmem>>, vector<1x64x128xbf16>
    %106 = vector.shape_cast %105 : vector<1x64x128xbf16> to vector<64x128xbf16>
    %107 = arith.extf %106 : vector<64x128xbf16> to vector<64x128xf32>
    %108 = arith.addf %104, %107 : vector<64x128xf32>
    %c0_132 = arith.constant 0 : index
    %c0_133 = arith.constant 0 : index
    %c0_134 = arith.constant 0 : index
    %109 = vector.load %arg6[%c0_132, %c0_133, %c0_134] : memref<1x64x128xf32, #tpu.memory_space<vmem>>, vector<1x64x128xf32>
    %110 = vector.shape_cast %109 : vector<1x64x128xf32> to vector<64x128xf32>
    %111 = vector.shape_cast %108 : vector<64x128xf32> to vector<1x64x128xf32>
    tpu.vector_store %arg6[%c0_132, %c0_133, %c0_134], %111 {strides = array<i32>} : memref<1x64x128xf32, #tpu.memory_space<vmem>>, vector<1x64x128xf32>,
    return
  }
  func.func @transform_0(%arg0: i32) -> (i32, i32, i32, i32) {
    %c0_i32 = arith.constant 0 : i32
    %c0_i32_0 = arith.constant 0 : i32
    %c0_i32_1 = arith.constant 0 : i32
    %c0_i32_2 = arith.constant 0 : i32
    return %arg0, %c0_i32, %c0_i32_0, %c0_i32_1 : i32, i32, i32, i32
  }
  func.func @transform_1(%arg0: i32) -> (i32, i32) {
    %c0_i32 = arith.constant 0 : i32
    %c0_i32_0 = arith.constant 0 : i32
    %c0_i32_1 = arith.constant 0 : i32
    return %c0_i32, %c0_i32_0 : i32, i32
  }
  func.func @transform_2(%arg0: i32) -> (i32, i32) {
    %c0_i32 = arith.constant 0 : i32
    %c0_i32_0 = arith.constant 0 : i32
    %c0_i32_1 = arith.constant 0 : i32
    return %c0_i32, %c0_i32_0 : i32, i32
  }
  func.func @transform_3(%arg0: i32) -> (i32, i32, i32, i32) {
    %c0_i32 = arith.constant 0 : i32
    %c0_i32_0 = arith.constant 0 : i32
    %c0_i32_1 = arith.constant 0 : i32
    %c0_i32_2 = arith.constant 0 : i32
    %c0_i32_3 = arith.constant 0 : i32
    return %c0_i32, %c0_i32_0, %c0_i32_1, %c0_i32_2 : i32, i32, i32, i32
  }
  func.func @transform_4(%arg0: i32) -> (i32, i32, i32) {
    %c0_i32 = arith.constant 0 : i32
    %c0_i32_0 = arith.constant 0 : i32
    %c0_i32_1 = arith.constant 0 : i32
    return %arg0, %c0_i32, %c0_i32_0 : i32, i32, i32
  }
  func.func @transform_5(%arg0: i32) -> (i32, i32, i32) {
    %c0_i32 = arith.constant 0 : i32
    %c0_i32_0 = arith.constant 0 : i32
    %c0_i32_1 = arith.constant 0 : i32
    return %arg0, %c0_i32, %c0_i32_0 : i32, i32, i32
  }
}

</mosaic_0001>

<llo_original>
// kernel: basic_block_forward.3
$region0: #{basic_block_forward.3}
  #allocation0 [shape = 'u32[]', space=smem, size = 0x4, offset = 0x4, fixed_abs, tag = 'smem constant byte address 0x4 - core index']
  #allocation1 [shape = 'u32[144,128]{1,0:T(1,128)}', space=vmem, size = 0x12000, scoped, tag = 'internal scratch']
  %s0 = inlined_call_operand.vmem [shape: f32[512,128], index: 0, kind: input, shape index: {}]
  %s1 = inlined_call_operand.vmem [shape: f32[1,128], index: 1, kind: output, shape index: {0}]
  %s2 = inlined_call_operand.vmem [shape: f32[1,128], index: 2, kind: output, shape index: {1}]
  %3 = xla_tuple %s1, %s2
  %s4 = sld [smem:[#allocation0]]
  $region26: #{basic_block_forward.3} parent=0
    _
  %s6 = ssub.s32 1, %s4
  %s7 = scalar_select 0, %s6, %s4
  // Predicated region
  $region2: #{basic_block_forward.3} parent=0 // pred_check
    _
  $region3: #{basic_block_forward.3} parent=0 // pred_check_branch
    %9 = sbr.rel (0) target = $region5
  $region4: #{basic_block_forward.3} parent=0 // pred_region
    _
  $region5: #{basic_block_forward.3} parent=0 // pred_fallthru
    _
  %p10 = scmp.eq.s32.totalorder 0, 0
  // Predicated region
  $region6: #{basic_block_forward.3} parent=0 // pred_check
    %p11 = pneg %p10
  $region7: #{basic_block_forward.3} parent=0 // pred_check_branch
    %13 = sbr.rel (%p11) target = $region9
  $region8: #{basic_block_forward.3} parent=0 // pred_region
    %14 = vst [vmem:[%s1] sm:$0x1] 0.0
    %15 = vst [vmem:[%s2] sm:$0x1] 0.0
  $region9: #{basic_block_forward.3} parent=0 // pred_fallthru
    _
  %v16 = vld [vmem:[%s0] sm:$0xff]
  %v17 = vld [vmem:[%s0 + $0x8] sm:$0xff]
  %v18 = vld [vmem:[%s0 + $0x10] sm:$0xff]
  %v19 = vld [vmem:[%s0 + $0x18] sm:$0xff]
  %v20 = vld [vmem:[%s0 + $0x20] sm:$0xff]
  %v21 = vld [vmem:[%s0 + $0x28] sm:$0xff]
  %v22 = vld [vmem:[%s0 + $0x30] sm:$0xff]
  %v23 = vld [vmem:[%s0 + $0x38] sm:$0xff]
  %v24 = vld [vmem:[%s0 + $0x40] sm:$0xff]
  %v25 = vld [vmem:[%s0 + $0x48] sm:$0xff]
  %v26 = vld [vmem:[%s0 + $0x50] sm:$0xff]
  %v27 = vld [vmem:[%s0 + $0x58] sm:$0xff]
  %v28 = vld [vmem:[%s0 + $0x60] sm:$0xff]
  %v29 = vld [vmem:[%s0 + $0x68] sm:$0xff]
  %v30 = vld [vmem:[%s0 + $0x70] sm:$0xff]
  %v31 = vld [vmem:[%s0 + $0x78] sm:$0xff]
  %v32 = vld [vmem:[%s0 + $0x80] sm:$0xff]
  %v33 = vld [vmem:[%s0 + $0x88] sm:$0xff]
  %v34 = vld [vmem:[%s0 + $0x90] sm:$0xff]
  %v35 = vld [vmem:[%s0 + $0x98] sm:$0xff]
  %v36 = vld [vmem:[%s0 + $0xa0] sm:$0xff]
  %v37 = vld [vmem:[%s0 + $0xa8] sm:$0xff]
  %v38 = vld [vmem:[%s0 + $0xb0] sm:$0xff]
  %v39 = vld [vmem:[%s0 + $0xb8] sm:$0xff]
  %v40 = vld [vmem:[%s0 + $0xc0] sm:$0xff]
  %v41 = vld [vmem:[%s0 + $0xc8] sm:$0xff]
  %v42 = vld [vmem:[%s0 + $0xd0] sm:$0xff]
  %v43 = vld [vmem:[%s0 + $0xd8] sm:$0xff]
  %v44 = vld [vmem:[%s0 + $0xe0] sm:$0xff]
  %v45 = vld [vmem:[%s0 + $0xe8] sm:$0xff]
  %v46 = vld [vmem:[%s0 + $0xf0] sm:$0xff]
  %v47 = vld [vmem:[%s0 + $0xf8] sm:$0xff]
  %v48 = vld [vmem:[%s0 + $0x100] sm:$0xff]
  %v49 = vld [vmem:[%s0 + $0x108] sm:$0xff]
  %v50 = vld [vmem:[%s0 + $0x110] sm:$0xff]
  %v51 = vld [vmem:[%s0 + $0x118] sm:$0xff]
  %v52 = vld [vmem:[%s0 + $0x120] sm:$0xff]
  %v53 = vld [vmem:[%s0 + $0x128] sm:$0xff]
  %v54 = vld [vmem:[%s0 + $0x130] sm:$0xff]
  %v55 = vld [vmem:[%s0 + $0x138] sm:$0xff]
  %v56 = vld [vmem:[%s0 + $0x140] sm:$0xff]
  %v57 = vld [vmem:[%s0 + $0x148] sm:$0xff]
  %v58 = vld [vmem:[%s0 + $0x150] sm:$0xff]
  %v59 = vld [vmem:[%s0 + $0x158] sm:$0xff]
  %v60 = vld [vmem:[%s0 + $0x160] sm:$0xff]
  %v61 = vld [vmem:[%s0 + $0x168] sm:$0xff]
  %v62 = vld [vmem:[%s0 + $0x170] sm:$0xff]
  %v63 = vld [vmem:[%s0 + $0x178] sm:$0xff]
  %v64 = vld [vmem:[%s0 + $0x180] sm:$0xff]
  %v65 = vld [vmem:[%s0 + $0x188] sm:$0xff]
  %v66 = vld [vmem:[%s0 + $0x190] sm:$0xff]
  %v67 = vld [vmem:[%s0 + $0x198] sm:$0xff]
  %v68 = vld [vmem:[%s0 + $0x1a0] sm:$0xff]
  %v69 = vld [vmem:[%s0 + $0x1a8] sm:$0xff]
  %v70 = vld [vmem:[%s0 + $0x1b0] sm:$0xff]
  %v71 = vld [vmem:[%s0 + $0x1b8] sm:$0xff]
  %v72 = vld [vmem:[%s0 + $0x1c0] sm:$0xff]
  %v73 = vld [vmem:[%s0 + $0x1c8] sm:$0xff]
  %v74 = vld [vmem:[%s0 + $0x1d0] sm:$0xff]
  %v75 = vld [vmem:[%s0 + $0x1d8] sm:$0xff]
  %v76 = vld [vmem:[%s0 + $0x1e0] sm:$0xff]
  %v77 = vld [vmem:[%s0 + $0x1e8] sm:$0xff]
  %v78 = vld [vmem:[%s0 + $0x1f0] sm:$0xff]
  %v79 = vld [vmem:[%s0 + $0x1f8] sm:$0xff]
  %v80 = vld [vmem:[%s1] sm:$0x1]
  %v81 = vadd.f32 %v16, %v17
  %v82 = vadd.f32 %v81, %v18
  %v83 = vadd.f32 %v82, %v19
  %v84 = vadd.f32 %v83, %v20
  %v85 = vadd.f32 %v84, %v21
  %v86 = vadd.f32 %v85, %v22
  %v87 = vadd.f32 %v86, %v23
  %v88 = vadd.f32 %v87, %v24
  %v89 = vadd.f32 %v88, %v25
  %v90 = vadd.f32 %v89, %v26
  %v91 = vadd.f32 %v90, %v27
  %v92 = vadd.f32 %v91, %v28
  %v93 = vadd.f32 %v92, %v29
  %v94 = vadd.f32 %v93, %v30
  %v95 = vadd.f32 %v94, %v31
  %v96 = vadd.f32 %v95, %v32
  %v97 = vadd.f32 %v96, %v33
  %v98 = vadd.f32 %v97, %v34
  %v99 = vadd.f32 %v98, %v35
  %v100 = vadd.f32 %v99, %v36
  %v101 = vadd.f32 %v100, %v37
  %v102 = vadd.f32 %v101, %v38
  %v103 = vadd.f32 %v102, %v39
  %v104 = vadd.f32 %v103, %v40
  %v105 = vadd.f32 %v104, %v41
  %v106 = vadd.f32 %v105, %v42
  %v107 = vadd.f32 %v106, %v43
  %v108 = vadd.f32 %v107, %v44
  %v109 = vadd.f32 %v108, %v45
  %v110 = vadd.f32 %v109, %v46
  %v111 = vadd.f32 %v110, %v47
  %v112 = vadd.f32 %v111, %v48
  %v113 = vadd.f32 %v112, %v49
  %v114 = vadd.f32 %v113, %v50
  %v115 = vadd.f32 %v114, %v51
  %v116 = vadd.f32 %v115, %v52
  %v117 = vadd.f32 %v116, %v53
  %v118 = vadd.f32 %v117, %v54
  %v119 = vadd.f32 %v118, %v55
  %v120 = vadd.f32 %v119, %v56
  %v121 = vadd.f32 %v120, %v57
  %v122 = vadd.f32 %v121, %v58
  %v123 = vadd.f32 %v122, %v59
  %v124 = vadd.f32 %v123, %v60
  %v125 = vadd.f32 %v124, %v61
  %v126 = vadd.f32 %v125, %v62
  %v127 = vadd.f32 %v126, %v63
  %v128 = vadd.f32 %v127, %v64
  %v129 = vadd.f32 %v128, %v65
  %v130 = vadd.f32 %v129, %v66
  %v131 = vadd.f32 %v130, %v67
  %v132 = vadd.f32 %v131, %v68
  %v133 = vadd.f32 %v132, %v69
  %v134 = vadd.f32 %v133, %v70
  %v135 = vadd.f32 %v134, %v71
  %v136 = vadd.f32 %v135, %v72
  %v137 = vadd.f32 %v136, %v73
  %v138 = vadd.f32 %v137, %v74
  %v139 = vadd.f32 %v138, %v75
  %v140 = vadd.f32 %v139, %v76
  %v141 = vadd.f32 %v140, %v77
  %v142 = vadd.f32 %v141, %v78
  %v143 = vadd.f32 %v142, %v79
  %v144 = vrot.slane %v143, 4
  %v145 = vadd.f32 %v143, %v144
  %v146 = vrot.slane %v145, 2
  %v147 = vadd.f32 %v145, %v146
  %v148 = vrot.slane %v147, 1
  %v149 = vadd.f32 %v147, %v148
  %v150 = vadd.f32 %v80, %v149
  %151 = vst [vmem:[%s1] sm:$0x1] %v150
  %v152 = vld [vmem:[%s2] sm:$0x1]
  %v153 = vmul.f32 %v16, %v16
  %v154 = vmul.f32 %v17, %v17
  %v155 = vmul.f32 %v18, %v18
  %v156 = vmul.f32 %v19, %v19
  %v157 = vmul.f32 %v20, %v20
  %v158 = vmul.f32 %v21, %v21
  %v159 = vmul.f32 %v22, %v22
  %v160 = vmul.f32 %v23, %v23
  %v161 = vmul.f32 %v24, %v24
  %v162 = vmul.f32 %v25, %v25
  %v163 = vmul.f32 %v26, %v26
  %v164 = vmul.f32 %v27, %v27
  %v165 = vmul.f32 %v28, %v28
  %v166 = vmul.f32 %v29, %v29
  %v167 = vmul.f32 %v30, %v30
  %v168 = vmul.f32 %v31, %v31
  %v169 = vmul.f32 %v32, %v32
  %v170 = vmul.f32 %v33, %v33
  %v171 = vmul.f32 %v34, %v34
  %v172 = vmul.f32 %v35, %v35
  %v173 = vmul.f32 %v36, %v36
  %v174 = vmul.f32 %v37, %v37
  %v175 = vmul.f32 %v38, %v38
  %v176 = vmul.f32 %v39, %v39
  %v177 = vmul.f32 %v40, %v40
  %v178 = vmul.f32 %v41, %v41
  %v179 = vmul.f32 %v42, %v42
  %v180 = vmul.f32 %v43, %v43
  %v181 = vmul.f32 %v44, %v44
  %v182 = vmul.f32 %v45, %v45
  %v183 = vmul.f32 %v46, %v46
  %v184 = vmul.f32 %v47, %v47
  %v185 = vmul.f32 %v48, %v48
  %v186 = vmul.f32 %v49, %v49
  %v187 = vmul.f32 %v50, %v50
  %v188 = vmul.f32 %v51, %v51
  %v189 = vmul.f32 %v52, %v52
  %v190 = vmul.f32 %v53, %v53
  %v191 = vmul.f32 %v54, %v54
  %v192 = vmul.f32 %v55, %v55
  %v193 = vmul.f32 %v56, %v56
  %v194 = vmul.f32 %v57, %v57
  %v195 = vmul.f32 %v58, %v58
  %v196 = vmul.f32 %v59, %v59
  %v197 = vmul.f32 %v60, %v60
  %v198 = vmul.f32 %v61, %v61
  %v199 = vmul.f32 %v62, %v62
  %v200 = vmul.f32 %v63, %v63
  %v201 = vmul.f32 %v64, %v64
  %v202 = vmul.f32 %v65, %v65
  %v203 = vmul.f32 %v66, %v66
  %v204 = vmul.f32 %v67, %v67
  %v205 = vmul.f32 %v68, %v68
  %v206 = vmul.f32 %v69, %v69
  %v207 = vmul.f32 %v70, %v70
  %v208 = vmul.f32 %v71, %v71
  %v209 = vmul.f32 %v72, %v72
  %v210 = vmul.f32 %v73, %v73
  %v211 = vmul.f32 %v74, %v74
  %v212 = vmul.f32 %v75, %v75
  %v213 = vmul.f32 %v76, %v76
  %v214 = vmul.f32 %v77, %v77
  %v215 = vmul.f32 %v78, %v78
  %v216 = vmul.f32 %v79, %v79
  %v217 = vadd.f32 %v153, %v154
  %v218 = vadd.f32 %v217, %v155
  %v219 = vadd.f32 %v218, %v156
  %v220 = vadd.f32 %v219, %v157
  %v221 = vadd.f32 %v220, %v158
  %v222 = vadd.f32 %v221, %v159
  %v223 = vadd.f32 %v222, %v160
  %v224 = vadd.f32 %v223, %v161
  %v225 = vadd.f32 %v224, %v162
  %v226 = vadd.f32 %v225, %v163
  %v227 = vadd.f32 %v226, %v164
  %v228 = vadd.f32 %v227, %v165
  %v229 = vadd.f32 %v228, %v166
  %v230 = vadd.f32 %v229, %v167
  %v231 = vadd.f32 %v230, %v168
  %v232 = vadd.f32 %v231, %v169
  %v233 = vadd.f32 %v232, %v170
  %v234 = vadd.f32 %v233, %v171
  %v235 = vadd.f32 %v234, %v172
  %v236 = vadd.f32 %v235, %v173
  %v237 = vadd.f32 %v236, %v174
  %v238 = vadd.f32 %v237, %v175
  %v239 = vadd.f32 %v238, %v176
  %v240 = vadd.f32 %v239, %v177
  %v241 = vadd.f32 %v240, %v178
  %v242 = vadd.f32 %v241, %v179
  %v243 = vadd.f32 %v242, %v180
  %v244 = vadd.f32 %v243, %v181
  %v245 = vadd.f32 %v244, %v182
  %v246 = vadd.f32 %v245, %v183
  %v247 = vadd.f32 %v246, %v184
  %v248 = vadd.f32 %v247, %v185
  %v249 = vadd.f32 %v248, %v186
  %v250 = vadd.f32 %v249, %v187
  %v251 = vadd.f32 %v250, %v188
  %v252 = vadd.f32 %v251, %v189
  %v253 = vadd.f32 %v252, %v190
  %v254 = vadd.f32 %v253, %v191
  %v255 = vadd.f32 %v254, %v192
  %v256 = vadd.f32 %v255, %v193
  %v257 = vadd.f32 %v256, %v194
  %v258 = vadd.f32 %v257, %v195
  %v259 = vadd.f32 %v258, %v196
  %v260 = vadd.f32 %v259, %v197
  %v261 = vadd.f32 %v260, %v198
  %v262 = vadd.f32 %v261, %v199
  %v263 = vadd.f32 %v262, %v200
  %v264 = vadd.f32 %v263, %v201
  %v265 = vadd.f32 %v264, %v202
  %v266 = vadd.f32 %v265, %v203
  %v267 = vadd.f32 %v266, %v204
  %v268 = vadd.f32 %v267, %v205
  %v269 = vadd.f32 %v268, %v206
  %v270 = vadd.f32 %v269, %v207
  %v271 = vadd.f32 %v270, %v208
  %v272 = vadd.f32 %v271, %v209
  %v273 = vadd.f32 %v272, %v210
  %v274 = vadd.f32 %v273, %v211
  %v275 = vadd.f32 %v274, %v212
  %v276 = vadd.f32 %v275, %v213
  %v277 = vadd.f32 %v276, %v214
  %v278 = vadd.f32 %v277, %v215
  %v279 = vadd.f32 %v278, %v216
  %v280 = vrot.slane %v279, 4
  %v281 = vadd.f32 %v279, %v280
  %v282 = vrot.slane %v281, 2
  %v283 = vadd.f32 %v281, %v282
  %v284 = vrot.slane %v283, 1
  %v285 = vadd.f32 %v283, %v284
  %v286 = vadd.f32 %v152, %v285
  %287 = vst [vmem:[%s2] sm:$0x1] %v286
  // Predicated region
  $region10: #{basic_block_forward.3} parent=0 // pred_check
    _
  $region11: #{basic_block_forward.3} parent=0 // pred_check_branch
    %289 = sbr.rel (0) target = $region13
  $region12: #{basic_block_forward.3} parent=0 // pred_region
    _
  $region13: #{basic_block_forward.3} parent=0 // pred_fallthru
    _
  // Predicated region
  $region14: #{basic_block_forward.3} parent=0 // pred_check
    _
  $region15: #{basic_block_forward.3} parent=0 // pred_check_branch
    %291 = sbr.rel (0) target = $region17
  $region16: #{basic_block_forward.3} parent=0 // pred_region
    _
  $region17: #{basic_block_forward.3} parent=0 // pred_fallthru
    _
  // Predicated region
  $region18: #{basic_block_forward.3} parent=0 // pred_check
    _
  $region19: #{basic_block_forward.3} parent=0 // pred_check_branch
    %293 = sbr.rel (0) target = $region21
  $region20: #{basic_block_forward.3} parent=0 // pred_region
    _
  $region21: #{basic_block_forward.3} parent=0 // pred_fallthru
    _
  // Predicated region
  $region22: #{basic_block_forward.3} parent=0 // pred_check
    _
  $region23: #{basic_block_forward.3} parent=0 // pred_check_branch
    %295 = sbr.rel (0) target = $region25
  $region24: #{basic_block_forward.3} parent=0 // pred_region
    _
  $region25: #{basic_block_forward.3} parent=0 // pred_fallthru
    _

// kernel: basic_block_forward.5
$region0: #{basic_block_forward.5}
  #allocation0 [shape = 'u32[]', space=smem, size = 0x4, offset = 0x4, fixed_abs, tag = 'smem constant byte address 0x4 - core index']
  #allocation1 [shape = 'u32[144,128]{1,0:T(1,128)}', space=vmem, size = 0x12000, scoped, tag = 'internal scratch']
  #allocation2 [shape = 'bf16[1,10,11,128]{3,2,1,0:T(8,128)(2,1)}', space=vmem, size = 0xa000, scoped, tag = 'scratch operand']
  #allocation3 [shape = 'f32[64,128]{1,0:T(8,128)}', space=vmem, size = 0x8000, scoped, tag = 'scratch operand']
  %s0 = inlined_call_operand.vmem [shape: bf16[2,8,8,128], index: 0, kind: input, shape index: {}]
  %s1 = inlined_call_operand.vmem [shape: f32[1,128], index: 1, kind: input, shape index: {}]
  %s2 = inlined_call_operand.vmem [shape: f32[1,128], index: 2, kind: input, shape index: {}]
  %s3 = inlined_call_operand.vmem [shape: bf16[3,3,128,128], index: 3, kind: input, shape index: {}]
  %s4 = inlined_call_operand.vmem [shape: bf16[2,64,128], index: 4, kind: input, shape index: {}]
  %s5 = inlined_call_operand.vmem [shape: f32[2,64,128], index: 5, kind: output, shape index: {}]
  %s6 = sld [smem:[#allocation0]]
  $region53: #{basic_block_forward.5} parent=0
    _
  %s8 = ssub.s32 1, %s6
  %s9 = scalar_select 0, %s8, %s6
  loop: start=0, step=1, limit=4
  $region2: #{basic_block_forward.5} parent=0 // loop_pre_header
    _
  $region3: #{basic_block_forward.5} parent=0 // loop_header
    %s11 = sphi 0, %s15
    %p12 = scmp.ge.s32.totalorder %s11, 4
    %s21 = sphi 0, %s23
    %s24 = sphi 0, %s21
    %s25 = sphi 0, %s24
    %s41 = sphi 0, %s25
    %s45 = sphi 0, %s45
    %s47 = sphi 0, %s45
    %s48 = sphi 0, %s47
    %s62 = sphi 0, %s48
    %s66 = sphi 0, %s66
    %s68 = sphi 0, %s66
    %s69 = sphi 0, %s68
    %s83 = sphi 0, %s69
    %s87 = sphi 0, %s87
    %s89 = sphi 0, %s87
    %s90 = sphi 0, %s89
    %s104 = sphi 0, %s90
    %s110 = sphi 0, %s112
    %s113 = sphi 0, %s110
    %s114 = sphi 0, %s113
    %s130 = sphi 0, %s114
    %s136 = sphi 0, %s138
    %s139 = sphi 0, %s136
    %s140 = sphi 0, %s139
    %s156 = sphi 0, %s140
  $region4: #{basic_block_forward.5} parent=0 // loop_header_branch
    %14 = sbr.rel (%p12) target = $region8
  $region5: #{basic_block_forward.5} parent=0 // loop_body
    %s16 = ssub.s32 %s11, 1
    %s17 = ssub.s32 %s11, 2
    %s18 = sadd.s32 %s11, 1
    %s19 = ssub.s32 %s11, %s18
    %p20 = scmp.eq.s32.totalorder %s19, 0
    %s22 = sadd.s32 %s21, 1
    %s23 = scalar_select %p20, %s21, %s22
    %p26 = pneg %p20
    %p27 = scmp.eq.s32.totalorder %s11, 1
    %p28 = por %p26, %p27
    %p29 = scmp.ne.s32.totalorder %s21, %s24
    %p30 = scmp.eq.s32.totalorder %s11, 0
    %p31 = por %p29, %p30
    %p32 = scmp.ne.s32.totalorder %s21, %s24
    %p33 = scmp.eq.s32.totalorder %s16, 1
    %p34 = por %p32, %p33
    %p35 = scmp.ne.s32.totalorder %s24, %s25
    %p36 = scmp.eq.s32.totalorder %s16, 0
    %p37 = por %p35, %p36
    %p38 = scmp.ne.s32.totalorder %s24, %s25
    %p39 = scmp.eq.s32.totalorder %s17, 1
    %p40 = por %p38, %p39
    %p42 = scmp.ne.s32.totalorder %s25, %s41
    %p43 = scmp.eq.s32.totalorder %s17, 0
    %p44 = por %p42, %p43
    %s46 = sadd.s32 %s45, 1
    %p49 = scmp.eq.s32.totalorder %s11, 1
    %p50 = scmp.ne.s32.totalorder %s45, %s47
    %p51 = scmp.eq.s32.totalorder %s11, 0
    %p52 = por %p50, %p51
    %p53 = scmp.ne.s32.totalorder %s45, %s47
    %p54 = scmp.eq.s32.totalorder %s16, 1
    %p55 = por %p53, %p54
    %p56 = scmp.ne.s32.totalorder %s47, %s48
    %p57 = scmp.eq.s32.totalorder %s16, 0
    %p58 = por %p56, %p57
    %p59 = scmp.ne.s32.totalorder %s47, %s48
    %p60 = scmp.eq.s32.totalorder %s17, 1
    %p61 = por %p59, %p60
    %p63 = scmp.ne.s32.totalorder %s48, %s62
    %p64 = scmp.eq.s32.totalorder %s17, 0
    %p65 = por %p63, %p64
    %s67 = sadd.s32 %s66, 1
    %p70 = scmp.eq.s32.totalorder %s11, 1
    %p71 = scmp.ne.s32.totalorder %s66, %s68
    %p72 = scmp.eq.s32.totalorder %s11, 0
    %p73 = por %p71, %p72
    %p74 = scmp.ne.s32.totalorder %s66, %s68
    %p75 = scmp.eq.s32.totalorder %s16, 1
    %p76 = por %p74, %p75
    %p77 = scmp.ne.s32.totalorder %s68, %s69
    %p78 = scmp.eq.s32.totalorder %s16, 0
    %p79 = por %p77, %p78
    %p80 = scmp.ne.s32.totalorder %s68, %s69
    %p81 = scmp.eq.s32.totalorder %s17, 1
    %p82 = por %p80, %p81
    %p84 = scmp.ne.s32.totalorder %s69, %s83
    %p85 = scmp.eq.s32.totalorder %s17, 0
    %p86 = por %p84, %p85
    %s88 = sadd.s32 %s87, 1
    %p91 = scmp.eq.s32.totalorder %s11, 1
    %p92 = scmp.ne.s32.totalorder %s87, %s89
    %p93 = scmp.eq.s32.totalorder %s11, 0
    %p94 = por %p92, %p93
    %p95 = scmp.ne.s32.totalorder %s87, %s89
    %p96 = scmp.eq.s32.totalorder %s16, 1
    %p97 = por %p95, %p96
    %p98 = scmp.ne.s32.totalorder %s89, %s90
    %p99 = scmp.eq.s32.totalorder %s16, 0
    %p100 = por %p98, %p99
    %p101 = scmp.ne.s32.totalorder %s89, %s90
    %p102 = scmp.eq.s32.totalorder %s17, 1
    %p103 = por %p101, %p102
    %p105 = scmp.ne.s32.totalorder %s90, %s104
    %p106 = scmp.eq.s32.totalorder %s17, 0
    %p107 = por %p105, %p106
    %s108 = ssub.s32 %s11, %s18
    %p109 = scmp.eq.s32.totalorder %s108, 0
    %s111 = sadd.s32 %s110, 1
    %s112 = scalar_select %p109, %s110, %s111
    %p115 = pneg %p109
    %p116 = scmp.eq.s32.totalorder %s11, 1
    %p117 = por %p115, %p116
    %p118 = scmp.ne.s32.totalorder %s110, %s113
    %p119 = scmp.eq.s32.totalorder %s11, 0
    %p120 = por %p118, %p119
    %p121 = scmp.ne.s32.totalorder %s110, %s113
    %p122 = scmp.eq.s32.totalorder %s16, 1
    %p123 = por %p121, %p122
    %p124 = scmp.ne.s32.totalorder %s113, %s114
    %p125 = scmp.eq.s32.totalorder %s16, 0
    %p126 = por %p124, %p125
    %p127 = scmp.ne.s32.totalorder %s113, %s114
    %p128 = scmp.eq.s32.totalorder %s17, 1
    %p129 = por %p127, %p128
    %p131 = scmp.ne.s32.totalorder %s114, %s130
    %p132 = scmp.eq.s32.totalorder %s17, 0
    %p133 = por %p131, %p132
    %s134 = ssub.s32 %s11, %s18
    %p135 = scmp.eq.s32.totalorder %s134, 0
    %s137 = sadd.s32 %s136, 1
    %s138 = scalar_select %p135, %s136, %s137
    %p141 = pneg %p135
    %p142 = scmp.eq.s32.totalorder %s11, 1
    %p143 = por %p141, %p142
    %p144 = scmp.ne.s32.totalorder %s136, %s139
    %p145 = scmp.eq.s32.totalorder %s11, 0
    %p146 = por %p144, %p145
    %p147 = scmp.ne.s32.totalorder %s136, %s139
    %p148 = scmp.eq.s32.totalorder %s16, 1
    %p149 = por %p147, %p148
    %p150 = scmp.ne.s32.totalorder %s139, %s140
    %p151 = scmp.eq.s32.totalorder %s16, 0
    %p152 = por %p150, %p151
    %p153 = scmp.ne.s32.totalorder %s139, %s140
    %p154 = scmp.eq.s32.totalorder %s17, 1
    %p155 = por %p153, %p154
    %p157 = scmp.ne.s32.totalorder %s140, %s156
    %p158 = scmp.eq.s32.totalorder %s17, 0
    %p159 = por %p157, %p158
    %p160 = scmp.le.s32.totalorder 1, %s11
    %p161 = scmp.lt.s32.totalorder %s11, 3
    %p162 = pnand %p160, %p161
    %p163 = pneg %p162
    // Predicated region
    $region9: #{basic_block_forward.5} parent=5 // pred_check
      _
    $region10: #{basic_block_forward.5} parent=5 // pred_check_branch
      %165 = sbr.rel (%p162) target = $region12
    $region11: #{basic_block_forward.5} parent=5 // pred_region
      %s166 = ssub.s32 %s11, 1
      // Predicated region
      $region13: #{basic_block_forward.5} parent=11 // pred_check
        %p167 = pneg %p58
      $region14: #{basic_block_forward.5} parent=11 // pred_check_branch
        %169 = sbr.rel (%p167) target = $region16
      $region15: #{basic_block_forward.5} parent=11 // pred_region
        _
      $region16: #{basic_block_forward.5} parent=11 // pred_fallthru
        _
      // Predicated region
      $region17: #{basic_block_forward.5} parent=11 // pred_check
        %p170 = pneg %p79
      $region18: #{basic_block_forward.5} parent=11 // pred_check_branch
        %172 = sbr.rel (%p170) target = $region20
      $region19: #{basic_block_forward.5} parent=11 // pred_region
        _
      $region20: #{basic_block_forward.5} parent=11 // pred_fallthru
        _
      // Predicated region
      $region21: #{basic_block_forward.5} parent=11 // pred_check
        %p173 = pneg %p100
      $region22: #{basic_block_forward.5} parent=11 // pred_check_branch
        %175 = sbr.rel (%p173) target = $region24
      $region23: #{basic_block_forward.5} parent=11 // pred_region
        _
      $region24: #{basic_block_forward.5} parent=11 // pred_fallthru
        _
    $region12: #{basic_block_forward.5} parent=5 // pred_fallthru
      _
    %p176 = scmp.lt.s32.totalorder %s11, 2
    // Predicated region
    $region25: #{basic_block_forward.5} parent=5 // pred_check
      %p177 = pneg %p176
    $region26: #{basic_block_forward.5} parent=5 // pred_check_branch
      %179 = sbr.rel (%p177) target = $region28
    $region27: #{basic_block_forward.5} parent=5 // pred_region
      // Predicated region
      $region29: #{basic_block_forward.5} parent=27 // pred_check
        %p180 = pneg %p31
      $region30: #{basic_block_forward.5} parent=27 // pred_check_branch
        %182 = sbr.rel (%p180) target = $region32
      $region31: #{basic_block_forward.5} parent=27 // pred_region
        %p183 = scmp.lt.s32.totalorder %s11, 1
        %s184 = scalar_select %p183, %s11, 1
        %s185 = smul.addr %s184, 8
        %s186 = smul.addr %s185, 4
        %s187 = scalar_lea.vmem %s0, %s186
      $region32: #{basic_block_forward.5} parent=27 // pred_fallthru
        _
      // Predicated region
      $region33: #{basic_block_forward.5} parent=27 // pred_check
        %p188 = pneg %p120
      $region34: #{basic_block_forward.5} parent=27 // pred_check_branch
        %190 = sbr.rel (%p188) target = $region36
      $region35: #{basic_block_forward.5} parent=27 // pred_region
        %p191 = scmp.lt.s32.totalorder %s11, 1
        %s192 = scalar_select %p191, %s11, 1
        %s193 = smul.addr %s192, 8
        %s194 = smul.addr %s193, 4
        %s195 = scalar_lea.vmem %s4, %s194
      $region36: #{basic_block_forward.5} parent=27 // pred_fallthru
        _
    $region28: #{basic_block_forward.5} parent=5 // pred_fallthru
      _
    %p196 = scmp.le.s32.totalorder 1, %s11
    %p197 = scmp.lt.s32.totalorder %s11, 3
    %p198 = pnand %p196, %p197
    %p199 = pneg %p198
    // Predicated region
    $region37: #{basic_block_forward.5} parent=5 // pred_check
      _
    $region38: #{basic_block_forward.5} parent=5 // pred_check_branch
      %201 = sbr.rel (%p198) target = $region40
    $region39: #{basic_block_forward.5} parent=5 // pred_region
      %s202 = ssub.s32 %s11, 1
      %p203 = scmp.lt.s32.totalorder %s16, 1
      %s204 = scalar_select %p203, %s16, 1
      %s205 = smul.addr %s204, 8
      %s206 = smul.addr %s205, 4
      %s207 = scalar_lea.vmem %s0, %s206
      %p208 = pneg %p37
      %p209 = pneg %p34
      %p210 = pneg %p58
      %p211 = pneg %p55
      %p212 = pneg %p79
      %p213 = pneg %p76
      %p214 = pneg %p100
      %p215 = pneg %p97
      %p216 = scmp.lt.s32.totalorder %s16, 1
      %s217 = scalar_select %p216, %s16, 1
      %s218 = smul.addr %s217, 8
      %s219 = smul.addr %s218, 4
      %s220 = scalar_lea.vmem %s4, %s219
      %p221 = pneg %p126
      %p222 = pneg %p123
      %p223 = pneg %p152
      %p224 = pneg %p149
      %p225 = scmp.lt.s32.totalorder %s16, 1
      %s226 = scalar_select %p225, %s16, 1
      %s227 = smul.addr %s226, 8
      %s228 = smul.addr %s227, 8
      %s229 = scalar_lea.vmem %s5, %s228
      %p230 = scmp.lt.s32.totalorder %s16, 1
      %s231 = scalar_select %p230, %s16, 1
      %s232 = smul.addr %s231, 8
      %s233 = smul.addr %s232, 4
      %s234 = scalar_lea.vmem %s0, %s233
      %p235 = scmp.lt.s32.totalorder %s16, 1
      %s236 = scalar_select %p235, %s16, 1
      %s237 = smul.addr %s236, 8
      %s238 = smul.addr %s237, 4
      %s239 = scalar_lea.vmem %s4, %s238
      %p240 = scmp.lt.s32.totalorder %s16, 1
      %s241 = scalar_select %p240, %s16, 1
      %s242 = smul.addr %s241, 8
      %s243 = smul.addr %s242, 8
      %s244 = scalar_lea.vmem %s5, %s243
      %246 = vst [vmem:[#allocation2] sm:$0xf] 0
      %vm247 = vcmask 1041408
      %vm248 = vsmask.f32 1280
      %vm249 = vmand %vm247, %vm248
      %v250 = vld [vmem:[#allocation2 + $0x4] sm:$0x3]
      %v251 = vsel %vm249, 0, %v250
      %252 = vst [vmem:[#allocation2 + $0x4] sm:$0x3] %v251
      %s253 = scalar_lea.vmem [#allocation2], 72
      %254 = vst [vmem:[%s253] sm:$0xf] 0
      %v255 = vld [vmem:[%s253 + $0x4] sm:$0x3]
      %v256 = vsel %vm249, 0, %v255
      %257 = vst [vmem:[%s253 + $0x4] sm:$0x3] %v256
      %s258 = scalar_lea.vmem [#allocation2], 8
      %vm259 = vcmask 1040384
      %vm260 = vsmask.f32 256
      %vm261 = vmand %vm259, %vm260
      %v262 = vld [vmem:[%s258] sm:$0x1]
      %v263 = vsel %vm261, 0, %v262
      %264 = vst [vmem:[%s258] sm:$0x1] %v263
      %v265 = vld [vmem:[%s258 + $0x8] sm:$0x1]
      %v266 = vsel %vm261, 0, %v265
      %267 = vst [vmem:[%s258 + $0x8] sm:$0x1] %v266
      %v268 = vld [vmem:[%s258 + $0x10] sm:$0x1]
      %v269 = vsel %vm261, 0, %v268
      %270 = vst [vmem:[%s258 + $0x10] sm:$0x1] %v269
      %v271 = vld [vmem:[%s258 + $0x18] sm:$0x1]
      %v272 = vsel %vm261, 0, %v271
      %273 = vst [vmem:[%s258 + $0x18] sm:$0x1] %v272
      %v274 = vld [vmem:[%s258 + $0x20] sm:$0x1]
      %v275 = vsel %vm261, 0, %v274
      %276 = vst [vmem:[%s258 + $0x20] sm:$0x1] %v275
      %v277 = vld [vmem:[%s258 + $0x28] sm:$0x1]
      %v278 = vsel %vm261, 0, %v277
      %279 = vst [vmem:[%s258 + $0x28] sm:$0x1] %v278
      %v280 = vld [vmem:[%s258 + $0x30] sm:$0x1]
      %v281 = vsel %vm261, 0, %v280
      %282 = vst [vmem:[%s258 + $0x30] sm:$0x1] %v281
      %v283 = vld [vmem:[%s258 + $0x38] sm:$0x1]
      %v284 = vsel %vm261, 0, %v283
      %285 = vst [vmem:[%s258 + $0x38] sm:$0x1] %v284
      %vm286 = vsmask.f32 1282
      %vm287 = vmand %vm247, %vm286
      %v288 = vld [vmem:[%s258 + $0x4] sm:$0x3]
      %v289 = vsel %vm287, 0, %v288
      %290 = vst [vmem:[%s258 + $0x4] sm:$0x3] %v289
      %v291 = vld [vmem:[%s258 + $0xc] sm:$0x3]
      %v292 = vsel %vm287, 0, %v291
      %293 = vst [vmem:[%s258 + $0xc] sm:$0x3] %v292
      %v294 = vld [vmem:[%s258 + $0x14] sm:$0x3]
      %v295 = vsel %vm287, 0, %v294
      %296 = vst [vmem:[%s258 + $0x14] sm:$0x3] %v295
      %v297 = vld [vmem:[%s258 + $0x1c] sm:$0x3]
      %v298 = vsel %vm287, 0, %v297
      %299 = vst [vmem:[%s258 + $0x1c] sm:$0x3] %v298
      %v300 = vld [vmem:[%s258 + $0x24] sm:$0x3]
      %v301 = vsel %vm287, 0, %v300
      %302 = vst [vmem:[%s258 + $0x24] sm:$0x3] %v301
      %v303 = vld [vmem:[%s258 + $0x2c] sm:$0x3]
      %v304 = vsel %vm287, 0, %v303
      %305 = vst [vmem:[%s258 + $0x2c] sm:$0x3] %v304
      %v306 = vld [vmem:[%s258 + $0x34] sm:$0x3]
      %v307 = vsel %vm287, 0, %v306
      %308 = vst [vmem:[%s258 + $0x34] sm:$0x3] %v307
      %v309 = vld [vmem:[%s258 + $0x3c] sm:$0x3]
      %v310 = vsel %vm287, 0, %v309
      %311 = vst [vmem:[%s258 + $0x3c] sm:$0x3] %v310
      %v312 = vld [vmem:[%s1] sm:$0x1]
      %v313 = vld [vmem:[%s2] sm:$0x1]
      %v314 = vld [vmem:[%s234] sm:$0xf]
      %v315 = vld [vmem:[%s234 + $0x4] sm:$0xf]
      %v316 = vld [vmem:[%s234 + $0x8] sm:$0xf]
      %v317 = vld [vmem:[%s234 + $0xc] sm:$0xf]
      %v318 = vld [vmem:[%s234 + $0x10] sm:$0xf]
      %v319 = vld [vmem:[%s234 + $0x14] sm:$0xf]
      %v320 = vld [vmem:[%s234 + $0x18] sm:$0xf]
      %v321 = vld [vmem:[%s234 + $0x1c] sm:$0xf]
      %v322 = vunpack.c.l.bf16 %v314
      %v323 = vunpack.c.l.bf16 %v315
      %v324 = vunpack.c.l.bf16 %v316
      %v325 = vunpack.c.l.bf16 %v317
      %v326 = vunpack.c.l.bf16 %v318
      %v327 = vunpack.c.l.bf16 %v319
      %v328 = vunpack.c.l.bf16 %v320
      %v329 = vunpack.c.l.bf16 %v321
      %v331 = vlaneseq
      %v332 = vshrl.u32 %v331, 7
      %v333 = vsub.s32 0, %v332
      %v334 = vrot.slane %v312, %v333
      %v336 = vmul.f32 %v322, %v334
      %v337 = vmul.f32 %v323, %v334
      %v338 = vmul.f32 %v324, %v334
      %v339 = vmul.f32 %v325, %v334
      %v340 = vmul.f32 %v326, %v334
      %v341 = vmul.f32 %v327, %v334
      %v342 = vmul.f32 %v328, %v334
      %v343 = vmul.f32 %v329, %v334
      %v345 = vlaneseq
      %v346 = vshrl.u32 %v345, 7
      %v347 = vsub.s32 0, %v346
      %v348 = vrot.slane %v313, %v347
      %v350 = vadd.f32 %v336, %v348
      %v351 = vadd.f32 %v337, %v348
      %v352 = vadd.f32 %v338, %v348
      %v353 = vadd.f32 %v339, %v348
      %v354 = vadd.f32 %v340, %v348
      %v355 = vadd.f32 %v341, %v348
      %v356 = vadd.f32 %v342, %v348
      %v357 = vadd.f32 %v343, %v348
      %v358 = vmax.f32 %v350, 0.0
      %v359 = vmax.f32 %v351, 0.0
      %v360 = vmax.f32 %v352, 0.0
      %v361 = vmax.f32 %v353, 0.0
      %v362 = vmax.f32 %v354, 0.0
      %v363 = vmax.f32 %v355, 0.0
      %v364 = vmax.f32 %v356, 0.0
      %v365 = vmax.f32 %v357, 0.0
      %v366 = vpack.c.bf16 %v358, %v358
      %v367 = vpack.c.bf16 %v359, %v359
      %v368 = vpack.c.bf16 %v360, %v360
      %v369 = vpack.c.bf16 %v361, %v361
      %v370 = vpack.c.bf16 %v362, %v362
      %v371 = vpack.c.bf16 %v363, %v363
      %v372 = vpack.c.bf16 %v364, %v364
      %v373 = vpack.c.bf16 %v365, %v365
      %v382 = vunpack.c.l.b16 %v366
      %v383 = vunpack.c.l.b16 %v367
      %v384 = vunpack.c.l.b16 %v368
      %v385 = vunpack.c.l.b16 %v369
      %v386 = vunpack.c.l.b16 %v370
      %v387 = vunpack.c.l.b16 %v371
      %v388 = vunpack.c.l.b16 %v372
      %v389 = vunpack.c.l.b16 %v373
      %v390 = vpack.c.b16 %v382, %v382
      %v391 = vpack.c.b16 %v383, %v383
      %v392 = vpack.c.b16 %v384, %v384
      %v393 = vpack.c.b16 %v385, %v385
      %v394 = vpack.c.b16 %v386, %v386
      %v395 = vpack.c.b16 %v387, %v387
      %v396 = vpack.c.b16 %v388, %v388
      %v397 = vpack.c.b16 %v389, %v389
      %v399 = vshrl.u32 %v390, 16
      %v401 = vrot.slane %v399, 7
      %v402 = vshll.u32 %v390, 16
      %v404 = vor.u32 %v401, %v402
      %v405 = vrot.slane %v401, 4
      %v407 = vshrl.u32 %v391, 16
      %v409 = vrot.slane %v407, 7
      %v410 = vshll.u32 %v391, 16
      %v412 = vor.u32 %v409, %v410
      %v413 = vrot.slane %v409, 4
      %v415 = vshrl.u32 %v392, 16
      %v417 = vrot.slane %v415, 7
      %v418 = vshll.u32 %v392, 16
      %v420 = vor.u32 %v417, %v418
      %v421 = vrot.slane %v417, 4
      %v423 = vshrl.u32 %v393, 16
      %v425 = vrot.slane %v423, 7
      %v426 = vshll.u32 %v393, 16
      %v428 = vor.u32 %v425, %v426
      %v429 = vrot.slane %v425, 4
      %v431 = vshrl.u32 %v394, 16
      %v433 = vrot.slane %v431, 7
      %v434 = vshll.u32 %v394, 16
      %v436 = vor.u32 %v433, %v434
      %v437 = vrot.slane %v433, 4
      %v439 = vshrl.u32 %v395, 16
      %v441 = vrot.slane %v439, 7
      %v442 = vshll.u32 %v395, 16
      %v444 = vor.u32 %v441, %v442
      %v445 = vrot.slane %v441, 4
      %v447 = vshrl.u32 %v396, 16
      %v449 = vrot.slane %v447, 7
      %v450 = vshll.u32 %v396, 16
      %v452 = vor.u32 %v449, %v450
      %v453 = vrot.slane %v449, 4
      %v455 = vshrl.u32 %v397, 16
      %v457 = vrot.slane %v455, 7
      %v458 = vshll.u32 %v397, 16
      %v460 = vor.u32 %v457, %v458
      %v461 = vrot.slane %v457, 4
      %vm478 = vcmask 1043456
      %vm479 = vsmask.f32 7938
      %vm480 = vmand %vm478, %vm479
      %v481 = vld [vmem:[%s258] sm:$0xf]
      %v482 = vsel %vm480, %v404, %v481
      %483 = vst [vmem:[%s258] sm:$0xf] %v482
      %v484 = vld [vmem:[%s258 + $0x4] sm:$0x1]
      %v485 = vsel %vm261, %v405, %v484
      %486 = vst [vmem:[%s258 + $0x4] sm:$0x1] %v485
      %v487 = vld [vmem:[%s258 + $0x8] sm:$0xf]
      %v488 = vsel %vm480, %v412, %v487
      %489 = vst [vmem:[%s258 + $0x8] sm:$0xf] %v488
      %v490 = vld [vmem:[%s258 + $0xc] sm:$0x1]
      %v491 = vsel %vm261, %v413, %v490
      %492 = vst [vmem:[%s258 + $0xc] sm:$0x1] %v491
      %v493 = vld [vmem:[%s258 + $0x10] sm:$0xf]
      %v494 = vsel %vm480, %v420, %v493
      %495 = vst [vmem:[%s258 + $0x10] sm:$0xf] %v494
      %v496 = vld [vmem:[%s258 + $0x14] sm:$0x1]
      %v497 = vsel %vm261, %v421, %v496
      %498 = vst [vmem:[%s258 + $0x14] sm:$0x1] %v497
      %v499 = vld [vmem:[%s258 + $0x18] sm:$0xf]
      %v500 = vsel %vm480, %v428, %v499
      %501 = vst [vmem:[%s258 + $0x18] sm:$0xf] %v500
      %v502 = vld [vmem:[%s258 + $0x1c] sm:$0x1]
      %v503 = vsel %vm261, %v429, %v502
      %504 = vst [vmem:[%s258 + $0x1c] sm:$0x1] %v503
      %v505 = vld [vmem:[%s258 + $0x20] sm:$0xf]
      %v506 = vsel %vm480, %v436, %v505
      %507 = vst [vmem:[%s258 + $0x20] sm:$0xf] %v506
      %v508 = vld [vmem:[%s258 + $0x24] sm:$0x1]
      %v509 = vsel %vm261, %v437, %v508
      %510 = vst [vmem:[%s258 + $0x24] sm:$0x1] %v509
      %v511 = vld [vmem:[%s258 + $0x28] sm:$0xf]
      %v512 = vsel %vm480, %v444, %v511
      %513 = vst [vmem:[%s258 + $0x28] sm:$0xf] %v512
      %v514 = vld [vmem:[%s258 + $0x2c] sm:$0x1]
      %v515 = vsel %vm261, %v445, %v514
      %516 = vst [vmem:[%s258 + $0x2c] sm:$0x1] %v515
      %v517 = vld [vmem:[%s258 + $0x30] sm:$0xf]
      %v518 = vsel %vm480, %v452, %v517
      %519 = vst [vmem:[%s258 + $0x30] sm:$0xf] %v518
      %v520 = vld [vmem:[%s258 + $0x34] sm:$0x1]
      %v521 = vsel %vm261, %v453, %v520
      %522 = vst [vmem:[%s258 + $0x34] sm:$0x1] %v521
      %v523 = vld [vmem:[%s258 + $0x38] sm:$0xf]
      %v524 = vsel %vm480, %v460, %v523
      %525 = vst [vmem:[%s258 + $0x38] sm:$0xf] %v524
      %v526 = vld [vmem:[%s258 + $0x3c] sm:$0x1]
      %v527 = vsel %vm261, %v461, %v526
      %528 = vst [vmem:[%s258 + $0x3c] sm:$0x1] %v527
      %v529 = vld [vmem:[#allocation2] sm:$0xf]
      %v530 = vld [vmem:[#allocation2 + $0x8] sm:$0xf]
      %v531 = vld [vmem:[#allocation2 + $0x10] sm:$0xf]
      %v532 = vld [vmem:[#allocation2 + $0x18] sm:$0xf]
      %v533 = vld [vmem:[#allocation2 + $0x20] sm:$0xf]
      %v534 = vld [vmem:[#allocation2 + $0x28] sm:$0xf]
      %v535 = vld [vmem:[#allocation2 + $0x30] sm:$0xf]
      %v536 = vld [vmem:[#allocation2 + $0x38] sm:$0xf]
      %v537 = vld [vmem:[%s3] sm:$0xf]
      %v538 = vld [vmem:[%s3 + $0x4] sm:$0xf]
      %v539 = vld [vmem:[%s3 + $0x8] sm:$0xf]
      %v540 = vld [vmem:[%s3 + $0xc] sm:$0xf]
      %v541 = vld [vmem:[%s3 + $0x10] sm:$0xf]
      %v542 = vld [vmem:[%s3 + $0x14] sm:$0xf]
      %v543 = vld [vmem:[%s3 + $0x18] sm:$0xf]
      %v544 = vld [vmem:[%s3 + $0x1c] sm:$0xf]
      %v545 = vld [vmem:[%s3 + $0x20] sm:$0xf]
      %v546 = vld [vmem:[%s3 + $0x24] sm:$0xf]
      %v547 = vld [vmem:[%s3 + $0x28] sm:$0xf]
      %v548 = vld [vmem:[%s3 + $0x2c] sm:$0xf]
      %v549 = vld [vmem:[%s3 + $0x30] sm:$0xf]
      %v550 = vld [vmem:[%s3 + $0x34] sm:$0xf]
      %v551 = vld [vmem:[%s3 + $0x38] sm:$0xf]
      %v552 = vld [vmem:[%s3 + $0x3c] sm:$0xf]
      %v561 = vunpack.c.l.b16 %v529
      %v562 = vunpack.c.l.b16 %v530
      %v563 = vunpack.c.l.b16 %v531
      %v564 = vunpack.c.l.b16 %v532
      %v565 = vunpack.c.l.b16 %v533
      %v566 = vunpack.c.l.b16 %v534
      %v567 = vunpack.c.l.b16 %v535
      %v568 = vunpack.c.l.b16 %v536
      %v569 = vpack.c.b16 %v562, %v561
      %v570 = vpack.c.b16 %v564, %v563
      %v571 = vpack.c.b16 %v566, %v565
      %v572 = vpack.c.b16 %v568, %v567
      %v593 = vunpack.c.l.b16 %v537
      %v594 = vunpack.c.l.b16 %v538
      %v595 = vunpack.c.l.b16 %v539
      %v596 = vunpack.c.l.b16 %v540
      %v597 = vunpack.c.l.b16 %v541
      %v598 = vunpack.c.l.b16 %v542
      %v599 = vunpack.c.l.b16 %v543
      %v600 = vunpack.c.l.b16 %v544
      %v601 = vunpack.c.l.b16 %v545
      %v602 = vunpack.c.l.b16 %v546
      %v603 = vunpack.c.l.b16 %v547
      %v604 = vunpack.c.l.b16 %v548
      %v605 = vunpack.c.l.b16 %v549
      %v606 = vunpack.c.l.b16 %v550
      %v607 = vunpack.c.l.b16 %v551
      %v608 = vunpack.c.l.b16 %v552
      %v609 = vpack.c.b16 %v594, %v593
      %v610 = vpack.c.b16 %v596, %v595
      %v611 = vpack.c.b16 %v598, %v597
      %v612 = vpack.c.b16 %v600, %v599
      %v613 = vpack.c.b16 %v602, %v601
      %v614 = vpack.c.b16 %v604, %v603
      %v615 = vpack.c.b16 %v606, %v605
      %v616 = vpack.c.b16 %v608, %v607
      %625 = vmatprep.subr.bf16.mxu0 0
      %626 = vmatpush1.bf16.msra.mxu0 %v616
      %627 = vmatprep.subr.bf16.mxu0 0
      %628 = vmatpush1.bf16.msra.mxu0 %v615
      %629 = vmatprep.subr.bf16.mxu0 0
      %630 = vmatpush1.bf16.msra.mxu0 %v614
      %631 = vmatprep.subr.bf16.mxu0 0
      %632 = vmatpush1.bf16.msra.mxu0 %v613
      %633 = vmatprep.subr.bf16.mxu0 0
      %634 = vmatpush1.bf16.msra.mxu0 %v612
      %635 = vmatprep.subr.bf16.mxu0 0
      %636 = vmatpush1.bf16.msra.mxu0 %v611
      %637 = vmatprep.subr.bf16.mxu0 0
      %638 = vmatpush1.bf16.msra.mxu0 %v610
      %639 = vmatprep.subr.bf16.mxu0 0
      %640 = vmatpush1.bf16.msra.mxu0 %v609
      %641 = vmatprep.subr.bf16.mxu0 0
      %642 = vmatpush2.bf16.msra.mxu0 0
      %643 = vmatprep.subr.bf16.mxu0 0
      %644 = vmatpush2.bf16.msra.mxu0 0
      %645 = vmatprep.subr.bf16.mxu0 0
      %646 = vmatpush2.bf16.msra.mxu0 0
      %647 = vmatprep.subr.bf16.mxu0 0
      %648 = vmatpush2.bf16.msra.mxu0 0
      %649 = vmatprep.subr.bf16.mxu0 0
      %650 = vmatpush2.bf16.msra.mxu0 0
      %651 = vmatprep.subr.bf16.mxu0 0
      %652 = vmatpush2.bf16.msra.mxu0 0
      %653 = vmatprep.subr.bf16.mxu0 0
      %654 = vmatpush2.bf16.msra.mxu0 0
      %655 = vmatprep.subr.bf16.mxu0 0
      %656 = vmatpush2.bf16.msra.mxu0 0
      %657 = vmatprep.mubr.bf16.mxu0 0
      %658 = vmatmul.mubr.bf16.gmra.mxu0 %v569
      %v659 = vpop.f32.mrf.mxu0
      %v660 = vadd.f32 0.0, %v659
      %v661 = vpop.f32.mrf.mxu0
      %v662 = vpop.f32.mrf.mxu0
      %v663 = vadd.f32 0.0, %v662
      %v664 = vpop.f32.mrf.mxu0
      %665 = vmatprep.mubr.bf16.mxu0 0
      %666 = vmatmul.mubr.bf16.gmra.mxu0 %v570
      %v667 = vpop.f32.mrf.mxu0
      %v668 = vadd.f32 0.0, %v667
      %v669 = vpop.f32.mrf.mxu0
      %v670 = vpop.f32.mrf.mxu0
      %v671 = vadd.f32 0.0, %v670
      %v672 = vpop.f32.mrf.mxu0
      %673 = vmatprep.mubr.bf16.mxu0 0
      %674 = vmatmul.mubr.bf16.gmra.mxu0 %v571
      %v675 = vpop.f32.mrf.mxu0
      %v676 = vadd.f32 0.0, %v675
      %v677 = vpop.f32.mrf.mxu0
      %v678 = vpop.f32.mrf.mxu0
      %v679 = vadd.f32 0.0, %v678
      %v680 = vpop.f32.mrf.mxu0
      %681 = vmatprep.mubr.bf16.mxu0 0
      %682 = vmatmul.mubr.bf16.gmra.mxu0 %v572
      %v683 = vpop.f32.mrf.mxu0
      %v684 = vadd.f32 0.0, %v683
      %v685 = vpop.f32.mrf.mxu0
      %v686 = vpop.f32.mrf.mxu0
      %v687 = vadd.f32 0.0, %v686
      %v688 = vpop.f32.mrf.mxu0
      %689 = vdwg.mxu0
      %690 = vst [vmem:[#allocation3] sm:$0xff] %v660
      %691 = vst [vmem:[#allocation3 + $0x8] sm:$0xff] %v663
      %692 = vst [vmem:[#allocation3 + $0x10] sm:$0xff] %v668
      %693 = vst [vmem:[#allocation3 + $0x18] sm:$0xff] %v671
      %694 = vst [vmem:[#allocation3 + $0x20] sm:$0xff] %v676
      %695 = vst [vmem:[#allocation3 + $0x28] sm:$0xff] %v679
      %696 = vst [vmem:[#allocation3 + $0x30] sm:$0xff] %v684
      %697 = vst [vmem:[#allocation3 + $0x38] sm:$0xff] %v687
      %v698 = vld [vmem:[#allocation3] sm:$0xff]
      %v699 = vld [vmem:[#allocation3 + $0x8] sm:$0xff]
      %v700 = vld [vmem:[#allocation3 + $0x10] sm:$0xff]
      %v701 = vld [vmem:[#allocation3 + $0x18] sm:$0xff]
      %v702 = vld [vmem:[#allocation3 + $0x20] sm:$0xff]
      %v703 = vld [vmem:[#allocation3 + $0x28] sm:$0xff]
      %v704 = vld [vmem:[#allocation3 + $0x30] sm:$0xff]
      %v705 = vld [vmem:[#allocation3 + $0x38] sm:$0xff]
      %v706 = vld [vmem:[#allocation2] sm:$0xf]
      %v707 = vld [vmem:[#allocation2 + $0x4] sm:$0x1]
      %v708 = vld [vmem:[#allocation2 + $0x8] sm:$0xf]
      %v709 = vld [vmem:[#allocation2 + $0xc] sm:$0x1]
      %v710 = vld [vmem:[#allocation2 + $0x10] sm:$0xf]
      %v711 = vld [vmem:[#allocation2 + $0x14] sm:$0x1]
      %v712 = vld [vmem:[#allocation2 + $0x18] sm:$0xf]
      %v713 = vld [vmem:[#allocation2 + $0x1c] sm:$0x1]
      %v714 = vld [vmem:[#allocation2 + $0x20] sm:$0xf]
      %v715 = vld [vmem:[#allocation2 + $0x24] sm:$0x1]
      %v716 = vld [vmem:[#allocation2 + $0x28] sm:$0xf]
      %v717 = vld [vmem:[#allocation2 + $0x2c] sm:$0x1]
      %v718 = vld [vmem:[#allocation2 + $0x30] sm:$0xf]
      %v719 = vld [vmem:[#allocation2 + $0x34] sm:$0x1]
      %v720 = vld [vmem:[#allocation2 + $0x38] sm:$0xf]
      %v721 = vld [vmem:[#allocation2 + $0x3c] sm:$0x1]
      %vm722 = vsmask.f32 3328
      %vm723 = vsmask.f32 7440
      %vm724 = vmor %vm722, %vm723
      %v726 = vshrl.u32 %v706, 16
      %v728 = vrot.slane %v726, 4
      %v729 = vshll.u32 %v706, 16
      %v731 = vrot.slane %v729, 5
      %v732 = vor.u32 %v728, %v731
      %v733 = vrot.slane %v732, 4
      %v735 = vshll.u32 %v707, 16
      %v737 = vrot.slane %v735, 5
      %v738 = vsel %vm724, %v733, %v737
      %v740 = vshrl.u32 %v708, 16
      %v742 = vrot.slane %v740, 4
      %v743 = vshll.u32 %v708, 16
      %v745 = vrot.slane %v743, 5
      %v746 = vor.u32 %v742, %v745
      %v747 = vrot.slane %v746, 4
      %v749 = vshll.u32 %v709, 16
      %v751 = vrot.slane %v749, 5
      %v752 = vsel %vm724, %v747, %v751
      %v754 = vshrl.u32 %v710, 16
      %v756 = vrot.slane %v754, 4
      %v757 = vshll.u32 %v710, 16
      %v759 = vrot.slane %v757, 5
      %v760 = vor.u32 %v756, %v759
      %v761 = vrot.slane %v760, 4
      %v763 = vshll.u32 %v711, 16
      %v765 = vrot.slane %v763, 5
      %v766 = vsel %vm724, %v761, %v765
      %v768 = vshrl.u32 %v712, 16
      %v770 = vrot.slane %v768, 4
      %v771 = vshll.u32 %v712, 16
      %v773 = vrot.slane %v771, 5
      %v774 = vor.u32 %v770, %v773
      %v775 = vrot.slane %v774, 4
      %v777 = vshll.u32 %v713, 16
      %v779 = vrot.slane %v777, 5
      %v780 = vsel %vm724, %v775, %v779
      %v782 = vshrl.u32 %v714, 16
      %v784 = vrot.slane %v782, 4
      %v785 = vshll.u32 %v714, 16
      %v787 = vrot.slane %v785, 5
      %v788 = vor.u32 %v784, %v787
      %v789 = vrot.slane %v788, 4
      %v791 = vshll.u32 %v715, 16
      %v793 = vrot.slane %v791, 5
      %v794 = vsel %vm724, %v789, %v793
      %v796 = vshrl.u32 %v716, 16
      %v798 = vrot.slane %v796, 4
      %v799 = vshll.u32 %v716, 16
      %v801 = vrot.slane %v799, 5
      %v802 = vor.u32 %v798, %v801
      %v803 = vrot.slane %v802, 4
      %v805 = vshll.u32 %v717, 16
      %v807 = vrot.slane %v805, 5
      %v808 = vsel %vm724, %v803, %v807
      %v810 = vshrl.u32 %v718, 16
      %v812 = vrot.slane %v810, 4
      %v813 = vshll.u32 %v718, 16
      %v815 = vrot.slane %v813, 5
      %v816 = vor.u32 %v812, %v815
      %v817 = vrot.slane %v816, 4
      %v819 = vshll.u32 %v719, 16
      %v821 = vrot.slane %v819, 5
      %v822 = vsel %vm724, %v817, %v821
      %v824 = vshrl.u32 %v720, 16
      %v826 = vrot.slane %v824, 4
      %v827 = vshll.u32 %v720, 16
      %v829 = vrot.slane %v827, 5
      %v830 = vor.u32 %v826, %v829
      %v831 = vrot.slane %v830, 4
      %v833 = vshll.u32 %v721, 16
      %v835 = vrot.slane %v833, 5
      %v836 = vsel %vm724, %v831, %v835
      %s837 = scalar_lea.vmem %s3, 64
      %v838 = vld [vmem:[%s837] sm:$0xf]
      %v839 = vld [vmem:[%s837 + $0x4] sm:$0xf]
      %v840 = vld [vmem:[%s837 + $0x8] sm:$0xf]
      %v841 = vld [vmem:[%s837 + $0xc] sm:$0xf]
      %v842 = vld [vmem:[%s837 + $0x10] sm:$0xf]
      %v843 = vld [vmem:[%s837 + $0x14] sm:$0xf]
      %v844 = vld [vmem:[%s837 + $0x18] sm:$0xf]
      %v845 = vld [vmem:[%s837 + $0x1c] sm:$0xf]
      %v846 = vld [vmem:[%s837 + $0x20] sm:$0xf]
      %v847 = vld [vmem:[%s837 + $0x24] sm:$0xf]
      %v848 = vld [vmem:[%s837 + $0x28] sm:$0xf]
      %v849 = vld [vmem:[%s837 + $0x2c] sm:$0xf]
      %v850 = vld [vmem:[%s837 + $0x30] sm:$0xf]
      %v851 = vld [vmem:[%s837 + $0x34] sm:$0xf]
      %v852 = vld [vmem:[%s837 + $0x38] sm:$0xf]
      %v853 = vld [vmem:[%s837 + $0x3c] sm:$0xf]
      %v854 = vld [vmem:[#allocation2] sm:$0xe]
      %v855 = vld [vmem:[#allocation2 + $0x8] sm:$0xe]
      %v856 = vld [vmem:[#allocation2 + $0x10] sm:$0xe]
      %v857 = vld [vmem:[#allocation2 + $0x18] sm:$0xe]
      %v858 = vld [vmem:[#allocation2 + $0x20] sm:$0xe]
      %v859 = vld [vmem:[#allocation2 + $0x28] sm:$0xe]
      %v860 = vld [vmem:[#allocation2 + $0x30] sm:$0xe]
      %v861 = vld [vmem:[#allocation2 + $0x38] sm:$0xe]
      %vm878 = vcmask 1042432
      %vm879 = vcmask 1046532
      %vm880 = vmor %vm878, %vm879
      %v881 = vrot.slane %v854, 5
      %v882 = vrot.slane %v881, 4
      %v883 = vrot.slane %v707, 5
      %v884 = vsel %vm880, %v882, %v883
      %v885 = vrot.slane %v855, 5
      %v886 = vrot.slane %v885, 4
      %v887 = vrot.slane %v709, 5
      %v888 = vsel %vm880, %v886, %v887
      %v889 = vrot.slane %v856, 5
      %v890 = vrot.slane %v889, 4
      %v891 = vrot.slane %v711, 5
      %v892 = vsel %vm880, %v890, %v891
      %v893 = vrot.slane %v857, 5
      %v894 = vrot.slane %v893, 4
      %v895 = vrot.slane %v713, 5
      %v896 = vsel %vm880, %v894, %v895
      %v897 = vrot.slane %v858, 5
      %v898 = vrot.slane %v897, 4
      %v899 = vrot.slane %v715, 5
      %v900 = vsel %vm880, %v898, %v899
      %v901 = vrot.slane %v859, 5
      %v902 = vrot.slane %v901, 4
      %v903 = vrot.slane %v717, 5
      %v904 = vsel %vm880, %v902, %v903
      %v905 = vrot.slane %v860, 5
      %v906 = vrot.slane %v905, 4
      %v907 = vrot.slane %v719, 5
      %v908 = vsel %vm880, %v906, %v907
      %v909 = vrot.slane %v861, 5
      %v910 = vrot.slane %v909, 4
      %v911 = vrot.slane %v721, 5
      %v912 = vsel %vm880, %v910, %v911
      %s913 = scalar_lea.vmem %s3, 128
      %v914 = vld [vmem:[%s913] sm:$0xf]
      %v915 = vld [vmem:[%s913 + $0x4] sm:$0xf]
      %v916 = vld [vmem:[%s913 + $0x8] sm:$0xf]
      %v917 = vld [vmem:[%s913 + $0xc] sm:$0xf]
      %v918 = vld [vmem:[%s913 + $0x10] sm:$0xf]
      %v919 = vld [vmem:[%s913 + $0x14] sm:$0xf]
      %v920 = vld [vmem:[%s913 + $0x18] sm:$0xf]
      %v921 = vld [vmem:[%s913 + $0x1c] sm:$0xf]
      %v922 = vld [vmem:[%s913 + $0x20] sm:$0xf]
      %v923 = vld [vmem:[%s913 + $0x24] sm:$0xf]
      %v924 = vld [vmem:[%s913 + $0x28] sm:$0xf]
      %v925 = vld [vmem:[%s913 + $0x2c] sm:$0xf]
      %v926 = vld [vmem:[%s913 + $0x30] sm:$0xf]
      %v927 = vld [vmem:[%s913 + $0x34] sm:$0xf]
      %v928 = vld [vmem:[%s913 + $0x38] sm:$0xf]
      %v929 = vld [vmem:[%s913 + $0x3c] sm:$0xf]
      %v930 = vunpack.c.l.b16 %v884
      %v931 = vunpack.c.l.b16 %v888
      %v932 = vunpack.c.l.b16 %v892
      %v933 = vunpack.c.l.b16 %v896
      %v934 = vunpack.c.l.b16 %v900
      %v935 = vunpack.c.l.b16 %v904
      %v936 = vunpack.c.l.b16 %v908
      %v937 = vunpack.c.l.b16 %v912
      %v938 = vpack.c.b16 %v931, %v930
      %v939 = vpack.c.b16 %v933, %v932
      %v940 = vpack.c.b16 %v935, %v934
      %v941 = vpack.c.b16 %v937, %v936
      %v962 = vunpack.c.l.b16 %v914
      %v963 = vunpack.c.l.b16 %v915
      %v964 = vunpack.c.l.b16 %v916
      %v965 = vunpack.c.l.b16 %v917
      %v966 = vunpack.c.l.b16 %v918
      %v967 = vunpack.c.l.b16 %v919
      %v968 = vunpack.c.l.b16 %v920
      %v969 = vunpack.c.l.b16 %v921
      %v970 = vunpack.c.l.b16 %v922
      %v971 = vunpack.c.l.b16 %v923
      %v972 = vunpack.c.l.b16 %v924
      %v973 = vunpack.c.l.b16 %v925
      %v974 = vunpack.c.l.b16 %v926
      %v975 = vunpack.c.l.b16 %v927
      %v976 = vunpack.c.l.b16 %v928
      %v977 = vunpack.c.l.b16 %v929
      %v978 = vpack.c.b16 %v963, %v962
      %v979 = vpack.c.b16 %v965, %v964
      %v980 = vpack.c.b16 %v967, %v966
      %v981 = vpack.c.b16 %v969, %v968
      %v982 = vpack.c.b16 %v971, %v970
      %v983 = vpack.c.b16 %v973, %v972
      %v984 = vpack.c.b16 %v975, %v974
      %v985 = vpack.c.b16 %v977, %v976
      %994 = vmatprep.subr.bf16.mxu0 0
      %995 = vmatpush1.bf16.msra.mxu0 %v985
      %996 = vmatprep.subr.bf16.mxu0 0
      %997 = vmatpush1.bf16.msra.mxu0 %v984
      %998 = vmatprep.subr.bf16.mxu0 0
      %999 = vmatpush1.bf16.msra.mxu0 %v983
      %1000 = vmatprep.subr.bf16.mxu0 0
      %1001 = vmatpush1.bf16.msra.mxu0 %v982
      %1002 = vmatprep.subr.bf16.mxu0 0
      %1003 = vmatpush1.bf16.msra.mxu0 %v981
      %1004 = vmatprep.subr.bf16.mxu0 0
      %1005 = vmatpush1.bf16.msra.mxu0 %v980
      %1006 = vmatprep.subr.bf16.mxu0 0
      %1007 = vmatpush1.bf16.msra.mxu0 %v979
      %1008 = vmatprep.subr.bf16.mxu0 0
      %1009 = vmatpush1.bf16.msra.mxu0 %v978
      %1010 = vmatprep.subr.bf16.mxu0 0
      %1011 = vmatpush2.bf16.msra.mxu0 0
      %1012 = vmatprep.subr.bf16.mxu0 0
      %1013 = vmatpush2.bf16.msra.mxu0 0
      %1014 = vmatprep.subr.bf16.mxu0 0
      %1015 = vmatpush2.bf16.msra.mxu0 0
      %1016 = vmatprep.subr.bf16.mxu0 0
      %1017 = vmatpush2.bf16.msra.mxu0 0
      %1018 = vmatprep.subr.bf16.mxu0 0
      %1019 = vmatpush2.bf16.msra.mxu0 0
      %1020 = vmatprep.subr.bf16.mxu0 0
      %1021 = vmatpush2.bf16.msra.mxu0 0
      %1022 = vmatprep.subr.bf16.mxu0 0
      %1023 = vmatpush2.bf16.msra.mxu0 0
      %1024 = vmatprep.subr.bf16.mxu0 0
      %1025 = vmatpush2.bf16.msra.mxu0 0
      %1026 = vmatprep.mubr.bf16.mxu0 0
      %1027 = vmatmul.mubr.bf16.gmra.mxu0 %v938
      %v1028 = vpop.f32.mrf.mxu0
      %v1029 = vadd.f32 0.0, %v1028
      %v1030 = vpop.f32.mrf.mxu0
      %v1031 = vpop.f32.mrf.mxu0
      %v1032 = vadd.f32 0.0, %v1031
      %v1033 = vpop.f32.mrf.mxu0
      %1034 = vmatprep.mubr.bf16.mxu0 0
      %1035 = vmatmul.mubr.bf16.gmra.mxu0 %v939
      %v1036 = vpop.f32.mrf.mxu0
      %v1037 = vadd.f32 0.0, %v1036
      %v1038 = vpop.f32.mrf.mxu0
      %v1039 = vpop.f32.mrf.mxu0
      %v1040 = vadd.f32 0.0, %v1039
      %v1041 = vpop.f32.mrf.mxu0
      %1042 = vmatprep.mubr.bf16.mxu0 0
      %1043 = vmatmul.mubr.bf16.gmra.mxu0 %v940
      %v1044 = vpop.f32.mrf.mxu0
      %v1045 = vadd.f32 0.0, %v1044
      %v1046 = vpop.f32.mrf.mxu0
      %v1047 = vpop.f32.mrf.mxu0
      %v1048 = vadd.f32 0.0, %v1047
      %v1049 = vpop.f32.mrf.mxu0
      %1050 = vmatprep.mubr.bf16.mxu0 0
      %1051 = vmatmul.mubr.bf16.gmra.mxu0 %v941
      %v1052 = vpop.f32.mrf.mxu0
      %v1053 = vadd.f32 0.0, %v1052
      %v1054 = vpop.f32.mrf.mxu0
      %v1055 = vpop.f32.mrf.mxu0
      %v1056 = vadd.f32 0.0, %v1055
      %v1057 = vpop.f32.mrf.mxu0
      %1058 = vdwg.mxu0
      %v1059 = vunpack.c.l.b16 %v738
      %v1060 = vunpack.c.l.b16 %v752
      %v1061 = vunpack.c.l.b16 %v766
      %v1062 = vunpack.c.l.b16 %v780
      %v1063 = vunpack.c.l.b16 %v794
      %v1064 = vunpack.c.l.b16 %v808
      %v1065 = vunpack.c.l.b16 %v822
      %v1066 = vunpack.c.l.b16 %v836
      %v1067 = vpack.c.b16 %v1060, %v1059
      %v1068 = vpack.c.b16 %v1062, %v1061
      %v1069 = vpack.c.b16 %v1064, %v1063
      %v1070 = vpack.c.b16 %v1066, %v1065
      %v1091 = vunpack.c.l.b16 %v838
      %v1092 = vunpack.c.l.b16 %v839
      %v1093 = vunpack.c.l.b16 %v840
      %v1094 = vunpack.c.l.b16 %v841
      %v1095 = vunpack.c.l.b16 %v842
      %v1096 = vunpack.c.l.b16 %v843
      %v1097 = vunpack.c.l.b16 %v844
      %v1098 = vunpack.c.l.b16 %v845
      %v1099 = vunpack.c.l.b16 %v846
      %v1100 = vunpack.c.l.b16 %v847
      %v1101 = vunpack.c.l.b16 %v848
      %v1102 = vunpack.c.l.b16 %v849
      %v1103 = vunpack.c.l.b16 %v850
      %v1104 = vunpack.c.l.b16 %v851
      %v1105 = vunpack.c.l.b16 %v852
      %v1106 = vunpack.c.l.b16 %v853
      %v1107 = vpack.c.b16 %v1092, %v1091
      %v1108 = vpack.c.b16 %v1094, %v1093
      %v1109 = vpack.c.b16 %v1096, %v1095
      %v1110 = vpack.c.b16 %v1098, %v1097
      %v1111 = vpack.c.b16 %v1100, %v1099
      %v1112 = vpack.c.b16 %v1102, %v1101
      %v1113 = vpack.c.b16 %v1104, %v1103
      %v1114 = vpack.c.b16 %v1106, %v1105
      %1123 = vmatprep.subr.bf16.mxu0 0
      %1124 = vmatpush1.bf16.msra.mxu0 %v1114
      %1125 = vmatprep.subr.bf16.mxu0 0
      %1126 = vmatpush1.bf16.msra.mxu0 %v1113
      %1127 = vmatprep.subr.bf16.mxu0 0
      %1128 = vmatpush1.bf16.msra.mxu0 %v1112
      %1129 = vmatprep.subr.bf16.mxu0 0
      %1130 = vmatpush1.bf16.msra.mxu0 %v1111
      %1131 = vmatprep.subr.bf16.mxu0 0
      %1132 = vmatpush1.bf16.msra.mxu0 %v1110
      %1133 = vmatprep.subr.bf16.mxu0 0
      %1134 = vmatpush1.bf16.msra.mxu0 %v1109
      %1135 = vmatprep.subr.bf16.mxu0 0
      %1136 = vmatpush1.bf16.msra.mxu0 %v1108
      %1137 = vmatprep.subr.bf16.mxu0 0
      %1138 = vmatpush1.bf16.msra.mxu0 %v1107
      %1139 = vmatprep.subr.bf16.mxu0 0
      %1140 = vmatpush2.bf16.msra.mxu0 0
      %1141 = vmatprep.subr.bf16.mxu0 0
      %1142 = vmatpush2.bf16.msra.mxu0 0
      %1143 = vmatprep.subr.bf16.mxu0 0
      %1144 = vmatpush2.bf16.msra.mxu0 0
      %1145 = vmatprep.subr.bf16.mxu0 0
      %1146 = vmatpush2.bf16.msra.mxu0 0
      %1147 = vmatprep.subr.bf16.mxu0 0
      %1148 = vmatpush2.bf16.msra.mxu0 0
      %1149 = vmatprep.subr.bf16.mxu0 0
      %1150 = vmatpush2.bf16.msra.mxu0 0
      %1151 = vmatprep.subr.bf16.mxu0 0
      %1152 = vmatpush2.bf16.msra.mxu0 0
      %1153 = vmatprep.subr.bf16.mxu0 0
      %1154 = vmatpush2.bf16.msra.mxu0 0
      %1155 = vmatprep.mubr.bf16.mxu0 0
      %1156 = vmatmul.mubr.bf16.gmra.mxu0 %v1067
      %v1157 = vpop.f32.mrf.mxu0
      %v1158 = vadd.f32 %v1029, %v1157
      %v1159 = vpop.f32.mrf.mxu0
      %v1160 = vpop.f32.mrf.mxu0
      %v1161 = vadd.f32 %v1032, %v1160
      %v1162 = vpop.f32.mrf.mxu0
      %1163 = vmatprep.mubr.bf16.mxu0 0
      %1164 = vmatmul.mubr.bf16.gmra.mxu0 %v1068
      %v1165 = vpop.f32.mrf.mxu0
      %v1166 = vadd.f32 %v1037, %v1165
      %v1167 = vpop.f32.mrf.mxu0
      %v1168 = vpop.f32.mrf.mxu0
      %v1169 = vadd.f32 %v1040, %v1168
      %v1170 = vpop.f32.mrf.mxu0
      %1171 = vmatprep.mubr.bf16.mxu0 0
      %1172 = vmatmul.mubr.bf16.gmra.mxu0 %v1069
      %v1173 = vpop.f32.mrf.mxu0
      %v1174 = vadd.f32 %v1045, %v1173
      %v1175 = vpop.f32.mrf.mxu0
      %v1176 = vpop.f32.mrf.mxu0
      %v1177 = vadd.f32 %v1048, %v1176
      %v1178 = vpop.f32.mrf.mxu0
      %1179 = vmatprep.mubr.bf16.mxu0 0
      %1180 = vmatmul.mubr.bf16.gmra.mxu0 %v1070
      %v1181 = vpop.f32.mrf.mxu0
      %v1182 = vadd.f32 %v1053, %v1181
      %v1183 = vpop.f32.mrf.mxu0
      %v1184 = vpop.f32.mrf.mxu0
      %v1185 = vadd.f32 %v1056, %v1184
      %v1186 = vpop.f32.mrf.mxu0
      %1187 = vdwg.mxu0
      %v1188 = vadd.f32 %v698, %v1158
      %v1189 = vadd.f32 %v699, %v1161
      %v1190 = vadd.f32 %v700, %v1166
      %v1191 = vadd.f32 %v701, %v1169
      %v1192 = vadd.f32 %v702, %v1174
      %v1193 = vadd.f32 %v703, %v1177
      %v1194 = vadd.f32 %v704, %v1182
      %v1195 = vadd.f32 %v705, %v1185
      %1196 = vst [vmem:[#allocation3] sm:$0xff] %v1188
      %1197 = vst [vmem:[#allocation3 + $0x8] sm:$0xff] %v1189
      %1198 = vst [vmem:[#allocation3 + $0x10] sm:$0xff] %v1190
      %1199 = vst [vmem:[#allocation3 + $0x18] sm:$0xff] %v1191
      %1200 = vst [vmem:[#allocation3 + $0x20] sm:$0xff] %v1192
      %1201 = vst [vmem:[#allocation3 + $0x28] sm:$0xff] %v1193
      %1202 = vst [vmem:[#allocation3 + $0x30] sm:$0xff] %v1194
      %1203 = vst [vmem:[#allocation3 + $0x38] sm:$0xff] %v1195
      %v1204 = vld [vmem:[#allocation3] sm:$0xff]
      %v1205 = vld [vmem:[#allocation3 + $0x8] sm:$0xff]
      %v1206 = vld [vmem:[#allocation3 + $0x10] sm:$0xff]
      %v1207 = vld [vmem:[#allocation3 + $0x18] sm:$0xff]
      %v1208 = vld [vmem:[#allocation3 + $0x20] sm:$0xff]
      %v1209 = vld [vmem:[#allocation3 + $0x28] sm:$0xff]
      %v1210 = vld [vmem:[#allocation3 + $0x30] sm:$0xff]
      %v1211 = vld [vmem:[#allocation3 + $0x38] sm:$0xff]
      %v1212 = vld [vmem:[%s258] sm:$0xf]
      %v1213 = vld [vmem:[%s258 + $0x8] sm:$0xf]
      %v1214 = vld [vmem:[%s258 + $0x10] sm:$0xf]
      %v1215 = vld [vmem:[%s258 + $0x18] sm:$0xf]
      %v1216 = vld [vmem:[%s258 + $0x20] sm:$0xf]
      %v1217 = vld [vmem:[%s258 + $0x28] sm:$0xf]
      %v1218 = vld [vmem:[%s258 + $0x30] sm:$0xf]
      %v1219 = vld [vmem:[%s258 + $0x38] sm:$0xf]
      %s1220 = scalar_lea.vmem %s3, 192
      %v1221 = vld [vmem:[%s1220] sm:$0xf]
      %v1222 = vld [vmem:[%s1220 + $0x4] sm:$0xf]
      %v1223 = vld [vmem:[%s1220 + $0x8] sm:$0xf]
      %v1224 = vld [vmem:[%s1220 + $0xc] sm:$0xf]
      %v1225 = vld [vmem:[%s1220 + $0x10] sm:$0xf]
      %v1226 = vld [vmem:[%s1220 + $0x14] sm:$0xf]
      %v1227 = vld [vmem:[%s1220 + $0x18] sm:$0xf]
      %v1228 = vld [vmem:[%s1220 + $0x1c] sm:$0xf]
      %v1229 = vld [vmem:[%s1220 + $0x20] sm:$0xf]
      %v1230 = vld [vmem:[%s1220 + $0x24] sm:$0xf]
      %v1231 = vld [vmem:[%s1220 + $0x28] sm:$0xf]
      %v1232 = vld [vmem:[%s1220 + $0x2c] sm:$0xf]
      %v1233 = vld [vmem:[%s1220 + $0x30] sm:$0xf]
      %v1234 = vld [vmem:[%s1220 + $0x34] sm:$0xf]
      %v1235 = vld [vmem:[%s1220 + $0x38] sm:$0xf]
      %v1236 = vld [vmem:[%s1220 + $0x3c] sm:$0xf]
      %v1237 = vld [vmem:[%s258 + $0x4] sm:$0x1]
      %v1238 = vld [vmem:[%s258 + $0xc] sm:$0x1]
      %v1239 = vld [vmem:[%s258 + $0x14] sm:$0x1]
      %v1240 = vld [vmem:[%s258 + $0x1c] sm:$0x1]
      %v1241 = vld [vmem:[%s258 + $0x24] sm:$0x1]
      %v1242 = vld [vmem:[%s258 + $0x2c] sm:$0x1]
      %v1243 = vld [vmem:[%s258 + $0x34] sm:$0x1]
      %v1244 = vld [vmem:[%s258 + $0x3c] sm:$0x1]
      %v1246 = vshrl.u32 %v1212, 16
      %v1248 = vrot.slane %v1246, 4
      %v1249 = vshll.u32 %v1212, 16
      %v1251 = vrot.slane %v1249, 5
      %v1252 = vor.u32 %v1248, %v1251
      %v1253 = vrot.slane %v1252, 4
      %v1255 = vshll.u32 %v1237, 16
      %v1257 = vrot.slane %v1255, 5
      %v1258 = vsel %vm724, %v1253, %v1257
      %v1260 = vshrl.u32 %v1213, 16
      %v1262 = vrot.slane %v1260, 4
      %v1263 = vshll.u32 %v1213, 16
      %v1265 = vrot.slane %v1263, 5
      %v1266 = vor.u32 %v1262, %v1265
      %v1267 = vrot.slane %v1266, 4
      %v1269 = vshll.u32 %v1238, 16
      %v1271 = vrot.slane %v1269, 5
      %v1272 = vsel %vm724, %v1267, %v1271
      %v1274 = vshrl.u32 %v1214, 16
      %v1276 = vrot.slane %v1274, 4
      %v1277 = vshll.u32 %v1214, 16
      %v1279 = vrot.slane %v1277, 5
      %v1280 = vor.u32 %v1276, %v1279
      %v1281 = vrot.slane %v1280, 4
      %v1283 = vshll.u32 %v1239, 16
      %v1285 = vrot.slane %v1283, 5
      %v1286 = vsel %vm724, %v1281, %v1285
      %v1288 = vshrl.u32 %v1215, 16
      %v1290 = vrot.slane %v1288, 4
      %v1291 = vshll.u32 %v1215, 16
      %v1293 = vrot.slane %v1291, 5
      %v1294 = vor.u32 %v1290, %v1293
      %v1295 = vrot.slane %v1294, 4
      %v1297 = vshll.u32 %v1240, 16
      %v1299 = vrot.slane %v1297, 5
      %v1300 = vsel %vm724, %v1295, %v1299
      %v1302 = vshrl.u32 %v1216, 16
      %v1304 = vrot.slane %v1302, 4
      %v1305 = vshll.u32 %v1216, 16
      %v1307 = vrot.slane %v1305, 5
      %v1308 = vor.u32 %v1304, %v1307
      %v1309 = vrot.slane %v1308, 4
      %v1311 = vshll.u32 %v1241, 16
      %v1313 = vrot.slane %v1311, 5
      %v1314 = vsel %vm724, %v1309, %v1313
      %v1316 = vshrl.u32 %v1217, 16
      %v1318 = vrot.slane %v1316, 4
      %v1319 = vshll.u32 %v1217, 16
      %v1321 = vrot.slane %v1319, 5
      %v1322 = vor.u32 %v1318, %v1321
      %v1323 = vrot.slane %v1322, 4
      %v1325 = vshll.u32 %v1242, 16
      %v1327 = vrot.slane %v1325, 5
      %v1328 = vsel %vm724, %v1323, %v1327
      %v1330 = vshrl.u32 %v1218, 16
      %v1332 = vrot.slane %v1330, 4
      %v1333 = vshll.u32 %v1218, 16
      %v1335 = vrot.slane %v1333, 5
      %v1336 = vor.u32 %v1332, %v1335
      %v1337 = vrot.slane %v1336, 4
      %v1339 = vshll.u32 %v1243, 16
      %v1341 = vrot.slane %v1339, 5
      %v1342 = vsel %vm724, %v1337, %v1341
      %v1344 = vshrl.u32 %v1219, 16
      %v1346 = vrot.slane %v1344, 4
      %v1347 = vshll.u32 %v1219, 16
      %v1349 = vrot.slane %v1347, 5
      %v1350 = vor.u32 %v1346, %v1349
      %v1351 = vrot.slane %v1350, 4
      %v1353 = vshll.u32 %v1244, 16
      %v1355 = vrot.slane %v1353, 5
      %v1356 = vsel %vm724, %v1351, %v1355
      %s1357 = scalar_lea.vmem %s3, 256
      %v1358 = vld [vmem:[%s1357] sm:$0xf]
      %v1359 = vld [vmem:[%s1357 + $0x4] sm:$0xf]
      %v1360 = vld [vmem:[%s1357 + $0x8] sm:$0xf]
      %v1361 = vld [vmem:[%s1357 + $0xc] sm:$0xf]
      %v1362 = vld [vmem:[%s1357 + $0x10] sm:$0xf]
      %v1363 = vld [vmem:[%s1357 + $0x14] sm:$0xf]
      %v1364 = vld [vmem:[%s1357 + $0x18] sm:$0xf]
      %v1365 = vld [vmem:[%s1357 + $0x1c] sm:$0xf]
      %v1366 = vld [vmem:[%s1357 + $0x20] sm:$0xf]
      %v1367 = vld [vmem:[%s1357 + $0x24] sm:$0xf]
      %v1368 = vld [vmem:[%s1357 + $0x28] sm:$0xf]
      %v1369 = vld [vmem:[%s1357 + $0x2c] sm:$0xf]
      %v1370 = vld [vmem:[%s1357 + $0x30] sm:$0xf]
      %v1371 = vld [vmem:[%s1357 + $0x34] sm:$0xf]
      %v1372 = vld [vmem:[%s1357 + $0x38] sm:$0xf]
      %v1373 = vld [vmem:[%s1357 + $0x3c] sm:$0xf]
      %v1374 = vunpack.c.l.b16 %v1258
      %v1375 = vunpack.c.l.b16 %v1272
      %v1376 = vunpack.c.l.b16 %v1286
      %v1377 = vunpack.c.l.b16 %v1300
      %v1378 = vunpack.c.l.b16 %v1314
      %v1379 = vunpack.c.l.b16 %v1328
      %v1380 = vunpack.c.l.b16 %v1342
      %v1381 = vunpack.c.l.b16 %v1356
      %v1382 = vpack.c.b16 %v1375, %v1374
      %v1383 = vpack.c.b16 %v1377, %v1376
      %v1384 = vpack.c.b16 %v1379, %v1378
      %v1385 = vpack.c.b16 %v1381, %v1380
      %v1406 = vunpack.c.l.b16 %v1358
      %v1407 = vunpack.c.l.b16 %v1359
      %v1408 = vunpack.c.l.b16 %v1360
      %v1409 = vunpack.c.l.b16 %v1361
      %v1410 = vunpack.c.l.b16 %v1362
      %v1411 = vunpack.c.l.b16 %v1363
      %v1412 = vunpack.c.l.b16 %v1364
      %v1413 = vunpack.c.l.b16 %v1365
      %v1414 = vunpack.c.l.b16 %v1366
      %v1415 = vunpack.c.l.b16 %v1367
      %v1416 = vunpack.c.l.b16 %v1368
      %v1417 = vunpack.c.l.b16 %v1369
      %v1418 = vunpack.c.l.b16 %v1370
      %v1419 = vunpack.c.l.b16 %v1371
      %v1420 = vunpack.c.l.b16 %v1372
      %v1421 = vunpack.c.l.b16 %v1373
      %v1422 = vpack.c.b16 %v1407, %v1406
      %v1423 = vpack.c.b16 %v1409, %v1408
      %v1424 = vpack.c.b16 %v1411, %v1410
      %v1425 = vpack.c.b16 %v1413, %v1412
      %v1426 = vpack.c.b16 %v1415, %v1414
      %v1427 = vpack.c.b16 %v1417, %v1416
      %v1428 = vpack.c.b16 %v1419, %v1418
      %v1429 = vpack.c.b16 %v1421, %v1420
      %1438 = vmatprep.subr.bf16.mxu0 0
      %1439 = vmatpush1.bf16.msra.mxu0 %v1429
      %1440 = vmatprep.subr.bf16.mxu0 0
      %1441 = vmatpush1.bf16.msra.mxu0 %v1428
      %1442 = vmatprep.subr.bf16.mxu0 0
      %1443 = vmatpush1.bf16.msra.mxu0 %v1427
      %1444 = vmatprep.subr.bf16.mxu0 0
      %1445 = vmatpush1.bf16.msra.mxu0 %v1426
      %1446 = vmatprep.subr.bf16.mxu0 0
      %1447 = vmatpush1.bf16.msra.mxu0 %v1425
      %1448 = vmatprep.subr.bf16.mxu0 0
      %1449 = vmatpush1.bf16.msra.mxu0 %v1424
      %1450 = vmatprep.subr.bf16.mxu0 0
      %1451 = vmatpush1.bf16.msra.mxu0 %v1423
      %1452 = vmatprep.subr.bf16.mxu0 0
      %1453 = vmatpush1.bf16.msra.mxu0 %v1422
      %1454 = vmatprep.subr.bf16.mxu0 0
      %1455 = vmatpush2.bf16.msra.mxu0 0
      %1456 = vmatprep.subr.bf16.mxu0 0
      %1457 = vmatpush2.bf16.msra.mxu0 0
      %1458 = vmatprep.subr.bf16.mxu0 0
      %1459 = vmatpush2.bf16.msra.mxu0 0
      %1460 = vmatprep.subr.bf16.mxu0 0
      %1461 = vmatpush2.bf16.msra.mxu0 0
      %1462 = vmatprep.subr.bf16.mxu0 0
      %1463 = vmatpush2.bf16.msra.mxu0 0
      %1464 = vmatprep.subr.bf16.mxu0 0
      %1465 = vmatpush2.bf16.msra.mxu0 0
      %1466 = vmatprep.subr.bf16.mxu0 0
      %1467 = vmatpush2.bf16.msra.mxu0 0
      %1468 = vmatprep.subr.bf16.mxu0 0
      %1469 = vmatpush2.bf16.msra.mxu0 0
      %1470 = vmatprep.mubr.bf16.mxu0 0
      %1471 = vmatmul.mubr.bf16.gmra.mxu0 %v1382
      %v1472 = vpop.f32.mrf.mxu0
      %v1473 = vadd.f32 0.0, %v1472
      %v1474 = vpop.f32.mrf.mxu0
      %v1475 = vpop.f32.mrf.mxu0
      %v1476 = vadd.f32 0.0, %v1475
      %v1477 = vpop.f32.mrf.mxu0
      %1478 = vmatprep.mubr.bf16.mxu0 0
      %1479 = vmatmul.mubr.bf16.gmra.mxu0 %v1383
      %v1480 = vpop.f32.mrf.mxu0
      %v1481 = vadd.f32 0.0, %v1480
      %v1482 = vpop.f32.mrf.mxu0
      %v1483 = vpop.f32.mrf.mxu0
      %v1484 = vadd.f32 0.0, %v1483
      %v1485 = vpop.f32.mrf.mxu0
      %1486 = vmatprep.mubr.bf16.mxu0 0
      %1487 = vmatmul.mubr.bf16.gmra.mxu0 %v1384
      %v1488 = vpop.f32.mrf.mxu0
      %v1489 = vadd.f32 0.0, %v1488
      %v1490 = vpop.f32.mrf.mxu0
      %v1491 = vpop.f32.mrf.mxu0
      %v1492 = vadd.f32 0.0, %v1491
      %v1493 = vpop.f32.mrf.mxu0
      %1494 = vmatprep.mubr.bf16.mxu0 0
      %1495 = vmatmul.mubr.bf16.gmra.mxu0 %v1385
      %v1496 = vpop.f32.mrf.mxu0
      %v1497 = vadd.f32 0.0, %v1496
      %v1498 = vpop.f32.mrf.mxu0
      %v1499 = vpop.f32.mrf.mxu0
      %v1500 = vadd.f32 0.0, %v1499
      %v1501 = vpop.f32.mrf.mxu0
      %1502 = vdwg.mxu0
      %v1511 = vunpack.c.l.b16 %v1212
      %v1512 = vunpack.c.l.b16 %v1213
      %v1513 = vunpack.c.l.b16 %v1214
      %v1514 = vunpack.c.l.b16 %v1215
      %v1515 = vunpack.c.l.b16 %v1216
      %v1516 = vunpack.c.l.b16 %v1217
      %v1517 = vunpack.c.l.b16 %v1218
      %v1518 = vunpack.c.l.b16 %v1219
      %v1519 = vpack.c.b16 %v1512, %v1511
      %v1520 = vpack.c.b16 %v1514, %v1513
      %v1521 = vpack.c.b16 %v1516, %v1515
      %v1522 = vpack.c.b16 %v1518, %v1517
      %v1543 = vunpack.c.l.b16 %v1221
      %v1544 = vunpack.c.l.b16 %v1222
      %v1545 = vunpack.c.l.b16 %v1223
      %v1546 = vunpack.c.l.b16 %v1224
      %v1547 = vunpack.c.l.b16 %v1225
      %v1548 = vunpack.c.l.b16 %v1226
      %v1549 = vunpack.c.l.b16 %v1227
      %v1550 = vunpack.c.l.b16 %v1228
      %v1551 = vunpack.c.l.b16 %v1229
      %v1552 = vunpack.c.l.b16 %v1230
      %v1553 = vunpack.c.l.b16 %v1231
      %v1554 = vunpack.c.l.b16 %v1232
      %v1555 = vunpack.c.l.b16 %v1233
      %v1556 = vunpack.c.l.b16 %v1234
      %v1557 = vunpack.c.l.b16 %v1235
      %v1558 = vunpack.c.l.b16 %v1236
      %v1559 = vpack.c.b16 %v1544, %v1543
      %v1560 = vpack.c.b16 %v1546, %v1545
      %v1561 = vpack.c.b16 %v1548, %v1547
      %v1562 = vpack.c.b16 %v1550, %v1549
      %v1563 = vpack.c.b16 %v1552, %v1551
      %v1564 = vpack.c.b16 %v1554, %v1553
      %v1565 = vpack.c.b16 %v1556, %v1555
      %v1566 = vpack.c.b16 %v1558, %v1557
      %1575 = vmatprep.subr.bf16.mxu0 0
      %1576 = vmatpush1.bf16.msra.mxu0 %v1566
      %1577 = vmatprep.subr.bf16.mxu0 0
      %1578 = vmatpush1.bf16.msra.mxu0 %v1565
      %1579 = vmatprep.subr.bf16.mxu0 0
      %1580 = vmatpush1.bf16.msra.mxu0 %v1564
      %1581 = vmatprep.subr.bf16.mxu0 0
      %1582 = vmatpush1.bf16.msra.mxu0 %v1563
      %1583 = vmatprep.subr.bf16.mxu0 0
      %1584 = vmatpush1.bf16.msra.mxu0 %v1562
      %1585 = vmatprep.subr.bf16.mxu0 0
      %1586 = vmatpush1.bf16.msra.mxu0 %v1561
      %1587 = vmatprep.subr.bf16.mxu0 0
      %1588 = vmatpush1.bf16.msra.mxu0 %v1560
      %1589 = vmatprep.subr.bf16.mxu0 0
      %1590 = vmatpush1.bf16.msra.mxu0 %v1559
      %1591 = vmatprep.subr.bf16.mxu0 0
      %1592 = vmatpush2.bf16.msra.mxu0 0
      %1593 = vmatprep.subr.bf16.mxu0 0
      %1594 = vmatpush2.bf16.msra.mxu0 0
      %1595 = vmatprep.subr.bf16.mxu0 0
      %1596 = vmatpush2.bf16.msra.mxu0 0
      %1597 = vmatprep.subr.bf16.mxu0 0
      %1598 = vmatpush2.bf16.msra.mxu0 0
      %1599 = vmatprep.subr.bf16.mxu0 0
      %1600 = vmatpush2.bf16.msra.mxu0 0
      %1601 = vmatprep.subr.bf16.mxu0 0
      %1602 = vmatpush2.bf16.msra.mxu0 0
      %1603 = vmatprep.subr.bf16.mxu0 0
      %1604 = vmatpush2.bf16.msra.mxu0 0
      %1605 = vmatprep.subr.bf16.mxu0 0
      %1606 = vmatpush2.bf16.msra.mxu0 0
      %1607 = vmatprep.mubr.bf16.mxu0 0
      %1608 = vmatmul.mubr.bf16.gmra.mxu0 %v1519
      %v1609 = vpop.f32.mrf.mxu0
      %v1610 = vadd.f32 %v1473, %v1609
      %v1611 = vpop.f32.mrf.mxu0
      %v1612 = vpop.f32.mrf.mxu0
      %v1613 = vadd.f32 %v1476, %v1612
      %v1614 = vpop.f32.mrf.mxu0
      %1615 = vmatprep.mubr.bf16.mxu0 0
      %1616 = vmatmul.mubr.bf16.gmra.mxu0 %v1520
      %v1617 = vpop.f32.mrf.mxu0
      %v1618 = vadd.f32 %v1481, %v1617
      %v1619 = vpop.f32.mrf.mxu0
      %v1620 = vpop.f32.mrf.mxu0
      %v1621 = vadd.f32 %v1484, %v1620
      %v1622 = vpop.f32.mrf.mxu0
      %1623 = vmatprep.mubr.bf16.mxu0 0
      %1624 = vmatmul.mubr.bf16.gmra.mxu0 %v1521
      %v1625 = vpop.f32.mrf.mxu0
      %v1626 = vadd.f32 %v1489, %v1625
      %v1627 = vpop.f32.mrf.mxu0
      %v1628 = vpop.f32.mrf.mxu0
      %v1629 = vadd.f32 %v1492, %v1628
      %v1630 = vpop.f32.mrf.mxu0
      %1631 = vmatprep.mubr.bf16.mxu0 0
      %1632 = vmatmul.mubr.bf16.gmra.mxu0 %v1522
      %v1633 = vpop.f32.mrf.mxu0
      %v1634 = vadd.f32 %v1497, %v1633
      %v1635 = vpop.f32.mrf.mxu0
      %v1636 = vpop.f32.mrf.mxu0
      %v1637 = vadd.f32 %v1500, %v1636
      %v1638 = vpop.f32.mrf.mxu0
      %1639 = vdwg.mxu0
      %v1640 = vadd.f32 %v1204, %v1610
      %v1641 = vadd.f32 %v1205, %v1613
      %v1642 = vadd.f32 %v1206, %v1618
      %v1643 = vadd.f32 %v1207, %v1621
      %v1644 = vadd.f32 %v1208, %v1626
      %v1645 = vadd.f32 %v1209, %v1629
      %v1646 = vadd.f32 %v1210, %v1634
      %v1647 = vadd.f32 %v1211, %v1637
      %1648 = vst [vmem:[#allocation3] sm:$0xff] %v1640
      %1649 = vst [vmem:[#allocation3 + $0x8] sm:$0xff] %v1641
      %1650 = vst [vmem:[#allocation3 + $0x10] sm:$0xff] %v1642
      %1651 = vst [vmem:[#allocation3 + $0x18] sm:$0xff] %v1643
      %1652 = vst [vmem:[#allocation3 + $0x20] sm:$0xff] %v1644
      %1653 = vst [vmem:[#allocation3 + $0x28] sm:$0xff] %v1645
      %1654 = vst [vmem:[#allocation3 + $0x30] sm:$0xff] %v1646
      %1655 = vst [vmem:[#allocation3 + $0x38] sm:$0xff] %v1647
      %v1656 = vld [vmem:[#allocation3] sm:$0xff]
      %v1657 = vld [vmem:[#allocation3 + $0x8] sm:$0xff]
      %v1658 = vld [vmem:[#allocation3 + $0x10] sm:$0xff]
      %v1659 = vld [vmem:[#allocation3 + $0x18] sm:$0xff]
      %v1660 = vld [vmem:[#allocation3 + $0x20] sm:$0xff]
      %v1661 = vld [vmem:[#allocation3 + $0x28] sm:$0xff]
      %v1662 = vld [vmem:[#allocation3 + $0x30] sm:$0xff]
      %v1663 = vld [vmem:[#allocation3 + $0x38] sm:$0xff]
      %v1664 = vld [vmem:[%s258] sm:$0xe]
      %v1665 = vld [vmem:[%s258 + $0x4] sm:$0x1]
      %v1666 = vld [vmem:[%s258 + $0x8] sm:$0xe]
      %v1667 = vld [vmem:[%s258 + $0xc] sm:$0x1]
      %v1668 = vld [vmem:[%s258 + $0x10] sm:$0xe]
      %v1669 = vld [vmem:[%s258 + $0x14] sm:$0x1]
      %v1670 = vld [vmem:[%s258 + $0x18] sm:$0xe]
      %v1671 = vld [vmem:[%s258 + $0x1c] sm:$0x1]
      %v1672 = vld [vmem:[%s258 + $0x20] sm:$0xe]
      %v1673 = vld [vmem:[%s258 + $0x24] sm:$0x1]
      %v1674 = vld [vmem:[%s258 + $0x28] sm:$0xe]
      %v1675 = vld [vmem:[%s258 + $0x2c] sm:$0x1]
      %v1676 = vld [vmem:[%s258 + $0x30] sm:$0xe]
      %v1677 = vld [vmem:[%s258 + $0x34] sm:$0x1]
      %v1678 = vld [vmem:[%s258 + $0x38] sm:$0xe]
      %v1679 = vld [vmem:[%s258 + $0x3c] sm:$0x1]
      %v1696 = vrot.slane %v1664, 5
      %v1697 = vrot.slane %v1696, 4
      %v1698 = vrot.slane %v1665, 5
      %v1699 = vsel %vm880, %v1697, %v1698
      %v1700 = vrot.slane %v1666, 5
      %v1701 = vrot.slane %v1700, 4
      %v1702 = vrot.slane %v1667, 5
      %v1703 = vsel %vm880, %v1701, %v1702
      %v1704 = vrot.slane %v1668, 5
      %v1705 = vrot.slane %v1704, 4
      %v1706 = vrot.slane %v1669, 5
      %v1707 = vsel %vm880, %v1705, %v1706
      %v1708 = vrot.slane %v1670, 5
      %v1709 = vrot.slane %v1708, 4
      %v1710 = vrot.slane %v1671, 5
      %v1711 = vsel %vm880, %v1709, %v1710
      %v1712 = vrot.slane %v1672, 5
      %v1713 = vrot.slane %v1712, 4
      %v1714 = vrot.slane %v1673, 5
      %v1715 = vsel %vm880, %v1713, %v1714
      %v1716 = vrot.slane %v1674, 5
      %v1717 = vrot.slane %v1716, 4
      %v1718 = vrot.slane %v1675, 5
      %v1719 = vsel %vm880, %v1717, %v1718
      %v1720 = vrot.slane %v1676, 5
      %v1721 = vrot.slane %v1720, 4
      %v1722 = vrot.slane %v1677, 5
      %v1723 = vsel %vm880, %v1721, %v1722
      %v1724 = vrot.slane %v1678, 5
      %v1725 = vrot.slane %v1724, 4
      %v1726 = vrot.slane %v1679, 5
      %v1727 = vsel %vm880, %v1725, %v1726
      %s1728 = scalar_lea.vmem %s3, 320
      %v1729 = vld [vmem:[%s1728] sm:$0xf]
      %v1730 = vld [vmem:[%s1728 + $0x4] sm:$0xf]
      %v1731 = vld [vmem:[%s1728 + $0x8] sm:$0xf]
      %v1732 = vld [vmem:[%s1728 + $0xc] sm:$0xf]
      %v1733 = vld [vmem:[%s1728 + $0x10] sm:$0xf]
      %v1734 = vld [vmem:[%s1728 + $0x14] sm:$0xf]
      %v1735 = vld [vmem:[%s1728 + $0x18] sm:$0xf]
      %v1736 = vld [vmem:[%s1728 + $0x1c] sm:$0xf]
      %v1737 = vld [vmem:[%s1728 + $0x20] sm:$0xf]
      %v1738 = vld [vmem:[%s1728 + $0x24] sm:$0xf]
      %v1739 = vld [vmem:[%s1728 + $0x28] sm:$0xf]
      %v1740 = vld [vmem:[%s1728 + $0x2c] sm:$0xf]
      %v1741 = vld [vmem:[%s1728 + $0x30] sm:$0xf]
      %v1742 = vld [vmem:[%s1728 + $0x34] sm:$0xf]
      %v1743 = vld [vmem:[%s1728 + $0x38] sm:$0xf]
      %v1744 = vld [vmem:[%s1728 + $0x3c] sm:$0xf]
      %s1745 = scalar_lea.vmem [#allocation2], 16
      %v1746 = vld [vmem:[%s1745] sm:$0xf]
      %v1747 = vld [vmem:[%s1745 + $0x8] sm:$0xf]
      %v1748 = vld [vmem:[%s1745 + $0x10] sm:$0xf]
      %v1749 = vld [vmem:[%s1745 + $0x18] sm:$0xf]
      %v1750 = vld [vmem:[%s1745 + $0x20] sm:$0xf]
      %v1751 = vld [vmem:[%s1745 + $0x28] sm:$0xf]
      %v1752 = vld [vmem:[%s1745 + $0x30] sm:$0xf]
      %v1753 = vld [vmem:[%s1745 + $0x38] sm:$0xf]
      %s1754 = scalar_lea.vmem %s3, 384
      %v1755 = vld [vmem:[%s1754] sm:$0xf]
      %v1756 = vld [vmem:[%s1754 + $0x4] sm:$0xf]
      %v1757 = vld [vmem:[%s1754 + $0x8] sm:$0xf]
      %v1758 = vld [vmem:[%s1754 + $0xc] sm:$0xf]
      %v1759 = vld [vmem:[%s1754 + $0x10] sm:$0xf]
      %v1760 = vld [vmem:[%s1754 + $0x14] sm:$0xf]
      %v1761 = vld [vmem:[%s1754 + $0x18] sm:$0xf]
      %v1762 = vld [vmem:[%s1754 + $0x1c] sm:$0xf]
      %v1763 = vld [vmem:[%s1754 + $0x20] sm:$0xf]
      %v1764 = vld [vmem:[%s1754 + $0x24] sm:$0xf]
      %v1765 = vld [vmem:[%s1754 + $0x28] sm:$0xf]
      %v1766 = vld [vmem:[%s1754 + $0x2c] sm:$0xf]
      %v1767 = vld [vmem:[%s1754 + $0x30] sm:$0xf]
      %v1768 = vld [vmem:[%s1754 + $0x34] sm:$0xf]
      %v1769 = vld [vmem:[%s1754 + $0x38] sm:$0xf]
      %v1770 = vld [vmem:[%s1754 + $0x3c] sm:$0xf]
      %v1779 = vunpack.c.l.b16 %v1746
      %v1780 = vunpack.c.l.b16 %v1747
      %v1781 = vunpack.c.l.b16 %v1748
      %v1782 = vunpack.c.l.b16 %v1749
      %v1783 = vunpack.c.l.b16 %v1750
      %v1784 = vunpack.c.l.b16 %v1751
      %v1785 = vunpack.c.l.b16 %v1752
      %v1786 = vunpack.c.l.b16 %v1753
      %v1787 = vpack.c.b16 %v1780, %v1779
      %v1788 = vpack.c.b16 %v1782, %v1781
      %v1789 = vpack.c.b16 %v1784, %v1783
      %v1790 = vpack.c.b16 %v1786, %v1785
      %v1811 = vunpack.c.l.b16 %v1755
      %v1812 = vunpack.c.l.b16 %v1756
      %v1813 = vunpack.c.l.b16 %v1757
      %v1814 = vunpack.c.l.b16 %v1758
      %v1815 = vunpack.c.l.b16 %v1759
      %v1816 = vunpack.c.l.b16 %v1760
      %v1817 = vunpack.c.l.b16 %v1761
      %v1818 = vunpack.c.l.b16 %v1762
      %v1819 = vunpack.c.l.b16 %v1763
      %v1820 = vunpack.c.l.b16 %v1764
      %v1821 = vunpack.c.l.b16 %v1765
      %v1822 = vunpack.c.l.b16 %v1766
      %v1823 = vunpack.c.l.b16 %v1767
      %v1824 = vunpack.c.l.b16 %v1768
      %v1825 = vunpack.c.l.b16 %v1769
      %v1826 = vunpack.c.l.b16 %v1770
      %v1827 = vpack.c.b16 %v1812, %v1811
      %v1828 = vpack.c.b16 %v1814, %v1813
      %v1829 = vpack.c.b16 %v1816, %v1815
      %v1830 = vpack.c.b16 %v1818, %v1817
      %v1831 = vpack.c.b16 %v1820, %v1819
      %v1832 = vpack.c.b16 %v1822, %v1821
      %v1833 = vpack.c.b16 %v1824, %v1823
      %v1834 = vpack.c.b16 %v1826, %v1825
      %1843 = vmatprep.subr.bf16.mxu0 0
      %1844 = vmatpush1.bf16.msra.mxu0 %v1834
      %1845 = vmatprep.subr.bf16.mxu0 0
      %1846 = vmatpush1.bf16.msra.mxu0 %v1833
      %1847 = vmatprep.subr.bf16.mxu0 0
      %1848 = vmatpush1.bf16.msra.mxu0 %v1832
      %1849 = vmatprep.subr.bf16.mxu0 0
      %1850 = vmatpush1.bf16.msra.mxu0 %v1831
      %1851 = vmatprep.subr.bf16.mxu0 0
      %1852 = vmatpush1.bf16.msra.mxu0 %v1830
      %1853 = vmatprep.subr.bf16.mxu0 0
      %1854 = vmatpush1.bf16.msra.mxu0 %v1829
      %1855 = vmatprep.subr.bf16.mxu0 0
      %1856 = vmatpush1.bf16.msra.mxu0 %v1828
      %1857 = vmatprep.subr.bf16.mxu0 0
      %1858 = vmatpush1.bf16.msra.mxu0 %v1827
      %1859 = vmatprep.subr.bf16.mxu0 0
      %1860 = vmatpush2.bf16.msra.mxu0 0
      %1861 = vmatprep.subr.bf16.mxu0 0
      %1862 = vmatpush2.bf16.msra.mxu0 0
      %1863 = vmatprep.subr.bf16.mxu0 0
      %1864 = vmatpush2.bf16.msra.mxu0 0
      %1865 = vmatprep.subr.bf16.mxu0 0
      %1866 = vmatpush2.bf16.msra.mxu0 0
      %1867 = vmatprep.subr.bf16.mxu0 0
      %1868 = vmatpush2.bf16.msra.mxu0 0
      %1869 = vmatprep.subr.bf16.mxu0 0
      %1870 = vmatpush2.bf16.msra.mxu0 0
      %1871 = vmatprep.subr.bf16.mxu0 0
      %1872 = vmatpush2.bf16.msra.mxu0 0
      %1873 = vmatprep.subr.bf16.mxu0 0
      %1874 = vmatpush2.bf16.msra.mxu0 0
      %1875 = vmatprep.mubr.bf16.mxu0 0
      %1876 = vmatmul.mubr.bf16.gmra.mxu0 %v1787
      %v1877 = vpop.f32.mrf.mxu0
      %v1878 = vadd.f32 0.0, %v1877
      %v1879 = vpop.f32.mrf.mxu0
      %v1880 = vpop.f32.mrf.mxu0
      %v1881 = vadd.f32 0.0, %v1880
      %v1882 = vpop.f32.mrf.mxu0
      %1883 = vmatprep.mubr.bf16.mxu0 0
      %1884 = vmatmul.mubr.bf16.gmra.mxu0 %v1788
      %v1885 = vpop.f32.mrf.mxu0
      %v1886 = vadd.f32 0.0, %v1885
      %v1887 = vpop.f32.mrf.mxu0
      %v1888 = vpop.f32.mrf.mxu0
      %v1889 = vadd.f32 0.0, %v1888
      %v1890 = vpop.f32.mrf.mxu0
      %1891 = vmatprep.mubr.bf16.mxu0 0
      %1892 = vmatmul.mubr.bf16.gmra.mxu0 %v1789
      %v1893 = vpop.f32.mrf.mxu0
      %v1894 = vadd.f32 0.0, %v1893
      %v1895 = vpop.f32.mrf.mxu0
      %v1896 = vpop.f32.mrf.mxu0
      %v1897 = vadd.f32 0.0, %v1896
      %v1898 = vpop.f32.mrf.mxu0
      %1899 = vmatprep.mubr.bf16.mxu0 0
      %1900 = vmatmul.mubr.bf16.gmra.mxu0 %v1790
      %v1901 = vpop.f32.mrf.mxu0
      %v1902 = vadd.f32 0.0, %v1901
      %v1903 = vpop.f32.mrf.mxu0
      %v1904 = vpop.f32.mrf.mxu0
      %v1905 = vadd.f32 0.0, %v1904
      %v1906 = vpop.f32.mrf.mxu0
      %1907 = vdwg.mxu0
      %v1908 = vunpack.c.l.b16 %v1699
      %v1909 = vunpack.c.l.b16 %v1703
      %v1910 = vunpack.c.l.b16 %v1707
      %v1911 = vunpack.c.l.b16 %v1711
      %v1912 = vunpack.c.l.b16 %v1715
      %v1913 = vunpack.c.l.b16 %v1719
      %v1914 = vunpack.c.l.b16 %v1723
      %v1915 = vunpack.c.l.b16 %v1727
      %v1916 = vpack.c.b16 %v1909, %v1908
      %v1917 = vpack.c.b16 %v1911, %v1910
      %v1918 = vpack.c.b16 %v1913, %v1912
      %v1919 = vpack.c.b16 %v1915, %v1914
      %v1940 = vunpack.c.l.b16 %v1729
      %v1941 = vunpack.c.l.b16 %v1730
      %v1942 = vunpack.c.l.b16 %v1731
      %v1943 = vunpack.c.l.b16 %v1732
      %v1944 = vunpack.c.l.b16 %v1733
      %v1945 = vunpack.c.l.b16 %v1734
      %v1946 = vunpack.c.l.b16 %v1735
      %v1947 = vunpack.c.l.b16 %v1736
      %v1948 = vunpack.c.l.b16 %v1737
      %v1949 = vunpack.c.l.b16 %v1738
      %v1950 = vunpack.c.l.b16 %v1739
      %v1951 = vunpack.c.l.b16 %v1740
      %v1952 = vunpack.c.l.b16 %v1741
      %v1953 = vunpack.c.l.b16 %v1742
      %v1954 = vunpack.c.l.b16 %v1743
      %v1955 = vunpack.c.l.b16 %v1744
      %v1956 = vpack.c.b16 %v1941, %v1940
      %v1957 = vpack.c.b16 %v1943, %v1942
      %v1958 = vpack.c.b16 %v1945, %v1944
      %v1959 = vpack.c.b16 %v1947, %v1946
      %v1960 = vpack.c.b16 %v1949, %v1948
      %v1961 = vpack.c.b16 %v1951, %v1950
      %v1962 = vpack.c.b16 %v1953, %v1952
      %v1963 = vpack.c.b16 %v1955, %v1954
      %1972 = vmatprep.subr.bf16.mxu0 0
      %1973 = vmatpush1.bf16.msra.mxu0 %v1963
      %1974 = vmatprep.subr.bf16.mxu0 0
      %1975 = vmatpush1.bf16.msra.mxu0 %v1962
      %1976 = vmatprep.subr.bf16.mxu0 0
      %1977 = vmatpush1.bf16.msra.mxu0 %v1961
      %1978 = vmatprep.subr.bf16.mxu0 0
      %1979 = vmatpush1.bf16.msra.mxu0 %v1960
      %1980 = vmatprep.subr.bf16.mxu0 0
      %1981 = vmatpush1.bf16.msra.mxu0 %v1959
      %1982 = vmatprep.subr.bf16.mxu0 0
      %1983 = vmatpush1.bf16.msra.mxu0 %v1958
      %1984 = vmatprep.subr.bf16.mxu0 0
      %1985 = vmatpush1.bf16.msra.mxu0 %v1957
      %1986 = vmatprep.subr.bf16.mxu0 0
      %1987 = vmatpush1.bf16.msra.mxu0 %v1956
      %1988 = vmatprep.subr.bf16.mxu0 0
      %1989 = vmatpush2.bf16.msra.mxu0 0
      %1990 = vmatprep.subr.bf16.mxu0 0
      %1991 = vmatpush2.bf16.msra.mxu0 0
      %1992 = vmatprep.subr.bf16.mxu0 0
      %1993 = vmatpush2.bf16.msra.mxu0 0
      %1994 = vmatprep.subr.bf16.mxu0 0
      %1995 = vmatpush2.bf16.msra.mxu0 0
      %1996 = vmatprep.subr.bf16.mxu0 0
      %1997 = vmatpush2.bf16.msra.mxu0 0
      %1998 = vmatprep.subr.bf16.mxu0 0
      %1999 = vmatpush2.bf16.msra.mxu0 0
      %2000 = vmatprep.subr.bf16.mxu0 0
      %2001 = vmatpush2.bf16.msra.mxu0 0
      %2002 = vmatprep.subr.bf16.mxu0 0
      %2003 = vmatpush2.bf16.msra.mxu0 0
      %2004 = vmatprep.mubr.bf16.mxu0 0
      %2005 = vmatmul.mubr.bf16.gmra.mxu0 %v1916
      %v2006 = vpop.f32.mrf.mxu0
      %v2007 = vadd.f32 %v1878, %v2006
      %v2008 = vpop.f32.mrf.mxu0
      %v2009 = vpop.f32.mrf.mxu0
      %v2010 = vadd.f32 %v1881, %v2009
      %v2011 = vpop.f32.mrf.mxu0
      %2012 = vmatprep.mubr.bf16.mxu0 0
      %2013 = vmatmul.mubr.bf16.gmra.mxu0 %v1917
      %v2014 = vpop.f32.mrf.mxu0
      %v2015 = vadd.f32 %v1886, %v2014
      %v2016 = vpop.f32.mrf.mxu0
      %v2017 = vpop.f32.mrf.mxu0
      %v2018 = vadd.f32 %v1889, %v2017
      %v2019 = vpop.f32.mrf.mxu0
      %2020 = vmatprep.mubr.bf16.mxu0 0
      %2021 = vmatmul.mubr.bf16.gmra.mxu0 %v1918
      %v2022 = vpop.f32.mrf.mxu0
      %v2023 = vadd.f32 %v1894, %v2022
      %v2024 = vpop.f32.mrf.mxu0
      %v2025 = vpop.f32.mrf.mxu0
      %v2026 = vadd.f32 %v1897, %v2025
      %v2027 = vpop.f32.mrf.mxu0
      %2028 = vmatprep.mubr.bf16.mxu0 0
      %2029 = vmatmul.mubr.bf16.gmra.mxu0 %v1919
      %v2030 = vpop.f32.mrf.mxu0
      %v2031 = vadd.f32 %v1902, %v2030
      %v2032 = vpop.f32.mrf.mxu0
      %v2033 = vpop.f32.mrf.mxu0
      %v2034 = vadd.f32 %v1905, %v2033
      %v2035 = vpop.f32.mrf.mxu0
      %2036 = vdwg.mxu0
      %v2037 = vadd.f32 %v1656, %v2007
      %v2038 = vadd.f32 %v1657, %v2010
      %v2039 = vadd.f32 %v1658, %v2015
      %v2040 = vadd.f32 %v1659, %v2018
      %v2041 = vadd.f32 %v1660, %v2023
      %v2042 = vadd.f32 %v1661, %v2026
      %v2043 = vadd.f32 %v1662, %v2031
      %v2044 = vadd.f32 %v1663, %v2034
      %2045 = vst [vmem:[#allocation3] sm:$0xff] %v2037
      %2046 = vst [vmem:[#allocation3 + $0x8] sm:$0xff] %v2038
      %2047 = vst [vmem:[#allocation3 + $0x10] sm:$0xff] %v2039
      %2048 = vst [vmem:[#allocation3 + $0x18] sm:$0xff] %v2040
      %2049 = vst [vmem:[#allocation3 + $0x20] sm:$0xff] %v2041
      %2050 = vst [vmem:[#allocation3 + $0x28] sm:$0xff] %v2042
      %2051 = vst [vmem:[#allocation3 + $0x30] sm:$0xff] %v2043
      %2052 = vst [vmem:[#allocation3 + $0x38] sm:$0xff] %v2044
      %v2053 = vld [vmem:[#allocation3] sm:$0xff]
      %v2054 = vld [vmem:[#allocation3 + $0x8] sm:$0xff]
      %v2055 = vld [vmem:[#allocation3 + $0x10] sm:$0xff]
      %v2056 = vld [vmem:[#allocation3 + $0x18] sm:$0xff]
      %v2057 = vld [vmem:[#allocation3 + $0x20] sm:$0xff]
      %v2058 = vld [vmem:[#allocation3 + $0x28] sm:$0xff]
      %v2059 = vld [vmem:[#allocation3 + $0x30] sm:$0xff]
      %v2060 = vld [vmem:[#allocation3 + $0x38] sm:$0xff]
      %v2061 = vld [vmem:[%s1745] sm:$0xf]
      %v2062 = vld [vmem:[%s1745 + $0x4] sm:$0x1]
      %v2063 = vld [vmem:[%s1745 + $0x8] sm:$0xf]
      %v2064 = vld [vmem:[%s1745 + $0xc] sm:$0x1]
      %v2065 = vld [vmem:[%s1745 + $0x10] sm:$0xf]
      %v2066 = vld [vmem:[%s1745 + $0x14] sm:$0x1]
      %v2067 = vld [vmem:[%s1745 + $0x18] sm:$0xf]
      %v2068 = vld [vmem:[%s1745 + $0x1c] sm:$0x1]
      %v2069 = vld [vmem:[%s1745 + $0x20] sm:$0xf]
      %v2070 = vld [vmem:[%s1745 + $0x24] sm:$0x1]
      %v2071 = vld [vmem:[%s1745 + $0x28] sm:$0xf]
      %v2072 = vld [vmem:[%s1745 + $0x2c] sm:$0x1]
      %v2073 = vld [vmem:[%s1745 + $0x30] sm:$0xf]
      %v2074 = vld [vmem:[%s1745 + $0x34] sm:$0x1]
      %v2075 = vld [vmem:[%s1745 + $0x38] sm:$0xf]
      %v2076 = vld [vmem:[%s1745 + $0x3c] sm:$0x1]
      %v2078 = vshrl.u32 %v2061, 16
      %v2080 = vrot.slane %v2078, 4
      %v2081 = vshll.u32 %v2061, 16
      %v2083 = vrot.slane %v2081, 5
      %v2084 = vor.u32 %v2080, %v2083
      %v2085 = vrot.slane %v2084, 4
      %v2087 = vshll.u32 %v2062, 16
      %v2089 = vrot.slane %v2087, 5
      %v2090 = vsel %vm724, %v2085, %v2089
      %v2092 = vshrl.u32 %v2063, 16
      %v2094 = vrot.slane %v2092, 4
      %v2095 = vshll.u32 %v2063, 16
      %v2097 = vrot.slane %v2095, 5
      %v2098 = vor.u32 %v2094, %v2097
      %v2099 = vrot.slane %v2098, 4
      %v2101 = vshll.u32 %v2064, 16
      %v2103 = vrot.slane %v2101, 5
      %v2104 = vsel %vm724, %v2099, %v2103
      %v2106 = vshrl.u32 %v2065, 16
      %v2108 = vrot.slane %v2106, 4
      %v2109 = vshll.u32 %v2065, 16
      %v2111 = vrot.slane %v2109, 5
      %v2112 = vor.u32 %v2108, %v2111
      %v2113 = vrot.slane %v2112, 4
      %v2115 = vshll.u32 %v2066, 16
      %v2117 = vrot.slane %v2115, 5
      %v2118 = vsel %vm724, %v2113, %v2117
      %v2120 = vshrl.u32 %v2067, 16
      %v2122 = vrot.slane %v2120, 4
      %v2123 = vshll.u32 %v2067, 16
      %v2125 = vrot.slane %v2123, 5
      %v2126 = vor.u32 %v2122, %v2125
      %v2127 = vrot.slane %v2126, 4
      %v2129 = vshll.u32 %v2068, 16
      %v2131 = vrot.slane %v2129, 5
      %v2132 = vsel %vm724, %v2127, %v2131
      %v2134 = vshrl.u32 %v2069, 16
      %v2136 = vrot.slane %v2134, 4
      %v2137 = vshll.u32 %v2069, 16
      %v2139 = vrot.slane %v2137, 5
      %v2140 = vor.u32 %v2136, %v2139
      %v2141 = vrot.slane %v2140, 4
      %v2143 = vshll.u32 %v2070, 16
      %v2145 = vrot.slane %v2143, 5
      %v2146 = vsel %vm724, %v2141, %v2145
      %v2148 = vshrl.u32 %v2071, 16
      %v2150 = vrot.slane %v2148, 4
      %v2151 = vshll.u32 %v2071, 16
      %v2153 = vrot.slane %v2151, 5
      %v2154 = vor.u32 %v2150, %v2153
      %v2155 = vrot.slane %v2154, 4
      %v2157 = vshll.u32 %v2072, 16
      %v2159 = vrot.slane %v2157, 5
      %v2160 = vsel %vm724, %v2155, %v2159
      %v2162 = vshrl.u32 %v2073, 16
      %v2164 = vrot.slane %v2162, 4
      %v2165 = vshll.u32 %v2073, 16
      %v2167 = vrot.slane %v2165, 5
      %v2168 = vor.u32 %v2164, %v2167
      %v2169 = vrot.slane %v2168, 4
      %v2171 = vshll.u32 %v2074, 16
      %v2173 = vrot.slane %v2171, 5
      %v2174 = vsel %vm724, %v2169, %v2173
      %v2176 = vshrl.u32 %v2075, 16
      %v2178 = vrot.slane %v2176, 4
      %v2179 = vshll.u32 %v2075, 16
      %v2181 = vrot.slane %v2179, 5
      %v2182 = vor.u32 %v2178, %v2181
      %v2183 = vrot.slane %v2182, 4
      %v2185 = vshll.u32 %v2076, 16
      %v2187 = vrot.slane %v2185, 5
      %v2188 = vsel %vm724, %v2183, %v2187
      %s2189 = scalar_lea.vmem %s3, 448
      %v2190 = vld [vmem:[%s2189] sm:$0xf]
      %v2191 = vld [vmem:[%s2189 + $0x4] sm:$0xf]
      %v2192 = vld [vmem:[%s2189 + $0x8] sm:$0xf]
      %v2193 = vld [vmem:[%s2189 + $0xc] sm:$0xf]
      %v2194 = vld [vmem:[%s2189 + $0x10] sm:$0xf]
      %v2195 = vld [vmem:[%s2189 + $0x14] sm:$0xf]
      %v2196 = vld [vmem:[%s2189 + $0x18] sm:$0xf]
      %v2197 = vld [vmem:[%s2189 + $0x1c] sm:$0xf]
      %v2198 = vld [vmem:[%s2189 + $0x20] sm:$0xf]
      %v2199 = vld [vmem:[%s2189 + $0x24] sm:$0xf]
      %v2200 = vld [vmem:[%s2189 + $0x28] sm:$0xf]
      %v2201 = vld [vmem:[%s2189 + $0x2c] sm:$0xf]
      %v2202 = vld [vmem:[%s2189 + $0x30] sm:$0xf]
      %v2203 = vld [vmem:[%s2189 + $0x34] sm:$0xf]
      %v2204 = vld [vmem:[%s2189 + $0x38] sm:$0xf]
      %v2205 = vld [vmem:[%s2189 + $0x3c] sm:$0xf]
      %v2206 = vld [vmem:[%s1745] sm:$0xe]
      %v2207 = vld [vmem:[%s1745 + $0x8] sm:$0xe]
      %v2208 = vld [vmem:[%s1745 + $0x10] sm:$0xe]
      %v2209 = vld [vmem:[%s1745 + $0x18] sm:$0xe]
      %v2210 = vld [vmem:[%s1745 + $0x20] sm:$0xe]
      %v2211 = vld [vmem:[%s1745 + $0x28] sm:$0xe]
      %v2212 = vld [vmem:[%s1745 + $0x30] sm:$0xe]
      %v2213 = vld [vmem:[%s1745 + $0x38] sm:$0xe]
      %v2230 = vrot.slane %v2206, 5
      %v2231 = vrot.slane %v2230, 4
      %v2232 = vrot.slane %v2062, 5
      %v2233 = vsel %vm880, %v2231, %v2232
      %v2234 = vrot.slane %v2207, 5
      %v2235 = vrot.slane %v2234, 4
      %v2236 = vrot.slane %v2064, 5
      %v2237 = vsel %vm880, %v2235, %v2236
      %v2238 = vrot.slane %v2208, 5
      %v2239 = vrot.slane %v2238, 4
      %v2240 = vrot.slane %v2066, 5
      %v2241 = vsel %vm880, %v2239, %v2240
      %v2242 = vrot.slane %v2209, 5
      %v2243 = vrot.slane %v2242, 4
      %v2244 = vrot.slane %v2068, 5
      %v2245 = vsel %vm880, %v2243, %v2244
      %v2246 = vrot.slane %v2210, 5
      %v2247 = vrot.slane %v2246, 4
      %v2248 = vrot.slane %v2070, 5
      %v2249 = vsel %vm880, %v2247, %v2248
      %v2250 = vrot.slane %v2211, 5
      %v2251 = vrot.slane %v2250, 4
      %v2252 = vrot.slane %v2072, 5
      %v2253 = vsel %vm880, %v2251, %v2252
      %v2254 = vrot.slane %v2212, 5
      %v2255 = vrot.slane %v2254, 4
      %v2256 = vrot.slane %v2074, 5
      %v2257 = vsel %vm880, %v2255, %v2256
      %v2258 = vrot.slane %v2213, 5
      %v2259 = vrot.slane %v2258, 4
      %v2260 = vrot.slane %v2076, 5
      %v2261 = vsel %vm880, %v2259, %v2260
      %s2262 = scalar_lea.vmem %s3, 512
      %v2263 = vld [vmem:[%s2262] sm:$0xf]
      %v2264 = vld [vmem:[%s2262 + $0x4] sm:$0xf]
      %v2265 = vld [vmem:[%s2262 + $0x8] sm:$0xf]
      %v2266 = vld [vmem:[%s2262 + $0xc] sm:$0xf]
      %v2267 = vld [vmem:[%s2262 + $0x10] sm:$0xf]
      %v2268 = vld [vmem:[%s2262 + $0x14] sm:$0xf]
      %v2269 = vld [vmem:[%s2262 + $0x18] sm:$0xf]
      %v2270 = vld [vmem:[%s2262 + $0x1c] sm:$0xf]
      %v2271 = vld [vmem:[%s2262 + $0x20] sm:$0xf]
      %v2272 = vld [vmem:[%s2262 + $0x24] sm:$0xf]
      %v2273 = vld [vmem:[%s2262 + $0x28] sm:$0xf]
      %v2274 = vld [vmem:[%s2262 + $0x2c] sm:$0xf]
      %v2275 = vld [vmem:[%s2262 + $0x30] sm:$0xf]
      %v2276 = vld [vmem:[%s2262 + $0x34] sm:$0xf]
      %v2277 = vld [vmem:[%s2262 + $0x38] sm:$0xf]
      %v2278 = vld [vmem:[%s2262 + $0x3c] sm:$0xf]
      %v2279 = vunpack.c.l.b16 %v2233
      %v2280 = vunpack.c.l.b16 %v2237
      %v2281 = vunpack.c.l.b16 %v2241
      %v2282 = vunpack.c.l.b16 %v2245
      %v2283 = vunpack.c.l.b16 %v2249
      %v2284 = vunpack.c.l.b16 %v2253
      %v2285 = vunpack.c.l.b16 %v2257
      %v2286 = vunpack.c.l.b16 %v2261
      %v2287 = vpack.c.b16 %v2280, %v2279
      %v2288 = vpack.c.b16 %v2282, %v2281
      %v2289 = vpack.c.b16 %v2284, %v2283
      %v2290 = vpack.c.b16 %v2286, %v2285
      %v2311 = vunpack.c.l.b16 %v2263
      %v2312 = vunpack.c.l.b16 %v2264
      %v2313 = vunpack.c.l.b16 %v2265
      %v2314 = vunpack.c.l.b16 %v2266
      %v2315 = vunpack.c.l.b16 %v2267
      %v2316 = vunpack.c.l.b16 %v2268
      %v2317 = vunpack.c.l.b16 %v2269
      %v2318 = vunpack.c.l.b16 %v2270
      %v2319 = vunpack.c.l.b16 %v2271
      %v2320 = vunpack.c.l.b16 %v2272
      %v2321 = vunpack.c.l.b16 %v2273
      %v2322 = vunpack.c.l.b16 %v2274
      %v2323 = vunpack.c.l.b16 %v2275
      %v2324 = vunpack.c.l.b16 %v2276
      %v2325 = vunpack.c.l.b16 %v2277
      %v2326 = vunpack.c.l.b16 %v2278
      %v2327 = vpack.c.b16 %v2312, %v2311
      %v2328 = vpack.c.b16 %v2314, %v2313
      %v2329 = vpack.c.b16 %v2316, %v2315
      %v2330 = vpack.c.b16 %v2318, %v2317
      %v2331 = vpack.c.b16 %v2320, %v2319
      %v2332 = vpack.c.b16 %v2322, %v2321
      %v2333 = vpack.c.b16 %v2324, %v2323
      %v2334 = vpack.c.b16 %v2326, %v2325
      %2343 = vmatprep.subr.bf16.mxu0 0
      %2344 = vmatpush1.bf16.msra.mxu0 %v2334
      %2345 = vmatprep.subr.bf16.mxu0 0
      %2346 = vmatpush1.bf16.msra.mxu0 %v2333
      %2347 = vmatprep.subr.bf16.mxu0 0
      %2348 = vmatpush1.bf16.msra.mxu0 %v2332
      %2349 = vmatprep.subr.bf16.mxu0 0
      %2350 = vmatpush1.bf16.msra.mxu0 %v2331
      %2351 = vmatprep.subr.bf16.mxu0 0
      %2352 = vmatpush1.bf16.msra.mxu0 %v2330
      %2353 = vmatprep.subr.bf16.mxu0 0
      %2354 = vmatpush1.bf16.msra.mxu0 %v2329
      %2355 = vmatprep.subr.bf16.mxu0 0
      %2356 = vmatpush1.bf16.msra.mxu0 %v2328
      %2357 = vmatprep.subr.bf16.mxu0 0
      %2358 = vmatpush1.bf16.msra.mxu0 %v2327
      %2359 = vmatprep.subr.bf16.mxu0 0
      %2360 = vmatpush2.bf16.msra.mxu0 0
      %2361 = vmatprep.subr.bf16.mxu0 0
      %2362 = vmatpush2.bf16.msra.mxu0 0
      %2363 = vmatprep.subr.bf16.mxu0 0
      %2364 = vmatpush2.bf16.msra.mxu0 0
      %2365 = vmatprep.subr.bf16.mxu0 0
      %2366 = vmatpush2.bf16.msra.mxu0 0
      %2367 = vmatprep.subr.bf16.mxu0 0
      %2368 = vmatpush2.bf16.msra.mxu0 0
      %2369 = vmatprep.subr.bf16.mxu0 0
      %2370 = vmatpush2.bf16.msra.mxu0 0
      %2371 = vmatprep.subr.bf16.mxu0 0
      %2372 = vmatpush2.bf16.msra.mxu0 0
      %2373 = vmatprep.subr.bf16.mxu0 0
      %2374 = vmatpush2.bf16.msra.mxu0 0
      %2375 = vmatprep.mubr.bf16.mxu0 0
      %2376 = vmatmul.mubr.bf16.gmra.mxu0 %v2287
      %v2377 = vpop.f32.mrf.mxu0
      %v2378 = vadd.f32 0.0, %v2377
      %v2379 = vpop.f32.mrf.mxu0
      %v2380 = vpop.f32.mrf.mxu0
      %v2381 = vadd.f32 0.0, %v2380
      %v2382 = vpop.f32.mrf.mxu0
      %2383 = vmatprep.mubr.bf16.mxu0 0
      %2384 = vmatmul.mubr.bf16.gmra.mxu0 %v2288
      %v2385 = vpop.f32.mrf.mxu0
      %v2386 = vadd.f32 0.0, %v2385
      %v2387 = vpop.f32.mrf.mxu0
      %v2388 = vpop.f32.mrf.mxu0
      %v2389 = vadd.f32 0.0, %v2388
      %v2390 = vpop.f32.mrf.mxu0
      %2391 = vmatprep.mubr.bf16.mxu0 0
      %2392 = vmatmul.mubr.bf16.gmra.mxu0 %v2289
      %v2393 = vpop.f32.mrf.mxu0
      %v2394 = vadd.f32 0.0, %v2393
      %v2395 = vpop.f32.mrf.mxu0
      %v2396 = vpop.f32.mrf.mxu0
      %v2397 = vadd.f32 0.0, %v2396
      %v2398 = vpop.f32.mrf.mxu0
      %2399 = vmatprep.mubr.bf16.mxu0 0
      %2400 = vmatmul.mubr.bf16.gmra.mxu0 %v2290
      %v2401 = vpop.f32.mrf.mxu0
      %v2402 = vadd.f32 0.0, %v2401
      %v2403 = vpop.f32.mrf.mxu0
      %v2404 = vpop.f32.mrf.mxu0
      %v2405 = vadd.f32 0.0, %v2404
      %v2406 = vpop.f32.mrf.mxu0
      %2407 = vdwg.mxu0
      %v2408 = vunpack.c.l.b16 %v2090
      %v2409 = vunpack.c.l.b16 %v2104
      %v2410 = vunpack.c.l.b16 %v2118
      %v2411 = vunpack.c.l.b16 %v2132
      %v2412 = vunpack.c.l.b16 %v2146
      %v2413 = vunpack.c.l.b16 %v2160
      %v2414 = vunpack.c.l.b16 %v2174
      %v2415 = vunpack.c.l.b16 %v2188
      %v2416 = vpack.c.b16 %v2409, %v2408
      %v2417 = vpack.c.b16 %v2411, %v2410
      %v2418 = vpack.c.b16 %v2413, %v2412
      %v2419 = vpack.c.b16 %v2415, %v2414
      %v2440 = vunpack.c.l.b16 %v2190
      %v2441 = vunpack.c.l.b16 %v2191
      %v2442 = vunpack.c.l.b16 %v2192
      %v2443 = vunpack.c.l.b16 %v2193
      %v2444 = vunpack.c.l.b16 %v2194
      %v2445 = vunpack.c.l.b16 %v2195
      %v2446 = vunpack.c.l.b16 %v2196
      %v2447 = vunpack.c.l.b16 %v2197
      %v2448 = vunpack.c.l.b16 %v2198
      %v2449 = vunpack.c.l.b16 %v2199
      %v2450 = vunpack.c.l.b16 %v2200
      %v2451 = vunpack.c.l.b16 %v2201
      %v2452 = vunpack.c.l.b16 %v2202
      %v2453 = vunpack.c.l.b16 %v2203
      %v2454 = vunpack.c.l.b16 %v2204
      %v2455 = vunpack.c.l.b16 %v2205
      %v2456 = vpack.c.b16 %v2441, %v2440
      %v2457 = vpack.c.b16 %v2443, %v2442
      %v2458 = vpack.c.b16 %v2445, %v2444
      %v2459 = vpack.c.b16 %v2447, %v2446
      %v2460 = vpack.c.b16 %v2449, %v2448
      %v2461 = vpack.c.b16 %v2451, %v2450
      %v2462 = vpack.c.b16 %v2453, %v2452
      %v2463 = vpack.c.b16 %v2455, %v2454
      %2472 = vmatprep.subr.bf16.mxu0 0
      %2473 = vmatpush1.bf16.msra.mxu0 %v2463
      %2474 = vmatprep.subr.bf16.mxu0 0
      %2475 = vmatpush1.bf16.msra.mxu0 %v2462
      %2476 = vmatprep.subr.bf16.mxu0 0
      %2477 = vmatpush1.bf16.msra.mxu0 %v2461
      %2478 = vmatprep.subr.bf16.mxu0 0
      %2479 = vmatpush1.bf16.msra.mxu0 %v2460
      %2480 = vmatprep.subr.bf16.mxu0 0
      %2481 = vmatpush1.bf16.msra.mxu0 %v2459
      %2482 = vmatprep.subr.bf16.mxu0 0
      %2483 = vmatpush1.bf16.msra.mxu0 %v2458
      %2484 = vmatprep.subr.bf16.mxu0 0
      %2485 = vmatpush1.bf16.msra.mxu0 %v2457
      %2486 = vmatprep.subr.bf16.mxu0 0
      %2487 = vmatpush1.bf16.msra.mxu0 %v2456
      %2488 = vmatprep.subr.bf16.mxu0 0
      %2489 = vmatpush2.bf16.msra.mxu0 0
      %2490 = vmatprep.subr.bf16.mxu0 0
      %2491 = vmatpush2.bf16.msra.mxu0 0
      %2492 = vmatprep.subr.bf16.mxu0 0
      %2493 = vmatpush2.bf16.msra.mxu0 0
      %2494 = vmatprep.subr.bf16.mxu0 0
      %2495 = vmatpush2.bf16.msra.mxu0 0
      %2496 = vmatprep.subr.bf16.mxu0 0
      %2497 = vmatpush2.bf16.msra.mxu0 0
      %2498 = vmatprep.subr.bf16.mxu0 0
      %2499 = vmatpush2.bf16.msra.mxu0 0
      %2500 = vmatprep.subr.bf16.mxu0 0
      %2501 = vmatpush2.bf16.msra.mxu0 0
      %2502 = vmatprep.subr.bf16.mxu0 0
      %2503 = vmatpush2.bf16.msra.mxu0 0
      %2504 = vmatprep.mubr.bf16.mxu0 0
      %2505 = vmatmul.mubr.bf16.gmra.mxu0 %v2416
      %v2506 = vpop.f32.mrf.mxu0
      %v2507 = vadd.f32 %v2378, %v2506
      %v2508 = vpop.f32.mrf.mxu0
      %v2509 = vpop.f32.mrf.mxu0
      %v2510 = vadd.f32 %v2381, %v2509
      %v2511 = vpop.f32.mrf.mxu0
      %2512 = vmatprep.mubr.bf16.mxu0 0
      %2513 = vmatmul.mubr.bf16.gmra.mxu0 %v2417
      %v2514 = vpop.f32.mrf.mxu0
      %v2515 = vadd.f32 %v2386, %v2514
      %v2516 = vpop.f32.mrf.mxu0
      %v2517 = vpop.f32.mrf.mxu0
      %v2518 = vadd.f32 %v2389, %v2517
      %v2519 = vpop.f32.mrf.mxu0
      %2520 = vmatprep.mubr.bf16.mxu0 0
      %2521 = vmatmul.mubr.bf16.gmra.mxu0 %v2418
      %v2522 = vpop.f32.mrf.mxu0
      %v2523 = vadd.f32 %v2394, %v2522
      %v2524 = vpop.f32.mrf.mxu0
      %v2525 = vpop.f32.mrf.mxu0
      %v2526 = vadd.f32 %v2397, %v2525
      %v2527 = vpop.f32.mrf.mxu0
      %2528 = vmatprep.mubr.bf16.mxu0 0
      %2529 = vmatmul.mubr.bf16.gmra.mxu0 %v2419
      %v2530 = vpop.f32.mrf.mxu0
      %v2531 = vadd.f32 %v2402, %v2530
      %v2532 = vpop.f32.mrf.mxu0
      %v2533 = vpop.f32.mrf.mxu0
      %v2534 = vadd.f32 %v2405, %v2533
      %v2535 = vpop.f32.mrf.mxu0
      %2536 = vdwg.mxu0
      %v2537 = vadd.f32 %v2053, %v2507
      %v2538 = vadd.f32 %v2054, %v2510
      %v2539 = vadd.f32 %v2055, %v2515
      %v2540 = vadd.f32 %v2056, %v2518
      %v2541 = vadd.f32 %v2057, %v2523
      %v2542 = vadd.f32 %v2058, %v2526
      %v2543 = vadd.f32 %v2059, %v2531
      %v2544 = vadd.f32 %v2060, %v2534
      %2545 = vst [vmem:[#allocation3] sm:$0xff] %v2537
      %2546 = vst [vmem:[#allocation3 + $0x8] sm:$0xff] %v2538
      %2547 = vst [vmem:[#allocation3 + $0x10] sm:$0xff] %v2539
      %2548 = vst [vmem:[#allocation3 + $0x18] sm:$0xff] %v2540
      %2549 = vst [vmem:[#allocation3 + $0x20] sm:$0xff] %v2541
      %2550 = vst [vmem:[#allocation3 + $0x28] sm:$0xff] %v2542
      %2551 = vst [vmem:[#allocation3 + $0x30] sm:$0xff] %v2543
      %2552 = vst [vmem:[#allocation3 + $0x38] sm:$0xff] %v2544
      %v2553 = vld [vmem:[#allocation3] sm:$0xff]
      %v2554 = vld [vmem:[#allocation3 + $0x8] sm:$0xff]
      %v2555 = vld [vmem:[#allocation3 + $0x10] sm:$0xff]
      %v2556 = vld [vmem:[#allocation3 + $0x18] sm:$0xff]
      %v2557 = vld [vmem:[#allocation3 + $0x20] sm:$0xff]
      %v2558 = vld [vmem:[#allocation3 + $0x28] sm:$0xff]
      %v2559 = vld [vmem:[#allocation3 + $0x30] sm:$0xff]
      %v2560 = vld [vmem:[#allocation3 + $0x38] sm:$0xff]
      %v2561 = vld [vmem:[%s239] sm:$0xf]
      %v2562 = vld [vmem:[%s239 + $0x4] sm:$0xf]
      %v2563 = vld [vmem:[%s239 + $0x8] sm:$0xf]
      %v2564 = vld [vmem:[%s239 + $0xc] sm:$0xf]
      %v2565 = vld [vmem:[%s239 + $0x10] sm:$0xf]
      %v2566 = vld [vmem:[%s239 + $0x14] sm:$0xf]
      %v2567 = vld [vmem:[%s239 + $0x18] sm:$0xf]
      %v2568 = vld [vmem:[%s239 + $0x1c] sm:$0xf]
      %v2569 = vunpack.c.l.bf16 %v2561
      %v2570 = vunpack.c.l.bf16 %v2562
      %v2571 = vunpack.c.l.bf16 %v2563
      %v2572 = vunpack.c.l.bf16 %v2564
      %v2573 = vunpack.c.l.bf16 %v2565
      %v2574 = vunpack.c.l.bf16 %v2566
      %v2575 = vunpack.c.l.bf16 %v2567
      %v2576 = vunpack.c.l.bf16 %v2568
      %v2577 = vadd.f32 %v2553, %v2569
      %v2578 = vadd.f32 %v2554, %v2570
      %v2579 = vadd.f32 %v2555, %v2571
      %v2580 = vadd.f32 %v2556, %v2572
      %v2581 = vadd.f32 %v2557, %v2573
      %v2582 = vadd.f32 %v2558, %v2574
      %v2583 = vadd.f32 %v2559, %v2575
      %v2584 = vadd.f32 %v2560, %v2576
      %2585 = vst [vmem:[%s244] sm:$0xff] %v2577
      %2586 = vst [vmem:[%s244 + $0x8] sm:$0xff] %v2578
      %2587 = vst [vmem:[%s244 + $0x10] sm:$0xff] %v2579
      %2588 = vst [vmem:[%s244 + $0x18] sm:$0xff] %v2580
      %2589 = vst [vmem:[%s244 + $0x20] sm:$0xff] %v2581
      %2590 = vst [vmem:[%s244 + $0x28] sm:$0xff] %v2582
      %2591 = vst [vmem:[%s244 + $0x30] sm:$0xff] %v2583
      %2592 = vst [vmem:[%s244 + $0x38] sm:$0xff] %v2584
      %p2593 = scmp.lt.s32.totalorder %s16, 1
      %s2594 = scalar_select %p2593, %s16, 1
      %s2595 = smul.addr %s2594, 8
      %s2596 = smul.addr %s2595, 8
      %s2597 = scalar_lea.vmem %s5, %s2596
      // Predicated region
      $region41: #{basic_block_forward.5} parent=39 // pred_check
        %p2598 = pneg %p149
      $region42: #{basic_block_forward.5} parent=39 // pred_check_branch
        %2600 = sbr.rel (%p2598) target = $region44
      $region43: #{basic_block_forward.5} parent=39 // pred_region
        _
      $region44: #{basic_block_forward.5} parent=39 // pred_fallthru
        _
    $region40: #{basic_block_forward.5} parent=5 // pred_fallthru
      _
    %p2601 = scmp.le.s32.totalorder 2, %s11
    // Predicated region
    $region45: #{basic_block_forward.5} parent=5 // pred_check
      %p2602 = pneg %p2601
    $region46: #{basic_block_forward.5} parent=5 // pred_check_branch
      %2604 = sbr.rel (%p2602) target = $region48
    $region47: #{basic_block_forward.5} parent=5 // pred_region
      %s2605 = ssub.s32 %s11, 2
      // Predicated region
      $region49: #{basic_block_forward.5} parent=47 // pred_check
        %p2606 = pneg %p155
      $region50: #{basic_block_forward.5} parent=47 // pred_check_branch
        %2608 = sbr.rel (%p2606) target = $region52
      $region51: #{basic_block_forward.5} parent=47 // pred_region
        %p2609 = scmp.lt.s32.totalorder %s17, 1
        %s2610 = scalar_select %p2609, %s17, 1
        %s2611 = smul.addr %s2610, 8
        %s2612 = smul.addr %s2611, 8
        %s2613 = scalar_lea.vmem %s5, %s2612
      $region52: #{basic_block_forward.5} parent=47 // pred_fallthru
        _
    $region48: #{basic_block_forward.5} parent=5 // pred_fallthru
      _
  $region6: #{basic_block_forward.5} parent=0 // loop_footer
    %s15 = sadd.s32 1, %s11
  $region7: #{basic_block_forward.5} parent=0 // loop_footer_branch
    %10 = sbr.rel target = $region3
  $region8: #{basic_block_forward.5} parent=0 // loop_exit
    _

// kernel: basic_block_forward.4
$region0: #{basic_block_forward.4}
  #allocation0 [shape = 'u32[]', space=smem, size = 0x4, offset = 0x4, fixed_abs, tag = 'smem constant byte address 0x4 - core index']
  #allocation1 [shape = 'u32[144,128]{1,0:T(1,128)}', space=vmem, size = 0x12000, scoped, tag = 'internal scratch']
  #allocation2 [shape = 'bf16[2,9,19,128]{3,2,1,0:T(8,128)(2,1)}', space=vmem, size = 0x1b000, scoped, tag = 'scratch operand']
  #allocation3 [shape = 'f32[64,128]{1,0:T(8,128)}', space=vmem, size = 0x8000, scoped, tag = 'scratch operand']
  %s0 = inlined_call_operand.vmem [shape: f32[2,16,16,128], index: 0, kind: input, shape index: {}]
  %s1 = inlined_call_operand.vmem [shape: f32[1,128], index: 1, kind: input, shape index: {}]
  %s2 = inlined_call_operand.vmem [shape: f32[1,128], index: 2, kind: input, shape index: {}]
  %s3 = inlined_call_operand.vmem [shape: bf16[3,2,256,128], index: 3, kind: input, shape index: {}]
  %s4 = inlined_call_operand.vmem [shape: bf16[256,128], index: 4, kind: input, shape index: {}]
  %s5 = inlined_call_operand.vmem [shape: bf16[2,64,128], index: 5, kind: output, shape index: {0}]
  %s6 = inlined_call_operand.vmem [shape: bf16[2,64,128], index: 6, kind: output, shape index: {1}]
  %s7 = inlined_call_operand.vmem [shape: f32[2,1,128], index: 7, kind: output, shape index: {2}]
  %s8 = inlined_call_operand.vmem [shape: f32[2,1,128], index: 8, kind: output, shape index: {3}]
  %9 = xla_tuple %s5, %s6, %s7, %s8
  %s10 = sld [smem:[#allocation0]]
  $region77: #{basic_block_forward.4} parent=0
    _
  %s12 = ssub.s32 1, %s10
  %s13 = scalar_select 0, %s12, %s10
  loop: start=0, step=1, limit=4
  $region2: #{basic_block_forward.4} parent=0 // loop_pre_header
    _
  $region3: #{basic_block_forward.4} parent=0 // loop_header
    %s15 = sphi 0, %s19
    %p16 = scmp.ge.s32.totalorder %s15, 4
    %s25 = sphi 0, %s27
    %s28 = sphi 0, %s25
    %s29 = sphi 0, %s28
    %s45 = sphi 0, %s29
    %s49 = sphi 0, %s49
    %s51 = sphi 0, %s49
    %s52 = sphi 0, %s51
    %s66 = sphi 0, %s52
    %s70 = sphi 0, %s70
    %s72 = sphi 0, %s70
    %s73 = sphi 0, %s72
    %s87 = sphi 0, %s73
    %s91 = sphi 0, %s91
    %s93 = sphi 0, %s91
    %s94 = sphi 0, %s93
    %s108 = sphi 0, %s94
    %s112 = sphi 0, %s112
    %s114 = sphi 0, %s112
    %s115 = sphi 0, %s114
    %s129 = sphi 0, %s115
    %s135 = sphi 0, %s137
    %s138 = sphi 0, %s135
    %s139 = sphi 0, %s138
    %s155 = sphi 0, %s139
    %s161 = sphi 0, %s163
    %s164 = sphi 0, %s161
    %s165 = sphi 0, %s164
    %s181 = sphi 0, %s165
    %s187 = sphi 0, %s189
    %s190 = sphi 0, %s187
    %s191 = sphi 0, %s190
    %s207 = sphi 0, %s191
    %s213 = sphi 0, %s215
    %s216 = sphi 0, %s213
    %s217 = sphi 0, %s216
    %s233 = sphi 0, %s217
  $region4: #{basic_block_forward.4} parent=0 // loop_header_branch
    %18 = sbr.rel (%p16) target = $region8
  $region5: #{basic_block_forward.4} parent=0 // loop_body
    %s20 = ssub.s32 %s15, 1
    %s21 = ssub.s32 %s15, 2
    %s22 = sadd.s32 %s15, 1
    %s23 = ssub.s32 %s15, %s22
    %p24 = scmp.eq.s32.totalorder %s23, 0
    %s26 = sadd.s32 %s25, 1
    %s27 = scalar_select %p24, %s25, %s26
    %p30 = pneg %p24
    %p31 = scmp.eq.s32.totalorder %s15, 1
    %p32 = por %p30, %p31
    %p33 = scmp.ne.s32.totalorder %s25, %s28
    %p34 = scmp.eq.s32.totalorder %s15, 0
    %p35 = por %p33, %p34
    %p36 = scmp.ne.s32.totalorder %s25, %s28
    %p37 = scmp.eq.s32.totalorder %s20, 1
    %p38 = por %p36, %p37
    %p39 = scmp.ne.s32.totalorder %s28, %s29
    %p40 = scmp.eq.s32.totalorder %s20, 0
    %p41 = por %p39, %p40
    %p42 = scmp.ne.s32.totalorder %s28, %s29
    %p43 = scmp.eq.s32.totalorder %s21, 1
    %p44 = por %p42, %p43
    %p46 = scmp.ne.s32.totalorder %s29, %s45
    %p47 = scmp.eq.s32.totalorder %s21, 0
    %p48 = por %p46, %p47
    %s50 = sadd.s32 %s49, 1
    %p53 = scmp.eq.s32.totalorder %s15, 1
    %p54 = scmp.ne.s32.totalorder %s49, %s51
    %p55 = scmp.eq.s32.totalorder %s15, 0
    %p56 = por %p54, %p55
    %p57 = scmp.ne.s32.totalorder %s49, %s51
    %p58 = scmp.eq.s32.totalorder %s20, 1
    %p59 = por %p57, %p58
    %p60 = scmp.ne.s32.totalorder %s51, %s52
    %p61 = scmp.eq.s32.totalorder %s20, 0
    %p62 = por %p60, %p61
    %p63 = scmp.ne.s32.totalorder %s51, %s52
    %p64 = scmp.eq.s32.totalorder %s21, 1
    %p65 = por %p63, %p64
    %p67 = scmp.ne.s32.totalorder %s52, %s66
    %p68 = scmp.eq.s32.totalorder %s21, 0
    %p69 = por %p67, %p68
    %s71 = sadd.s32 %s70, 1
    %p74 = scmp.eq.s32.totalorder %s15, 1
    %p75 = scmp.ne.s32.totalorder %s70, %s72
    %p76 = scmp.eq.s32.totalorder %s15, 0
    %p77 = por %p75, %p76
    %p78 = scmp.ne.s32.totalorder %s70, %s72
    %p79 = scmp.eq.s32.totalorder %s20, 1
    %p80 = por %p78, %p79
    %p81 = scmp.ne.s32.totalorder %s72, %s73
    %p82 = scmp.eq.s32.totalorder %s20, 0
    %p83 = por %p81, %p82
    %p84 = scmp.ne.s32.totalorder %s72, %s73
    %p85 = scmp.eq.s32.totalorder %s21, 1
    %p86 = por %p84, %p85
    %p88 = scmp.ne.s32.totalorder %s73, %s87
    %p89 = scmp.eq.s32.totalorder %s21, 0
    %p90 = por %p88, %p89
    %s92 = sadd.s32 %s91, 1
    %p95 = scmp.eq.s32.totalorder %s15, 1
    %p96 = scmp.ne.s32.totalorder %s91, %s93
    %p97 = scmp.eq.s32.totalorder %s15, 0
    %p98 = por %p96, %p97
    %p99 = scmp.ne.s32.totalorder %s91, %s93
    %p100 = scmp.eq.s32.totalorder %s20, 1
    %p101 = por %p99, %p100
    %p102 = scmp.ne.s32.totalorder %s93, %s94
    %p103 = scmp.eq.s32.totalorder %s20, 0
    %p104 = por %p102, %p103
    %p105 = scmp.ne.s32.totalorder %s93, %s94
    %p106 = scmp.eq.s32.totalorder %s21, 1
    %p107 = por %p105, %p106
    %p109 = scmp.ne.s32.totalorder %s94, %s108
    %p110 = scmp.eq.s32.totalorder %s21, 0
    %p111 = por %p109, %p110
    %s113 = sadd.s32 %s112, 1
    %p116 = scmp.eq.s32.totalorder %s15, 1
    %p117 = scmp.ne.s32.totalorder %s112, %s114
    %p118 = scmp.eq.s32.totalorder %s15, 0
    %p119 = por %p117, %p118
    %p120 = scmp.ne.s32.totalorder %s112, %s114
    %p121 = scmp.eq.s32.totalorder %s20, 1
    %p122 = por %p120, %p121
    %p123 = scmp.ne.s32.totalorder %s114, %s115
    %p124 = scmp.eq.s32.totalorder %s20, 0
    %p125 = por %p123, %p124
    %p126 = scmp.ne.s32.totalorder %s114, %s115
    %p127 = scmp.eq.s32.totalorder %s21, 1
    %p128 = por %p126, %p127
    %p130 = scmp.ne.s32.totalorder %s115, %s129
    %p131 = scmp.eq.s32.totalorder %s21, 0
    %p132 = por %p130, %p131
    %s133 = ssub.s32 %s15, %s22
    %p134 = scmp.eq.s32.totalorder %s133, 0
    %s136 = sadd.s32 %s135, 1
    %s137 = scalar_select %p134, %s135, %s136
    %p140 = pneg %p134
    %p141 = scmp.eq.s32.totalorder %s15, 1
    %p142 = por %p140, %p141
    %p143 = scmp.ne.s32.totalorder %s135, %s138
    %p144 = scmp.eq.s32.totalorder %s15, 0
    %p145 = por %p143, %p144
    %p146 = scmp.ne.s32.totalorder %s135, %s138
    %p147 = scmp.eq.s32.totalorder %s20, 1
    %p148 = por %p146, %p147
    %p149 = scmp.ne.s32.totalorder %s138, %s139
    %p150 = scmp.eq.s32.totalorder %s20, 0
    %p151 = por %p149, %p150
    %p152 = scmp.ne.s32.totalorder %s138, %s139
    %p153 = scmp.eq.s32.totalorder %s21, 1
    %p154 = por %p152, %p153
    %p156 = scmp.ne.s32.totalorder %s139, %s155
    %p157 = scmp.eq.s32.totalorder %s21, 0
    %p158 = por %p156, %p157
    %s159 = ssub.s32 %s15, %s22
    %p160 = scmp.eq.s32.totalorder %s159, 0
    %s162 = sadd.s32 %s161, 1
    %s163 = scalar_select %p160, %s161, %s162
    %p166 = pneg %p160
    %p167 = scmp.eq.s32.totalorder %s15, 1
    %p168 = por %p166, %p167
    %p169 = scmp.ne.s32.totalorder %s161, %s164
    %p170 = scmp.eq.s32.totalorder %s15, 0
    %p171 = por %p169, %p170
    %p172 = scmp.ne.s32.totalorder %s161, %s164
    %p173 = scmp.eq.s32.totalorder %s20, 1
    %p174 = por %p172, %p173
    %p175 = scmp.ne.s32.totalorder %s164, %s165
    %p176 = scmp.eq.s32.totalorder %s20, 0
    %p177 = por %p175, %p176
    %p178 = scmp.ne.s32.totalorder %s164, %s165
    %p179 = scmp.eq.s32.totalorder %s21, 1
    %p180 = por %p178, %p179
    %p182 = scmp.ne.s32.totalorder %s165, %s181
    %p183 = scmp.eq.s32.totalorder %s21, 0
    %p184 = por %p182, %p183
    %s185 = ssub.s32 %s15, %s22
    %p186 = scmp.eq.s32.totalorder %s185, 0
    %s188 = sadd.s32 %s187, 1
    %s189 = scalar_select %p186, %s187, %s188
    %p192 = pneg %p186
    %p193 = scmp.eq.s32.totalorder %s15, 1
    %p194 = por %p192, %p193
    %p195 = scmp.ne.s32.totalorder %s187, %s190
    %p196 = scmp.eq.s32.totalorder %s15, 0
    %p197 = por %p195, %p196
    %p198 = scmp.ne.s32.totalorder %s187, %s190
    %p199 = scmp.eq.s32.totalorder %s20, 1
    %p200 = por %p198, %p199
    %p201 = scmp.ne.s32.totalorder %s190, %s191
    %p202 = scmp.eq.s32.totalorder %s20, 0
    %p203 = por %p201, %p202
    %p204 = scmp.ne.s32.totalorder %s190, %s191
    %p205 = scmp.eq.s32.totalorder %s21, 1
    %p206 = por %p204, %p205
    %p208 = scmp.ne.s32.totalorder %s191, %s207
    %p209 = scmp.eq.s32.totalorder %s21, 0
    %p210 = por %p208, %p209
    %s211 = ssub.s32 %s15, %s22
    %p212 = scmp.eq.s32.totalorder %s211, 0
    %s214 = sadd.s32 %s213, 1
    %s215 = scalar_select %p212, %s213, %s214
    %p218 = pneg %p212
    %p219 = scmp.eq.s32.totalorder %s15, 1
    %p220 = por %p218, %p219
    %p221 = scmp.ne.s32.totalorder %s213, %s216
    %p222 = scmp.eq.s32.totalorder %s15, 0
    %p223 = por %p221, %p222
    %p224 = scmp.ne.s32.totalorder %s213, %s216
    %p225 = scmp.eq.s32.totalorder %s20, 1
    %p226 = por %p224, %p225
    %p227 = scmp.ne.s32.totalorder %s216, %s217
    %p228 = scmp.eq.s32.totalorder %s20, 0
    %p229 = por %p227, %p228
    %p230 = scmp.ne.s32.totalorder %s216, %s217
    %p231 = scmp.eq.s32.totalorder %s21, 1
    %p232 = por %p230, %p231
    %p234 = scmp.ne.s32.totalorder %s217, %s233
    %p235 = scmp.eq.s32.totalorder %s21, 0
    %p236 = por %p234, %p235
    %p237 = scmp.le.s32.totalorder 1, %s15
    %p238 = scmp.lt.s32.totalorder %s15, 3
    %p239 = pnand %p237, %p238
    %p240 = pneg %p239
    // Predicated region
    $region9: #{basic_block_forward.4} parent=5 // pred_check
      _
    $region10: #{basic_block_forward.4} parent=5 // pred_check_branch
      %242 = sbr.rel (%p239) target = $region12
    $region11: #{basic_block_forward.4} parent=5 // pred_region
      %s243 = ssub.s32 %s15, 1
      // Predicated region
      $region13: #{basic_block_forward.4} parent=11 // pred_check
        %p244 = pneg %p62
      $region14: #{basic_block_forward.4} parent=11 // pred_check_branch
        %246 = sbr.rel (%p244) target = $region16
      $region15: #{basic_block_forward.4} parent=11 // pred_region
        _
      $region16: #{basic_block_forward.4} parent=11 // pred_fallthru
        _
      // Predicated region
      $region17: #{basic_block_forward.4} parent=11 // pred_check
        %p247 = pneg %p83
      $region18: #{basic_block_forward.4} parent=11 // pred_check_branch
        %249 = sbr.rel (%p247) target = $region20
      $region19: #{basic_block_forward.4} parent=11 // pred_region
        _
      $region20: #{basic_block_forward.4} parent=11 // pred_fallthru
        _
      // Predicated region
      $region21: #{basic_block_forward.4} parent=11 // pred_check
        %p250 = pneg %p104
      $region22: #{basic_block_forward.4} parent=11 // pred_check_branch
        %252 = sbr.rel (%p250) target = $region24
      $region23: #{basic_block_forward.4} parent=11 // pred_region
        _
      $region24: #{basic_block_forward.4} parent=11 // pred_fallthru
        _
      // Predicated region
      $region25: #{basic_block_forward.4} parent=11 // pred_check
        %p253 = pneg %p125
      $region26: #{basic_block_forward.4} parent=11 // pred_check_branch
        %255 = sbr.rel (%p253) target = $region28
      $region27: #{basic_block_forward.4} parent=11 // pred_region
        _
      $region28: #{basic_block_forward.4} parent=11 // pred_fallthru
        _
    $region12: #{basic_block_forward.4} parent=5 // pred_fallthru
      _
    %p256 = scmp.lt.s32.totalorder %s15, 2
    // Predicated region
    $region29: #{basic_block_forward.4} parent=5 // pred_check
      %p257 = pneg %p256
    $region30: #{basic_block_forward.4} parent=5 // pred_check_branch
      %259 = sbr.rel (%p257) target = $region32
    $region31: #{basic_block_forward.4} parent=5 // pred_region
      // Predicated region
      $region33: #{basic_block_forward.4} parent=31 // pred_check
        %p260 = pneg %p35
      $region34: #{basic_block_forward.4} parent=31 // pred_check_branch
        %262 = sbr.rel (%p260) target = $region36
      $region35: #{basic_block_forward.4} parent=31 // pred_region
        %p263 = scmp.lt.s32.totalorder %s15, 1
        %s264 = scalar_select %p263, %s15, 1
        %s265 = smul.addr %s264, 32
        %s266 = smul.addr %s265, 8
        %s267 = scalar_lea.vmem %s0, %s266
      $region36: #{basic_block_forward.4} parent=31 // pred_fallthru
        _
    $region32: #{basic_block_forward.4} parent=5 // pred_fallthru
      _
    %p268 = scmp.le.s32.totalorder 1, %s15
    %p269 = scmp.lt.s32.totalorder %s15, 3
    %p270 = pnand %p268, %p269
    %p271 = pneg %p270
    // Predicated region
    $region37: #{basic_block_forward.4} parent=5 // pred_check
      _
    $region38: #{basic_block_forward.4} parent=5 // pred_check_branch
      %273 = sbr.rel (%p270) target = $region40
    $region39: #{basic_block_forward.4} parent=5 // pred_region
      %s274 = ssub.s32 %s15, 1
      %p275 = scmp.lt.s32.totalorder %s20, 1
      %s276 = scalar_select %p275, %s20, 1
      %s277 = smul.addr %s276, 32
      %s278 = smul.addr %s277, 8
      %s279 = scalar_lea.vmem %s0, %s278
      %p280 = pneg %p41
      %p281 = pneg %p38
      %p282 = pneg %p62
      %p283 = pneg %p59
      %p284 = pneg %p83
      %p285 = pneg %p80
      %p286 = pneg %p104
      %p287 = pneg %p101
      %p288 = pneg %p125
      %p289 = pneg %p122
      %p290 = pneg %p151
      %p291 = pneg %p148
      %p292 = scmp.lt.s32.totalorder %s20, 1
      %s293 = scalar_select %p292, %s20, 1
      %s294 = smul.addr %s293, 8
      %s295 = smul.addr %s294, 4
      %s296 = scalar_lea.vmem %s5, %s295
      %p297 = pneg %p177
      %p298 = pneg %p174
      %p299 = scmp.lt.s32.totalorder %s20, 1
      %s300 = scalar_select %p299, %s20, 1
      %s301 = smul.addr %s300, 8
      %s302 = smul.addr %s301, 4
      %s303 = scalar_lea.vmem %s6, %s302
      %p304 = pneg %p203
      %p305 = pneg %p200
      %p306 = scmp.lt.s32.totalorder %s20, 1
      %s307 = scalar_select %p306, %s20, 1
      %s308 = scalar_lea.vmem %s7, %s307
      %p309 = pneg %p229
      %p310 = pneg %p226
      %p311 = scmp.lt.s32.totalorder %s20, 1
      %s312 = scalar_select %p311, %s20, 1
      %s313 = scalar_lea.vmem %s8, %s312
      %p314 = scmp.lt.s32.totalorder %s20, 1
      %s315 = scalar_select %p314, %s20, 1
      %s316 = smul.addr %s315, 32
      %s317 = smul.addr %s316, 8
      %s318 = scalar_lea.vmem %s0, %s317
      %p319 = scmp.lt.s32.totalorder %s20, 1
      %s320 = scalar_select %p319, %s20, 1
      %s321 = smul.addr %s320, 8
      %s322 = smul.addr %s321, 4
      %s323 = scalar_lea.vmem %s5, %s322
      %p324 = scmp.lt.s32.totalorder %s20, 1
      %s325 = scalar_select %p324, %s20, 1
      %s326 = smul.addr %s325, 8
      %s327 = smul.addr %s326, 4
      %s328 = scalar_lea.vmem %s6, %s327
      %p329 = scmp.lt.s32.totalorder %s20, 1
      %s330 = scalar_select %p329, %s20, 1
      %s331 = scalar_lea.vmem %s7, %s330
      %p332 = scmp.lt.s32.totalorder %s20, 1
      %s333 = scalar_select %p332, %s20, 1
      %s334 = scalar_lea.vmem %s8, %s333
      %336 = vst [vmem:[#allocation2] sm:$0xf] 0
      %337 = vst [vmem:[#allocation2 + $0x4] sm:$0xf] 0
      %vm338 = vcmask 1041408
      %vm339 = vsmask.f32 1280
      %vm340 = vmand %vm338, %vm339
      %v341 = vld [vmem:[#allocation2 + $0x8] sm:$0x3]
      %v342 = vsel %vm340, 0, %v341
      %343 = vst [vmem:[#allocation2 + $0x8] sm:$0x3] %v342
      %s344 = scalar_lea.vmem [#allocation2], 12
      %vm345 = vcmask 1040384
      %vm346 = vsmask.f32 256
      %vm347 = vmand %vm345, %vm346
      %v348 = vld [vmem:[%s344] sm:$0x1]
      %v349 = vsel %vm347, 0, %v348
      %350 = vst [vmem:[%s344] sm:$0x1] %v349
      %v351 = vld [vmem:[%s344 + $0xc] sm:$0x1]
      %v352 = vsel %vm347, 0, %v351
      %353 = vst [vmem:[%s344 + $0xc] sm:$0x1] %v352
      %v354 = vld [vmem:[%s344 + $0x18] sm:$0x1]
      %v355 = vsel %vm347, 0, %v354
      %356 = vst [vmem:[%s344 + $0x18] sm:$0x1] %v355
      %v357 = vld [vmem:[%s344 + $0x24] sm:$0x1]
      %v358 = vsel %vm347, 0, %v357
      %359 = vst [vmem:[%s344 + $0x24] sm:$0x1] %v358
      %v360 = vld [vmem:[%s344 + $0x30] sm:$0x1]
      %v361 = vsel %vm347, 0, %v360
      %362 = vst [vmem:[%s344 + $0x30] sm:$0x1] %v361
      %v363 = vld [vmem:[%s344 + $0x3c] sm:$0x1]
      %v364 = vsel %vm347, 0, %v363
      %365 = vst [vmem:[%s344 + $0x3c] sm:$0x1] %v364
      %v366 = vld [vmem:[%s344 + $0x48] sm:$0x1]
      %v367 = vsel %vm347, 0, %v366
      %368 = vst [vmem:[%s344 + $0x48] sm:$0x1] %v367
      %v369 = vld [vmem:[%s344 + $0x54] sm:$0x1]
      %v370 = vsel %vm347, 0, %v369
      %371 = vst [vmem:[%s344 + $0x54] sm:$0x1] %v370
      %vm372 = vsmask.f32 1282
      %vm373 = vmand %vm338, %vm372
      %v374 = vld [vmem:[%s344 + $0x8] sm:$0x3]
      %v375 = vsel %vm373, 0, %v374
      %376 = vst [vmem:[%s344 + $0x8] sm:$0x3] %v375
      %v377 = vld [vmem:[%s344 + $0x14] sm:$0x3]
      %v378 = vsel %vm373, 0, %v377
      %379 = vst [vmem:[%s344 + $0x14] sm:$0x3] %v378
      %v380 = vld [vmem:[%s344 + $0x20] sm:$0x3]
      %v381 = vsel %vm373, 0, %v380
      %382 = vst [vmem:[%s344 + $0x20] sm:$0x3] %v381
      %v383 = vld [vmem:[%s344 + $0x2c] sm:$0x3]
      %v384 = vsel %vm373, 0, %v383
      %385 = vst [vmem:[%s344 + $0x2c] sm:$0x3] %v384
      %v386 = vld [vmem:[%s344 + $0x38] sm:$0x3]
      %v387 = vsel %vm373, 0, %v386
      %388 = vst [vmem:[%s344 + $0x38] sm:$0x3] %v387
      %v389 = vld [vmem:[%s344 + $0x44] sm:$0x3]
      %v390 = vsel %vm373, 0, %v389
      %391 = vst [vmem:[%s344 + $0x44] sm:$0x3] %v390
      %v392 = vld [vmem:[%s344 + $0x50] sm:$0x3]
      %v393 = vsel %vm373, 0, %v392
      %394 = vst [vmem:[%s344 + $0x50] sm:$0x3] %v393
      %v395 = vld [vmem:[%s344 + $0x5c] sm:$0x3]
      %v396 = vsel %vm373, 0, %v395
      %397 = vst [vmem:[%s344 + $0x5c] sm:$0x3] %v396
      %s398 = scalar_lea.vmem [#allocation2], 204
      %399 = vst [vmem:[%s398] sm:$0xf] 0
      %400 = vst [vmem:[%s398 + $0x4] sm:$0xf] 0
      %v401 = vld [vmem:[%s398 + $0x8] sm:$0x3]
      %v402 = vsel %vm340, 0, %v401
      %403 = vst [vmem:[%s398 + $0x8] sm:$0x3] %v402
      %s404 = scalar_lea.vmem [#allocation2], 108
      %v405 = vld [vmem:[%s404] sm:$0x1]
      %v406 = vsel %vm347, 0, %v405
      %407 = vst [vmem:[%s404] sm:$0x1] %v406
      %v408 = vld [vmem:[%s404 + $0xc] sm:$0x1]
      %v409 = vsel %vm347, 0, %v408
      %410 = vst [vmem:[%s404 + $0xc] sm:$0x1] %v409
      %v411 = vld [vmem:[%s404 + $0x18] sm:$0x1]
      %v412 = vsel %vm347, 0, %v411
      %413 = vst [vmem:[%s404 + $0x18] sm:$0x1] %v412
      %v414 = vld [vmem:[%s404 + $0x24] sm:$0x1]
      %v415 = vsel %vm347, 0, %v414
      %416 = vst [vmem:[%s404 + $0x24] sm:$0x1] %v415
      %v417 = vld [vmem:[%s404 + $0x30] sm:$0x1]
      %v418 = vsel %vm347, 0, %v417
      %419 = vst [vmem:[%s404 + $0x30] sm:$0x1] %v418
      %v420 = vld [vmem:[%s404 + $0x3c] sm:$0x1]
      %v421 = vsel %vm347, 0, %v420
      %422 = vst [vmem:[%s404 + $0x3c] sm:$0x1] %v421
      %v423 = vld [vmem:[%s404 + $0x48] sm:$0x1]
      %v424 = vsel %vm347, 0, %v423
      %425 = vst [vmem:[%s404 + $0x48] sm:$0x1] %v424
      %v426 = vld [vmem:[%s404 + $0x54] sm:$0x1]
      %v427 = vsel %vm347, 0, %v426
      %428 = vst [vmem:[%s404 + $0x54] sm:$0x1] %v427
      %v429 = vld [vmem:[%s404 + $0x8] sm:$0x3]
      %v430 = vsel %vm373, 0, %v429
      %431 = vst [vmem:[%s404 + $0x8] sm:$0x3] %v430
      %v432 = vld [vmem:[%s404 + $0x14] sm:$0x3]
      %v433 = vsel %vm373, 0, %v432
      %434 = vst [vmem:[%s404 + $0x14] sm:$0x3] %v433
      %v435 = vld [vmem:[%s404 + $0x20] sm:$0x3]
      %v436 = vsel %vm373, 0, %v435
      %437 = vst [vmem:[%s404 + $0x20] sm:$0x3] %v436
      %v438 = vld [vmem:[%s404 + $0x2c] sm:$0x3]
      %v439 = vsel %vm373, 0, %v438
      %440 = vst [vmem:[%s404 + $0x2c] sm:$0x3] %v439
      %v441 = vld [vmem:[%s404 + $0x38] sm:$0x3]
      %v442 = vsel %vm373, 0, %v441
      %443 = vst [vmem:[%s404 + $0x38] sm:$0x3] %v442
      %v444 = vld [vmem:[%s404 + $0x44] sm:$0x3]
      %v445 = vsel %vm373, 0, %v444
      %446 = vst [vmem:[%s404 + $0x44] sm:$0x3] %v445
      %v447 = vld [vmem:[%s404 + $0x50] sm:$0x3]
      %v448 = vsel %vm373, 0, %v447
      %449 = vst [vmem:[%s404 + $0x50] sm:$0x3] %v448
      %v450 = vld [vmem:[%s404 + $0x5c] sm:$0x3]
      %v451 = vsel %vm373, 0, %v450
      %452 = vst [vmem:[%s404 + $0x5c] sm:$0x3] %v451
      %v453 = vld [vmem:[%s1] sm:$0x1]
      %v454 = vld [vmem:[%s2] sm:$0x1]
      %v455 = vld [vmem:[%s318] sm:$0xff]
      %v456 = vld [vmem:[%s318 + $0x8] sm:$0xff]
      %v457 = vld [vmem:[%s318 + $0x10] sm:$0xff]
      %v458 = vld [vmem:[%s318 + $0x18] sm:$0xff]
      %v459 = vld [vmem:[%s318 + $0x20] sm:$0xff]
      %v460 = vld [vmem:[%s318 + $0x28] sm:$0xff]
      %v461 = vld [vmem:[%s318 + $0x30] sm:$0xff]
      %v462 = vld [vmem:[%s318 + $0x38] sm:$0xff]
      %v463 = vld [vmem:[%s318 + $0x40] sm:$0xff]
      %v464 = vld [vmem:[%s318 + $0x48] sm:$0xff]
      %v465 = vld [vmem:[%s318 + $0x50] sm:$0xff]
      %v466 = vld [vmem:[%s318 + $0x58] sm:$0xff]
      %v467 = vld [vmem:[%s318 + $0x60] sm:$0xff]
      %v468 = vld [vmem:[%s318 + $0x68] sm:$0xff]
      %v469 = vld [vmem:[%s318 + $0x70] sm:$0xff]
      %v470 = vld [vmem:[%s318 + $0x78] sm:$0xff]
      %v472 = vlaneseq
      %v473 = vshrl.u32 %v472, 7
      %v474 = vsub.s32 0, %v473
      %v475 = vrot.slane %v453, %v474
      %v477 = vmul.f32 %v455, %v475
      %v478 = vmul.f32 %v456, %v475
      %v479 = vmul.f32 %v457, %v475
      %v480 = vmul.f32 %v458, %v475
      %v481 = vmul.f32 %v459, %v475
      %v482 = vmul.f32 %v460, %v475
      %v483 = vmul.f32 %v461, %v475
      %v484 = vmul.f32 %v462, %v475
      %v485 = vmul.f32 %v463, %v475
      %v486 = vmul.f32 %v464, %v475
      %v487 = vmul.f32 %v465, %v475
      %v488 = vmul.f32 %v466, %v475
      %v489 = vmul.f32 %v467, %v475
      %v490 = vmul.f32 %v468, %v475
      %v491 = vmul.f32 %v469, %v475
      %v492 = vmul.f32 %v470, %v475
      %v494 = vlaneseq
      %v495 = vshrl.u32 %v494, 7
      %v496 = vsub.s32 0, %v495
      %v497 = vrot.slane %v454, %v496
      %v499 = vadd.f32 %v477, %v497
      %v500 = vadd.f32 %v478, %v497
      %v501 = vadd.f32 %v479, %v497
      %v502 = vadd.f32 %v480, %v497
      %v503 = vadd.f32 %v481, %v497
      %v504 = vadd.f32 %v482, %v497
      %v505 = vadd.f32 %v483, %v497
      %v506 = vadd.f32 %v484, %v497
      %v507 = vadd.f32 %v485, %v497
      %v508 = vadd.f32 %v486, %v497
      %v509 = vadd.f32 %v487, %v497
      %v510 = vadd.f32 %v488, %v497
      %v511 = vadd.f32 %v489, %v497
      %v512 = vadd.f32 %v490, %v497
      %v513 = vadd.f32 %v491, %v497
      %v514 = vadd.f32 %v492, %v497
      %v515 = vmax.f32 %v499, 0.0
      %v516 = vmax.f32 %v500, 0.0
      %v517 = vmax.f32 %v501, 0.0
      %v518 = vmax.f32 %v502, 0.0
      %v519 = vmax.f32 %v503, 0.0
      %v520 = vmax.f32 %v504, 0.0
      %v521 = vmax.f32 %v505, 0.0
      %v522 = vmax.f32 %v506, 0.0
      %v523 = vmax.f32 %v507, 0.0
      %v524 = vmax.f32 %v508, 0.0
      %v525 = vmax.f32 %v509, 0.0
      %v526 = vmax.f32 %v510, 0.0
      %v527 = vmax.f32 %v511, 0.0
      %v528 = vmax.f32 %v512, 0.0
      %v529 = vmax.f32 %v513, 0.0
      %v530 = vmax.f32 %v514, 0.0
      %v531 = vpack.c.bf16 %v516, %v515
      %v532 = vpack.c.bf16 %v518, %v517
      %v533 = vpack.c.bf16 %v520, %v519
      %v534 = vpack.c.bf16 %v522, %v521
      %v535 = vpack.c.bf16 %v524, %v523
      %v536 = vpack.c.bf16 %v526, %v525
      %v537 = vpack.c.bf16 %v528, %v527
      %v538 = vpack.c.bf16 %v530, %v529
      %v540 = vunpack.c.l.b16 %v531
      %v541 = vunpack.c.h.b16 %v531
      %v542 = vpack.c.b16 %v540, %v540
      %v543 = vpack.c.b16 %v541, %v541
      %vm544 = vsmask.f32 4368
      %vm545 = vmor %vm346, %vm544
      %v547 = vshrl.u32 %v542, 16
      %v549 = vrot.slane %v547, 7
      %v550 = vshll.u32 %v542, 16
      %v552 = vor.u32 %v549, %v550
      %v553 = vrot.slane %v549, 4
      %v555 = vshrl.u32 %v543, 16
      %v557 = vrot.slane %v555, 7
      %v558 = vshll.u32 %v543, 16
      %v560 = vor.u32 %v557, %v558
      %v561 = vsel %vm545, %v553, %v560
      %v562 = vrot.slane %v557, 4
      %vm566 = vcmask 1043456
      %vm567 = vsmask.f32 7938
      %vm568 = vmand %vm566, %vm567
      %v569 = vld [vmem:[%s404] sm:$0xf]
      %v570 = vsel %vm568, %v552, %v569
      %571 = vst [vmem:[%s404] sm:$0xf] %v570
      %572 = vst [vmem:[%s404 + $0x4] sm:$0xf] %v561
      %v573 = vld [vmem:[%s404 + $0x8] sm:$0x1]
      %v574 = vsel %vm347, %v562, %v573
      %575 = vst [vmem:[%s404 + $0x8] sm:$0x1] %v574
      %v577 = vunpack.c.l.b16 %v532
      %v578 = vunpack.c.h.b16 %v532
      %v579 = vpack.c.b16 %v577, %v577
      %v580 = vpack.c.b16 %v578, %v578
      %v582 = vshrl.u32 %v579, 16
      %v584 = vrot.slane %v582, 7
      %v585 = vshll.u32 %v579, 16
      %v587 = vor.u32 %v584, %v585
      %v588 = vrot.slane %v584, 4
      %v590 = vshrl.u32 %v580, 16
      %v592 = vrot.slane %v590, 7
      %v593 = vshll.u32 %v580, 16
      %v595 = vor.u32 %v592, %v593
      %v596 = vsel %vm545, %v588, %v595
      %v597 = vrot.slane %v592, 4
      %v601 = vld [vmem:[%s344] sm:$0xf]
      %v602 = vsel %vm568, %v587, %v601
      %603 = vst [vmem:[%s344] sm:$0xf] %v602
      %604 = vst [vmem:[%s344 + $0x4] sm:$0xf] %v596
      %v605 = vld [vmem:[%s344 + $0x8] sm:$0x1]
      %v606 = vsel %vm347, %v597, %v605
      %607 = vst [vmem:[%s344 + $0x8] sm:$0x1] %v606
      %v609 = vunpack.c.l.b16 %v533
      %v610 = vunpack.c.h.b16 %v533
      %v611 = vpack.c.b16 %v609, %v609
      %v612 = vpack.c.b16 %v610, %v610
      %v614 = vshrl.u32 %v611, 16
      %v616 = vrot.slane %v614, 7
      %v617 = vshll.u32 %v611, 16
      %v619 = vor.u32 %v616, %v617
      %v620 = vrot.slane %v616, 4
      %v622 = vshrl.u32 %v612, 16
      %v624 = vrot.slane %v622, 7
      %v625 = vshll.u32 %v612, 16
      %v627 = vor.u32 %v624, %v625
      %v628 = vsel %vm545, %v620, %v627
      %v629 = vrot.slane %v624, 4
      %s633 = scalar_lea.vmem [#allocation2], 120
      %v634 = vld [vmem:[%s633] sm:$0xf]
      %v635 = vsel %vm568, %v619, %v634
      %636 = vst [vmem:[%s633] sm:$0xf] %v635
      %637 = vst [vmem:[%s633 + $0x4] sm:$0xf] %v628
      %v638 = vld [vmem:[%s633 + $0x8] sm:$0x1]
      %v639 = vsel %vm347, %v629, %v638
      %640 = vst [vmem:[%s633 + $0x8] sm:$0x1] %v639
      %v642 = vunpack.c.l.b16 %v534
      %v643 = vunpack.c.h.b16 %v534
      %v644 = vpack.c.b16 %v642, %v642
      %v645 = vpack.c.b16 %v643, %v643
      %v647 = vshrl.u32 %v644, 16
      %v649 = vrot.slane %v647, 7
      %v650 = vshll.u32 %v644, 16
      %v652 = vor.u32 %v649, %v650
      %v653 = vrot.slane %v649, 4
      %v655 = vshrl.u32 %v645, 16
      %v657 = vrot.slane %v655, 7
      %v658 = vshll.u32 %v645, 16
      %v660 = vor.u32 %v657, %v658
      %v661 = vsel %vm545, %v653, %v660
      %v662 = vrot.slane %v657, 4
      %s666 = scalar_lea.vmem [#allocation2], 24
      %v667 = vld [vmem:[%s666] sm:$0xf]
      %v668 = vsel %vm568, %v652, %v667
      %669 = vst [vmem:[%s666] sm:$0xf] %v668
      %670 = vst [vmem:[%s666 + $0x4] sm:$0xf] %v661
      %v671 = vld [vmem:[%s666 + $0x8] sm:$0x1]
      %v672 = vsel %vm347, %v662, %v671
      %673 = vst [vmem:[%s666 + $0x8] sm:$0x1] %v672
      %v675 = vunpack.c.l.b16 %v535
      %v676 = vunpack.c.h.b16 %v535
      %v677 = vpack.c.b16 %v675, %v675
      %v678 = vpack.c.b16 %v676, %v676
      %v680 = vshrl.u32 %v677, 16
      %v682 = vrot.slane %v680, 7
      %v683 = vshll.u32 %v677, 16
      %v685 = vor.u32 %v682, %v683
      %v686 = vrot.slane %v682, 4
      %v688 = vshrl.u32 %v678, 16
      %v690 = vrot.slane %v688, 7
      %v691 = vshll.u32 %v678, 16
      %v693 = vor.u32 %v690, %v691
      %v694 = vsel %vm545, %v686, %v693
      %v695 = vrot.slane %v690, 4
      %s699 = scalar_lea.vmem [#allocation2], 132
      %v700 = vld [vmem:[%s699] sm:$0xf]
      %v701 = vsel %vm568, %v685, %v700
      %702 = vst [vmem:[%s699] sm:$0xf] %v701
      %703 = vst [vmem:[%s699 + $0x4] sm:$0xf] %v694
      %v704 = vld [vmem:[%s699 + $0x8] sm:$0x1]
      %v705 = vsel %vm347, %v695, %v704
      %706 = vst [vmem:[%s699 + $0x8] sm:$0x1] %v705
      %v708 = vunpack.c.l.b16 %v536
      %v709 = vunpack.c.h.b16 %v536
      %v710 = vpack.c.b16 %v708, %v708
      %v711 = vpack.c.b16 %v709, %v709
      %v713 = vshrl.u32 %v710, 16
      %v715 = vrot.slane %v713, 7
      %v716 = vshll.u32 %v710, 16
      %v718 = vor.u32 %v715, %v716
      %v719 = vrot.slane %v715, 4
      %v721 = vshrl.u32 %v711, 16
      %v723 = vrot.slane %v721, 7
      %v724 = vshll.u32 %v711, 16
      %v726 = vor.u32 %v723, %v724
      %v727 = vsel %vm545, %v719, %v726
      %v728 = vrot.slane %v723, 4
      %s732 = scalar_lea.vmem [#allocation2], 36
      %v733 = vld [vmem:[%s732] sm:$0xf]
      %v734 = vsel %vm568, %v718, %v733
      %735 = vst [vmem:[%s732] sm:$0xf] %v734
      %736 = vst [vmem:[%s732 + $0x4] sm:$0xf] %v727
      %v737 = vld [vmem:[%s732 + $0x8] sm:$0x1]
      %v738 = vsel %vm347, %v728, %v737
      %739 = vst [vmem:[%s732 + $0x8] sm:$0x1] %v738
      %v741 = vunpack.c.l.b16 %v537
      %v742 = vunpack.c.h.b16 %v537
      %v743 = vpack.c.b16 %v741, %v741
      %v744 = vpack.c.b16 %v742, %v742
      %v746 = vshrl.u32 %v743, 16
      %v748 = vrot.slane %v746, 7
      %v749 = vshll.u32 %v743, 16
      %v751 = vor.u32 %v748, %v749
      %v752 = vrot.slane %v748, 4
      %v754 = vshrl.u32 %v744, 16
      %v756 = vrot.slane %v754, 7
      %v757 = vshll.u32 %v744, 16
      %v759 = vor.u32 %v756, %v757
      %v760 = vsel %vm545, %v752, %v759
      %v761 = vrot.slane %v756, 4
      %s765 = scalar_lea.vmem [#allocation2], 144
      %v766 = vld [vmem:[%s765] sm:$0xf]
      %v767 = vsel %vm568, %v751, %v766
      %768 = vst [vmem:[%s765] sm:$0xf] %v767
      %769 = vst [vmem:[%s765 + $0x4] sm:$0xf] %v760
      %v770 = vld [vmem:[%s765 + $0x8] sm:$0x1]
      %v771 = vsel %vm347, %v761, %v770
      %772 = vst [vmem:[%s765 + $0x8] sm:$0x1] %v771
      %v774 = vunpack.c.l.b16 %v538
      %v775 = vunpack.c.h.b16 %v538
      %v776 = vpack.c.b16 %v774, %v774
      %v777 = vpack.c.b16 %v775, %v775
      %v779 = vshrl.u32 %v776, 16
      %v781 = vrot.slane %v779, 7
      %v782 = vshll.u32 %v776, 16
      %v784 = vor.u32 %v781, %v782
      %v785 = vrot.slane %v781, 4
      %v787 = vshrl.u32 %v777, 16
      %v789 = vrot.slane %v787, 7
      %v790 = vshll.u32 %v777, 16
      %v792 = vor.u32 %v789, %v790
      %v793 = vsel %vm545, %v785, %v792
      %v794 = vrot.slane %v789, 4
      %s798 = scalar_lea.vmem [#allocation2], 48
      %v799 = vld [vmem:[%s798] sm:$0xf]
      %v800 = vsel %vm568, %v784, %v799
      %801 = vst [vmem:[%s798] sm:$0xf] %v800
      %802 = vst [vmem:[%s798 + $0x4] sm:$0xf] %v793
      %v803 = vld [vmem:[%s798 + $0x8] sm:$0x1]
      %v804 = vsel %vm347, %v794, %v803
      %805 = vst [vmem:[%s798 + $0x8] sm:$0x1] %v804
      %s806 = scalar_lea.vmem %s318, 128
      %v807 = vld [vmem:[%s806] sm:$0xff]
      %v808 = vld [vmem:[%s806 + $0x8] sm:$0xff]
      %v809 = vld [vmem:[%s806 + $0x10] sm:$0xff]
      %v810 = vld [vmem:[%s806 + $0x18] sm:$0xff]
      %v811 = vld [vmem:[%s806 + $0x20] sm:$0xff]
      %v812 = vld [vmem:[%s806 + $0x28] sm:$0xff]
      %v813 = vld [vmem:[%s806 + $0x30] sm:$0xff]
      %v814 = vld [vmem:[%s806 + $0x38] sm:$0xff]
      %v815 = vld [vmem:[%s806 + $0x40] sm:$0xff]
      %v816 = vld [vmem:[%s806 + $0x48] sm:$0xff]
      %v817 = vld [vmem:[%s806 + $0x50] sm:$0xff]
      %v818 = vld [vmem:[%s806 + $0x58] sm:$0xff]
      %v819 = vld [vmem:[%s806 + $0x60] sm:$0xff]
      %v820 = vld [vmem:[%s806 + $0x68] sm:$0xff]
      %v821 = vld [vmem:[%s806 + $0x70] sm:$0xff]
      %v822 = vld [vmem:[%s806 + $0x78] sm:$0xff]
      %v823 = vmul.f32 %v807, %v475
      %v824 = vmul.f32 %v808, %v475
      %v825 = vmul.f32 %v809, %v475
      %v826 = vmul.f32 %v810, %v475
      %v827 = vmul.f32 %v811, %v475
      %v828 = vmul.f32 %v812, %v475
      %v829 = vmul.f32 %v813, %v475
      %v830 = vmul.f32 %v814, %v475
      %v831 = vmul.f32 %v815, %v475
      %v832 = vmul.f32 %v816, %v475
      %v833 = vmul.f32 %v817, %v475
      %v834 = vmul.f32 %v818, %v475
      %v835 = vmul.f32 %v819, %v475
      %v836 = vmul.f32 %v820, %v475
      %v837 = vmul.f32 %v821, %v475
      %v838 = vmul.f32 %v822, %v475
      %v839 = vadd.f32 %v823, %v497
      %v840 = vadd.f32 %v824, %v497
      %v841 = vadd.f32 %v825, %v497
      %v842 = vadd.f32 %v826, %v497
      %v843 = vadd.f32 %v827, %v497
      %v844 = vadd.f32 %v828, %v497
      %v845 = vadd.f32 %v829, %v497
      %v846 = vadd.f32 %v830, %v497
      %v847 = vadd.f32 %v831, %v497
      %v848 = vadd.f32 %v832, %v497
      %v849 = vadd.f32 %v833, %v497
      %v850 = vadd.f32 %v834, %v497
      %v851 = vadd.f32 %v835, %v497
      %v852 = vadd.f32 %v836, %v497
      %v853 = vadd.f32 %v837, %v497
      %v854 = vadd.f32 %v838, %v497
      %v855 = vmax.f32 %v839, 0.0
      %v856 = vmax.f32 %v840, 0.0
      %v857 = vmax.f32 %v841, 0.0
      %v858 = vmax.f32 %v842, 0.0
      %v859 = vmax.f32 %v843, 0.0
      %v860 = vmax.f32 %v844, 0.0
      %v861 = vmax.f32 %v845, 0.0
      %v862 = vmax.f32 %v846, 0.0
      %v863 = vmax.f32 %v847, 0.0
      %v864 = vmax.f32 %v848, 0.0
      %v865 = vmax.f32 %v849, 0.0
      %v866 = vmax.f32 %v850, 0.0
      %v867 = vmax.f32 %v851, 0.0
      %v868 = vmax.f32 %v852, 0.0
      %v869 = vmax.f32 %v853, 0.0
      %v870 = vmax.f32 %v854, 0.0
      %v871 = vpack.c.bf16 %v856, %v855
      %v872 = vpack.c.bf16 %v858, %v857
      %v873 = vpack.c.bf16 %v860, %v859
      %v874 = vpack.c.bf16 %v862, %v861
      %v875 = vpack.c.bf16 %v864, %v863
      %v876 = vpack.c.bf16 %v866, %v865
      %v877 = vpack.c.bf16 %v868, %v867
      %v878 = vpack.c.bf16 %v870, %v869
      %v880 = vunpack.c.l.b16 %v871
      %v881 = vunpack.c.h.b16 %v871
      %v882 = vpack.c.b16 %v880, %v880
      %v883 = vpack.c.b16 %v881, %v881
      %v885 = vshrl.u32 %v882, 16
      %v887 = vrot.slane %v885, 7
      %v888 = vshll.u32 %v882, 16
      %v890 = vor.u32 %v887, %v888
      %v891 = vrot.slane %v887, 4
      %v893 = vshrl.u32 %v883, 16
      %v895 = vrot.slane %v893, 7
      %v896 = vshll.u32 %v883, 16
      %v898 = vor.u32 %v895, %v896
      %v899 = vsel %vm545, %v891, %v898
      %v900 = vrot.slane %v895, 4
      %s904 = scalar_lea.vmem [#allocation2], 156
      %v905 = vld [vmem:[%s904] sm:$0xf]
      %v906 = vsel %vm568, %v890, %v905
      %907 = vst [vmem:[%s904] sm:$0xf] %v906
      %908 = vst [vmem:[%s904 + $0x4] sm:$0xf] %v899
      %v909 = vld [vmem:[%s904 + $0x8] sm:$0x1]
      %v910 = vsel %vm347, %v900, %v909
      %911 = vst [vmem:[%s904 + $0x8] sm:$0x1] %v910
      %v913 = vunpack.c.l.b16 %v872
      %v914 = vunpack.c.h.b16 %v872
      %v915 = vpack.c.b16 %v913, %v913
      %v916 = vpack.c.b16 %v914, %v914
      %v918 = vshrl.u32 %v915, 16
      %v920 = vrot.slane %v918, 7
      %v921 = vshll.u32 %v915, 16
      %v923 = vor.u32 %v920, %v921
      %v924 = vrot.slane %v920, 4
      %v926 = vshrl.u32 %v916, 16
      %v928 = vrot.slane %v926, 7
      %v929 = vshll.u32 %v916, 16
      %v931 = vor.u32 %v928, %v929
      %v932 = vsel %vm545, %v924, %v931
      %v933 = vrot.slane %v928, 4
      %s937 = scalar_lea.vmem [#allocation2], 60
      %v938 = vld [vmem:[%s937] sm:$0xf]
      %v939 = vsel %vm568, %v923, %v938
      %940 = vst [vmem:[%s937] sm:$0xf] %v939
      %941 = vst [vmem:[%s937 + $0x4] sm:$0xf] %v932
      %v942 = vld [vmem:[%s937 + $0x8] sm:$0x1]
      %v943 = vsel %vm347, %v933, %v942
      %944 = vst [vmem:[%s937 + $0x8] sm:$0x1] %v943
      %v946 = vunpack.c.l.b16 %v873
      %v947 = vunpack.c.h.b16 %v873
      %v948 = vpack.c.b16 %v946, %v946
      %v949 = vpack.c.b16 %v947, %v947
      %v951 = vshrl.u32 %v948, 16
      %v953 = vrot.slane %v951, 7
      %v954 = vshll.u32 %v948, 16
      %v956 = vor.u32 %v953, %v954
      %v957 = vrot.slane %v953, 4
      %v959 = vshrl.u32 %v949, 16
      %v961 = vrot.slane %v959, 7
      %v962 = vshll.u32 %v949, 16
      %v964 = vor.u32 %v961, %v962
      %v965 = vsel %vm545, %v957, %v964
      %v966 = vrot.slane %v961, 4
      %s970 = scalar_lea.vmem [#allocation2], 168
      %v971 = vld [vmem:[%s970] sm:$0xf]
      %v972 = vsel %vm568, %v956, %v971
      %973 = vst [vmem:[%s970] sm:$0xf] %v972
      %974 = vst [vmem:[%s970 + $0x4] sm:$0xf] %v965
      %v975 = vld [vmem:[%s970 + $0x8] sm:$0x1]
      %v976 = vsel %vm347, %v966, %v975
      %977 = vst [vmem:[%s970 + $0x8] sm:$0x1] %v976
      %v979 = vunpack.c.l.b16 %v874
      %v980 = vunpack.c.h.b16 %v874
      %v981 = vpack.c.b16 %v979, %v979
      %v982 = vpack.c.b16 %v980, %v980
      %v984 = vshrl.u32 %v981, 16
      %v986 = vrot.slane %v984, 7
      %v987 = vshll.u32 %v981, 16
      %v989 = vor.u32 %v986, %v987
      %v990 = vrot.slane %v986, 4
      %v992 = vshrl.u32 %v982, 16
      %v994 = vrot.slane %v992, 7
      %v995 = vshll.u32 %v982, 16
      %v997 = vor.u32 %v994, %v995
      %v998 = vsel %vm545, %v990, %v997
      %v999 = vrot.slane %v994, 4
      %s1003 = scalar_lea.vmem [#allocation2], 72
      %v1004 = vld [vmem:[%s1003] sm:$0xf]
      %v1005 = vsel %vm568, %v989, %v1004
      %1006 = vst [vmem:[%s1003] sm:$0xf] %v1005
      %1007 = vst [vmem:[%s1003 + $0x4] sm:$0xf] %v998
      %v1008 = vld [vmem:[%s1003 + $0x8] sm:$0x1]
      %v1009 = vsel %vm347, %v999, %v1008
      %1010 = vst [vmem:[%s1003 + $0x8] sm:$0x1] %v1009
      %v1012 = vunpack.c.l.b16 %v875
      %v1013 = vunpack.c.h.b16 %v875
      %v1014 = vpack.c.b16 %v1012, %v1012
      %v1015 = vpack.c.b16 %v1013, %v1013
      %v1017 = vshrl.u32 %v1014, 16
      %v1019 = vrot.slane %v1017, 7
      %v1020 = vshll.u32 %v1014, 16
      %v1022 = vor.u32 %v1019, %v1020
      %v1023 = vrot.slane %v1019, 4
      %v1025 = vshrl.u32 %v1015, 16
      %v1027 = vrot.slane %v1025, 7
      %v1028 = vshll.u32 %v1015, 16
      %v1030 = vor.u32 %v1027, %v1028
      %v1031 = vsel %vm545, %v1023, %v1030
      %v1032 = vrot.slane %v1027, 4
      %s1036 = scalar_lea.vmem [#allocation2], 180
      %v1037 = vld [vmem:[%s1036] sm:$0xf]
      %v1038 = vsel %vm568, %v1022, %v1037
      %1039 = vst [vmem:[%s1036] sm:$0xf] %v1038
      %1040 = vst [vmem:[%s1036 + $0x4] sm:$0xf] %v1031
      %v1041 = vld [vmem:[%s1036 + $0x8] sm:$0x1]
      %v1042 = vsel %vm347, %v1032, %v1041
      %1043 = vst [vmem:[%s1036 + $0x8] sm:$0x1] %v1042
      %v1045 = vunpack.c.l.b16 %v876
      %v1046 = vunpack.c.h.b16 %v876
      %v1047 = vpack.c.b16 %v1045, %v1045
      %v1048 = vpack.c.b16 %v1046, %v1046
      %v1050 = vshrl.u32 %v1047, 16
      %v1052 = vrot.slane %v1050, 7
      %v1053 = vshll.u32 %v1047, 16
      %v1055 = vor.u32 %v1052, %v1053
      %v1056 = vrot.slane %v1052, 4
      %v1058 = vshrl.u32 %v1048, 16
      %v1060 = vrot.slane %v1058, 7
      %v1061 = vshll.u32 %v1048, 16
      %v1063 = vor.u32 %v1060, %v1061
      %v1064 = vsel %vm545, %v1056, %v1063
      %v1065 = vrot.slane %v1060, 4
      %s1069 = scalar_lea.vmem [#allocation2], 84
      %v1070 = vld [vmem:[%s1069] sm:$0xf]
      %v1071 = vsel %vm568, %v1055, %v1070
      %1072 = vst [vmem:[%s1069] sm:$0xf] %v1071
      %1073 = vst [vmem:[%s1069 + $0x4] sm:$0xf] %v1064
      %v1074 = vld [vmem:[%s1069 + $0x8] sm:$0x1]
      %v1075 = vsel %vm347, %v1065, %v1074
      %1076 = vst [vmem:[%s1069 + $0x8] sm:$0x1] %v1075
      %v1078 = vunpack.c.l.b16 %v877
      %v1079 = vunpack.c.h.b16 %v877
      %v1080 = vpack.c.b16 %v1078, %v1078
      %v1081 = vpack.c.b16 %v1079, %v1079
      %v1083 = vshrl.u32 %v1080, 16
      %v1085 = vrot.slane %v1083, 7
      %v1086 = vshll.u32 %v1080, 16
      %v1088 = vor.u32 %v1085, %v1086
      %v1089 = vrot.slane %v1085, 4
      %v1091 = vshrl.u32 %v1081, 16
      %v1093 = vrot.slane %v1091, 7
      %v1094 = vshll.u32 %v1081, 16
      %v1096 = vor.u32 %v1093, %v1094
      %v1097 = vsel %vm545, %v1089, %v1096
      %v1098 = vrot.slane %v1093, 4
      %s1102 = scalar_lea.vmem [#allocation2], 192
      %v1103 = vld [vmem:[%s1102] sm:$0xf]
      %v1104 = vsel %vm568, %v1088, %v1103
      %1105 = vst [vmem:[%s1102] sm:$0xf] %v1104
      %1106 = vst [vmem:[%s1102 + $0x4] sm:$0xf] %v1097
      %v1107 = vld [vmem:[%s1102 + $0x8] sm:$0x1]
      %v1108 = vsel %vm347, %v1098, %v1107
      %1109 = vst [vmem:[%s1102 + $0x8] sm:$0x1] %v1108
      %v1111 = vunpack.c.l.b16 %v878
      %v1112 = vunpack.c.h.b16 %v878
      %v1113 = vpack.c.b16 %v1111, %v1111
      %v1114 = vpack.c.b16 %v1112, %v1112
      %v1116 = vshrl.u32 %v1113, 16
      %v1118 = vrot.slane %v1116, 7
      %v1119 = vshll.u32 %v1113, 16
      %v1121 = vor.u32 %v1118, %v1119
      %v1122 = vrot.slane %v1118, 4
      %v1124 = vshrl.u32 %v1114, 16
      %v1126 = vrot.slane %v1124, 7
      %v1127 = vshll.u32 %v1114, 16
      %v1129 = vor.u32 %v1126, %v1127
      %v1130 = vsel %vm545, %v1122, %v1129
      %v1131 = vrot.slane %v1126, 4
      %s1135 = scalar_lea.vmem [#allocation2], 96
      %v1136 = vld [vmem:[%s1135] sm:$0xf]
      %v1137 = vsel %vm568, %v1121, %v1136
      %1138 = vst [vmem:[%s1135] sm:$0xf] %v1137
      %1139 = vst [vmem:[%s1135 + $0x4] sm:$0xf] %v1130
      %v1140 = vld [vmem:[%s1135 + $0x8] sm:$0x1]
      %v1141 = vsel %vm347, %v1131, %v1140
      %1142 = vst [vmem:[%s1135 + $0x8] sm:$0x1] %v1141
      %v1143 = vld [vmem:[#allocation2] sm:$0xf]
      %v1144 = vld [vmem:[#allocation2 + $0x4] sm:$0xf]
      %v1145 = vld [vmem:[#allocation2 + $0xc] sm:$0xf]
      %v1146 = vld [vmem:[#allocation2 + $0x10] sm:$0xf]
      %v1147 = vld [vmem:[#allocation2 + $0x18] sm:$0xf]
      %v1148 = vld [vmem:[#allocation2 + $0x1c] sm:$0xf]
      %v1149 = vld [vmem:[#allocation2 + $0x24] sm:$0xf]
      %v1150 = vld [vmem:[#allocation2 + $0x28] sm:$0xf]
      %v1151 = vld [vmem:[#allocation2 + $0x30] sm:$0xf]
      %v1152 = vld [vmem:[#allocation2 + $0x34] sm:$0xf]
      %v1153 = vld [vmem:[#allocation2 + $0x3c] sm:$0xf]
      %v1154 = vld [vmem:[#allocation2 + $0x40] sm:$0xf]
      %v1155 = vld [vmem:[#allocation2 + $0x48] sm:$0xf]
      %v1156 = vld [vmem:[#allocation2 + $0x4c] sm:$0xf]
      %v1157 = vld [vmem:[#allocation2 + $0x54] sm:$0xf]
      %v1158 = vld [vmem:[#allocation2 + $0x58] sm:$0xf]
      %v1175 = vunpack.c.l.b16 %v1143
      %v1176 = vunpack.c.l.b16 %v1144
      %v1177 = vunpack.c.l.b16 %v1145
      %v1178 = vunpack.c.l.b16 %v1146
      %v1179 = vunpack.c.l.b16 %v1147
      %v1180 = vunpack.c.l.b16 %v1148
      %v1181 = vunpack.c.l.b16 %v1149
      %v1182 = vunpack.c.l.b16 %v1150
      %v1183 = vunpack.c.l.b16 %v1151
      %v1184 = vunpack.c.l.b16 %v1152
      %v1185 = vunpack.c.l.b16 %v1153
      %v1186 = vunpack.c.l.b16 %v1154
      %v1187 = vunpack.c.l.b16 %v1155
      %v1188 = vunpack.c.l.b16 %v1156
      %v1189 = vunpack.c.l.b16 %v1157
      %v1190 = vunpack.c.l.b16 %v1158
      %v1191 = vpack.c.b16 %v1176, %v1175
      %v1192 = vpack.c.b16 %v1178, %v1177
      %v1193 = vpack.c.b16 %v1180, %v1179
      %v1194 = vpack.c.b16 %v1182, %v1181
      %v1195 = vpack.c.b16 %v1184, %v1183
      %v1196 = vpack.c.b16 %v1186, %v1185
      %v1197 = vpack.c.b16 %v1188, %v1187
      %v1198 = vpack.c.b16 %v1190, %v1189
      %v1199 = vunpack.i.l.s16 %v1191
      %v1200 = vunpack.i.h.s16 %v1191
      %v1201 = vunpack.i.l.s16 %v1192
      %v1202 = vunpack.i.h.s16 %v1192
      %v1203 = vunpack.i.l.s16 %v1193
      %v1204 = vunpack.i.h.s16 %v1193
      %v1205 = vunpack.i.l.s16 %v1194
      %v1206 = vunpack.i.h.s16 %v1194
      %v1207 = vunpack.i.l.s16 %v1195
      %v1208 = vunpack.i.h.s16 %v1195
      %v1209 = vunpack.i.l.s16 %v1196
      %v1210 = vunpack.i.h.s16 %v1196
      %v1211 = vunpack.i.l.s16 %v1197
      %v1212 = vunpack.i.h.s16 %v1197
      %v1213 = vunpack.i.l.s16 %v1198
      %v1214 = vunpack.i.h.s16 %v1198
      %v1215 = vld [vmem:[%s3] sm:$0xf]
      %v1216 = vld [vmem:[%s3 + $0x4] sm:$0xf]
      %v1217 = vld [vmem:[%s3 + $0x8] sm:$0xf]
      %v1218 = vld [vmem:[%s3 + $0xc] sm:$0xf]
      %v1219 = vld [vmem:[%s3 + $0x10] sm:$0xf]
      %v1220 = vld [vmem:[%s3 + $0x14] sm:$0xf]
      %v1221 = vld [vmem:[%s3 + $0x18] sm:$0xf]
      %v1222 = vld [vmem:[%s3 + $0x1c] sm:$0xf]
      %v1223 = vld [vmem:[%s3 + $0x20] sm:$0xf]
      %v1224 = vld [vmem:[%s3 + $0x24] sm:$0xf]
      %v1225 = vld [vmem:[%s3 + $0x28] sm:$0xf]
      %v1226 = vld [vmem:[%s3 + $0x2c] sm:$0xf]
      %v1227 = vld [vmem:[%s3 + $0x30] sm:$0xf]
      %v1228 = vld [vmem:[%s3 + $0x34] sm:$0xf]
      %v1229 = vld [vmem:[%s3 + $0x38] sm:$0xf]
      %v1230 = vld [vmem:[%s3 + $0x3c] sm:$0xf]
      %v1231 = vld [vmem:[%s3 + $0x40] sm:$0xf]
      %v1232 = vld [vmem:[%s3 + $0x44] sm:$0xf]
      %v1233 = vld [vmem:[%s3 + $0x48] sm:$0xf]
      %v1234 = vld [vmem:[%s3 + $0x4c] sm:$0xf]
      %v1235 = vld [vmem:[%s3 + $0x50] sm:$0xf]
      %v1236 = vld [vmem:[%s3 + $0x54] sm:$0xf]
      %v1237 = vld [vmem:[%s3 + $0x58] sm:$0xf]
      %v1238 = vld [vmem:[%s3 + $0x5c] sm:$0xf]
      %v1239 = vld [vmem:[%s3 + $0x60] sm:$0xf]
      %v1240 = vld [vmem:[%s3 + $0x64] sm:$0xf]
      %v1241 = vld [vmem:[%s3 + $0x68] sm:$0xf]
      %v1242 = vld [vmem:[%s3 + $0x6c] sm:$0xf]
      %v1243 = vld [vmem:[%s3 + $0x70] sm:$0xf]
      %v1244 = vld [vmem:[%s3 + $0x74] sm:$0xf]
      %v1245 = vld [vmem:[%s3 + $0x78] sm:$0xf]
      %v1246 = vld [vmem:[%s3 + $0x7c] sm:$0xf]
      %v1247 = vpack.c.b16 %v1201, %v1199
      %v1248 = vpack.c.b16 %v1202, %v1200
      %v1249 = vpack.c.b16 %v1205, %v1203
      %v1250 = vpack.c.b16 %v1206, %v1204
      %v1251 = vpack.c.b16 %v1209, %v1207
      %v1252 = vpack.c.b16 %v1210, %v1208
      %v1253 = vpack.c.b16 %v1213, %v1211
      %v1254 = vpack.c.b16 %v1214, %v1212
      %v1295 = vunpack.c.l.b16 %v1215
      %v1296 = vunpack.c.l.b16 %v1216
      %v1297 = vunpack.c.l.b16 %v1217
      %v1298 = vunpack.c.l.b16 %v1218
      %v1299 = vunpack.c.l.b16 %v1219
      %v1300 = vunpack.c.l.b16 %v1220
      %v1301 = vunpack.c.l.b16 %v1221
      %v1302 = vunpack.c.l.b16 %v1222
      %v1303 = vunpack.c.l.b16 %v1223
      %v1304 = vunpack.c.l.b16 %v1224
      %v1305 = vunpack.c.l.b16 %v1225
      %v1306 = vunpack.c.l.b16 %v1226
      %v1307 = vunpack.c.l.b16 %v1227
      %v1308 = vunpack.c.l.b16 %v1228
      %v1309 = vunpack.c.l.b16 %v1229
      %v1310 = vunpack.c.l.b16 %v1230
      %v1311 = vunpack.c.l.b16 %v1231
      %v1312 = vunpack.c.l.b16 %v1232
      %v1313 = vunpack.c.l.b16 %v1233
      %v1314 = vunpack.c.l.b16 %v1234
      %v1315 = vunpack.c.l.b16 %v1235
      %v1316 = vunpack.c.l.b16 %v1236
      %v1317 = vunpack.c.l.b16 %v1237
      %v1318 = vunpack.c.l.b16 %v1238
      %v1319 = vunpack.c.l.b16 %v1239
      %v1320 = vunpack.c.l.b16 %v1240
      %v1321 = vunpack.c.l.b16 %v1241
      %v1322 = vunpack.c.l.b16 %v1242
      %v1323 = vunpack.c.l.b16 %v1243
      %v1324 = vunpack.c.l.b16 %v1244
      %v1325 = vunpack.c.l.b16 %v1245
      %v1326 = vunpack.c.l.b16 %v1246
      %v1327 = vpack.c.b16 %v1296, %v1295
      %v1328 = vpack.c.b16 %v1298, %v1297
      %v1329 = vpack.c.b16 %v1300, %v1299
      %v1330 = vpack.c.b16 %v1302, %v1301
      %v1331 = vpack.c.b16 %v1304, %v1303
      %v1332 = vpack.c.b16 %v1306, %v1305
      %v1333 = vpack.c.b16 %v1308, %v1307
      %v1334 = vpack.c.b16 %v1310, %v1309
      %v1335 = vpack.c.b16 %v1312, %v1311
      %v1336 = vpack.c.b16 %v1314, %v1313
      %v1337 = vpack.c.b16 %v1316, %v1315
      %v1338 = vpack.c.b16 %v1318, %v1317
      %v1339 = vpack.c.b16 %v1320, %v1319
      %v1340 = vpack.c.b16 %v1322, %v1321
      %v1341 = vpack.c.b16 %v1324, %v1323
      %v1342 = vpack.c.b16 %v1326, %v1325
      %1359 = vmatprep.subr.bf16.mxu0 0
      %1360 = vmatpush1.bf16.msra.mxu0 %v1334
      %1361 = vmatprep.subr.bf16.mxu0 0
      %1362 = vmatpush1.bf16.msra.mxu0 %v1333
      %1363 = vmatprep.subr.bf16.mxu0 0
      %1364 = vmatpush1.bf16.msra.mxu0 %v1332
      %1365 = vmatprep.subr.bf16.mxu0 0
      %1366 = vmatpush1.bf16.msra.mxu0 %v1331
      %1367 = vmatprep.subr.bf16.mxu0 0
      %1368 = vmatpush1.bf16.msra.mxu0 %v1330
      %1369 = vmatprep.subr.bf16.mxu0 0
      %1370 = vmatpush1.bf16.msra.mxu0 %v1329
      %1371 = vmatprep.subr.bf16.mxu0 0
      %1372 = vmatpush1.bf16.msra.mxu0 %v1328
      %1373 = vmatprep.subr.bf16.mxu0 0
      %1374 = vmatpush1.bf16.msra.mxu0 %v1327
      %1375 = vmatprep.subr.bf16.mxu0 0
      %1376 = vmatpush2.bf16.msra.mxu0 %v1342
      %1377 = vmatprep.subr.bf16.mxu0 0
      %1378 = vmatpush2.bf16.msra.mxu0 %v1341
      %1379 = vmatprep.subr.bf16.mxu0 0
      %1380 = vmatpush2.bf16.msra.mxu0 %v1340
      %1381 = vmatprep.subr.bf16.mxu0 0
      %1382 = vmatpush2.bf16.msra.mxu0 %v1339
      %1383 = vmatprep.subr.bf16.mxu0 0
      %1384 = vmatpush2.bf16.msra.mxu0 %v1338
      %1385 = vmatprep.subr.bf16.mxu0 0
      %1386 = vmatpush2.bf16.msra.mxu0 %v1337
      %1387 = vmatprep.subr.bf16.mxu0 0
      %1388 = vmatpush2.bf16.msra.mxu0 %v1336
      %1389 = vmatprep.subr.bf16.mxu0 0
      %1390 = vmatpush2.bf16.msra.mxu0 %v1335
      %1391 = vmatprep.mubr.bf16.mxu0 %v1248
      %1392 = vmatmul.mubr.bf16.gmra.mxu0 %v1247
      %v1393 = vpop.f32.mrf.mxu0
      %v1394 = vadd.f32 0.0, %v1393
      %v1395 = vpop.f32.mrf.mxu0
      %v1396 = vpop.f32.mrf.mxu0
      %v1397 = vadd.f32 0.0, %v1396
      %v1398 = vpop.f32.mrf.mxu0
      %1399 = vmatprep.mubr.bf16.mxu0 %v1250
      %1400 = vmatmul.mubr.bf16.gmra.mxu0 %v1249
      %v1401 = vpop.f32.mrf.mxu0
      %v1402 = vadd.f32 0.0, %v1401
      %v1403 = vpop.f32.mrf.mxu0
      %v1404 = vpop.f32.mrf.mxu0
      %v1405 = vadd.f32 0.0, %v1404
      %v1406 = vpop.f32.mrf.mxu0
      %1407 = vmatprep.mubr.bf16.mxu0 %v1252
      %1408 = vmatmul.mubr.bf16.gmra.mxu0 %v1251
      %v1409 = vpop.f32.mrf.mxu0
      %v1410 = vadd.f32 0.0, %v1409
      %v1411 = vpop.f32.mrf.mxu0
      %v1412 = vpop.f32.mrf.mxu0
      %v1413 = vadd.f32 0.0, %v1412
      %v1414 = vpop.f32.mrf.mxu0
      %1415 = vmatprep.mubr.bf16.mxu0 %v1254
      %1416 = vmatmul.mubr.bf16.gmra.mxu0 %v1253
      %v1417 = vpop.f32.mrf.mxu0
      %v1418 = vadd.f32 0.0, %v1417
      %v1419 = vpop.f32.mrf.mxu0
      %v1420 = vpop.f32.mrf.mxu0
      %v1421 = vadd.f32 0.0, %v1420
      %v1422 = vpop.f32.mrf.mxu0
      %1423 = vdwg.mxu0
      %1424 = vst [vmem:[#allocation3] sm:$0xff] %v1394
      %1425 = vst [vmem:[#allocation3 + $0x8] sm:$0xff] %v1397
      %1426 = vst [vmem:[#allocation3 + $0x10] sm:$0xff] %v1402
      %1427 = vst [vmem:[#allocation3 + $0x18] sm:$0xff] %v1405
      %1428 = vst [vmem:[#allocation3 + $0x20] sm:$0xff] %v1410
      %1429 = vst [vmem:[#allocation3 + $0x28] sm:$0xff] %v1413
      %1430 = vst [vmem:[#allocation3 + $0x30] sm:$0xff] %v1418
      %1431 = vst [vmem:[#allocation3 + $0x38] sm:$0xff] %v1421
      %v1432 = vld [vmem:[#allocation3] sm:$0xff]
      %v1433 = vld [vmem:[#allocation3 + $0x8] sm:$0xff]
      %v1434 = vld [vmem:[#allocation3 + $0x10] sm:$0xff]
      %v1435 = vld [vmem:[#allocation3 + $0x18] sm:$0xff]
      %v1436 = vld [vmem:[#allocation3 + $0x20] sm:$0xff]
      %v1437 = vld [vmem:[#allocation3 + $0x28] sm:$0xff]
      %v1438 = vld [vmem:[#allocation3 + $0x30] sm:$0xff]
      %v1439 = vld [vmem:[#allocation3 + $0x38] sm:$0xff]
      %v1440 = vld [vmem:[#allocation2] sm:$0xe]
      %v1441 = vld [vmem:[#allocation2 + $0x4] sm:$0xf]
      %v1442 = vld [vmem:[#allocation2 + $0x8] sm:$0x1]
      %v1443 = vld [vmem:[#allocation2 + $0xc] sm:$0xe]
      %v1444 = vld [vmem:[#allocation2 + $0x10] sm:$0xf]
      %v1445 = vld [vmem:[#allocation2 + $0x14] sm:$0x1]
      %v1446 = vld [vmem:[#allocation2 + $0x18] sm:$0xe]
      %v1447 = vld [vmem:[#allocation2 + $0x1c] sm:$0xf]
      %v1448 = vld [vmem:[#allocation2 + $0x20] sm:$0x1]
      %v1449 = vld [vmem:[#allocation2 + $0x24] sm:$0xe]
      %v1450 = vld [vmem:[#allocation2 + $0x28] sm:$0xf]
      %v1451 = vld [vmem:[#allocation2 + $0x2c] sm:$0x1]
      %v1452 = vld [vmem:[#allocation2 + $0x30] sm:$0xe]
      %v1453 = vld [vmem:[#allocation2 + $0x34] sm:$0xf]
      %v1454 = vld [vmem:[#allocation2 + $0x38] sm:$0x1]
      %v1455 = vld [vmem:[#allocation2 + $0x3c] sm:$0xe]
      %v1456 = vld [vmem:[#allocation2 + $0x40] sm:$0xf]
      %v1457 = vld [vmem:[#allocation2 + $0x44] sm:$0x1]
      %v1458 = vld [vmem:[#allocation2 + $0x48] sm:$0xe]
      %v1459 = vld [vmem:[#allocation2 + $0x4c] sm:$0xf]
      %v1460 = vld [vmem:[#allocation2 + $0x50] sm:$0x1]
      %v1461 = vld [vmem:[#allocation2 + $0x54] sm:$0xe]
      %v1462 = vld [vmem:[#allocation2 + $0x58] sm:$0xf]
      %v1463 = vld [vmem:[#allocation2 + $0x5c] sm:$0x1]
      %v1488 = vunpack.c.l.b16 %v1440
      %v1489 = vunpack.c.l.b16 %v1441
      %v1490 = vunpack.c.l.b16 %v1442
      %v1491 = vunpack.c.l.b16 %v1443
      %v1492 = vunpack.c.l.b16 %v1444
      %v1493 = vunpack.c.l.b16 %v1445
      %v1494 = vunpack.c.l.b16 %v1446
      %v1495 = vunpack.c.l.b16 %v1447
      %v1496 = vunpack.c.l.b16 %v1448
      %v1497 = vunpack.c.l.b16 %v1449
      %v1498 = vunpack.c.l.b16 %v1450
      %v1499 = vunpack.c.l.b16 %v1451
      %v1500 = vunpack.c.l.b16 %v1452
      %v1501 = vunpack.c.l.b16 %v1453
      %v1502 = vunpack.c.l.b16 %v1454
      %v1503 = vunpack.c.l.b16 %v1455
      %v1504 = vunpack.c.l.b16 %v1456
      %v1505 = vunpack.c.l.b16 %v1457
      %v1506 = vunpack.c.l.b16 %v1458
      %v1507 = vunpack.c.l.b16 %v1459
      %v1508 = vunpack.c.l.b16 %v1460
      %v1509 = vunpack.c.l.b16 %v1461
      %v1510 = vunpack.c.l.b16 %v1462
      %v1511 = vunpack.c.l.b16 %v1463
      %v1512 = vpack.c.b16 %v1489, %v1488
      %v1513 = vpack.c.b16 %v1490, %v1490
      %v1514 = vpack.c.b16 %v1492, %v1491
      %v1515 = vpack.c.b16 %v1493, %v1493
      %v1516 = vpack.c.b16 %v1495, %v1494
      %v1517 = vpack.c.b16 %v1496, %v1496
      %v1518 = vpack.c.b16 %v1498, %v1497
      %v1519 = vpack.c.b16 %v1499, %v1499
      %v1520 = vpack.c.b16 %v1501, %v1500
      %v1521 = vpack.c.b16 %v1502, %v1502
      %v1522 = vpack.c.b16 %v1504, %v1503
      %v1523 = vpack.c.b16 %v1505, %v1505
      %v1524 = vpack.c.b16 %v1507, %v1506
      %v1525 = vpack.c.b16 %v1508, %v1508
      %v1526 = vpack.c.b16 %v1510, %v1509
      %v1527 = vpack.c.b16 %v1511, %v1511
      %vm1528 = vcmask 1046528
      %v1529 = vrot.slane %v1512, 1
      %v1530 = vrot.slane %v1513, 1
      %v1531 = vsel %vm1528, %v1529, %v1530
      %v1532 = vrot.slane %v1514, 1
      %v1533 = vrot.slane %v1515, 1
      %v1534 = vsel %vm1528, %v1532, %v1533
      %v1535 = vrot.slane %v1516, 1
      %v1536 = vrot.slane %v1517, 1
      %v1537 = vsel %vm1528, %v1535, %v1536
      %v1538 = vrot.slane %v1518, 1
      %v1539 = vrot.slane %v1519, 1
      %v1540 = vsel %vm1528, %v1538, %v1539
      %v1541 = vrot.slane %v1520, 1
      %v1542 = vrot.slane %v1521, 1
      %v1543 = vsel %vm1528, %v1541, %v1542
      %v1544 = vrot.slane %v1522, 1
      %v1545 = vrot.slane %v1523, 1
      %v1546 = vsel %vm1528, %v1544, %v1545
      %v1547 = vrot.slane %v1524, 1
      %v1548 = vrot.slane %v1525, 1
      %v1549 = vsel %vm1528, %v1547, %v1548
      %v1550 = vrot.slane %v1526, 1
      %v1551 = vrot.slane %v1527, 1
      %v1552 = vsel %vm1528, %v1550, %v1551
      %v1553 = vunpack.i.l.s16 %v1531
      %v1554 = vunpack.i.h.s16 %v1531
      %v1555 = vunpack.i.l.s16 %v1534
      %v1556 = vunpack.i.h.s16 %v1534
      %v1557 = vunpack.i.l.s16 %v1537
      %v1558 = vunpack.i.h.s16 %v1537
      %v1559 = vunpack.i.l.s16 %v1540
      %v1560 = vunpack.i.h.s16 %v1540
      %v1561 = vunpack.i.l.s16 %v1543
      %v1562 = vunpack.i.h.s16 %v1543
      %v1563 = vunpack.i.l.s16 %v1546
      %v1564 = vunpack.i.h.s16 %v1546
      %v1565 = vunpack.i.l.s16 %v1549
      %v1566 = vunpack.i.h.s16 %v1549
      %v1567 = vunpack.i.l.s16 %v1552
      %v1568 = vunpack.i.h.s16 %v1552
      %s1569 = scalar_lea.vmem %s3, 128
      %v1570 = vld [vmem:[%s1569] sm:$0xf]
      %v1571 = vld [vmem:[%s1569 + $0x4] sm:$0xf]
      %v1572 = vld [vmem:[%s1569 + $0x8] sm:$0xf]
      %v1573 = vld [vmem:[%s1569 + $0xc] sm:$0xf]
      %v1574 = vld [vmem:[%s1569 + $0x10] sm:$0xf]
      %v1575 = vld [vmem:[%s1569 + $0x14] sm:$0xf]
      %v1576 = vld [vmem:[%s1569 + $0x18] sm:$0xf]
      %v1577 = vld [vmem:[%s1569 + $0x1c] sm:$0xf]
      %v1578 = vld [vmem:[%s1569 + $0x20] sm:$0xf]
      %v1579 = vld [vmem:[%s1569 + $0x24] sm:$0xf]
      %v1580 = vld [vmem:[%s1569 + $0x28] sm:$0xf]
      %v1581 = vld [vmem:[%s1569 + $0x2c] sm:$0xf]
      %v1582 = vld [vmem:[%s1569 + $0x30] sm:$0xf]
      %v1583 = vld [vmem:[%s1569 + $0x34] sm:$0xf]
      %v1584 = vld [vmem:[%s1569 + $0x38] sm:$0xf]
      %v1585 = vld [vmem:[%s1569 + $0x3c] sm:$0xf]
      %v1586 = vld [vmem:[%s1569 + $0x40] sm:$0xf]
      %v1587 = vld [vmem:[%s1569 + $0x44] sm:$0xf]
      %v1588 = vld [vmem:[%s1569 + $0x48] sm:$0xf]
      %v1589 = vld [vmem:[%s1569 + $0x4c] sm:$0xf]
      %v1590 = vld [vmem:[%s1569 + $0x50] sm:$0xf]
      %v1591 = vld [vmem:[%s1569 + $0x54] sm:$0xf]
      %v1592 = vld [vmem:[%s1569 + $0x58] sm:$0xf]
      %v1593 = vld [vmem:[%s1569 + $0x5c] sm:$0xf]
      %v1594 = vld [vmem:[%s1569 + $0x60] sm:$0xf]
      %v1595 = vld [vmem:[%s1569 + $0x64] sm:$0xf]
      %v1596 = vld [vmem:[%s1569 + $0x68] sm:$0xf]
      %v1597 = vld [vmem:[%s1569 + $0x6c] sm:$0xf]
      %v1598 = vld [vmem:[%s1569 + $0x70] sm:$0xf]
      %v1599 = vld [vmem:[%s1569 + $0x74] sm:$0xf]
      %v1600 = vld [vmem:[%s1569 + $0x78] sm:$0xf]
      %v1601 = vld [vmem:[%s1569 + $0x7c] sm:$0xf]
      %v1602 = vld [vmem:[%s404] sm:$0xf]
      %v1603 = vld [vmem:[%s404 + $0x4] sm:$0xf]
      %v1604 = vld [vmem:[%s404 + $0xc] sm:$0xf]
      %v1605 = vld [vmem:[%s404 + $0x10] sm:$0xf]
      %v1606 = vld [vmem:[%s404 + $0x18] sm:$0xf]
      %v1607 = vld [vmem:[%s404 + $0x1c] sm:$0xf]
      %v1608 = vld [vmem:[%s404 + $0x24] sm:$0xf]
      %v1609 = vld [vmem:[%s404 + $0x28] sm:$0xf]
      %v1610 = vld [vmem:[%s404 + $0x30] sm:$0xf]
      %v1611 = vld [vmem:[%s404 + $0x34] sm:$0xf]
      %v1612 = vld [vmem:[%s404 + $0x3c] sm:$0xf]
      %v1613 = vld [vmem:[%s404 + $0x40] sm:$0xf]
      %v1614 = vld [vmem:[%s404 + $0x48] sm:$0xf]
      %v1615 = vld [vmem:[%s404 + $0x4c] sm:$0xf]
      %v1616 = vld [vmem:[%s404 + $0x54] sm:$0xf]
      %v1617 = vld [vmem:[%s404 + $0x58] sm:$0xf]
      %v1634 = vunpack.c.l.b16 %v1602
      %v1635 = vunpack.c.l.b16 %v1603
      %v1636 = vunpack.c.l.b16 %v1604
      %v1637 = vunpack.c.l.b16 %v1605
      %v1638 = vunpack.c.l.b16 %v1606
      %v1639 = vunpack.c.l.b16 %v1607
      %v1640 = vunpack.c.l.b16 %v1608
      %v1641 = vunpack.c.l.b16 %v1609
      %v1642 = vunpack.c.l.b16 %v1610
      %v1643 = vunpack.c.l.b16 %v1611
      %v1644 = vunpack.c.l.b16 %v1612
      %v1645 = vunpack.c.l.b16 %v1613
      %v1646 = vunpack.c.l.b16 %v1614
      %v1647 = vunpack.c.l.b16 %v1615
      %v1648 = vunpack.c.l.b16 %v1616
      %v1649 = vunpack.c.l.b16 %v1617
      %v1650 = vpack.c.b16 %v1635, %v1634
      %v1651 = vpack.c.b16 %v1637, %v1636
      %v1652 = vpack.c.b16 %v1639, %v1638
      %v1653 = vpack.c.b16 %v1641, %v1640
      %v1654 = vpack.c.b16 %v1643, %v1642
      %v1655 = vpack.c.b16 %v1645, %v1644
      %v1656 = vpack.c.b16 %v1647, %v1646
      %v1657 = vpack.c.b16 %v1649, %v1648
      %v1658 = vunpack.i.l.s16 %v1650
      %v1659 = vunpack.i.h.s16 %v1650
      %v1660 = vunpack.i.l.s16 %v1651
      %v1661 = vunpack.i.h.s16 %v1651
      %v1662 = vunpack.i.l.s16 %v1652
      %v1663 = vunpack.i.h.s16 %v1652
      %v1664 = vunpack.i.l.s16 %v1653
      %v1665 = vunpack.i.h.s16 %v1653
      %v1666 = vunpack.i.l.s16 %v1654
      %v1667 = vunpack.i.h.s16 %v1654
      %v1668 = vunpack.i.l.s16 %v1655
      %v1669 = vunpack.i.h.s16 %v1655
      %v1670 = vunpack.i.l.s16 %v1656
      %v1671 = vunpack.i.h.s16 %v1656
      %v1672 = vunpack.i.l.s16 %v1657
      %v1673 = vunpack.i.h.s16 %v1657
      %s1674 = scalar_lea.vmem %s3, 256
      %v1675 = vld [vmem:[%s1674] sm:$0xf]
      %v1676 = vld [vmem:[%s1674 + $0x4] sm:$0xf]
      %v1677 = vld [vmem:[%s1674 + $0x8] sm:$0xf]
      %v1678 = vld [vmem:[%s1674 + $0xc] sm:$0xf]
      %v1679 = vld [vmem:[%s1674 + $0x10] sm:$0xf]
      %v1680 = vld [vmem:[%s1674 + $0x14] sm:$0xf]
      %v1681 = vld [vmem:[%s1674 + $0x18] sm:$0xf]
      %v1682 = vld [vmem:[%s1674 + $0x1c] sm:$0xf]
      %v1683 = vld [vmem:[%s1674 + $0x20] sm:$0xf]
      %v1684 = vld [vmem:[%s1674 + $0x24] sm:$0xf]
      %v1685 = vld [vmem:[%s1674 + $0x28] sm:$0xf]
      %v1686 = vld [vmem:[%s1674 + $0x2c] sm:$0xf]
      %v1687 = vld [vmem:[%s1674 + $0x30] sm:$0xf]
      %v1688 = vld [vmem:[%s1674 + $0x34] sm:$0xf]
      %v1689 = vld [vmem:[%s1674 + $0x38] sm:$0xf]
      %v1690 = vld [vmem:[%s1674 + $0x3c] sm:$0xf]
      %v1691 = vld [vmem:[%s1674 + $0x40] sm:$0xf]
      %v1692 = vld [vmem:[%s1674 + $0x44] sm:$0xf]
      %v1693 = vld [vmem:[%s1674 + $0x48] sm:$0xf]
      %v1694 = vld [vmem:[%s1674 + $0x4c] sm:$0xf]
      %v1695 = vld [vmem:[%s1674 + $0x50] sm:$0xf]
      %v1696 = vld [vmem:[%s1674 + $0x54] sm:$0xf]
      %v1697 = vld [vmem:[%s1674 + $0x58] sm:$0xf]
      %v1698 = vld [vmem:[%s1674 + $0x5c] sm:$0xf]
      %v1699 = vld [vmem:[%s1674 + $0x60] sm:$0xf]
      %v1700 = vld [vmem:[%s1674 + $0x64] sm:$0xf]
      %v1701 = vld [vmem:[%s1674 + $0x68] sm:$0xf]
      %v1702 = vld [vmem:[%s1674 + $0x6c] sm:$0xf]
      %v1703 = vld [vmem:[%s1674 + $0x70] sm:$0xf]
      %v1704 = vld [vmem:[%s1674 + $0x74] sm:$0xf]
      %v1705 = vld [vmem:[%s1674 + $0x78] sm:$0xf]
      %v1706 = vld [vmem:[%s1674 + $0x7c] sm:$0xf]
      %v1707 = vpack.c.b16 %v1660, %v1658
      %v1708 = vpack.c.b16 %v1661, %v1659
      %v1709 = vpack.c.b16 %v1664, %v1662
      %v1710 = vpack.c.b16 %v1665, %v1663
      %v1711 = vpack.c.b16 %v1668, %v1666
      %v1712 = vpack.c.b16 %v1669, %v1667
      %v1713 = vpack.c.b16 %v1672, %v1670
      %v1714 = vpack.c.b16 %v1673, %v1671
      %v1755 = vunpack.c.l.b16 %v1675
      %v1756 = vunpack.c.l.b16 %v1676
      %v1757 = vunpack.c.l.b16 %v1677
      %v1758 = vunpack.c.l.b16 %v1678
      %v1759 = vunpack.c.l.b16 %v1679
      %v1760 = vunpack.c.l.b16 %v1680
      %v1761 = vunpack.c.l.b16 %v1681
      %v1762 = vunpack.c.l.b16 %v1682
      %v1763 = vunpack.c.l.b16 %v1683
      %v1764 = vunpack.c.l.b16 %v1684
      %v1765 = vunpack.c.l.b16 %v1685
      %v1766 = vunpack.c.l.b16 %v1686
      %v1767 = vunpack.c.l.b16 %v1687
      %v1768 = vunpack.c.l.b16 %v1688
      %v1769 = vunpack.c.l.b16 %v1689
      %v1770 = vunpack.c.l.b16 %v1690
      %v1771 = vunpack.c.l.b16 %v1691
      %v1772 = vunpack.c.l.b16 %v1692
      %v1773 = vunpack.c.l.b16 %v1693
      %v1774 = vunpack.c.l.b16 %v1694
      %v1775 = vunpack.c.l.b16 %v1695
      %v1776 = vunpack.c.l.b16 %v1696
      %v1777 = vunpack.c.l.b16 %v1697
      %v1778 = vunpack.c.l.b16 %v1698
      %v1779 = vunpack.c.l.b16 %v1699
      %v1780 = vunpack.c.l.b16 %v1700
      %v1781 = vunpack.c.l.b16 %v1701
      %v1782 = vunpack.c.l.b16 %v1702
      %v1783 = vunpack.c.l.b16 %v1703
      %v1784 = vunpack.c.l.b16 %v1704
      %v1785 = vunpack.c.l.b16 %v1705
      %v1786 = vunpack.c.l.b16 %v1706
      %v1787 = vpack.c.b16 %v1756, %v1755
      %v1788 = vpack.c.b16 %v1758, %v1757
      %v1789 = vpack.c.b16 %v1760, %v1759
      %v1790 = vpack.c.b16 %v1762, %v1761
      %v1791 = vpack.c.b16 %v1764, %v1763
      %v1792 = vpack.c.b16 %v1766, %v1765
      %v1793 = vpack.c.b16 %v1768, %v1767
      %v1794 = vpack.c.b16 %v1770, %v1769
      %v1795 = vpack.c.b16 %v1772, %v1771
      %v1796 = vpack.c.b16 %v1774, %v1773
      %v1797 = vpack.c.b16 %v1776, %v1775
      %v1798 = vpack.c.b16 %v1778, %v1777
      %v1799 = vpack.c.b16 %v1780, %v1779
      %v1800 = vpack.c.b16 %v1782, %v1781
      %v1801 = vpack.c.b16 %v1784, %v1783
      %v1802 = vpack.c.b16 %v1786, %v1785
      %1819 = vmatprep.subr.bf16.mxu0 0
      %1820 = vmatpush1.bf16.msra.mxu0 %v1794
      %1821 = vmatprep.subr.bf16.mxu0 0
      %1822 = vmatpush1.bf16.msra.mxu0 %v1793
      %1823 = vmatprep.subr.bf16.mxu0 0
      %1824 = vmatpush1.bf16.msra.mxu0 %v1792
      %1825 = vmatprep.subr.bf16.mxu0 0
      %1826 = vmatpush1.bf16.msra.mxu0 %v1791
      %1827 = vmatprep.subr.bf16.mxu0 0
      %1828 = vmatpush1.bf16.msra.mxu0 %v1790
      %1829 = vmatprep.subr.bf16.mxu0 0
      %1830 = vmatpush1.bf16.msra.mxu0 %v1789
      %1831 = vmatprep.subr.bf16.mxu0 0
      %1832 = vmatpush1.bf16.msra.mxu0 %v1788
      %1833 = vmatprep.subr.bf16.mxu0 0
      %1834 = vmatpush1.bf16.msra.mxu0 %v1787
      %1835 = vmatprep.subr.bf16.mxu0 0
      %1836 = vmatpush2.bf16.msra.mxu0 %v1802
      %1837 = vmatprep.subr.bf16.mxu0 0
      %1838 = vmatpush2.bf16.msra.mxu0 %v1801
      %1839 = vmatprep.subr.bf16.mxu0 0
      %1840 = vmatpush2.bf16.msra.mxu0 %v1800
      %1841 = vmatprep.subr.bf16.mxu0 0
      %1842 = vmatpush2.bf16.msra.mxu0 %v1799
      %1843 = vmatprep.subr.bf16.mxu0 0
      %1844 = vmatpush2.bf16.msra.mxu0 %v1798
      %1845 = vmatprep.subr.bf16.mxu0 0
      %1846 = vmatpush2.bf16.msra.mxu0 %v1797
      %1847 = vmatprep.subr.bf16.mxu0 0
      %1848 = vmatpush2.bf16.msra.mxu0 %v1796
      %1849 = vmatprep.subr.bf16.mxu0 0
      %1850 = vmatpush2.bf16.msra.mxu0 %v1795
      %1851 = vmatprep.mubr.bf16.mxu0 %v1708
      %1852 = vmatmul.mubr.bf16.gmra.mxu0 %v1707
      %v1853 = vpop.f32.mrf.mxu0
      %v1854 = vadd.f32 0.0, %v1853
      %v1855 = vpop.f32.mrf.mxu0
      %v1856 = vpop.f32.mrf.mxu0
      %v1857 = vadd.f32 0.0, %v1856
      %v1858 = vpop.f32.mrf.mxu0
      %1859 = vmatprep.mubr.bf16.mxu0 %v1710
      %1860 = vmatmul.mubr.bf16.gmra.mxu0 %v1709
      %v1861 = vpop.f32.mrf.mxu0
      %v1862 = vadd.f32 0.0, %v1861
      %v1863 = vpop.f32.mrf.mxu0
      %v1864 = vpop.f32.mrf.mxu0
      %v1865 = vadd.f32 0.0, %v1864
      %v1866 = vpop.f32.mrf.mxu0
      %1867 = vmatprep.mubr.bf16.mxu0 %v1712
      %1868 = vmatmul.mubr.bf16.gmra.mxu0 %v1711
      %v1869 = vpop.f32.mrf.mxu0
      %v1870 = vadd.f32 0.0, %v1869
      %v1871 = vpop.f32.mrf.mxu0
      %v1872 = vpop.f32.mrf.mxu0
      %v1873 = vadd.f32 0.0, %v1872
      %v1874 = vpop.f32.mrf.mxu0
      %1875 = vmatprep.mubr.bf16.mxu0 %v1714
      %1876 = vmatmul.mubr.bf16.gmra.mxu0 %v1713
      %v1877 = vpop.f32.mrf.mxu0
      %v1878 = vadd.f32 0.0, %v1877
      %v1879 = vpop.f32.mrf.mxu0
      %v1880 = vpop.f32.mrf.mxu0
      %v1881 = vadd.f32 0.0, %v1880
      %v1882 = vpop.f32.mrf.mxu0
      %1883 = vdwg.mxu0
      %v1884 = vpack.c.b16 %v1555, %v1553
      %v1885 = vpack.c.b16 %v1556, %v1554
      %v1886 = vpack.c.b16 %v1559, %v1557
      %v1887 = vpack.c.b16 %v1560, %v1558
      %v1888 = vpack.c.b16 %v1563, %v1561
      %v1889 = vpack.c.b16 %v1564, %v1562
      %v1890 = vpack.c.b16 %v1567, %v1565
      %v1891 = vpack.c.b16 %v1568, %v1566
      %v1932 = vunpack.c.l.b16 %v1570
      %v1933 = vunpack.c.l.b16 %v1571
      %v1934 = vunpack.c.l.b16 %v1572
      %v1935 = vunpack.c.l.b16 %v1573
      %v1936 = vunpack.c.l.b16 %v1574
      %v1937 = vunpack.c.l.b16 %v1575
      %v1938 = vunpack.c.l.b16 %v1576
      %v1939 = vunpack.c.l.b16 %v1577
      %v1940 = vunpack.c.l.b16 %v1578
      %v1941 = vunpack.c.l.b16 %v1579
      %v1942 = vunpack.c.l.b16 %v1580
      %v1943 = vunpack.c.l.b16 %v1581
      %v1944 = vunpack.c.l.b16 %v1582
      %v1945 = vunpack.c.l.b16 %v1583
      %v1946 = vunpack.c.l.b16 %v1584
      %v1947 = vunpack.c.l.b16 %v1585
      %v1948 = vunpack.c.l.b16 %v1586
      %v1949 = vunpack.c.l.b16 %v1587
      %v1950 = vunpack.c.l.b16 %v1588
      %v1951 = vunpack.c.l.b16 %v1589
      %v1952 = vunpack.c.l.b16 %v1590
      %v1953 = vunpack.c.l.b16 %v1591
      %v1954 = vunpack.c.l.b16 %v1592
      %v1955 = vunpack.c.l.b16 %v1593
      %v1956 = vunpack.c.l.b16 %v1594
      %v1957 = vunpack.c.l.b16 %v1595
      %v1958 = vunpack.c.l.b16 %v1596
      %v1959 = vunpack.c.l.b16 %v1597
      %v1960 = vunpack.c.l.b16 %v1598
      %v1961 = vunpack.c.l.b16 %v1599
      %v1962 = vunpack.c.l.b16 %v1600
      %v1963 = vunpack.c.l.b16 %v1601
      %v1964 = vpack.c.b16 %v1933, %v1932
      %v1965 = vpack.c.b16 %v1935, %v1934
      %v1966 = vpack.c.b16 %v1937, %v1936
      %v1967 = vpack.c.b16 %v1939, %v1938
      %v1968 = vpack.c.b16 %v1941, %v1940
      %v1969 = vpack.c.b16 %v1943, %v1942
      %v1970 = vpack.c.b16 %v1945, %v1944
      %v1971 = vpack.c.b16 %v1947, %v1946
      %v1972 = vpack.c.b16 %v1949, %v1948
      %v1973 = vpack.c.b16 %v1951, %v1950
      %v1974 = vpack.c.b16 %v1953, %v1952
      %v1975 = vpack.c.b16 %v1955, %v1954
      %v1976 = vpack.c.b16 %v1957, %v1956
      %v1977 = vpack.c.b16 %v1959, %v1958
      %v1978 = vpack.c.b16 %v1961, %v1960
      %v1979 = vpack.c.b16 %v1963, %v1962
      %1996 = vmatprep.subr.bf16.mxu0 0
      %1997 = vmatpush1.bf16.msra.mxu0 %v1971
      %1998 = vmatprep.subr.bf16.mxu0 0
      %1999 = vmatpush1.bf16.msra.mxu0 %v1970
      %2000 = vmatprep.subr.bf16.mxu0 0
      %2001 = vmatpush1.bf16.msra.mxu0 %v1969
      %2002 = vmatprep.subr.bf16.mxu0 0
      %2003 = vmatpush1.bf16.msra.mxu0 %v1968
      %2004 = vmatprep.subr.bf16.mxu0 0
      %2005 = vmatpush1.bf16.msra.mxu0 %v1967
      %2006 = vmatprep.subr.bf16.mxu0 0
      %2007 = vmatpush1.bf16.msra.mxu0 %v1966
      %2008 = vmatprep.subr.bf16.mxu0 0
      %2009 = vmatpush1.bf16.msra.mxu0 %v1965
      %2010 = vmatprep.subr.bf16.mxu0 0
      %2011 = vmatpush1.bf16.msra.mxu0 %v1964
      %2012 = vmatprep.subr.bf16.mxu0 0
      %2013 = vmatpush2.bf16.msra.mxu0 %v1979
      %2014 = vmatprep.subr.bf16.mxu0 0
      %2015 = vmatpush2.bf16.msra.mxu0 %v1978
      %2016 = vmatprep.subr.bf16.mxu0 0
      %2017 = vmatpush2.bf16.msra.mxu0 %v1977
      %2018 = vmatprep.subr.bf16.mxu0 0
      %2019 = vmatpush2.bf16.msra.mxu0 %v1976
      %2020 = vmatprep.subr.bf16.mxu0 0
      %2021 = vmatpush2.bf16.msra.mxu0 %v1975
      %2022 = vmatprep.subr.bf16.mxu0 0
      %2023 = vmatpush2.bf16.msra.mxu0 %v1974
      %2024 = vmatprep.subr.bf16.mxu0 0
      %2025 = vmatpush2.bf16.msra.mxu0 %v1973
      %2026 = vmatprep.subr.bf16.mxu0 0
      %2027 = vmatpush2.bf16.msra.mxu0 %v1972
      %2028 = vmatprep.mubr.bf16.mxu0 %v1885
      %2029 = vmatmul.mubr.bf16.gmra.mxu0 %v1884
      %v2030 = vpop.f32.mrf.mxu0
      %v2031 = vadd.f32 %v1854, %v2030
      %v2032 = vpop.f32.mrf.mxu0
      %v2033 = vpop.f32.mrf.mxu0
      %v2034 = vadd.f32 %v1857, %v2033
      %v2035 = vpop.f32.mrf.mxu0
      %2036 = vmatprep.mubr.bf16.mxu0 %v1887
      %2037 = vmatmul.mubr.bf16.gmra.mxu0 %v1886
      %v2038 = vpop.f32.mrf.mxu0
      %v2039 = vadd.f32 %v1862, %v2038
      %v2040 = vpop.f32.mrf.mxu0
      %v2041 = vpop.f32.mrf.mxu0
      %v2042 = vadd.f32 %v1865, %v2041
      %v2043 = vpop.f32.mrf.mxu0
      %2044 = vmatprep.mubr.bf16.mxu0 %v1889
      %2045 = vmatmul.mubr.bf16.gmra.mxu0 %v1888
      %v2046 = vpop.f32.mrf.mxu0
      %v2047 = vadd.f32 %v1870, %v2046
      %v2048 = vpop.f32.mrf.mxu0
      %v2049 = vpop.f32.mrf.mxu0
      %v2050 = vadd.f32 %v1873, %v2049
      %v2051 = vpop.f32.mrf.mxu0
      %2052 = vmatprep.mubr.bf16.mxu0 %v1891
      %2053 = vmatmul.mubr.bf16.gmra.mxu0 %v1890
      %v2054 = vpop.f32.mrf.mxu0
      %v2055 = vadd.f32 %v1878, %v2054
      %v2056 = vpop.f32.mrf.mxu0
      %v2057 = vpop.f32.mrf.mxu0
      %v2058 = vadd.f32 %v1881, %v2057
      %v2059 = vpop.f32.mrf.mxu0
      %2060 = vdwg.mxu0
      %v2061 = vadd.f32 %v1432, %v2031
      %v2062 = vadd.f32 %v1433, %v2034
      %v2063 = vadd.f32 %v1434, %v2039
      %v2064 = vadd.f32 %v1435, %v2042
      %v2065 = vadd.f32 %v1436, %v2047
      %v2066 = vadd.f32 %v1437, %v2050
      %v2067 = vadd.f32 %v1438, %v2055
      %v2068 = vadd.f32 %v1439, %v2058
      %2069 = vst [vmem:[#allocation3] sm:$0xff] %v2061
      %2070 = vst [vmem:[#allocation3 + $0x8] sm:$0xff] %v2062
      %2071 = vst [vmem:[#allocation3 + $0x10] sm:$0xff] %v2063
      %2072 = vst [vmem:[#allocation3 + $0x18] sm:$0xff] %v2064
      %2073 = vst [vmem:[#allocation3 + $0x20] sm:$0xff] %v2065
      %2074 = vst [vmem:[#allocation3 + $0x28] sm:$0xff] %v2066
      %2075 = vst [vmem:[#allocation3 + $0x30] sm:$0xff] %v2067
      %2076 = vst [vmem:[#allocation3 + $0x38] sm:$0xff] %v2068
      %v2077 = vld [vmem:[#allocation3] sm:$0xff]
      %v2078 = vld [vmem:[#allocation3 + $0x8] sm:$0xff]
      %v2079 = vld [vmem:[#allocation3 + $0x10] sm:$0xff]
      %v2080 = vld [vmem:[#allocation3 + $0x18] sm:$0xff]
      %v2081 = vld [vmem:[#allocation3 + $0x20] sm:$0xff]
      %v2082 = vld [vmem:[#allocation3 + $0x28] sm:$0xff]
      %v2083 = vld [vmem:[#allocation3 + $0x30] sm:$0xff]
      %v2084 = vld [vmem:[#allocation3 + $0x38] sm:$0xff]
      %v2085 = vld [vmem:[%s404] sm:$0xe]
      %v2086 = vld [vmem:[%s404 + $0x4] sm:$0xf]
      %v2087 = vld [vmem:[%s404 + $0x8] sm:$0x1]
      %v2088 = vld [vmem:[%s404 + $0xc] sm:$0xe]
      %v2089 = vld [vmem:[%s404 + $0x10] sm:$0xf]
      %v2090 = vld [vmem:[%s404 + $0x14] sm:$0x1]
      %v2091 = vld [vmem:[%s404 + $0x18] sm:$0xe]
      %v2092 = vld [vmem:[%s404 + $0x1c] sm:$0xf]
      %v2093 = vld [vmem:[%s404 + $0x20] sm:$0x1]
      %v2094 = vld [vmem:[%s404 + $0x24] sm:$0xe]
      %v2095 = vld [vmem:[%s404 + $0x28] sm:$0xf]
      %v2096 = vld [vmem:[%s404 + $0x2c] sm:$0x1]
      %v2097 = vld [vmem:[%s404 + $0x30] sm:$0xe]
      %v2098 = vld [vmem:[%s404 + $0x34] sm:$0xf]
      %v2099 = vld [vmem:[%s404 + $0x38] sm:$0x1]
      %v2100 = vld [vmem:[%s404 + $0x3c] sm:$0xe]
      %v2101 = vld [vmem:[%s404 + $0x40] sm:$0xf]
      %v2102 = vld [vmem:[%s404 + $0x44] sm:$0x1]
      %v2103 = vld [vmem:[%s404 + $0x48] sm:$0xe]
      %v2104 = vld [vmem:[%s404 + $0x4c] sm:$0xf]
      %v2105 = vld [vmem:[%s404 + $0x50] sm:$0x1]
      %v2106 = vld [vmem:[%s404 + $0x54] sm:$0xe]
      %v2107 = vld [vmem:[%s404 + $0x58] sm:$0xf]
      %v2108 = vld [vmem:[%s404 + $0x5c] sm:$0x1]
      %v2133 = vunpack.c.l.b16 %v2085
      %v2134 = vunpack.c.l.b16 %v2086
      %v2135 = vunpack.c.l.b16 %v2087
      %v2136 = vunpack.c.l.b16 %v2088
      %v2137 = vunpack.c.l.b16 %v2089
      %v2138 = vunpack.c.l.b16 %v2090
      %v2139 = vunpack.c.l.b16 %v2091
      %v2140 = vunpack.c.l.b16 %v2092
      %v2141 = vunpack.c.l.b16 %v2093
      %v2142 = vunpack.c.l.b16 %v2094
      %v2143 = vunpack.c.l.b16 %v2095
      %v2144 = vunpack.c.l.b16 %v2096
      %v2145 = vunpack.c.l.b16 %v2097
      %v2146 = vunpack.c.l.b16 %v2098
      %v2147 = vunpack.c.l.b16 %v2099
      %v2148 = vunpack.c.l.b16 %v2100
      %v2149 = vunpack.c.l.b16 %v2101
      %v2150 = vunpack.c.l.b16 %v2102
      %v2151 = vunpack.c.l.b16 %v2103
      %v2152 = vunpack.c.l.b16 %v2104
      %v2153 = vunpack.c.l.b16 %v2105
      %v2154 = vunpack.c.l.b16 %v2106
      %v2155 = vunpack.c.l.b16 %v2107
      %v2156 = vunpack.c.l.b16 %v2108
      %v2157 = vpack.c.b16 %v2134, %v2133
      %v2158 = vpack.c.b16 %v2135, %v2135
      %v2159 = vpack.c.b16 %v2137, %v2136
      %v2160 = vpack.c.b16 %v2138, %v2138
      %v2161 = vpack.c.b16 %v2140, %v2139
      %v2162 = vpack.c.b16 %v2141, %v2141
      %v2163 = vpack.c.b16 %v2143, %v2142
      %v2164 = vpack.c.b16 %v2144, %v2144
      %v2165 = vpack.c.b16 %v2146, %v2145
      %v2166 = vpack.c.b16 %v2147, %v2147
      %v2167 = vpack.c.b16 %v2149, %v2148
      %v2168 = vpack.c.b16 %v2150, %v2150
      %v2169 = vpack.c.b16 %v2152, %v2151
      %v2170 = vpack.c.b16 %v2153, %v2153
      %v2171 = vpack.c.b16 %v2155, %v2154
      %v2172 = vpack.c.b16 %v2156, %v2156
      %v2173 = vrot.slane %v2157, 1
      %v2174 = vrot.slane %v2158, 1
      %v2175 = vsel %vm1528, %v2173, %v2174
      %v2176 = vrot.slane %v2159, 1
      %v2177 = vrot.slane %v2160, 1
      %v2178 = vsel %vm1528, %v2176, %v2177
      %v2179 = vrot.slane %v2161, 1
      %v2180 = vrot.slane %v2162, 1
      %v2181 = vsel %vm1528, %v2179, %v2180
      %v2182 = vrot.slane %v2163, 1
      %v2183 = vrot.slane %v2164, 1
      %v2184 = vsel %vm1528, %v2182, %v2183
      %v2185 = vrot.slane %v2165, 1
      %v2186 = vrot.slane %v2166, 1
      %v2187 = vsel %vm1528, %v2185, %v2186
      %v2188 = vrot.slane %v2167, 1
      %v2189 = vrot.slane %v2168, 1
      %v2190 = vsel %vm1528, %v2188, %v2189
      %v2191 = vrot.slane %v2169, 1
      %v2192 = vrot.slane %v2170, 1
      %v2193 = vsel %vm1528, %v2191, %v2192
      %v2194 = vrot.slane %v2171, 1
      %v2195 = vrot.slane %v2172, 1
      %v2196 = vsel %vm1528, %v2194, %v2195
      %v2197 = vunpack.i.l.s16 %v2175
      %v2198 = vunpack.i.h.s16 %v2175
      %v2199 = vunpack.i.l.s16 %v2178
      %v2200 = vunpack.i.h.s16 %v2178
      %v2201 = vunpack.i.l.s16 %v2181
      %v2202 = vunpack.i.h.s16 %v2181
      %v2203 = vunpack.i.l.s16 %v2184
      %v2204 = vunpack.i.h.s16 %v2184
      %v2205 = vunpack.i.l.s16 %v2187
      %v2206 = vunpack.i.h.s16 %v2187
      %v2207 = vunpack.i.l.s16 %v2190
      %v2208 = vunpack.i.h.s16 %v2190
      %v2209 = vunpack.i.l.s16 %v2193
      %v2210 = vunpack.i.h.s16 %v2193
      %v2211 = vunpack.i.l.s16 %v2196
      %v2212 = vunpack.i.h.s16 %v2196
      %s2213 = scalar_lea.vmem %s3, 384
      %v2214 = vld [vmem:[%s2213] sm:$0xf]
      %v2215 = vld [vmem:[%s2213 + $0x4] sm:$0xf]
      %v2216 = vld [vmem:[%s2213 + $0x8] sm:$0xf]
      %v2217 = vld [vmem:[%s2213 + $0xc] sm:$0xf]
      %v2218 = vld [vmem:[%s2213 + $0x10] sm:$0xf]
      %v2219 = vld [vmem:[%s2213 + $0x14] sm:$0xf]
      %v2220 = vld [vmem:[%s2213 + $0x18] sm:$0xf]
      %v2221 = vld [vmem:[%s2213 + $0x1c] sm:$0xf]
      %v2222 = vld [vmem:[%s2213 + $0x20] sm:$0xf]
      %v2223 = vld [vmem:[%s2213 + $0x24] sm:$0xf]
      %v2224 = vld [vmem:[%s2213 + $0x28] sm:$0xf]
      %v2225 = vld [vmem:[%s2213 + $0x2c] sm:$0xf]
      %v2226 = vld [vmem:[%s2213 + $0x30] sm:$0xf]
      %v2227 = vld [vmem:[%s2213 + $0x34] sm:$0xf]
      %v2228 = vld [vmem:[%s2213 + $0x38] sm:$0xf]
      %v2229 = vld [vmem:[%s2213 + $0x3c] sm:$0xf]
      %v2230 = vld [vmem:[%s2213 + $0x40] sm:$0xf]
      %v2231 = vld [vmem:[%s2213 + $0x44] sm:$0xf]
      %v2232 = vld [vmem:[%s2213 + $0x48] sm:$0xf]
      %v2233 = vld [vmem:[%s2213 + $0x4c] sm:$0xf]
      %v2234 = vld [vmem:[%s2213 + $0x50] sm:$0xf]
      %v2235 = vld [vmem:[%s2213 + $0x54] sm:$0xf]
      %v2236 = vld [vmem:[%s2213 + $0x58] sm:$0xf]
      %v2237 = vld [vmem:[%s2213 + $0x5c] sm:$0xf]
      %v2238 = vld [vmem:[%s2213 + $0x60] sm:$0xf]
      %v2239 = vld [vmem:[%s2213 + $0x64] sm:$0xf]
      %v2240 = vld [vmem:[%s2213 + $0x68] sm:$0xf]
      %v2241 = vld [vmem:[%s2213 + $0x6c] sm:$0xf]
      %v2242 = vld [vmem:[%s2213 + $0x70] sm:$0xf]
      %v2243 = vld [vmem:[%s2213 + $0x74] sm:$0xf]
      %v2244 = vld [vmem:[%s2213 + $0x78] sm:$0xf]
      %v2245 = vld [vmem:[%s2213 + $0x7c] sm:$0xf]
      %v2246 = vld [vmem:[%s344] sm:$0xf]
      %v2247 = vld [vmem:[%s344 + $0x4] sm:$0xf]
      %v2248 = vld [vmem:[%s344 + $0xc] sm:$0xf]
      %v2249 = vld [vmem:[%s344 + $0x10] sm:$0xf]
      %v2250 = vld [vmem:[%s344 + $0x18] sm:$0xf]
      %v2251 = vld [vmem:[%s344 + $0x1c] sm:$0xf]
      %v2252 = vld [vmem:[%s344 + $0x24] sm:$0xf]
      %v2253 = vld [vmem:[%s344 + $0x28] sm:$0xf]
      %v2254 = vld [vmem:[%s344 + $0x30] sm:$0xf]
      %v2255 = vld [vmem:[%s344 + $0x34] sm:$0xf]
      %v2256 = vld [vmem:[%s344 + $0x3c] sm:$0xf]
      %v2257 = vld [vmem:[%s344 + $0x40] sm:$0xf]
      %v2258 = vld [vmem:[%s344 + $0x48] sm:$0xf]
      %v2259 = vld [vmem:[%s344 + $0x4c] sm:$0xf]
      %v2260 = vld [vmem:[%s344 + $0x54] sm:$0xf]
      %v2261 = vld [vmem:[%s344 + $0x58] sm:$0xf]
      %v2278 = vunpack.c.l.b16 %v2246
      %v2279 = vunpack.c.l.b16 %v2247
      %v2280 = vunpack.c.l.b16 %v2248
      %v2281 = vunpack.c.l.b16 %v2249
      %v2282 = vunpack.c.l.b16 %v2250
      %v2283 = vunpack.c.l.b16 %v2251
      %v2284 = vunpack.c.l.b16 %v2252
      %v2285 = vunpack.c.l.b16 %v2253
      %v2286 = vunpack.c.l.b16 %v2254
      %v2287 = vunpack.c.l.b16 %v2255
      %v2288 = vunpack.c.l.b16 %v2256
      %v2289 = vunpack.c.l.b16 %v2257
      %v2290 = vunpack.c.l.b16 %v2258
      %v2291 = vunpack.c.l.b16 %v2259
      %v2292 = vunpack.c.l.b16 %v2260
      %v2293 = vunpack.c.l.b16 %v2261
      %v2294 = vpack.c.b16 %v2279, %v2278
      %v2295 = vpack.c.b16 %v2281, %v2280
      %v2296 = vpack.c.b16 %v2283, %v2282
      %v2297 = vpack.c.b16 %v2285, %v2284
      %v2298 = vpack.c.b16 %v2287, %v2286
      %v2299 = vpack.c.b16 %v2289, %v2288
      %v2300 = vpack.c.b16 %v2291, %v2290
      %v2301 = vpack.c.b16 %v2293, %v2292
      %v2302 = vunpack.i.l.s16 %v2294
      %v2303 = vunpack.i.h.s16 %v2294
      %v2304 = vunpack.i.l.s16 %v2295
      %v2305 = vunpack.i.h.s16 %v2295
      %v2306 = vunpack.i.l.s16 %v2296
      %v2307 = vunpack.i.h.s16 %v2296
      %v2308 = vunpack.i.l.s16 %v2297
      %v2309 = vunpack.i.h.s16 %v2297
      %v2310 = vunpack.i.l.s16 %v2298
      %v2311 = vunpack.i.h.s16 %v2298
      %v2312 = vunpack.i.l.s16 %v2299
      %v2313 = vunpack.i.h.s16 %v2299
      %v2314 = vunpack.i.l.s16 %v2300
      %v2315 = vunpack.i.h.s16 %v2300
      %v2316 = vunpack.i.l.s16 %v2301
      %v2317 = vunpack.i.h.s16 %v2301
      %s2318 = scalar_lea.vmem %s3, 512
      %v2319 = vld [vmem:[%s2318] sm:$0xf]
      %v2320 = vld [vmem:[%s2318 + $0x4] sm:$0xf]
      %v2321 = vld [vmem:[%s2318 + $0x8] sm:$0xf]
      %v2322 = vld [vmem:[%s2318 + $0xc] sm:$0xf]
      %v2323 = vld [vmem:[%s2318 + $0x10] sm:$0xf]
      %v2324 = vld [vmem:[%s2318 + $0x14] sm:$0xf]
      %v2325 = vld [vmem:[%s2318 + $0x18] sm:$0xf]
      %v2326 = vld [vmem:[%s2318 + $0x1c] sm:$0xf]
      %v2327 = vld [vmem:[%s2318 + $0x20] sm:$0xf]
      %v2328 = vld [vmem:[%s2318 + $0x24] sm:$0xf]
      %v2329 = vld [vmem:[%s2318 + $0x28] sm:$0xf]
      %v2330 = vld [vmem:[%s2318 + $0x2c] sm:$0xf]
      %v2331 = vld [vmem:[%s2318 + $0x30] sm:$0xf]
      %v2332 = vld [vmem:[%s2318 + $0x34] sm:$0xf]
      %v2333 = vld [vmem:[%s2318 + $0x38] sm:$0xf]
      %v2334 = vld [vmem:[%s2318 + $0x3c] sm:$0xf]
      %v2335 = vld [vmem:[%s2318 + $0x40] sm:$0xf]
      %v2336 = vld [vmem:[%s2318 + $0x44] sm:$0xf]
      %v2337 = vld [vmem:[%s2318 + $0x48] sm:$0xf]
      %v2338 = vld [vmem:[%s2318 + $0x4c] sm:$0xf]
      %v2339 = vld [vmem:[%s2318 + $0x50] sm:$0xf]
      %v2340 = vld [vmem:[%s2318 + $0x54] sm:$0xf]
      %v2341 = vld [vmem:[%s2318 + $0x58] sm:$0xf]
      %v2342 = vld [vmem:[%s2318 + $0x5c] sm:$0xf]
      %v2343 = vld [vmem:[%s2318 + $0x60] sm:$0xf]
      %v2344 = vld [vmem:[%s2318 + $0x64] sm:$0xf]
      %v2345 = vld [vmem:[%s2318 + $0x68] sm:$0xf]
      %v2346 = vld [vmem:[%s2318 + $0x6c] sm:$0xf]
      %v2347 = vld [vmem:[%s2318 + $0x70] sm:$0xf]
      %v2348 = vld [vmem:[%s2318 + $0x74] sm:$0xf]
      %v2349 = vld [vmem:[%s2318 + $0x78] sm:$0xf]
      %v2350 = vld [vmem:[%s2318 + $0x7c] sm:$0xf]
      %v2351 = vpack.c.b16 %v2304, %v2302
      %v2352 = vpack.c.b16 %v2305, %v2303
      %v2353 = vpack.c.b16 %v2308, %v2306
      %v2354 = vpack.c.b16 %v2309, %v2307
      %v2355 = vpack.c.b16 %v2312, %v2310
      %v2356 = vpack.c.b16 %v2313, %v2311
      %v2357 = vpack.c.b16 %v2316, %v2314
      %v2358 = vpack.c.b16 %v2317, %v2315
      %v2399 = vunpack.c.l.b16 %v2319
      %v2400 = vunpack.c.l.b16 %v2320
      %v2401 = vunpack.c.l.b16 %v2321
      %v2402 = vunpack.c.l.b16 %v2322
      %v2403 = vunpack.c.l.b16 %v2323
      %v2404 = vunpack.c.l.b16 %v2324
      %v2405 = vunpack.c.l.b16 %v2325
      %v2406 = vunpack.c.l.b16 %v2326
      %v2407 = vunpack.c.l.b16 %v2327
      %v2408 = vunpack.c.l.b16 %v2328
      %v2409 = vunpack.c.l.b16 %v2329
      %v2410 = vunpack.c.l.b16 %v2330
      %v2411 = vunpack.c.l.b16 %v2331
      %v2412 = vunpack.c.l.b16 %v2332
      %v2413 = vunpack.c.l.b16 %v2333
      %v2414 = vunpack.c.l.b16 %v2334
      %v2415 = vunpack.c.l.b16 %v2335
      %v2416 = vunpack.c.l.b16 %v2336
      %v2417 = vunpack.c.l.b16 %v2337
      %v2418 = vunpack.c.l.b16 %v2338
      %v2419 = vunpack.c.l.b16 %v2339
      %v2420 = vunpack.c.l.b16 %v2340
      %v2421 = vunpack.c.l.b16 %v2341
      %v2422 = vunpack.c.l.b16 %v2342
      %v2423 = vunpack.c.l.b16 %v2343
      %v2424 = vunpack.c.l.b16 %v2344
      %v2425 = vunpack.c.l.b16 %v2345
      %v2426 = vunpack.c.l.b16 %v2346
      %v2427 = vunpack.c.l.b16 %v2347
      %v2428 = vunpack.c.l.b16 %v2348
      %v2429 = vunpack.c.l.b16 %v2349
      %v2430 = vunpack.c.l.b16 %v2350
      %v2431 = vpack.c.b16 %v2400, %v2399
      %v2432 = vpack.c.b16 %v2402, %v2401
      %v2433 = vpack.c.b16 %v2404, %v2403
      %v2434 = vpack.c.b16 %v2406, %v2405
      %v2435 = vpack.c.b16 %v2408, %v2407
      %v2436 = vpack.c.b16 %v2410, %v2409
      %v2437 = vpack.c.b16 %v2412, %v2411
      %v2438 = vpack.c.b16 %v2414, %v2413
      %v2439 = vpack.c.b16 %v2416, %v2415
      %v2440 = vpack.c.b16 %v2418, %v2417
      %v2441 = vpack.c.b16 %v2420, %v2419
      %v2442 = vpack.c.b16 %v2422, %v2421
      %v2443 = vpack.c.b16 %v2424, %v2423
      %v2444 = vpack.c.b16 %v2426, %v2425
      %v2445 = vpack.c.b16 %v2428, %v2427
      %v2446 = vpack.c.b16 %v2430, %v2429
      %2463 = vmatprep.subr.bf16.mxu0 0
      %2464 = vmatpush1.bf16.msra.mxu0 %v2438
      %2465 = vmatprep.subr.bf16.mxu0 0
      %2466 = vmatpush1.bf16.msra.mxu0 %v2437
      %2467 = vmatprep.subr.bf16.mxu0 0
      %2468 = vmatpush1.bf16.msra.mxu0 %v2436
      %2469 = vmatprep.subr.bf16.mxu0 0
      %2470 = vmatpush1.bf16.msra.mxu0 %v2435
      %2471 = vmatprep.subr.bf16.mxu0 0
      %2472 = vmatpush1.bf16.msra.mxu0 %v2434
      %2473 = vmatprep.subr.bf16.mxu0 0
      %2474 = vmatpush1.bf16.msra.mxu0 %v2433
      %2475 = vmatprep.subr.bf16.mxu0 0
      %2476 = vmatpush1.bf16.msra.mxu0 %v2432
      %2477 = vmatprep.subr.bf16.mxu0 0
      %2478 = vmatpush1.bf16.msra.mxu0 %v2431
      %2479 = vmatprep.subr.bf16.mxu0 0
      %2480 = vmatpush2.bf16.msra.mxu0 %v2446
      %2481 = vmatprep.subr.bf16.mxu0 0
      %2482 = vmatpush2.bf16.msra.mxu0 %v2445
      %2483 = vmatprep.subr.bf16.mxu0 0
      %2484 = vmatpush2.bf16.msra.mxu0 %v2444
      %2485 = vmatprep.subr.bf16.mxu0 0
      %2486 = vmatpush2.bf16.msra.mxu0 %v2443
      %2487 = vmatprep.subr.bf16.mxu0 0
      %2488 = vmatpush2.bf16.msra.mxu0 %v2442
      %2489 = vmatprep.subr.bf16.mxu0 0
      %2490 = vmatpush2.bf16.msra.mxu0 %v2441
      %2491 = vmatprep.subr.bf16.mxu0 0
      %2492 = vmatpush2.bf16.msra.mxu0 %v2440
      %2493 = vmatprep.subr.bf16.mxu0 0
      %2494 = vmatpush2.bf16.msra.mxu0 %v2439
      %2495 = vmatprep.mubr.bf16.mxu0 %v2352
      %2496 = vmatmul.mubr.bf16.gmra.mxu0 %v2351
      %v2497 = vpop.f32.mrf.mxu0
      %v2498 = vadd.f32 0.0, %v2497
      %v2499 = vpop.f32.mrf.mxu0
      %v2500 = vpop.f32.mrf.mxu0
      %v2501 = vadd.f32 0.0, %v2500
      %v2502 = vpop.f32.mrf.mxu0
      %2503 = vmatprep.mubr.bf16.mxu0 %v2354
      %2504 = vmatmul.mubr.bf16.gmra.mxu0 %v2353
      %v2505 = vpop.f32.mrf.mxu0
      %v2506 = vadd.f32 0.0, %v2505
      %v2507 = vpop.f32.mrf.mxu0
      %v2508 = vpop.f32.mrf.mxu0
      %v2509 = vadd.f32 0.0, %v2508
      %v2510 = vpop.f32.mrf.mxu0
      %2511 = vmatprep.mubr.bf16.mxu0 %v2356
      %2512 = vmatmul.mubr.bf16.gmra.mxu0 %v2355
      %v2513 = vpop.f32.mrf.mxu0
      %v2514 = vadd.f32 0.0, %v2513
      %v2515 = vpop.f32.mrf.mxu0
      %v2516 = vpop.f32.mrf.mxu0
      %v2517 = vadd.f32 0.0, %v2516
      %v2518 = vpop.f32.mrf.mxu0
      %2519 = vmatprep.mubr.bf16.mxu0 %v2358
      %2520 = vmatmul.mubr.bf16.gmra.mxu0 %v2357
      %v2521 = vpop.f32.mrf.mxu0
      %v2522 = vadd.f32 0.0, %v2521
      %v2523 = vpop.f32.mrf.mxu0
      %v2524 = vpop.f32.mrf.mxu0
      %v2525 = vadd.f32 0.0, %v2524
      %v2526 = vpop.f32.mrf.mxu0
      %2527 = vdwg.mxu0
      %v2528 = vpack.c.b16 %v2199, %v2197
      %v2529 = vpack.c.b16 %v2200, %v2198
      %v2530 = vpack.c.b16 %v2203, %v2201
      %v2531 = vpack.c.b16 %v2204, %v2202
      %v2532 = vpack.c.b16 %v2207, %v2205
      %v2533 = vpack.c.b16 %v2208, %v2206
      %v2534 = vpack.c.b16 %v2211, %v2209
      %v2535 = vpack.c.b16 %v2212, %v2210
      %v2576 = vunpack.c.l.b16 %v2214
      %v2577 = vunpack.c.l.b16 %v2215
      %v2578 = vunpack.c.l.b16 %v2216
      %v2579 = vunpack.c.l.b16 %v2217
      %v2580 = vunpack.c.l.b16 %v2218
      %v2581 = vunpack.c.l.b16 %v2219
      %v2582 = vunpack.c.l.b16 %v2220
      %v2583 = vunpack.c.l.b16 %v2221
      %v2584 = vunpack.c.l.b16 %v2222
      %v2585 = vunpack.c.l.b16 %v2223
      %v2586 = vunpack.c.l.b16 %v2224
      %v2587 = vunpack.c.l.b16 %v2225
      %v2588 = vunpack.c.l.b16 %v2226
      %v2589 = vunpack.c.l.b16 %v2227
      %v2590 = vunpack.c.l.b16 %v2228
      %v2591 = vunpack.c.l.b16 %v2229
      %v2592 = vunpack.c.l.b16 %v2230
      %v2593 = vunpack.c.l.b16 %v2231
      %v2594 = vunpack.c.l.b16 %v2232
      %v2595 = vunpack.c.l.b16 %v2233
      %v2596 = vunpack.c.l.b16 %v2234
      %v2597 = vunpack.c.l.b16 %v2235
      %v2598 = vunpack.c.l.b16 %v2236
      %v2599 = vunpack.c.l.b16 %v2237
      %v2600 = vunpack.c.l.b16 %v2238
      %v2601 = vunpack.c.l.b16 %v2239
      %v2602 = vunpack.c.l.b16 %v2240
      %v2603 = vunpack.c.l.b16 %v2241
      %v2604 = vunpack.c.l.b16 %v2242
      %v2605 = vunpack.c.l.b16 %v2243
      %v2606 = vunpack.c.l.b16 %v2244
      %v2607 = vunpack.c.l.b16 %v2245
      %v2608 = vpack.c.b16 %v2577, %v2576
      %v2609 = vpack.c.b16 %v2579, %v2578
      %v2610 = vpack.c.b16 %v2581, %v2580
      %v2611 = vpack.c.b16 %v2583, %v2582
      %v2612 = vpack.c.b16 %v2585, %v2584
      %v2613 = vpack.c.b16 %v2587, %v2586
      %v2614 = vpack.c.b16 %v2589, %v2588
      %v2615 = vpack.c.b16 %v2591, %v2590
      %v2616 = vpack.c.b16 %v2593, %v2592
      %v2617 = vpack.c.b16 %v2595, %v2594
      %v2618 = vpack.c.b16 %v2597, %v2596
      %v2619 = vpack.c.b16 %v2599, %v2598
      %v2620 = vpack.c.b16 %v2601, %v2600
      %v2621 = vpack.c.b16 %v2603, %v2602
      %v2622 = vpack.c.b16 %v2605, %v2604
      %v2623 = vpack.c.b16 %v2607, %v2606
      %2640 = vmatprep.subr.bf16.mxu0 0
      %2641 = vmatpush1.bf16.msra.mxu0 %v2615
      %2642 = vmatprep.subr.bf16.mxu0 0
      %2643 = vmatpush1.bf16.msra.mxu0 %v2614
      %2644 = vmatprep.subr.bf16.mxu0 0
      %2645 = vmatpush1.bf16.msra.mxu0 %v2613
      %2646 = vmatprep.subr.bf16.mxu0 0
      %2647 = vmatpush1.bf16.msra.mxu0 %v2612
      %2648 = vmatprep.subr.bf16.mxu0 0
      %2649 = vmatpush1.bf16.msra.mxu0 %v2611
      %2650 = vmatprep.subr.bf16.mxu0 0
      %2651 = vmatpush1.bf16.msra.mxu0 %v2610
      %2652 = vmatprep.subr.bf16.mxu0 0
      %2653 = vmatpush1.bf16.msra.mxu0 %v2609
      %2654 = vmatprep.subr.bf16.mxu0 0
      %2655 = vmatpush1.bf16.msra.mxu0 %v2608
      %2656 = vmatprep.subr.bf16.mxu0 0
      %2657 = vmatpush2.bf16.msra.mxu0 %v2623
      %2658 = vmatprep.subr.bf16.mxu0 0
      %2659 = vmatpush2.bf16.msra.mxu0 %v2622
      %2660 = vmatprep.subr.bf16.mxu0 0
      %2661 = vmatpush2.bf16.msra.mxu0 %v2621
      %2662 = vmatprep.subr.bf16.mxu0 0
      %2663 = vmatpush2.bf16.msra.mxu0 %v2620
      %2664 = vmatprep.subr.bf16.mxu0 0
      %2665 = vmatpush2.bf16.msra.mxu0 %v2619
      %2666 = vmatprep.subr.bf16.mxu0 0
      %2667 = vmatpush2.bf16.msra.mxu0 %v2618
      %2668 = vmatprep.subr.bf16.mxu0 0
      %2669 = vmatpush2.bf16.msra.mxu0 %v2617
      %2670 = vmatprep.subr.bf16.mxu0 0
      %2671 = vmatpush2.bf16.msra.mxu0 %v2616
      %2672 = vmatprep.mubr.bf16.mxu0 %v2529
      %2673 = vmatmul.mubr.bf16.gmra.mxu0 %v2528
      %v2674 = vpop.f32.mrf.mxu0
      %v2675 = vadd.f32 %v2498, %v2674
      %v2676 = vpop.f32.mrf.mxu0
      %v2677 = vpop.f32.mrf.mxu0
      %v2678 = vadd.f32 %v2501, %v2677
      %v2679 = vpop.f32.mrf.mxu0
      %2680 = vmatprep.mubr.bf16.mxu0 %v2531
      %2681 = vmatmul.mubr.bf16.gmra.mxu0 %v2530
      %v2682 = vpop.f32.mrf.mxu0
      %v2683 = vadd.f32 %v2506, %v2682
      %v2684 = vpop.f32.mrf.mxu0
      %v2685 = vpop.f32.mrf.mxu0
      %v2686 = vadd.f32 %v2509, %v2685
      %v2687 = vpop.f32.mrf.mxu0
      %2688 = vmatprep.mubr.bf16.mxu0 %v2533
      %2689 = vmatmul.mubr.bf16.gmra.mxu0 %v2532
      %v2690 = vpop.f32.mrf.mxu0
      %v2691 = vadd.f32 %v2514, %v2690
      %v2692 = vpop.f32.mrf.mxu0
      %v2693 = vpop.f32.mrf.mxu0
      %v2694 = vadd.f32 %v2517, %v2693
      %v2695 = vpop.f32.mrf.mxu0
      %2696 = vmatprep.mubr.bf16.mxu0 %v2535
      %2697 = vmatmul.mubr.bf16.gmra.mxu0 %v2534
      %v2698 = vpop.f32.mrf.mxu0
      %v2699 = vadd.f32 %v2522, %v2698
      %v2700 = vpop.f32.mrf.mxu0
      %v2701 = vpop.f32.mrf.mxu0
      %v2702 = vadd.f32 %v2525, %v2701
      %v2703 = vpop.f32.mrf.mxu0
      %2704 = vdwg.mxu0
      %v2705 = vadd.f32 %v2077, %v2675
      %v2706 = vadd.f32 %v2078, %v2678
      %v2707 = vadd.f32 %v2079, %v2683
      %v2708 = vadd.f32 %v2080, %v2686
      %v2709 = vadd.f32 %v2081, %v2691
      %v2710 = vadd.f32 %v2082, %v2694
      %v2711 = vadd.f32 %v2083, %v2699
      %v2712 = vadd.f32 %v2084, %v2702
      %2713 = vst [vmem:[#allocation3] sm:$0xff] %v2705
      %2714 = vst [vmem:[#allocation3 + $0x8] sm:$0xff] %v2706
      %2715 = vst [vmem:[#allocation3 + $0x10] sm:$0xff] %v2707
      %2716 = vst [vmem:[#allocation3 + $0x18] sm:$0xff] %v2708
      %2717 = vst [vmem:[#allocation3 + $0x20] sm:$0xff] %v2709
      %2718 = vst [vmem:[#allocation3 + $0x28] sm:$0xff] %v2710
      %2719 = vst [vmem:[#allocation3 + $0x30] sm:$0xff] %v2711
      %2720 = vst [vmem:[#allocation3 + $0x38] sm:$0xff] %v2712
      %v2721 = vld [vmem:[#allocation3] sm:$0xff]
      %v2722 = vld [vmem:[#allocation3 + $0x8] sm:$0xff]
      %v2723 = vld [vmem:[#allocation3 + $0x10] sm:$0xff]
      %v2724 = vld [vmem:[#allocation3 + $0x18] sm:$0xff]
      %v2725 = vld [vmem:[#allocation3 + $0x20] sm:$0xff]
      %v2726 = vld [vmem:[#allocation3 + $0x28] sm:$0xff]
      %v2727 = vld [vmem:[#allocation3 + $0x30] sm:$0xff]
      %v2728 = vld [vmem:[#allocation3 + $0x38] sm:$0xff]
      %v2729 = vld [vmem:[%s344] sm:$0xe]
      %v2730 = vld [vmem:[%s344 + $0x4] sm:$0xf]
      %v2731 = vld [vmem:[%s344 + $0x8] sm:$0x1]
      %v2732 = vld [vmem:[%s344 + $0xc] sm:$0xe]
      %v2733 = vld [vmem:[%s344 + $0x10] sm:$0xf]
      %v2734 = vld [vmem:[%s344 + $0x14] sm:$0x1]
      %v2735 = vld [vmem:[%s344 + $0x18] sm:$0xe]
      %v2736 = vld [vmem:[%s344 + $0x1c] sm:$0xf]
      %v2737 = vld [vmem:[%s344 + $0x20] sm:$0x1]
      %v2738 = vld [vmem:[%s344 + $0x24] sm:$0xe]
      %v2739 = vld [vmem:[%s344 + $0x28] sm:$0xf]
      %v2740 = vld [vmem:[%s344 + $0x2c] sm:$0x1]
      %v2741 = vld [vmem:[%s344 + $0x30] sm:$0xe]
      %v2742 = vld [vmem:[%s344 + $0x34] sm:$0xf]
      %v2743 = vld [vmem:[%s344 + $0x38] sm:$0x1]
      %v2744 = vld [vmem:[%s344 + $0x3c] sm:$0xe]
      %v2745 = vld [vmem:[%s344 + $0x40] sm:$0xf]
      %v2746 = vld [vmem:[%s344 + $0x44] sm:$0x1]
      %v2747 = vld [vmem:[%s344 + $0x48] sm:$0xe]
      %v2748 = vld [vmem:[%s344 + $0x4c] sm:$0xf]
      %v2749 = vld [vmem:[%s344 + $0x50] sm:$0x1]
      %v2750 = vld [vmem:[%s344 + $0x54] sm:$0xe]
      %v2751 = vld [vmem:[%s344 + $0x58] sm:$0xf]
      %v2752 = vld [vmem:[%s344 + $0x5c] sm:$0x1]
      %v2777 = vunpack.c.l.b16 %v2729
      %v2778 = vunpack.c.l.b16 %v2730
      %v2779 = vunpack.c.l.b16 %v2731
      %v2780 = vunpack.c.l.b16 %v2732
      %v2781 = vunpack.c.l.b16 %v2733
      %v2782 = vunpack.c.l.b16 %v2734
      %v2783 = vunpack.c.l.b16 %v2735
      %v2784 = vunpack.c.l.b16 %v2736
      %v2785 = vunpack.c.l.b16 %v2737
      %v2786 = vunpack.c.l.b16 %v2738
      %v2787 = vunpack.c.l.b16 %v2739
      %v2788 = vunpack.c.l.b16 %v2740
      %v2789 = vunpack.c.l.b16 %v2741
      %v2790 = vunpack.c.l.b16 %v2742
      %v2791 = vunpack.c.l.b16 %v2743
      %v2792 = vunpack.c.l.b16 %v2744
      %v2793 = vunpack.c.l.b16 %v2745
      %v2794 = vunpack.c.l.b16 %v2746
      %v2795 = vunpack.c.l.b16 %v2747
      %v2796 = vunpack.c.l.b16 %v2748
      %v2797 = vunpack.c.l.b16 %v2749
      %v2798 = vunpack.c.l.b16 %v2750
      %v2799 = vunpack.c.l.b16 %v2751
      %v2800 = vunpack.c.l.b16 %v2752
      %v2801 = vpack.c.b16 %v2778, %v2777
      %v2802 = vpack.c.b16 %v2779, %v2779
      %v2803 = vpack.c.b16 %v2781, %v2780
      %v2804 = vpack.c.b16 %v2782, %v2782
      %v2805 = vpack.c.b16 %v2784, %v2783
      %v2806 = vpack.c.b16 %v2785, %v2785
      %v2807 = vpack.c.b16 %v2787, %v2786
      %v2808 = vpack.c.b16 %v2788, %v2788
      %v2809 = vpack.c.b16 %v2790, %v2789
      %v2810 = vpack.c.b16 %v2791, %v2791
      %v2811 = vpack.c.b16 %v2793, %v2792
      %v2812 = vpack.c.b16 %v2794, %v2794
      %v2813 = vpack.c.b16 %v2796, %v2795
      %v2814 = vpack.c.b16 %v2797, %v2797
      %v2815 = vpack.c.b16 %v2799, %v2798
      %v2816 = vpack.c.b16 %v2800, %v2800
      %v2817 = vrot.slane %v2801, 1
      %v2818 = vrot.slane %v2802, 1
      %v2819 = vsel %vm1528, %v2817, %v2818
      %v2820 = vrot.slane %v2803, 1
      %v2821 = vrot.slane %v2804, 1
      %v2822 = vsel %vm1528, %v2820, %v2821
      %v2823 = vrot.slane %v2805, 1
      %v2824 = vrot.slane %v2806, 1
      %v2825 = vsel %vm1528, %v2823, %v2824
      %v2826 = vrot.slane %v2807, 1
      %v2827 = vrot.slane %v2808, 1
      %v2828 = vsel %vm1528, %v2826, %v2827
      %v2829 = vrot.slane %v2809, 1
      %v2830 = vrot.slane %v2810, 1
      %v2831 = vsel %vm1528, %v2829, %v2830
      %v2832 = vrot.slane %v2811, 1
      %v2833 = vrot.slane %v2812, 1
      %v2834 = vsel %vm1528, %v2832, %v2833
      %v2835 = vrot.slane %v2813, 1
      %v2836 = vrot.slane %v2814, 1
      %v2837 = vsel %vm1528, %v2835, %v2836
      %v2838 = vrot.slane %v2815, 1
      %v2839 = vrot.slane %v2816, 1
      %v2840 = vsel %vm1528, %v2838, %v2839
      %v2841 = vunpack.i.l.s16 %v2819
      %v2842 = vunpack.i.h.s16 %v2819
      %v2843 = vunpack.i.l.s16 %v2822
      %v2844 = vunpack.i.h.s16 %v2822
      %v2845 = vunpack.i.l.s16 %v2825
      %v2846 = vunpack.i.h.s16 %v2825
      %v2847 = vunpack.i.l.s16 %v2828
      %v2848 = vunpack.i.h.s16 %v2828
      %v2849 = vunpack.i.l.s16 %v2831
      %v2850 = vunpack.i.h.s16 %v2831
      %v2851 = vunpack.i.l.s16 %v2834
      %v2852 = vunpack.i.h.s16 %v2834
      %v2853 = vunpack.i.l.s16 %v2837
      %v2854 = vunpack.i.h.s16 %v2837
      %v2855 = vunpack.i.l.s16 %v2840
      %v2856 = vunpack.i.h.s16 %v2840
      %s2857 = scalar_lea.vmem %s3, 640
      %v2858 = vld [vmem:[%s2857] sm:$0xf]
      %v2859 = vld [vmem:[%s2857 + $0x4] sm:$0xf]
      %v2860 = vld [vmem:[%s2857 + $0x8] sm:$0xf]
      %v2861 = vld [vmem:[%s2857 + $0xc] sm:$0xf]
      %v2862 = vld [vmem:[%s2857 + $0x10] sm:$0xf]
      %v2863 = vld [vmem:[%s2857 + $0x14] sm:$0xf]
      %v2864 = vld [vmem:[%s2857 + $0x18] sm:$0xf]
      %v2865 = vld [vmem:[%s2857 + $0x1c] sm:$0xf]
      %v2866 = vld [vmem:[%s2857 + $0x20] sm:$0xf]
      %v2867 = vld [vmem:[%s2857 + $0x24] sm:$0xf]
      %v2868 = vld [vmem:[%s2857 + $0x28] sm:$0xf]
      %v2869 = vld [vmem:[%s2857 + $0x2c] sm:$0xf]
      %v2870 = vld [vmem:[%s2857 + $0x30] sm:$0xf]
      %v2871 = vld [vmem:[%s2857 + $0x34] sm:$0xf]
      %v2872 = vld [vmem:[%s2857 + $0x38] sm:$0xf]
      %v2873 = vld [vmem:[%s2857 + $0x3c] sm:$0xf]
      %v2874 = vld [vmem:[%s2857 + $0x40] sm:$0xf]
      %v2875 = vld [vmem:[%s2857 + $0x44] sm:$0xf]
      %v2876 = vld [vmem:[%s2857 + $0x48] sm:$0xf]
      %v2877 = vld [vmem:[%s2857 + $0x4c] sm:$0xf]
      %v2878 = vld [vmem:[%s2857 + $0x50] sm:$0xf]
      %v2879 = vld [vmem:[%s2857 + $0x54] sm:$0xf]
      %v2880 = vld [vmem:[%s2857 + $0x58] sm:$0xf]
      %v2881 = vld [vmem:[%s2857 + $0x5c] sm:$0xf]
      %v2882 = vld [vmem:[%s2857 + $0x60] sm:$0xf]
      %v2883 = vld [vmem:[%s2857 + $0x64] sm:$0xf]
      %v2884 = vld [vmem:[%s2857 + $0x68] sm:$0xf]
      %v2885 = vld [vmem:[%s2857 + $0x6c] sm:$0xf]
      %v2886 = vld [vmem:[%s2857 + $0x70] sm:$0xf]
      %v2887 = vld [vmem:[%s2857 + $0x74] sm:$0xf]
      %v2888 = vld [vmem:[%s2857 + $0x78] sm:$0xf]
      %v2889 = vld [vmem:[%s2857 + $0x7c] sm:$0xf]
      %v2890 = vpack.c.b16 %v2843, %v2841
      %v2891 = vpack.c.b16 %v2844, %v2842
      %v2892 = vpack.c.b16 %v2847, %v2845
      %v2893 = vpack.c.b16 %v2848, %v2846
      %v2894 = vpack.c.b16 %v2851, %v2849
      %v2895 = vpack.c.b16 %v2852, %v2850
      %v2896 = vpack.c.b16 %v2855, %v2853
      %v2897 = vpack.c.b16 %v2856, %v2854
      %v2938 = vunpack.c.l.b16 %v2858
      %v2939 = vunpack.c.l.b16 %v2859
      %v2940 = vunpack.c.l.b16 %v2860
      %v2941 = vunpack.c.l.b16 %v2861
      %v2942 = vunpack.c.l.b16 %v2862
      %v2943 = vunpack.c.l.b16 %v2863
      %v2944 = vunpack.c.l.b16 %v2864
      %v2945 = vunpack.c.l.b16 %v2865
      %v2946 = vunpack.c.l.b16 %v2866
      %v2947 = vunpack.c.l.b16 %v2867
      %v2948 = vunpack.c.l.b16 %v2868
      %v2949 = vunpack.c.l.b16 %v2869
      %v2950 = vunpack.c.l.b16 %v2870
      %v2951 = vunpack.c.l.b16 %v2871
      %v2952 = vunpack.c.l.b16 %v2872
      %v2953 = vunpack.c.l.b16 %v2873
      %v2954 = vunpack.c.l.b16 %v2874
      %v2955 = vunpack.c.l.b16 %v2875
      %v2956 = vunpack.c.l.b16 %v2876
      %v2957 = vunpack.c.l.b16 %v2877
      %v2958 = vunpack.c.l.b16 %v2878
      %v2959 = vunpack.c.l.b16 %v2879
      %v2960 = vunpack.c.l.b16 %v2880
      %v2961 = vunpack.c.l.b16 %v2881
      %v2962 = vunpack.c.l.b16 %v2882
      %v2963 = vunpack.c.l.b16 %v2883
      %v2964 = vunpack.c.l.b16 %v2884
      %v2965 = vunpack.c.l.b16 %v2885
      %v2966 = vunpack.c.l.b16 %v2886
      %v2967 = vunpack.c.l.b16 %v2887
      %v2968 = vunpack.c.l.b16 %v2888
      %v2969 = vunpack.c.l.b16 %v2889
      %v2970 = vpack.c.b16 %v2939, %v2938
      %v2971 = vpack.c.b16 %v2941, %v2940
      %v2972 = vpack.c.b16 %v2943, %v2942
      %v2973 = vpack.c.b16 %v2945, %v2944
      %v2974 = vpack.c.b16 %v2947, %v2946
      %v2975 = vpack.c.b16 %v2949, %v2948
      %v2976 = vpack.c.b16 %v2951, %v2950
      %v2977 = vpack.c.b16 %v2953, %v2952
      %v2978 = vpack.c.b16 %v2955, %v2954
      %v2979 = vpack.c.b16 %v2957, %v2956
      %v2980 = vpack.c.b16 %v2959, %v2958
      %v2981 = vpack.c.b16 %v2961, %v2960
      %v2982 = vpack.c.b16 %v2963, %v2962
      %v2983 = vpack.c.b16 %v2965, %v2964
      %v2984 = vpack.c.b16 %v2967, %v2966
      %v2985 = vpack.c.b16 %v2969, %v2968
      %3002 = vmatprep.subr.bf16.mxu0 0
      %3003 = vmatpush1.bf16.msra.mxu0 %v2977
      %3004 = vmatprep.subr.bf16.mxu0 0
      %3005 = vmatpush1.bf16.msra.mxu0 %v2976
      %3006 = vmatprep.subr.bf16.mxu0 0
      %3007 = vmatpush1.bf16.msra.mxu0 %v2975
      %3008 = vmatprep.subr.bf16.mxu0 0
      %3009 = vmatpush1.bf16.msra.mxu0 %v2974
      %3010 = vmatprep.subr.bf16.mxu0 0
      %3011 = vmatpush1.bf16.msra.mxu0 %v2973
      %3012 = vmatprep.subr.bf16.mxu0 0
      %3013 = vmatpush1.bf16.msra.mxu0 %v2972
      %3014 = vmatprep.subr.bf16.mxu0 0
      %3015 = vmatpush1.bf16.msra.mxu0 %v2971
      %3016 = vmatprep.subr.bf16.mxu0 0
      %3017 = vmatpush1.bf16.msra.mxu0 %v2970
      %3018 = vmatprep.subr.bf16.mxu0 0
      %3019 = vmatpush2.bf16.msra.mxu0 %v2985
      %3020 = vmatprep.subr.bf16.mxu0 0
      %3021 = vmatpush2.bf16.msra.mxu0 %v2984
      %3022 = vmatprep.subr.bf16.mxu0 0
      %3023 = vmatpush2.bf16.msra.mxu0 %v2983
      %3024 = vmatprep.subr.bf16.mxu0 0
      %3025 = vmatpush2.bf16.msra.mxu0 %v2982
      %3026 = vmatprep.subr.bf16.mxu0 0
      %3027 = vmatpush2.bf16.msra.mxu0 %v2981
      %3028 = vmatprep.subr.bf16.mxu0 0
      %3029 = vmatpush2.bf16.msra.mxu0 %v2980
      %3030 = vmatprep.subr.bf16.mxu0 0
      %3031 = vmatpush2.bf16.msra.mxu0 %v2979
      %3032 = vmatprep.subr.bf16.mxu0 0
      %3033 = vmatpush2.bf16.msra.mxu0 %v2978
      %3034 = vmatprep.mubr.bf16.mxu0 %v2891
      %3035 = vmatmul.mubr.bf16.gmra.mxu0 %v2890
      %v3036 = vpop.f32.mrf.mxu0
      %v3037 = vadd.f32 0.0, %v3036
      %v3038 = vpop.f32.mrf.mxu0
      %v3039 = vpop.f32.mrf.mxu0
      %v3040 = vadd.f32 0.0, %v3039
      %v3041 = vpop.f32.mrf.mxu0
      %3042 = vmatprep.mubr.bf16.mxu0 %v2893
      %3043 = vmatmul.mubr.bf16.gmra.mxu0 %v2892
      %v3044 = vpop.f32.mrf.mxu0
      %v3045 = vadd.f32 0.0, %v3044
      %v3046 = vpop.f32.mrf.mxu0
      %v3047 = vpop.f32.mrf.mxu0
      %v3048 = vadd.f32 0.0, %v3047
      %v3049 = vpop.f32.mrf.mxu0
      %3050 = vmatprep.mubr.bf16.mxu0 %v2895
      %3051 = vmatmul.mubr.bf16.gmra.mxu0 %v2894
      %v3052 = vpop.f32.mrf.mxu0
      %v3053 = vadd.f32 0.0, %v3052
      %v3054 = vpop.f32.mrf.mxu0
      %v3055 = vpop.f32.mrf.mxu0
      %v3056 = vadd.f32 0.0, %v3055
      %v3057 = vpop.f32.mrf.mxu0
      %3058 = vmatprep.mubr.bf16.mxu0 %v2897
      %3059 = vmatmul.mubr.bf16.gmra.mxu0 %v2896
      %v3060 = vpop.f32.mrf.mxu0
      %v3061 = vadd.f32 0.0, %v3060
      %v3062 = vpop.f32.mrf.mxu0
      %v3063 = vpop.f32.mrf.mxu0
      %v3064 = vadd.f32 0.0, %v3063
      %v3065 = vpop.f32.mrf.mxu0
      %3066 = vdwg.mxu0
      %v3067 = vadd.f32 %v2721, %v3037
      %v3068 = vadd.f32 %v2722, %v3040
      %v3069 = vadd.f32 %v2723, %v3045
      %v3070 = vadd.f32 %v2724, %v3048
      %v3071 = vadd.f32 %v2725, %v3053
      %v3072 = vadd.f32 %v2726, %v3056
      %v3073 = vadd.f32 %v2727, %v3061
      %v3074 = vadd.f32 %v2728, %v3064
      %3075 = vst [vmem:[#allocation3] sm:$0xff] %v3067
      %3076 = vst [vmem:[#allocation3 + $0x8] sm:$0xff] %v3068
      %3077 = vst [vmem:[#allocation3 + $0x10] sm:$0xff] %v3069
      %3078 = vst [vmem:[#allocation3 + $0x18] sm:$0xff] %v3070
      %3079 = vst [vmem:[#allocation3 + $0x20] sm:$0xff] %v3071
      %3080 = vst [vmem:[#allocation3 + $0x28] sm:$0xff] %v3072
      %3081 = vst [vmem:[#allocation3 + $0x30] sm:$0xff] %v3073
      %3082 = vst [vmem:[#allocation3 + $0x38] sm:$0xff] %v3074
      %v3083 = vld [vmem:[#allocation3] sm:$0xff]
      %v3084 = vld [vmem:[#allocation3 + $0x8] sm:$0xff]
      %v3085 = vld [vmem:[#allocation3 + $0x10] sm:$0xff]
      %v3086 = vld [vmem:[#allocation3 + $0x18] sm:$0xff]
      %v3087 = vld [vmem:[#allocation3 + $0x20] sm:$0xff]
      %v3088 = vld [vmem:[#allocation3 + $0x28] sm:$0xff]
      %v3089 = vld [vmem:[#allocation3 + $0x30] sm:$0xff]
      %v3090 = vld [vmem:[#allocation3 + $0x38] sm:$0xff]
      %v3091 = vadd.f32 %v3083, %v3084
      %v3092 = vadd.f32 %v3091, %v3085
      %v3093 = vadd.f32 %v3092, %v3086
      %v3094 = vadd.f32 %v3093, %v3087
      %v3095 = vadd.f32 %v3094, %v3088
      %v3096 = vadd.f32 %v3095, %v3089
      %v3097 = vadd.f32 %v3096, %v3090
      %v3098 = vrot.slane %v3097, 4
      %v3099 = vadd.f32 %v3097, %v3098
      %v3100 = vrot.slane %v3099, 2
      %v3101 = vadd.f32 %v3099, %v3100
      %v3102 = vrot.slane %v3101, 1
      %v3103 = vadd.f32 %v3101, %v3102
      %3104 = vst [vmem:[%s331] sm:$0x1] %v3103
      %v3105 = vmul.f32 %v3083, %v3083
      %v3106 = vmul.f32 %v3084, %v3084
      %v3107 = vmul.f32 %v3085, %v3085
      %v3108 = vmul.f32 %v3086, %v3086
      %v3109 = vmul.f32 %v3087, %v3087
      %v3110 = vmul.f32 %v3088, %v3088
      %v3111 = vmul.f32 %v3089, %v3089
      %v3112 = vmul.f32 %v3090, %v3090
      %v3113 = vadd.f32 %v3105, %v3106
      %v3114 = vadd.f32 %v3113, %v3107
      %v3115 = vadd.f32 %v3114, %v3108
      %v3116 = vadd.f32 %v3115, %v3109
      %v3117 = vadd.f32 %v3116, %v3110
      %v3118 = vadd.f32 %v3117, %v3111
      %v3119 = vadd.f32 %v3118, %v3112
      %v3120 = vrot.slane %v3119, 4
      %v3121 = vadd.f32 %v3119, %v3120
      %v3122 = vrot.slane %v3121, 2
      %v3123 = vadd.f32 %v3121, %v3122
      %v3124 = vrot.slane %v3123, 1
      %v3125 = vadd.f32 %v3123, %v3124
      %3126 = vst [vmem:[%s334] sm:$0x1] %v3125
      %v3127 = vpack.c.bf16 %v3084, %v3083
      %v3128 = vpack.c.bf16 %v3086, %v3085
      %v3129 = vpack.c.bf16 %v3088, %v3087
      %v3130 = vpack.c.bf16 %v3090, %v3089
      %v3135 = vunpack.c.l.b16 %v3127
      %v3136 = vunpack.c.h.b16 %v3127
      %v3137 = vunpack.c.l.b16 %v3128
      %v3138 = vunpack.c.h.b16 %v3128
      %v3139 = vunpack.c.l.b16 %v3129
      %v3140 = vunpack.c.h.b16 %v3129
      %v3141 = vunpack.c.l.b16 %v3130
      %v3142 = vunpack.c.h.b16 %v3130
      %v3143 = vpack.c.b16 %v3135, %v3135
      %v3144 = vpack.c.b16 %v3136, %v3136
      %v3145 = vpack.c.b16 %v3137, %v3137
      %v3146 = vpack.c.b16 %v3138, %v3138
      %v3147 = vpack.c.b16 %v3139, %v3139
      %v3148 = vpack.c.b16 %v3140, %v3140
      %v3149 = vpack.c.b16 %v3141, %v3141
      %v3150 = vpack.c.b16 %v3142, %v3142
      %3159 = vst [vmem:[%s323] sm:$0xf] %v3143
      %3160 = vst [vmem:[%s323 + $0x4] sm:$0xf] %v3144
      %3161 = vst [vmem:[%s323 + $0x8] sm:$0xf] %v3145
      %3162 = vst [vmem:[%s323 + $0xc] sm:$0xf] %v3146
      %3163 = vst [vmem:[%s323 + $0x10] sm:$0xf] %v3147
      %3164 = vst [vmem:[%s323 + $0x14] sm:$0xf] %v3148
      %3165 = vst [vmem:[%s323 + $0x18] sm:$0xf] %v3149
      %3166 = vst [vmem:[%s323 + $0x1c] sm:$0xf] %v3150
      %v3167 = vld [vmem:[%s404] sm:$0xf]
      %v3168 = vld [vmem:[%s404 + $0x4] sm:$0xf]
      %v3169 = vld [vmem:[%s404 + $0xc] sm:$0xf]
      %v3170 = vld [vmem:[%s404 + $0x10] sm:$0xf]
      %v3171 = vld [vmem:[%s404 + $0x18] sm:$0xf]
      %v3172 = vld [vmem:[%s404 + $0x1c] sm:$0xf]
      %v3173 = vld [vmem:[%s404 + $0x24] sm:$0xf]
      %v3174 = vld [vmem:[%s404 + $0x28] sm:$0xf]
      %v3175 = vld [vmem:[%s404 + $0x30] sm:$0xf]
      %v3176 = vld [vmem:[%s404 + $0x34] sm:$0xf]
      %v3177 = vld [vmem:[%s404 + $0x3c] sm:$0xf]
      %v3178 = vld [vmem:[%s404 + $0x40] sm:$0xf]
      %v3179 = vld [vmem:[%s404 + $0x48] sm:$0xf]
      %v3180 = vld [vmem:[%s404 + $0x4c] sm:$0xf]
      %v3181 = vld [vmem:[%s404 + $0x54] sm:$0xf]
      %v3182 = vld [vmem:[%s404 + $0x58] sm:$0xf]
      %v3199 = vunpack.c.l.b16 %v3167
      %v3200 = vunpack.c.l.b16 %v3168
      %v3201 = vunpack.c.l.b16 %v3169
      %v3202 = vunpack.c.l.b16 %v3170
      %v3203 = vunpack.c.l.b16 %v3171
      %v3204 = vunpack.c.l.b16 %v3172
      %v3205 = vunpack.c.l.b16 %v3173
      %v3206 = vunpack.c.l.b16 %v3174
      %v3207 = vunpack.c.l.b16 %v3175
      %v3208 = vunpack.c.l.b16 %v3176
      %v3209 = vunpack.c.l.b16 %v3177
      %v3210 = vunpack.c.l.b16 %v3178
      %v3211 = vunpack.c.l.b16 %v3179
      %v3212 = vunpack.c.l.b16 %v3180
      %v3213 = vunpack.c.l.b16 %v3181
      %v3214 = vunpack.c.l.b16 %v3182
      %v3215 = vpack.c.b16 %v3200, %v3199
      %v3216 = vpack.c.b16 %v3202, %v3201
      %v3217 = vpack.c.b16 %v3204, %v3203
      %v3218 = vpack.c.b16 %v3206, %v3205
      %v3219 = vpack.c.b16 %v3208, %v3207
      %v3220 = vpack.c.b16 %v3210, %v3209
      %v3221 = vpack.c.b16 %v3212, %v3211
      %v3222 = vpack.c.b16 %v3214, %v3213
      %v3223 = vunpack.i.l.s16 %v3215
      %v3224 = vunpack.i.h.s16 %v3215
      %v3225 = vunpack.i.l.s16 %v3216
      %v3226 = vunpack.i.h.s16 %v3216
      %v3227 = vunpack.i.l.s16 %v3217
      %v3228 = vunpack.i.h.s16 %v3217
      %v3229 = vunpack.i.l.s16 %v3218
      %v3230 = vunpack.i.h.s16 %v3218
      %v3231 = vunpack.i.l.s16 %v3219
      %v3232 = vunpack.i.h.s16 %v3219
      %v3233 = vunpack.i.l.s16 %v3220
      %v3234 = vunpack.i.h.s16 %v3220
      %v3235 = vunpack.i.l.s16 %v3221
      %v3236 = vunpack.i.h.s16 %v3221
      %v3237 = vunpack.i.l.s16 %v3222
      %v3238 = vunpack.i.h.s16 %v3222
      %v3239 = vld [vmem:[%s4] sm:$0xf]
      %v3240 = vld [vmem:[%s4 + $0x4] sm:$0xf]
      %v3241 = vld [vmem:[%s4 + $0x8] sm:$0xf]
      %v3242 = vld [vmem:[%s4 + $0xc] sm:$0xf]
      %v3243 = vld [vmem:[%s4 + $0x10] sm:$0xf]
      %v3244 = vld [vmem:[%s4 + $0x14] sm:$0xf]
      %v3245 = vld [vmem:[%s4 + $0x18] sm:$0xf]
      %v3246 = vld [vmem:[%s4 + $0x1c] sm:$0xf]
      %v3247 = vld [vmem:[%s4 + $0x20] sm:$0xf]
      %v3248 = vld [vmem:[%s4 + $0x24] sm:$0xf]
      %v3249 = vld [vmem:[%s4 + $0x28] sm:$0xf]
      %v3250 = vld [vmem:[%s4 + $0x2c] sm:$0xf]
      %v3251 = vld [vmem:[%s4 + $0x30] sm:$0xf]
      %v3252 = vld [vmem:[%s4 + $0x34] sm:$0xf]
      %v3253 = vld [vmem:[%s4 + $0x38] sm:$0xf]
      %v3254 = vld [vmem:[%s4 + $0x3c] sm:$0xf]
      %v3255 = vld [vmem:[%s4 + $0x40] sm:$0xf]
      %v3256 = vld [vmem:[%s4 + $0x44] sm:$0xf]
      %v3257 = vld [vmem:[%s4 + $0x48] sm:$0xf]
      %v3258 = vld [vmem:[%s4 + $0x4c] sm:$0xf]
      %v3259 = vld [vmem:[%s4 + $0x50] sm:$0xf]
      %v3260 = vld [vmem:[%s4 + $0x54] sm:$0xf]
      %v3261 = vld [vmem:[%s4 + $0x58] sm:$0xf]
      %v3262 = vld [vmem:[%s4 + $0x5c] sm:$0xf]
      %v3263 = vld [vmem:[%s4 + $0x60] sm:$0xf]
      %v3264 = vld [vmem:[%s4 + $0x64] sm:$0xf]
      %v3265 = vld [vmem:[%s4 + $0x68] sm:$0xf]
      %v3266 = vld [vmem:[%s4 + $0x6c] sm:$0xf]
      %v3267 = vld [vmem:[%s4 + $0x70] sm:$0xf]
      %v3268 = vld [vmem:[%s4 + $0x74] sm:$0xf]
      %v3269 = vld [vmem:[%s4 + $0x78] sm:$0xf]
      %v3270 = vld [vmem:[%s4 + $0x7c] sm:$0xf]
      %v3271 = vpack.c.b16 %v3225, %v3223
      %v3272 = vpack.c.b16 %v3226, %v3224
      %v3273 = vpack.c.b16 %v3229, %v3227
      %v3274 = vpack.c.b16 %v3230, %v3228
      %v3275 = vpack.c.b16 %v3233, %v3231
      %v3276 = vpack.c.b16 %v3234, %v3232
      %v3277 = vpack.c.b16 %v3237, %v3235
      %v3278 = vpack.c.b16 %v3238, %v3236
      %v3319 = vunpack.c.l.b16 %v3239
      %v3320 = vunpack.c.l.b16 %v3240
      %v3321 = vunpack.c.l.b16 %v3241
      %v3322 = vunpack.c.l.b16 %v3242
      %v3323 = vunpack.c.l.b16 %v3243
      %v3324 = vunpack.c.l.b16 %v3244
      %v3325 = vunpack.c.l.b16 %v3245
      %v3326 = vunpack.c.l.b16 %v3246
      %v3327 = vunpack.c.l.b16 %v3247
      %v3328 = vunpack.c.l.b16 %v3248
      %v3329 = vunpack.c.l.b16 %v3249
      %v3330 = vunpack.c.l.b16 %v3250
      %v3331 = vunpack.c.l.b16 %v3251
      %v3332 = vunpack.c.l.b16 %v3252
      %v3333 = vunpack.c.l.b16 %v3253
      %v3334 = vunpack.c.l.b16 %v3254
      %v3335 = vunpack.c.l.b16 %v3255
      %v3336 = vunpack.c.l.b16 %v3256
      %v3337 = vunpack.c.l.b16 %v3257
      %v3338 = vunpack.c.l.b16 %v3258
      %v3339 = vunpack.c.l.b16 %v3259
      %v3340 = vunpack.c.l.b16 %v3260
      %v3341 = vunpack.c.l.b16 %v3261
      %v3342 = vunpack.c.l.b16 %v3262
      %v3343 = vunpack.c.l.b16 %v3263
      %v3344 = vunpack.c.l.b16 %v3264
      %v3345 = vunpack.c.l.b16 %v3265
      %v3346 = vunpack.c.l.b16 %v3266
      %v3347 = vunpack.c.l.b16 %v3267
      %v3348 = vunpack.c.l.b16 %v3268
      %v3349 = vunpack.c.l.b16 %v3269
      %v3350 = vunpack.c.l.b16 %v3270
      %v3351 = vpack.c.b16 %v3320, %v3319
      %v3352 = vpack.c.b16 %v3322, %v3321
      %v3353 = vpack.c.b16 %v3324, %v3323
      %v3354 = vpack.c.b16 %v3326, %v3325
      %v3355 = vpack.c.b16 %v3328, %v3327
      %v3356 = vpack.c.b16 %v3330, %v3329
      %v3357 = vpack.c.b16 %v3332, %v3331
      %v3358 = vpack.c.b16 %v3334, %v3333
      %v3359 = vpack.c.b16 %v3336, %v3335
      %v3360 = vpack.c.b16 %v3338, %v3337
      %v3361 = vpack.c.b16 %v3340, %v3339
      %v3362 = vpack.c.b16 %v3342, %v3341
      %v3363 = vpack.c.b16 %v3344, %v3343
      %v3364 = vpack.c.b16 %v3346, %v3345
      %v3365 = vpack.c.b16 %v3348, %v3347
      %v3366 = vpack.c.b16 %v3350, %v3349
      %3383 = vmatprep.subr.bf16.mxu0 0
      %3384 = vmatpush1.bf16.msra.mxu0 %v3358
      %3385 = vmatprep.subr.bf16.mxu0 0
      %3386 = vmatpush1.bf16.msra.mxu0 %v3357
      %3387 = vmatprep.subr.bf16.mxu0 0
      %3388 = vmatpush1.bf16.msra.mxu0 %v3356
      %3389 = vmatprep.subr.bf16.mxu0 0
      %3390 = vmatpush1.bf16.msra.mxu0 %v3355
      %3391 = vmatprep.subr.bf16.mxu0 0
      %3392 = vmatpush1.bf16.msra.mxu0 %v3354
      %3393 = vmatprep.subr.bf16.mxu0 0
      %3394 = vmatpush1.bf16.msra.mxu0 %v3353
      %3395 = vmatprep.subr.bf16.mxu0 0
      %3396 = vmatpush1.bf16.msra.mxu0 %v3352
      %3397 = vmatprep.subr.bf16.mxu0 0
      %3398 = vmatpush1.bf16.msra.mxu0 %v3351
      %3399 = vmatprep.subr.bf16.mxu0 0
      %3400 = vmatpush2.bf16.msra.mxu0 %v3366
      %3401 = vmatprep.subr.bf16.mxu0 0
      %3402 = vmatpush2.bf16.msra.mxu0 %v3365
      %3403 = vmatprep.subr.bf16.mxu0 0
      %3404 = vmatpush2.bf16.msra.mxu0 %v3364
      %3405 = vmatprep.subr.bf16.mxu0 0
      %3406 = vmatpush2.bf16.msra.mxu0 %v3363
      %3407 = vmatprep.subr.bf16.mxu0 0
      %3408 = vmatpush2.bf16.msra.mxu0 %v3362
      %3409 = vmatprep.subr.bf16.mxu0 0
      %3410 = vmatpush2.bf16.msra.mxu0 %v3361
      %3411 = vmatprep.subr.bf16.mxu0 0
      %3412 = vmatpush2.bf16.msra.mxu0 %v3360
      %3413 = vmatprep.subr.bf16.mxu0 0
      %3414 = vmatpush2.bf16.msra.mxu0 %v3359
      %3415 = vmatprep.mubr.bf16.mxu0 %v3272
      %3416 = vmatmul.mubr.bf16.gmra.mxu0 %v3271
      %v3417 = vpop.f32.mrf.mxu0
      %v3418 = vadd.f32 0.0, %v3417
      %v3419 = vpop.f32.mrf.mxu0
      %v3420 = vpop.f32.mrf.mxu0
      %v3421 = vadd.f32 0.0, %v3420
      %v3422 = vpop.f32.mrf.mxu0
      %3423 = vmatprep.mubr.bf16.mxu0 %v3274
      %3424 = vmatmul.mubr.bf16.gmra.mxu0 %v3273
      %v3425 = vpop.f32.mrf.mxu0
      %v3426 = vadd.f32 0.0, %v3425
      %v3427 = vpop.f32.mrf.mxu0
      %v3428 = vpop.f32.mrf.mxu0
      %v3429 = vadd.f32 0.0, %v3428
      %v3430 = vpop.f32.mrf.mxu0
      %3431 = vmatprep.mubr.bf16.mxu0 %v3276
      %3432 = vmatmul.mubr.bf16.gmra.mxu0 %v3275
      %v3433 = vpop.f32.mrf.mxu0
      %v3434 = vadd.f32 0.0, %v3433
      %v3435 = vpop.f32.mrf.mxu0
      %v3436 = vpop.f32.mrf.mxu0
      %v3437 = vadd.f32 0.0, %v3436
      %v3438 = vpop.f32.mrf.mxu0
      %3439 = vmatprep.mubr.bf16.mxu0 %v3278
      %3440 = vmatmul.mubr.bf16.gmra.mxu0 %v3277
      %v3441 = vpop.f32.mrf.mxu0
      %v3442 = vadd.f32 0.0, %v3441
      %v3443 = vpop.f32.mrf.mxu0
      %v3444 = vpop.f32.mrf.mxu0
      %v3445 = vadd.f32 0.0, %v3444
      %v3446 = vpop.f32.mrf.mxu0
      %3447 = vdwg.mxu0
      %v3448 = vpack.c.bf16 %v3421, %v3418
      %v3449 = vpack.c.bf16 %v3429, %v3426
      %v3450 = vpack.c.bf16 %v3437, %v3434
      %v3451 = vpack.c.bf16 %v3445, %v3442
      %v3456 = vunpack.c.l.b16 %v3448
      %v3457 = vunpack.c.h.b16 %v3448
      %v3458 = vunpack.c.l.b16 %v3449
      %v3459 = vunpack.c.h.b16 %v3449
      %v3460 = vunpack.c.l.b16 %v3450
      %v3461 = vunpack.c.h.b16 %v3450
      %v3462 = vunpack.c.l.b16 %v3451
      %v3463 = vunpack.c.h.b16 %v3451
      %v3464 = vpack.c.b16 %v3456, %v3456
      %v3465 = vpack.c.b16 %v3457, %v3457
      %v3466 = vpack.c.b16 %v3458, %v3458
      %v3467 = vpack.c.b16 %v3459, %v3459
      %v3468 = vpack.c.b16 %v3460, %v3460
      %v3469 = vpack.c.b16 %v3461, %v3461
      %v3470 = vpack.c.b16 %v3462, %v3462
      %v3471 = vpack.c.b16 %v3463, %v3463
      %3480 = vst [vmem:[%s328] sm:$0xf] %v3464
      %3481 = vst [vmem:[%s328 + $0x4] sm:$0xf] %v3465
      %3482 = vst [vmem:[%s328 + $0x8] sm:$0xf] %v3466
      %3483 = vst [vmem:[%s328 + $0xc] sm:$0xf] %v3467
      %3484 = vst [vmem:[%s328 + $0x10] sm:$0xf] %v3468
      %3485 = vst [vmem:[%s328 + $0x14] sm:$0xf] %v3469
      %3486 = vst [vmem:[%s328 + $0x18] sm:$0xf] %v3470
      %3487 = vst [vmem:[%s328 + $0x1c] sm:$0xf] %v3471
      %p3488 = scmp.lt.s32.totalorder %s20, 1
      %s3489 = scalar_select %p3488, %s20, 1
      %s3490 = smul.addr %s3489, 8
      %s3491 = smul.addr %s3490, 4
      %s3492 = scalar_lea.vmem %s5, %s3491
      %p3493 = scmp.lt.s32.totalorder %s20, 1
      %s3494 = scalar_select %p3493, %s20, 1
      %s3495 = smul.addr %s3494, 8
      %s3496 = smul.addr %s3495, 4
      %s3497 = scalar_lea.vmem %s6, %s3496
      %p3498 = scmp.lt.s32.totalorder %s20, 1
      %s3499 = scalar_select %p3498, %s20, 1
      %s3500 = scalar_lea.vmem %s7, %s3499
      %p3501 = scmp.lt.s32.totalorder %s20, 1
      %s3502 = scalar_select %p3501, %s20, 1
      %s3503 = scalar_lea.vmem %s8, %s3502
      // Predicated region
      $region41: #{basic_block_forward.4} parent=39 // pred_check
        %p3504 = pneg %p148
      $region42: #{basic_block_forward.4} parent=39 // pred_check_branch
        %3506 = sbr.rel (%p3504) target = $region44
      $region43: #{basic_block_forward.4} parent=39 // pred_region
        _
      $region44: #{basic_block_forward.4} parent=39 // pred_fallthru
        _
      // Predicated region
      $region45: #{basic_block_forward.4} parent=39 // pred_check
        %p3507 = pneg %p174
      $region46: #{basic_block_forward.4} parent=39 // pred_check_branch
        %3509 = sbr.rel (%p3507) target = $region48
      $region47: #{basic_block_forward.4} parent=39 // pred_region
        _
      $region48: #{basic_block_forward.4} parent=39 // pred_fallthru
        _
      // Predicated region
      $region49: #{basic_block_forward.4} parent=39 // pred_check
        %p3510 = pneg %p200
      $region50: #{basic_block_forward.4} parent=39 // pred_check_branch
        %3512 = sbr.rel (%p3510) target = $region52
      $region51: #{basic_block_forward.4} parent=39 // pred_region
        _
      $region52: #{basic_block_forward.4} parent=39 // pred_fallthru
        _
      // Predicated region
      $region53: #{basic_block_forward.4} parent=39 // pred_check
        %p3513 = pneg %p226
      $region54: #{basic_block_forward.4} parent=39 // pred_check_branch
        %3515 = sbr.rel (%p3513) target = $region56
      $region55: #{basic_block_forward.4} parent=39 // pred_region
        _
      $region56: #{basic_block_forward.4} parent=39 // pred_fallthru
        _
    $region40: #{basic_block_forward.4} parent=5 // pred_fallthru
      _
    %p3516 = scmp.le.s32.totalorder 2, %s15
    // Predicated region
    $region57: #{basic_block_forward.4} parent=5 // pred_check
      %p3517 = pneg %p3516
    $region58: #{basic_block_forward.4} parent=5 // pred_check_branch
      %3519 = sbr.rel (%p3517) target = $region60
    $region59: #{basic_block_forward.4} parent=5 // pred_region
      %s3520 = ssub.s32 %s15, 2
      // Predicated region
      $region61: #{basic_block_forward.4} parent=59 // pred_check
        %p3521 = pneg %p154
      $region62: #{basic_block_forward.4} parent=59 // pred_check_branch
        %3523 = sbr.rel (%p3521) target = $region64
      $region63: #{basic_block_forward.4} parent=59 // pred_region
        %p3524 = scmp.lt.s32.totalorder %s21, 1
        %s3525 = scalar_select %p3524, %s21, 1
        %s3526 = smul.addr %s3525, 8
        %s3527 = smul.addr %s3526, 4
        %s3528 = scalar_lea.vmem %s5, %s3527
      $region64: #{basic_block_forward.4} parent=59 // pred_fallthru
        _
      // Predicated region
      $region65: #{basic_block_forward.4} parent=59 // pred_check
        %p3529 = pneg %p180
      $region66: #{basic_block_forward.4} parent=59 // pred_check_branch
        %3531 = sbr.rel (%p3529) target = $region68
      $region67: #{basic_block_forward.4} parent=59 // pred_region
        %p3532 = scmp.lt.s32.totalorder %s21, 1
        %s3533 = scalar_select %p3532, %s21, 1
        %s3534 = smul.addr %s3533, 8
        %s3535 = smul.addr %s3534, 4
        %s3536 = scalar_lea.vmem %s6, %s3535
      $region68: #{basic_block_forward.4} parent=59 // pred_fallthru
        _
      // Predicated region
      $region69: #{basic_block_forward.4} parent=59 // pred_check
        %p3537 = pneg %p206
      $region70: #{basic_block_forward.4} parent=59 // pred_check_branch
        %3539 = sbr.rel (%p3537) target = $region72
      $region71: #{basic_block_forward.4} parent=59 // pred_region
        %p3540 = scmp.lt.s32.totalorder %s21, 1
        %s3541 = scalar_select %p3540, %s21, 1
        %s3542 = scalar_lea.vmem %s7, %s3541
      $region72: #{basic_block_forward.4} parent=59 // pred_fallthru
        _
      // Predicated region
      $region73: #{basic_block_forward.4} parent=59 // pred_check
        %p3543 = pneg %p232
      $region74: #{basic_block_forward.4} parent=59 // pred_check_branch
        %3545 = sbr.rel (%p3543) target = $region76
      $region75: #{basic_block_forward.4} parent=59 // pred_region
        %p3546 = scmp.lt.s32.totalorder %s21, 1
        %s3547 = scalar_select %p3546, %s21, 1
        %s3548 = scalar_lea.vmem %s8, %s3547
      $region76: #{basic_block_forward.4} parent=59 // pred_fallthru
        _
    $region60: #{basic_block_forward.4} parent=5 // pred_fallthru
      _
  $region6: #{basic_block_forward.4} parent=0 // loop_footer
    %s19 = sadd.s32 1, %s15
  $region7: #{basic_block_forward.4} parent=0 // loop_footer_branch
    %14 = sbr.rel target = $region3
  $region8: #{basic_block_forward.4} parent=0 // loop_exit
    _

</llo_original>
